<compile_context>
chip_gen: v6e
topology: v6e:2x2x1
jax: 0.10.0
libtpu: 0.0.40
codegen_flags: <defaults>
</compile_context>

<pallas_src>
import jax
import jax.numpy as jnp
import numpy as np
from jax.experimental import pallas as pl
from jax.experimental.pallas import tpu as pltpu

# ---- module constants (from the PyTorch source) -----------------------------
CNV2 = 16            # cnv2Filters
DEPTH = 10
PIXELS = 28
END_PIX = 4          # int(((28 - 3) / 2 - 3) / 2)
KER_GEN = 2
KERNEL = 4
LATENT = 100
Q_PIX = 7
EPS = 1e-5           # BatchNorm eps (PyTorch default)
B = 4                # batch (BatchNorm training stats need > 1 sample)


# ----------------------------- pallas plumbing -------------------------------

def _full_spec(a):
    nd = a.ndim
    return pl.BlockSpec(a.shape, lambda i, _nd=nd: (0,) * _nd)


# ============================ the fused kernel ===============================

def _ae_fused_kernel(xp_ref, w1_ref, b1_ref, w2_ref, b2_ref,
                     wE_ref, bE_ref, gE_ref, betaE_ref,
                     wD_ref, bD_ref, gD_ref, betaD_ref,
                     wt1_ref, bt1_ref, gt1_ref, bet1_ref, s8_ref, s8t_ref,
                     wt2_ref, bt2_ref, gt2_ref, bet2_ref, s16_ref, s16t_ref,
                     wcv_ref, bcv_ref,
                     o_ref,
                     a1_s, y1_s, a2_s, y2_s, flat_s, h2_s, t1_s):
    f32 = jnp.float32
    bf16 = jnp.bfloat16

    # ----------------- stage 1: conv1(1->16,4x4) + relu + maxpool ------------
    # GEMM rows: (q = conv-row parity [pooled], u = pooled-row parity,
    #             v = pooled-row half 0..5, b) -> 96 rows.
    # GEMM K:    (di tap-row 0..3, j image col 0..27) -> 112.
    # Weight columns: (s = conv-col parity [pooled], oq = pooled col 0..11, c).
    for q in range(2):
        for u in range(2):
            r0 = (q * 2 + u) * 24
            for di in range(KERNEL):
                s = 2 * u + q + di              # needed image row = 4v + s
                k, c0 = s % 4, s // 4           # plane id, plane-row offset
                a1_s[r0:r0 + 24, di * 28:di * 28 + 28] = \
                    xp_ref[k, c0 * B:c0 * B + 24, :]
    y1 = jnp.dot(a1_s[...], w1_ref[...], preferred_element_type=f32)   # (96, 384)
    p1 = jnp.maximum(jnp.maximum(y1[0:48, 0:192], y1[0:48, 192:384]),
                     jnp.maximum(y1[48:96, 0:192], y1[48:96, 192:384]))
    # y1_s rows (u, v, b) <-> pooled H index r = 2v + u ; cols (oq, c)
    y1_s[...] = jnp.maximum(p1 + b1_ref[...], 0.0).astype(bf16)        # (48, 192)

    # ----------------- stage 2: conv2(16->32,4x4) + relu + maxpool -----------
    # GEMM rows: (q2 = conv-row parity [pooled], t = pooled row 0..3, b) -> 32.
    # GEMM K:    (di tap-row, y1-col 0..11, cin) -> 768.
    for q2 in range(2):
        for di in range(KERNEL):
            s2 = q2 + di                         # needed y1 row = 2t + s2
            u, c0 = s2 % 2, s2 // 2
            start = u * 24 + c0 * 4
            a2_s[q2 * 16:q2 * 16 + 16, di * 192:di * 192 + 192] = \
                y1_s[start:start + 16, :]
    y2 = jnp.dot(a2_s[...], w2_ref[...], preferred_element_type=f32)   # (32, 256)
    p2 = jnp.maximum(jnp.maximum(y2[0:16, 0:128], y2[0:16, 128:256]),
                     jnp.maximum(y2[16:32, 0:128], y2[16:32, 128:256]))
    # y2_s rows (t, b) ; cols (wq, oc)
    y2_s[...] = jnp.maximum(p2 + b2_ref[...], 0.0)                     # (16, 128) f32

    # ----------------- stage 3: flatten + fc1E + BN1d + relu -----------------
    for t in range(END_PIX):
        flat_s[:, t * 128:t * 128 + 128] = \
            y2_s[t * B:t * B + B, :].astype(bf16)                      # rows = b
    z = jnp.dot(flat_s[...], wE_ref[...], preferred_element_type=f32) + bE_ref[...]
    m = jnp.mean(z, axis=0, keepdims=True)
    v = jnp.mean(jnp.square(z - m), axis=0, keepdims=True)             # biased var
    z = jnp.maximum((z - m) * jax.lax.rsqrt(v + EPS) * gE_ref[...] + betaE_ref[...],
                    0.0)                                               # (B, 100)

    # ----------------- stage 4: fc1D + BN1d + relu ---------------------------
    h = jnp.dot(z.astype(bf16), wD_ref[...], preferred_element_type=f32) + bD_ref[...]
    m = jnp.mean(h, axis=0, keepdims=True)
    v = jnp.mean(jnp.square(h - m), axis=0, keepdims=True)
    h = jnp.maximum((h - m) * jax.lax.rsqrt(v + EPS) * gD_ref[...] + betaD_ref[...],
                    0.0)                                               # (B, 490) cols (i, j, c)

    # ----------------- stage 5: Tconv1 + BN2d(8) + relu ----------------------
    # rows (i, b), cols (j, c10) ; block-diag weight over j -> cols (j, di1, dj1, c8)
    for i in range(Q_PIX):
        h2_s[i * B:i * B + B, :] = h[:, i * 70:i * 70 + 70].astype(bf16)
    t1 = jnp.dot(h2_s[...], wt1_ref[...], preferred_element_type=f32) + bt1_ref[...]
    n1 = float(B * 14 * 14)
    msum = jnp.sum(t1, axis=0, keepdims=True)                          # (1, 224)
    m8 = jnp.dot(msum, s8_ref[...], preferred_element_type=f32) * (1.0 / n1)
    d = t1 - jnp.dot(m8, s8t_ref[...], preferred_element_type=f32)
    v8 = jnp.dot(jnp.sum(d * d, axis=0, keepdims=True), s8_ref[...],
                 preferred_element_type=f32) * (1.0 / n1)
    sc = gt1_ref[...] * jax.lax.rsqrt(v8 + EPS)
    sh = bet1_ref[...] - m8 * sc
    t1 = jnp.maximum(t1 * jnp.dot(sc, s8t_ref[...], preferred_element_type=f32)
                     + jnp.dot(sh, s8t_ref[...], preferred_element_type=f32), 0.0)

    # ----------------- stage 6: Tconv2 + BN2d(16) + sigmoid ------------------
    # move j into rows: t1_s rows (j, i, b), cols (di1, dj1, c8)
    for j in range(Q_PIX):
        t1_s[j * 28:j * 28 + 28, :] = t1[:, j * 32:j * 32 + 32].astype(bf16)
    t2 = jnp.dot(t1_s[...], wt2_ref[...], preferred_element_type=f32) + bt2_ref[...]
    n2 = float(B * 28 * 28)
    msum = jnp.sum(t2, axis=0, keepdims=True)                          # (1, 256)
    m16 = jnp.dot(msum, s16_ref[...], preferred_element_type=f32) * (1.0 / n2)
    d = t2 - jnp.dot(m16, s16t_ref[...], preferred_element_type=f32)
    v16 = jnp.dot(jnp.sum(d * d, axis=0, keepdims=True), s16_ref[...],
                  preferred_element_type=f32) * (1.0 / n2)
    sc = gt2_ref[...] * jax.lax.rsqrt(v16 + EPS)
    sh = bet2_ref[...] - m16 * sc
    t2 = jax.nn.sigmoid(t2 * jnp.dot(sc, s16t_ref[...], preferred_element_type=f32)
                        + jnp.dot(sh, s16t_ref[...], preferred_element_type=f32))

    # ----------------- stage 7: final 1x1 conv + sigmoid ---------------------
    o = jnp.dot(t2.astype(bf16), wcv_ref[...], preferred_element_type=f32) + bcv_ref[...]
    o_ref[...] = jax.nn.sigmoid(o)                                     # (196, 16)


# ============================== parameters ===================================

def init_params(key):
    """Deterministic PyTorch-style uniform(-1/sqrt(fan_in), 1/sqrt(fan_in)) init,
    pre-laid-out (with the conv/pool structure folded in) for the fused kernel."""
    ks = jax.random.split(key, 14)

    def uni(k, shape, fan_in):
        bound = 1.0 / float(fan_in) ** 0.5
        return np.asarray(jax.random.uniform(k, shape, jnp.float32, -bound, bound))

    p = {}
    c32 = 2 * CNV2
    c8 = CNV2 // 2

    # ---- conv1: Conv2d(1, 16, 4) -> (112, 384) GEMM weight --------------------
    # rows (di, j);  cols (s = conv-col parity, oq = pooled col, c)
    w1 = uni(ks[0], (CNV2, 1, KERNEL, KERNEL), KERNEL * KERNEL)
    b1 = uni(ks[1], (CNV2,), KERNEL * KERNEL)
    W1big = np.zeros((KERNEL * PIXELS, 2 * 12 * CNV2), np.float32)
    for di in range(KERNEL):
        for dj in range(KERNEL):
            for oq in range(12):
                for s in range(2):
                    jcol = 2 * oq + s + dj
                    col = s * 192 + oq * CNV2
                    W1big[di * PIXELS + jcol, col:col + CNV2] = w1[:, 0, di, dj]
    p["w1big"] = jnp.asarray(W1big, jnp.bfloat16)
    p["b1t"] = jnp.asarray(np.tile(b1, 12)[None, :], jnp.float32)        # (1, 192)

    # ---- conv2: Conv2d(16, 32, 4) -> (768, 256) GEMM weight -------------------
    # rows (di2, w1i, cin); cols (s, wq = pooled col, oc)
    w2 = uni(ks[2], (c32, CNV2, KERNEL, KERNEL), CNV2 * KERNEL * KERNEL)
    b2 = uni(ks[3], (c32,), CNV2 * KERNEL * KERNEL)
    W2big = np.zeros((KERNEL * 12 * CNV2, 2 * END_PIX * c32), np.float32)
    for di2 in range(KERNEL):
        for dj2 in range(KERNEL):
            for wq in range(END_PIX):
                for s in range(2):
                    w1i = 2 * wq + s + dj2
                    r0 = di2 * 192 + w1i * CNV2
                    c0 = s * 128 + wq * c32
                    W2big[r0:r0 + CNV2, c0:c0 + c32] = w2[:, :, di2, dj2].T
    p["w2big"] = jnp.asarray(W2big, jnp.bfloat16)
    p["b2t"] = jnp.asarray(np.tile(b2, END_PIX)[None, :], jnp.float32)   # (1, 128)

    # ---- fc1E: Linear(512, 100); rows permuted to our (t, wq, oc) flatten order
    fin = c32 * END_PIX * END_PIX
    wE = uni(ks[4], (LATENT, fin), fin)
    bE = uni(ks[5], (LATENT,), fin)
    t_ = np.arange(END_PIX)[:, None, None]
    w_ = np.arange(END_PIX)[None, :, None]
    c_ = np.arange(c32)[None, None, :]
    perm_in = (c_ * (END_PIX * END_PIX) + t_ * END_PIX + w_).reshape(-1)
    p["wE"] = jnp.asarray(wE.T[perm_in, :], jnp.bfloat16)                # (512, 100)
    p["bE"] = jnp.asarray(bE[None, :], jnp.float32)
    p["gE"] = jnp.ones((1, LATENT), jnp.float32)
    p["betaE"] = jnp.zeros((1, LATENT), jnp.float32)

    # ---- fc1D: Linear(100, 490); cols permuted to (i, j, c) order --------------
    nf = Q_PIX * Q_PIX * DEPTH
    wD = uni(ks[6], (nf, LATENT), LATENT)
    bD = uni(ks[7], (nf,), LATENT)
    i_ = np.arange(Q_PIX)[:, None, None]
    j_ = np.arange(Q_PIX)[None, :, None]
    cD = np.arange(DEPTH)[None, None, :]
    perm_out = (cD * (Q_PIX * Q_PIX) + i_ * Q_PIX + j_).reshape(-1)
    p["wD"] = jnp.asarray(wD.T[:, perm_out], jnp.bfloat16)               # (100, 490)
    p["bD"] = jnp.asarray(bD[perm_out][None, :], jnp.float32)
    p["gD"] = jnp.ones((1, nf), jnp.float32)
    p["betaD"] = jnp.zeros((1, nf), jnp.float32)

    # ---- Tconv1: ConvTranspose2d(10, 8, 2, stride 2); block-diag over j --------
    wt1 = uni(ks[8], (DEPTH, c8, KER_GEN, KER_GEN), DEPTH * KER_GEN * KER_GEN)
    bt1 = uni(ks[9], (c8,), DEPTH * KER_GEN * KER_GEN)
    W1t = np.transpose(wt1, (0, 2, 3, 1)).reshape(DEPTH, 4 * c8)         # (10, 32)
    p["wt1bd"] = jnp.asarray(np.kron(np.eye(Q_PIX, dtype=np.float32), W1t),
                             jnp.bfloat16)                               # (70, 224)
    p["bt1t"] = jnp.asarray(np.tile(bt1, Q_PIX * 4)[None, :], jnp.float32)
    p["gt1"] = jnp.ones((1, c8), jnp.float32)
    p["bet1"] = jnp.zeros((1, c8), jnp.float32)
    S8 = (np.arange(Q_PIX * 4 * c8)[:, None] % c8
          == np.arange(c8)[None, :]).astype(np.float32)                  # (224, 8)
    p["s8"] = jnp.asarray(S8, jnp.float32)
    p["s8t"] = jnp.asarray(S8.T, jnp.float32)

    # ---- Tconv2: ConvTranspose2d(8, 16, 2, stride 2); block-diag over (di1,dj1)
    wt2 = uni(ks[10], (c8, CNV2, KER_GEN, KER_GEN), c8 * KER_GEN * KER_GEN)
    bt2 = uni(ks[11], (CNV2,), c8 * KER_GEN * KER_GEN)
    W2t = np.transpose(wt2, (0, 2, 3, 1)).reshape(c8, 4 * CNV2)          # (8, 64)
    p["wt2bd"] = jnp.asarray(np.kron(np.eye(4, dtype=np.float32), W2t),
                             jnp.bfloat16)                               # (32, 256)
    p["bt2t"] = jnp.asarray(np.tile(bt2, 16)[None, :], jnp.float32)
    p["gt2"] = jnp.ones((1, CNV2), jnp.float32)
    p["bet2"] = jnp.zeros((1, CNV2), jnp.float32)
    S16 = (np.arange(16 * CNV2)[:, None] % CNV2
           == np.arange(CNV2)[None, :]).astype(np.float32)               # (256, 16)
    p["s16"] = jnp.asarray(S16, jnp.float32)
    p["s16t"] = jnp.asarray(S16.T, jnp.float32)

    # ---- final conv: Conv2d(16, 1, 1); block-diag over the 16 sub-positions ----
    wcv = uni(ks[12], (1, CNV2, 1, 1), CNV2).reshape(1, CNV2)
    bcv = uni(ks[13], (1,), CNV2)
    p["wcvbd"] = jnp.asarray(np.kron(np.eye(16, dtype=np.float32), wcv.T),
                             jnp.bfloat16)                               # (256, 16)
    p["bcv"] = jnp.asarray(np.tile(bcv, 16)[None, :], jnp.float32)       # (1, 16)
    return p


# ============================== forward pass =================================

def ae_forward(x_nchw, p):
    """Full AE forward.  x: (B, 1, 28, 28) f32 -> (B, 1, 28, 28) f32."""
    # TODO(synk): nn.BatchNorm running_mean / running_var buffer updates
    # (training-state side effects) are not modeled; only the training-mode
    # forward normalization (biased batch variance) is computed.
    assert x_nchw.shape[0] == B
    x = x_nchw[:, 0, :, :]
    # image rows split by (row mod 4): xp[k, jq*B + b, :] = x[b, 4*jq + k, :]
    xp = (x.reshape(B, Q_PIX, 4, PIXELS).transpose(2, 1, 0, 3)
          .reshape(4, Q_PIX * B, PIXELS).astype(jnp.bfloat16))

    args = (xp, p["w1big"], p["b1t"], p["w2big"], p["b2t"],
            p["wE"], p["bE"], p["gE"], p["betaE"],
            p["wD"], p["bD"], p["gD"], p["betaD"],
            p["wt1bd"], p["bt1t"], p["gt1"], p["bet1"], p["s8"], p["s8t"],
            p["wt2bd"], p["bt2t"], p["gt2"], p["bet2"], p["s16"], p["s16t"],
            p["wcvbd"], p["bcv"])

    out = pl.pallas_call(
        _ae_fused_kernel,
        out_shape=jax.ShapeDtypeStruct((Q_PIX * Q_PIX * B, 16), jnp.float32),
        grid=(1,),
        in_specs=[_full_spec(a) for a in args],
        out_specs=pl.BlockSpec((Q_PIX * Q_PIX * B, 16), lambda i: (0, 0)),
        scratch_shapes=[
            pltpu.VMEM((96, 112), jnp.bfloat16),    # a1_s  conv1 patches
            pltpu.VMEM((48, 192), jnp.bfloat16),    # y1_s  pool1 activations
            pltpu.VMEM((32, 768), jnp.bfloat16),    # a2_s  conv2 patches
            pltpu.VMEM((16, 128), jnp.float32),     # y2_s  pool2 activations
            pltpu.VMEM((B, 512), jnp.bfloat16),     # flat_s encoder flatten
            pltpu.VMEM((28, 70), jnp.bfloat16),     # h2_s  decoder (i,b) x (j,c)
            pltpu.VMEM((196, 32), jnp.bfloat16),    # t1_s  Tconv1 out, (j,i,b) rows
        ],
        compiler_params=pltpu.CompilerParams(
            dimension_semantics=("arbitrary",)),
    )(*args)

    # rows (j, i, b), cols (di1, dj1, di2, dj2) -> pixel (b, 4i+2di1+di2, 4j+2dj1+dj2)
    out = (out.reshape(Q_PIX, Q_PIX, B, 2, 2, 2, 2)
           .transpose(2, 1, 3, 5, 0, 4, 6)
           .reshape(B, PIXELS, PIXELS))
    return out[:, None, :, :]                                    # NCHW (B, 1, 28, 28)


# ================================ main =======================================

if __name__ == "__main__":
    key = jax.random.PRNGKey(0)
    pkey, xkey = jax.random.split(key)
    params = init_params(pkey)

    # batch=4 (BatchNorm training stats need > 1 sample); 28x28x1 input is fixed
    # by the architecture (fc1E expects 32*4*4 input features).
    x = jax.random.normal(xkey, (B, 1, PIXELS, PIXELS), jnp.float32)

    fwd = jax.jit(lambda xx: ae_forward(xx, params))
    out = jax.block_until_ready(fwd(x))

    assert out.shape == (B, 1, PIXELS, PIXELS), out.shape
    assert bool(jnp.all(jnp.isfinite(out)))
    assert bool(jnp.all((out >= 0.0) & (out <= 1.0)))   # final sigmoid range
    print("KERNEL_OK")
</pallas_src>

<mosaic_0001>
module attributes {stable_mosaic.version = 11 : i64} {
  func.func @_ae_fused_kernel(%arg0: i32, %arg1: memref<4x28x28xbf16, #tpu.memory_space<vmem>>, %arg2: memref<112x384xbf16, #tpu.memory_space<vmem>>, %arg3: memref<1x192xf32, #tpu.memory_space<vmem>>, %arg4: memref<768x256xbf16, #tpu.memory_space<vmem>>, %arg5: memref<1x128xf32, #tpu.memory_space<vmem>>, %arg6: memref<512x100xbf16, #tpu.memory_space<vmem>>, %arg7: memref<1x100xf32, #tpu.memory_space<vmem>>, %arg8: memref<1x100xf32, #tpu.memory_space<vmem>>, %arg9: memref<1x100xf32, #tpu.memory_space<vmem>>, %arg10: memref<100x490xbf16, #tpu.memory_space<vmem>>, %arg11: memref<1x490xf32, #tpu.memory_space<vmem>>, %arg12: memref<1x490xf32, #tpu.memory_space<vmem>>, %arg13: memref<1x490xf32, #tpu.memory_space<vmem>>, %arg14: memref<70x224xbf16, #tpu.memory_space<vmem>>, %arg15: memref<1x224xf32, #tpu.memory_space<vmem>>, %arg16: memref<1x8xf32, #tpu.memory_space<vmem>>, %arg17: memref<1x8xf32, #tpu.memory_space<vmem>>, %arg18: memref<224x8xf32, #tpu.memory_space<vmem>>, %arg19: memref<8x224xf32, #tpu.memory_space<vmem>>, %arg20: memref<32x256xbf16, #tpu.memory_space<vmem>>, %arg21: memref<1x256xf32, #tpu.memory_space<vmem>>, %arg22: memref<1x16xf32, #tpu.memory_space<vmem>>, %arg23: memref<1x16xf32, #tpu.memory_space<vmem>>, %arg24: memref<256x16xf32, #tpu.memory_space<vmem>>, %arg25: memref<16x256xf32, #tpu.memory_space<vmem>>, %arg26: memref<256x16xbf16, #tpu.memory_space<vmem>>, %arg27: memref<1x16xf32, #tpu.memory_space<vmem>>, %arg28: memref<196x16xf32, #tpu.memory_space<vmem>>, %arg29: memref<96x112xbf16, #tpu.memory_space<vmem>>, %arg30: memref<48x192xbf16, #tpu.memory_space<vmem>>, %arg31: memref<32x768xbf16, #tpu.memory_space<vmem>>, %arg32: memref<16x128xf32, #tpu.memory_space<vmem>>, %arg33: memref<4x512xbf16, #tpu.memory_space<vmem>>, %arg34: memref<28x70xbf16, #tpu.memory_space<vmem>>, %arg35: memref<196x32xbf16, #tpu.memory_space<vmem>>) attributes {dimension_semantics = [#tpu.dimension_semantics<arbitrary>], iteration_bounds = array<i64: 1>, scalar_prefetch = 0 : i64, scratch_operands = 7 : i64, tpu.core_type = #tpu.core_type<tc>, window_params = [{pipeline_mode = #tpu.pipeline_mode<synchronous>, transform_indices = @transform_0, window_bounds = array<i64: 4, 28, 28>}, {pipeline_mode = #tpu.pipeline_mode<synchronous>, transform_indices = @transform_1, window_bounds = array<i64: 112, 384>}, {pipeline_mode = #tpu.pipeline_mode<synchronous>, transform_indices = @transform_2, window_bounds = array<i64: 1, 192>}, {pipeline_mode = #tpu.pipeline_mode<synchronous>, transform_indices = @transform_3, window_bounds = array<i64: 768, 256>}, {pipeline_mode = #tpu.pipeline_mode<synchronous>, transform_indices = @transform_4, window_bounds = array<i64: 1, 128>}, {pipeline_mode = #tpu.pipeline_mode<synchronous>, transform_indices = @transform_5, window_bounds = array<i64: 512, 100>}, {pipeline_mode = #tpu.pipeline_mode<synchronous>, transform_indices = @transform_6, window_bounds = array<i64: 1, 100>}, {pipeline_mode = #tpu.pipeline_mode<synchronous>, transform_indices = @transform_7, window_bounds = array<i64: 1, 100>}, {pipeline_mode = #tpu.pipeline_mode<synchronous>, transform_indices = @transform_8, window_bounds = array<i64: 1, 100>}, {pipeline_mode = #tpu.pipeline_mode<synchronous>, transform_indices = @transform_9, window_bounds = array<i64: 100, 490>}, {pipeline_mode = #tpu.pipeline_mode<synchronous>, transform_indices = @transform_10, window_bounds = array<i64: 1, 490>}, {pipeline_mode = #tpu.pipeline_mode<synchronous>, transform_indices = @transform_11, window_bounds = array<i64: 1, 490>}, {pipeline_mode = #tpu.pipeline_mode<synchronous>, transform_indices = @transform_12, window_bounds = array<i64: 1, 490>}, {pipeline_mode = #tpu.pipeline_mode<synchronous>, transform_indices = @transform_13, window_bounds = array<i64: 70, 224>}, {pipeline_mode = #tpu.pipeline_mode<synchronous>, transform_indices = @transform_14, window_bounds = array<i64: 1, 224>}, {pipeline_mode = #tpu.pipeline_mode<synchronous>, transform_indices = @transform_15, window_bounds = array<i64: 1, 8>}, {pipeline_mode = #tpu.pipeline_mode<synchronous>, transform_indices = @transform_16, window_bounds = array<i64: 1, 8>}, {pipeline_mode = #tpu.pipeline_mode<synchronous>, transform_indices = @transform_17, window_bounds = array<i64: 224, 8>}, {pipeline_mode = #tpu.pipeline_mode<synchronous>, transform_indices = @transform_18, window_bounds = array<i64: 8, 224>}, {pipeline_mode = #tpu.pipeline_mode<synchronous>, transform_indices = @transform_19, window_bounds = array<i64: 32, 256>}, {pipeline_mode = #tpu.pipeline_mode<synchronous>, transform_indices = @transform_20, window_bounds = array<i64: 1, 256>}, {pipeline_mode = #tpu.pipeline_mode<synchronous>, transform_indices = @transform_21, window_bounds = array<i64: 1, 16>}, {pipeline_mode = #tpu.pipeline_mode<synchronous>, transform_indices = @transform_22, window_bounds = array<i64: 1, 16>}, {pipeline_mode = #tpu.pipeline_mode<synchronous>, transform_indices = @transform_23, window_bounds = array<i64: 256, 16>}, {pipeline_mode = #tpu.pipeline_mode<synchronous>, transform_indices = @transform_24, window_bounds = array<i64: 16, 256>}, {pipeline_mode = #tpu.pipeline_mode<synchronous>, transform_indices = @transform_25, window_bounds = array<i64: 256, 16>}, {pipeline_mode = #tpu.pipeline_mode<synchronous>, transform_indices = @transform_26, window_bounds = array<i64: 1, 16>}, {pipeline_mode = #tpu.pipeline_mode<synchronous>, transform_indices = @transform_27, window_bounds = array<i64: 196, 16>}]} {
    %c0 = arith.constant 0 : index
    %c0_0 = arith.constant 0 : index
    %c0_1 = arith.constant 0 : index
    %0 = vector.load %arg1[%c0, %c0_0, %c0_1] : memref<4x28x28xbf16, #tpu.memory_space<vmem>>, vector<1x24x28xbf16>
    %1 = vector.shape_cast %0 : vector<1x24x28xbf16> to vector<24x28xbf16>
    %c0_2 = arith.constant 0 : index
    %c0_3 = arith.constant 0 : index
    %2 = vector.load %arg29[%c0_2, %c0_3] : memref<96x112xbf16, #tpu.memory_space<vmem>>, vector<24x28xbf16>
    tpu.vector_store %arg29[%c0_2, %c0_3], %1 {strides = array<i32>} : memref<96x112xbf16, #tpu.memory_space<vmem>>, vector<24x28xbf16>,
    %c1 = arith.constant 1 : index
    %c0_4 = arith.constant 0 : index
    %c0_5 = arith.constant 0 : index
    %3 = vector.load %arg1[%c1, %c0_4, %c0_5] : memref<4x28x28xbf16, #tpu.memory_space<vmem>>, vector<1x24x28xbf16>
    %4 = vector.shape_cast %3 : vector<1x24x28xbf16> to vector<24x28xbf16>
    %c0_6 = arith.constant 0 : index
    %c28 = arith.constant 28 : index
    %5 = vector.load %arg29[%c0_6, %c28] : memref<96x112xbf16, #tpu.memory_space<vmem>>, vector<24x28xbf16>
    tpu.vector_store %arg29[%c0_6, %c28], %4 {strides = array<i32>} : memref<96x112xbf16, #tpu.memory_space<vmem>>, vector<24x28xbf16>,
    %c2 = arith.constant 2 : index
    %c0_7 = arith.constant 0 : index
    %c0_8 = arith.constant 0 : index
    %6 = vector.load %arg1[%c2, %c0_7, %c0_8] : memref<4x28x28xbf16, #tpu.memory_space<vmem>>, vector<1x24x28xbf16>
    %7 = vector.shape_cast %6 : vector<1x24x28xbf16> to vector<24x28xbf16>
    %c0_9 = arith.constant 0 : index
    %c56 = arith.constant 56 : index
    %8 = vector.load %arg29[%c0_9, %c56] : memref<96x112xbf16, #tpu.memory_space<vmem>>, vector<24x28xbf16>
    tpu.vector_store %arg29[%c0_9, %c56], %7 {strides = array<i32>} : memref<96x112xbf16, #tpu.memory_space<vmem>>, vector<24x28xbf16>,
    %c3 = arith.constant 3 : index
    %c0_10 = arith.constant 0 : index
    %c0_11 = arith.constant 0 : index
    %9 = vector.load %arg1[%c3, %c0_10, %c0_11] : memref<4x28x28xbf16, #tpu.memory_space<vmem>>, vector<1x24x28xbf16>
    %10 = vector.shape_cast %9 : vector<1x24x28xbf16> to vector<24x28xbf16>
    %c0_12 = arith.constant 0 : index
    %c84 = arith.constant 84 : index
    %11 = vector.load %arg29[%c0_12, %c84] : memref<96x112xbf16, #tpu.memory_space<vmem>>, vector<24x28xbf16>
    tpu.vector_store %arg29[%c0_12, %c84], %10 {strides = array<i32>} : memref<96x112xbf16, #tpu.memory_space<vmem>>, vector<24x28xbf16>,
    %c2_13 = arith.constant 2 : index
    %c0_14 = arith.constant 0 : index
    %c0_15 = arith.constant 0 : index
    %12 = vector.load %arg1[%c2_13, %c0_14, %c0_15] : memref<4x28x28xbf16, #tpu.memory_space<vmem>>, vector<1x24x28xbf16>
    %13 = vector.shape_cast %12 : vector<1x24x28xbf16> to vector<24x28xbf16>
    %c24 = arith.constant 24 : index
    %c0_16 = arith.constant 0 : index
    %14 = vector.load %arg29[%c24, %c0_16] : memref<96x112xbf16, #tpu.memory_space<vmem>>, vector<24x28xbf16>
    tpu.vector_store %arg29[%c24, %c0_16], %13 {strides = array<i32>} : memref<96x112xbf16, #tpu.memory_space<vmem>>, vector<24x28xbf16>,
    %c3_17 = arith.constant 3 : index
    %c0_18 = arith.constant 0 : index
    %c0_19 = arith.constant 0 : index
    %15 = vector.load %arg1[%c3_17, %c0_18, %c0_19] : memref<4x28x28xbf16, #tpu.memory_space<vmem>>, vector<1x24x28xbf16>
    %16 = vector.shape_cast %15 : vector<1x24x28xbf16> to vector<24x28xbf16>
    %c24_20 = arith.constant 24 : index
    %c28_21 = arith.constant 28 : index
    %17 = vector.load %arg29[%c24_20, %c28_21] : memref<96x112xbf16, #tpu.memory_space<vmem>>, vector<24x28xbf16>
    tpu.vector_store %arg29[%c24_20, %c28_21], %16 {strides = array<i32>} : memref<96x112xbf16, #tpu.memory_space<vmem>>, vector<24x28xbf16>,
    %c0_22 = arith.constant 0 : index
    %c4 = arith.constant 4 : index
    %c0_23 = arith.constant 0 : index
    %18 = vector.load %arg1[%c0_22, %c4, %c0_23] : memref<4x28x28xbf16, #tpu.memory_space<vmem>>, vector<1x24x28xbf16>
    %19 = vector.shape_cast %18 : vector<1x24x28xbf16> to vector<24x28xbf16>
    %c24_24 = arith.constant 24 : index
    %c56_25 = arith.constant 56 : index
    %20 = vector.load %arg29[%c24_24, %c56_25] : memref<96x112xbf16, #tpu.memory_space<vmem>>, vector<24x28xbf16>
    tpu.vector_store %arg29[%c24_24, %c56_25], %19 {strides = array<i32>} : memref<96x112xbf16, #tpu.memory_space<vmem>>, vector<24x28xbf16>,
    %c1_26 = arith.constant 1 : index
    %c4_27 = arith.constant 4 : index
    %c0_28 = arith.constant 0 : index
    %21 = vector.load %arg1[%c1_26, %c4_27, %c0_28] : memref<4x28x28xbf16, #tpu.memory_space<vmem>>, vector<1x24x28xbf16>
    %22 = vector.shape_cast %21 : vector<1x24x28xbf16> to vector<24x28xbf16>
    %c24_29 = arith.constant 24 : index
    %c84_30 = arith.constant 84 : index
    %23 = vector.load %arg29[%c24_29, %c84_30] : memref<96x112xbf16, #tpu.memory_space<vmem>>, vector<24x28xbf16>
    tpu.vector_store %arg29[%c24_29, %c84_30], %22 {strides = array<i32>} : memref<96x112xbf16, #tpu.memory_space<vmem>>, vector<24x28xbf16>,
    %c1_31 = arith.constant 1 : index
    %c0_32 = arith.constant 0 : index
    %c0_33 = arith.constant 0 : index
    %24 = vector.load %arg1[%c1_31, %c0_32, %c0_33] : memref<4x28x28xbf16, #tpu.memory_space<vmem>>, vector<1x24x28xbf16>
    %25 = vector.shape_cast %24 : vector<1x24x28xbf16> to vector<24x28xbf16>
    %c48 = arith.constant 48 : index
    %c0_34 = arith.constant 0 : index
    %26 = vector.load %arg29[%c48, %c0_34] : memref<96x112xbf16, #tpu.memory_space<vmem>>, vector<24x28xbf16>
    tpu.vector_store %arg29[%c48, %c0_34], %25 {strides = array<i32>} : memref<96x112xbf16, #tpu.memory_space<vmem>>, vector<24x28xbf16>,
    %c2_35 = arith.constant 2 : index
    %c0_36 = arith.constant 0 : index
    %c0_37 = arith.constant 0 : index
    %27 = vector.load %arg1[%c2_35, %c0_36, %c0_37] : memref<4x28x28xbf16, #tpu.memory_space<vmem>>, vector<1x24x28xbf16>
    %28 = vector.shape_cast %27 : vector<1x24x28xbf16> to vector<24x28xbf16>
    %c48_38 = arith.constant 48 : index
    %c28_39 = arith.constant 28 : index
    %29 = vector.load %arg29[%c48_38, %c28_39] : memref<96x112xbf16, #tpu.memory_space<vmem>>, vector<24x28xbf16>
    tpu.vector_store %arg29[%c48_38, %c28_39], %28 {strides = array<i32>} : memref<96x112xbf16, #tpu.memory_space<vmem>>, vector<24x28xbf16>,
    %c3_40 = arith.constant 3 : index
    %c0_41 = arith.constant 0 : index
    %c0_42 = arith.constant 0 : index
    %30 = vector.load %arg1[%c3_40, %c0_41, %c0_42] : memref<4x28x28xbf16, #tpu.memory_space<vmem>>, vector<1x24x28xbf16>
    %31 = vector.shape_cast %30 : vector<1x24x28xbf16> to vector<24x28xbf16>
    %c48_43 = arith.constant 48 : index
    %c56_44 = arith.constant 56 : index
    %32 = vector.load %arg29[%c48_43, %c56_44] : memref<96x112xbf16, #tpu.memory_space<vmem>>, vector<24x28xbf16>
    tpu.vector_store %arg29[%c48_43, %c56_44], %31 {strides = array<i32>} : memref<96x112xbf16, #tpu.memory_space<vmem>>, vector<24x28xbf16>,
    %c0_45 = arith.constant 0 : index
    %c4_46 = arith.constant 4 : index
    %c0_47 = arith.constant 0 : index
    %33 = vector.load %arg1[%c0_45, %c4_46, %c0_47] : memref<4x28x28xbf16, #tpu.memory_space<vmem>>, vector<1x24x28xbf16>
    %34 = vector.shape_cast %33 : vector<1x24x28xbf16> to vector<24x28xbf16>
    %c48_48 = arith.constant 48 : index
    %c84_49 = arith.constant 84 : index
    %35 = vector.load %arg29[%c48_48, %c84_49] : memref<96x112xbf16, #tpu.memory_space<vmem>>, vector<24x28xbf16>
    tpu.vector_store %arg29[%c48_48, %c84_49], %34 {strides = array<i32>} : memref<96x112xbf16, #tpu.memory_space<vmem>>, vector<24x28xbf16>,
    %c3_50 = arith.constant 3 : index
    %c0_51 = arith.constant 0 : index
    %c0_52 = arith.constant 0 : index
    %36 = vector.load %arg1[%c3_50, %c0_51, %c0_52] : memref<4x28x28xbf16, #tpu.memory_space<vmem>>, vector<1x24x28xbf16>
    %37 = vector.shape_cast %36 : vector<1x24x28xbf16> to vector<24x28xbf16>
    %c72 = arith.constant 72 : index
    %c0_53 = arith.constant 0 : index
    %38 = vector.load %arg29[%c72, %c0_53] : memref<96x112xbf16, #tpu.memory_space<vmem>>, vector<24x28xbf16>
    tpu.vector_store %arg29[%c72, %c0_53], %37 {strides = array<i32>} : memref<96x112xbf16, #tpu.memory_space<vmem>>, vector<24x28xbf16>,
    %c0_54 = arith.constant 0 : index
    %c4_55 = arith.constant 4 : index
    %c0_56 = arith.constant 0 : index
    %39 = vector.load %arg1[%c0_54, %c4_55, %c0_56] : memref<4x28x28xbf16, #tpu.memory_space<vmem>>, vector<1x24x28xbf16>
    %40 = vector.shape_cast %39 : vector<1x24x28xbf16> to vector<24x28xbf16>
    %c72_57 = arith.constant 72 : index
    %c28_58 = arith.constant 28 : index
    %41 = vector.load %arg29[%c72_57, %c28_58] : memref<96x112xbf16, #tpu.memory_space<vmem>>, vector<24x28xbf16>
    tpu.vector_store %arg29[%c72_57, %c28_58], %40 {strides = array<i32>} : memref<96x112xbf16, #tpu.memory_space<vmem>>, vector<24x28xbf16>,
    %c1_59 = arith.constant 1 : index
    %c4_60 = arith.constant 4 : index
    %c0_61 = arith.constant 0 : index
    %42 = vector.load %arg1[%c1_59, %c4_60, %c0_61] : memref<4x28x28xbf16, #tpu.memory_space<vmem>>, vector<1x24x28xbf16>
    %43 = vector.shape_cast %42 : vector<1x24x28xbf16> to vector<24x28xbf16>
    %c72_62 = arith.constant 72 : index
    %c56_63 = arith.constant 56 : index
    %44 = vector.load %arg29[%c72_62, %c56_63] : memref<96x112xbf16, #tpu.memory_space<vmem>>, vector<24x28xbf16>
    tpu.vector_store %arg29[%c72_62, %c56_63], %43 {strides = array<i32>} : memref<96x112xbf16, #tpu.memory_space<vmem>>, vector<24x28xbf16>,
    %c2_64 = arith.constant 2 : index
    %c4_65 = arith.constant 4 : index
    %c0_66 = arith.constant 0 : index
    %45 = vector.load %arg1[%c2_64, %c4_65, %c0_66] : memref<4x28x28xbf16, #tpu.memory_space<vmem>>, vector<1x24x28xbf16>
    %46 = vector.shape_cast %45 : vector<1x24x28xbf16> to vector<24x28xbf16>
    %c72_67 = arith.constant 72 : index
    %c84_68 = arith.constant 84 : index
    %47 = vector.load %arg29[%c72_67, %c84_68] : memref<96x112xbf16, #tpu.memory_space<vmem>>, vector<24x28xbf16>
    tpu.vector_store %arg29[%c72_67, %c84_68], %46 {strides = array<i32>} : memref<96x112xbf16, #tpu.memory_space<vmem>>, vector<24x28xbf16>,
    %c0_69 = arith.constant 0 : index
    %c0_70 = arith.constant 0 : index
    %48 = vector.load %arg29[%c0_69, %c0_70] : memref<96x112xbf16, #tpu.memory_space<vmem>>, vector<96x112xbf16>
    %c0_71 = arith.constant 0 : index
    %c0_72 = arith.constant 0 : index
    %49 = vector.load %arg2[%c0_71, %c0_72] : memref<112x384xbf16, #tpu.memory_space<vmem>>, vector<112x384xbf16>
    %cst = arith.constant dense<0.000000e+00> : vector<96x384xf32>
    %50 = tpu.matmul %48, %49, %cst {dimension_numbers = #tpu.dot_dimension_numbers<[1], [0], [0], [1], [0, 0, 1, 1], [], []>} : vector<96x112xbf16>, vector<112x384xbf16>, vector<96x384xf32> -> vector<96x384xf32>
    %51 = vector.extract_strided_slice %50 {offsets = [0, 0], sizes = [48, 192], strides = [1, 1]} : vector<96x384xf32> to vector<48x192xf32>
    %52 = vector.extract_strided_slice %50 {offsets = [0, 192], sizes = [48, 192], strides = [1, 1]} : vector<96x384xf32> to vector<48x192xf32>
    %53 = arith.maximumf %51, %52 : vector<48x192xf32>
    %54 = vector.extract_strided_slice %50 {offsets = [48, 0], sizes = [48, 192], strides = [1, 1]} : vector<96x384xf32> to vector<48x192xf32>
    %55 = vector.extract_strided_slice %50 {offsets = [48, 192], sizes = [48, 192], strides = [1, 1]} : vector<96x384xf32> to vector<48x192xf32>
    %56 = arith.maximumf %54, %55 : vector<48x192xf32>
    %57 = arith.maximumf %53, %56 : vector<48x192xf32>
    %c0_73 = arith.constant 0 : index
    %c0_74 = arith.constant 0 : index
    %58 = vector.load %arg3[%c0_73, %c0_74] : memref<1x192xf32, #tpu.memory_space<vmem>>, vector<1x192xf32>
    %59 = vector.broadcast %58 : vector<1x192xf32> to vector<48x192xf32>
    %60 = arith.addf %57, %59 : vector<48x192xf32>
    %cst_75 = arith.constant 0.000000e+00 : f32
    %61 = vector.broadcast %cst_75 : f32 to vector<48x192xf32>
    %62 = arith.maximumf %60, %61 : vector<48x192xf32>
    %63 = arith.truncf %62 : vector<48x192xf32> to vector<48x192xbf16>
    %c0_76 = arith.constant 0 : index
    %c0_77 = arith.constant 0 : index
    %64 = vector.load %arg30[%c0_76, %c0_77] : memref<48x192xbf16, #tpu.memory_space<vmem>>, vector<48x192xbf16>
    tpu.vector_store %arg30[%c0_76, %c0_77], %63 {strides = array<i32>} : memref<48x192xbf16, #tpu.memory_space<vmem>>, vector<48x192xbf16>,
    %c0_78 = arith.constant 0 : index
    %c0_79 = arith.constant 0 : index
    %65 = vector.load %arg30[%c0_78, %c0_79] : memref<48x192xbf16, #tpu.memory_space<vmem>>, vector<16x192xbf16>
    %c0_80 = arith.constant 0 : index
    %c0_81 = arith.constant 0 : index
    %66 = vector.load %arg31[%c0_80, %c0_81] : memref<32x768xbf16, #tpu.memory_space<vmem>>, vector<16x192xbf16>
    tpu.vector_store %arg31[%c0_80, %c0_81], %65 {strides = array<i32>} : memref<32x768xbf16, #tpu.memory_space<vmem>>, vector<16x192xbf16>,
    %c24_82 = arith.constant 24 : index
    %c0_83 = arith.constant 0 : index
    %67 = vector.load %arg30[%c24_82, %c0_83] : memref<48x192xbf16, #tpu.memory_space<vmem>>, vector<16x192xbf16>
    %c0_84 = arith.constant 0 : index
    %c192 = arith.constant 192 : index
    %68 = vector.load %arg31[%c0_84, %c192] : memref<32x768xbf16, #tpu.memory_space<vmem>>, vector<16x192xbf16>
    tpu.vector_store %arg31[%c0_84, %c192], %67 {strides = array<i32>} : memref<32x768xbf16, #tpu.memory_space<vmem>>, vector<16x192xbf16>,
    %c4_85 = arith.constant 4 : index
    %c0_86 = arith.constant 0 : index
    %69 = vector.load %arg30[%c4_85, %c0_86] : memref<48x192xbf16, #tpu.memory_space<vmem>>, vector<16x192xbf16>
    %c0_87 = arith.constant 0 : index
    %c384 = arith.constant 384 : index
    %70 = vector.load %arg31[%c0_87, %c384] : memref<32x768xbf16, #tpu.memory_space<vmem>>, vector<16x192xbf16>
    tpu.vector_store %arg31[%c0_87, %c384], %69 {strides = array<i32>} : memref<32x768xbf16, #tpu.memory_space<vmem>>, vector<16x192xbf16>,
    %c28_88 = arith.constant 28 : index
    %c0_89 = arith.constant 0 : index
    %71 = vector.load %arg30[%c28_88, %c0_89] : memref<48x192xbf16, #tpu.memory_space<vmem>>, vector<16x192xbf16>
    %c0_90 = arith.constant 0 : index
    %c576 = arith.constant 576 : index
    %72 = vector.load %arg31[%c0_90, %c576] : memref<32x768xbf16, #tpu.memory_space<vmem>>, vector<16x192xbf16>
    tpu.vector_store %arg31[%c0_90, %c576], %71 {strides = array<i32>} : memref<32x768xbf16, #tpu.memory_space<vmem>>, vector<16x192xbf16>,
    %c24_91 = arith.constant 24 : index
    %c0_92 = arith.constant 0 : index
    %73 = vector.load %arg30[%c24_91, %c0_92] : memref<48x192xbf16, #tpu.memory_space<vmem>>, vector<16x192xbf16>
    %c16 = arith.constant 16 : index
    %c0_93 = arith.constant 0 : index
    %74 = vector.load %arg31[%c16, %c0_93] : memref<32x768xbf16, #tpu.memory_space<vmem>>, vector<16x192xbf16>
    tpu.vector_store %arg31[%c16, %c0_93], %73 {strides = array<i32>} : memref<32x768xbf16, #tpu.memory_space<vmem>>, vector<16x192xbf16>,
    %c4_94 = arith.constant 4 : index
    %c0_95 = arith.constant 0 : index
    %75 = vector.load %arg30[%c4_94, %c0_95] : memref<48x192xbf16, #tpu.memory_space<vmem>>, vector<16x192xbf16>
    %c16_96 = arith.constant 16 : index
    %c192_97 = arith.constant 192 : index
    %76 = vector.load %arg31[%c16_96, %c192_97] : memref<32x768xbf16, #tpu.memory_space<vmem>>, vector<16x192xbf16>
    tpu.vector_store %arg31[%c16_96, %c192_97], %75 {strides = array<i32>} : memref<32x768xbf16, #tpu.memory_space<vmem>>, vector<16x192xbf16>,
    %c28_98 = arith.constant 28 : index
    %c0_99 = arith.constant 0 : index
    %77 = vector.load %arg30[%c28_98, %c0_99] : memref<48x192xbf16, #tpu.memory_space<vmem>>, vector<16x192xbf16>
    %c16_100 = arith.constant 16 : index
    %c384_101 = arith.constant 384 : index
    %78 = vector.load %arg31[%c16_100, %c384_101] : memref<32x768xbf16, #tpu.memory_space<vmem>>, vector<16x192xbf16>
    tpu.vector_store %arg31[%c16_100, %c384_101], %77 {strides = array<i32>} : memref<32x768xbf16, #tpu.memory_space<vmem>>, vector<16x192xbf16>,
    %c8 = arith.constant 8 : index
    %c0_102 = arith.constant 0 : index
    %79 = vector.load %arg30[%c8, %c0_102] : memref<48x192xbf16, #tpu.memory_space<vmem>>, vector<16x192xbf16>
    %c16_103 = arith.constant 16 : index
    %c576_104 = arith.constant 576 : index
    %80 = vector.load %arg31[%c16_103, %c576_104] : memref<32x768xbf16, #tpu.memory_space<vmem>>, vector<16x192xbf16>
    tpu.vector_store %arg31[%c16_103, %c576_104], %79 {strides = array<i32>} : memref<32x768xbf16, #tpu.memory_space<vmem>>, vector<16x192xbf16>,
    %c0_105 = arith.constant 0 : index
    %c0_106 = arith.constant 0 : index
    %81 = vector.load %arg31[%c0_105, %c0_106] : memref<32x768xbf16, #tpu.memory_space<vmem>>, vector<32x768xbf16>
    %c0_107 = arith.constant 0 : index
    %c0_108 = arith.constant 0 : index
    %82 = vector.load %arg4[%c0_107, %c0_108] : memref<768x256xbf16, #tpu.memory_space<vmem>>, vector<768x256xbf16>
    %cst_109 = arith.constant dense<0.000000e+00> : vector<32x256xf32>
    %83 = tpu.matmul %81, %82, %cst_109 {dimension_numbers = #tpu.dot_dimension_numbers<[1], [0], [0], [1], [0, 0, 1, 1], [], []>} : vector<32x768xbf16>, vector<768x256xbf16>, vector<32x256xf32> -> vector<32x256xf32>
    %84 = vector.extract_strided_slice %83 {offsets = [0, 0], sizes = [16, 128], strides = [1, 1]} : vector<32x256xf32> to vector<16x128xf32>
    %85 = vector.extract_strided_slice %83 {offsets = [0, 128], sizes = [16, 128], strides = [1, 1]} : vector<32x256xf32> to vector<16x128xf32>
    %86 = arith.maximumf %84, %85 : vector<16x128xf32>
    %87 = vector.extract_strided_slice %83 {offsets = [16, 0], sizes = [16, 128], strides = [1, 1]} : vector<32x256xf32> to vector<16x128xf32>
    %88 = vector.extract_strided_slice %83 {offsets = [16, 128], sizes = [16, 128], strides = [1, 1]} : vector<32x256xf32> to vector<16x128xf32>
    %89 = arith.maximumf %87, %88 : vector<16x128xf32>
    %90 = arith.maximumf %86, %89 : vector<16x128xf32>
    %c0_110 = arith.constant 0 : index
    %c0_111 = arith.constant 0 : index
    %91 = vector.load %arg5[%c0_110, %c0_111] : memref<1x128xf32, #tpu.memory_space<vmem>>, vector<1x128xf32>
    %92 = vector.broadcast %91 : vector<1x128xf32> to vector<16x128xf32>
    %93 = arith.addf %90, %92 : vector<16x128xf32>
    %cst_112 = arith.constant 0.000000e+00 : f32
    %94 = vector.broadcast %cst_112 : f32 to vector<16x128xf32>
    %95 = arith.maximumf %93, %94 : vector<16x128xf32>
    %c0_113 = arith.constant 0 : index
    %c0_114 = arith.constant 0 : index
    %96 = vector.load %arg32[%c0_113, %c0_114] : memref<16x128xf32, #tpu.memory_space<vmem>>, vector<16x128xf32>
    tpu.vector_store %arg32[%c0_113, %c0_114], %95 {strides = array<i32>} : memref<16x128xf32, #tpu.memory_space<vmem>>, vector<16x128xf32>,
    %c0_115 = arith.constant 0 : index
    %c0_116 = arith.constant 0 : index
    %97 = vector.load %arg32[%c0_115, %c0_116] : memref<16x128xf32, #tpu.memory_space<vmem>>, vector<4x128xf32>
    %98 = arith.truncf %97 : vector<4x128xf32> to vector<4x128xbf16>
    %c0_117 = arith.constant 0 : index
    %c0_118 = arith.constant 0 : index
    %99 = vector.load %arg33[%c0_117, %c0_118] : memref<4x512xbf16, #tpu.memory_space<vmem>>, vector<4x128xbf16>
    tpu.vector_store %arg33[%c0_117, %c0_118], %98 {strides = array<i32>} : memref<4x512xbf16, #tpu.memory_space<vmem>>, vector<4x128xbf16>,
    %c4_119 = arith.constant 4 : index
    %c0_120 = arith.constant 0 : index
    %100 = vector.load %arg32[%c4_119, %c0_120] : memref<16x128xf32, #tpu.memory_space<vmem>>, vector<4x128xf32>
    %101 = arith.truncf %100 : vector<4x128xf32> to vector<4x128xbf16>
    %c0_121 = arith.constant 0 : index
    %c128 = arith.constant 128 : index
    %102 = vector.load %arg33[%c0_121, %c128] : memref<4x512xbf16, #tpu.memory_space<vmem>>, vector<4x128xbf16>
    tpu.vector_store %arg33[%c0_121, %c128], %101 {strides = array<i32>} : memref<4x512xbf16, #tpu.memory_space<vmem>>, vector<4x128xbf16>,
    %c8_122 = arith.constant 8 : index
    %c0_123 = arith.constant 0 : index
    %103 = vector.load %arg32[%c8_122, %c0_123] : memref<16x128xf32, #tpu.memory_space<vmem>>, vector<4x128xf32>
    %104 = arith.truncf %103 : vector<4x128xf32> to vector<4x128xbf16>
    %c0_124 = arith.constant 0 : index
    %c256 = arith.constant 256 : index
    %105 = vector.load %arg33[%c0_124, %c256] : memref<4x512xbf16, #tpu.memory_space<vmem>>, vector<4x128xbf16>
    tpu.vector_store %arg33[%c0_124, %c256], %104 {strides = array<i32>} : memref<4x512xbf16, #tpu.memory_space<vmem>>, vector<4x128xbf16>,
    %c12 = arith.constant 12 : index
    %c0_125 = arith.constant 0 : index
    %106 = vector.load %arg32[%c12, %c0_125] : memref<16x128xf32, #tpu.memory_space<vmem>>, vector<4x128xf32>
    %107 = arith.truncf %106 : vector<4x128xf32> to vector<4x128xbf16>
    %c0_126 = arith.constant 0 : index
    %c384_127 = arith.constant 384 : index
    %108 = vector.load %arg33[%c0_126, %c384_127] : memref<4x512xbf16, #tpu.memory_space<vmem>>, vector<4x128xbf16>
    tpu.vector_store %arg33[%c0_126, %c384_127], %107 {strides = array<i32>} : memref<4x512xbf16, #tpu.memory_space<vmem>>, vector<4x128xbf16>,
    %c0_128 = arith.constant 0 : index
    %c0_129 = arith.constant 0 : index
    %109 = vector.load %arg33[%c0_128, %c0_129] : memref<4x512xbf16, #tpu.memory_space<vmem>>, vector<4x512xbf16>
    %c0_130 = arith.constant 0 : index
    %c0_131 = arith.constant 0 : index
    %110 = vector.load %arg6[%c0_130, %c0_131] : memref<512x100xbf16, #tpu.memory_space<vmem>>, vector<512x100xbf16>
    %cst_132 = arith.constant dense<0.000000e+00> : vector<4x100xf32>
    %111 = tpu.matmul %109, %110, %cst_132 {dimension_numbers = #tpu.dot_dimension_numbers<[1], [0], [0], [1], [0, 0, 1, 1], [], []>} : vector<4x512xbf16>, vector<512x100xbf16>, vector<4x100xf32> -> vector<4x100xf32>
    %c0_133 = arith.constant 0 : index
    %c0_134 = arith.constant 0 : index
    %112 = vector.load %arg7[%c0_133, %c0_134] : memref<1x100xf32, #tpu.memory_space<vmem>>, vector<1x100xf32>
    %113 = vector.broadcast %112 : vector<1x100xf32> to vector<4x100xf32>
    %114 = arith.addf %111, %113 : vector<4x100xf32>
    %cst_135 = arith.constant dense<0.000000e+00> : vector<100xf32>
    %115 = vector.multi_reduction <add>, %114, %cst_135 [0] : vector<4x100xf32> to vector<100xf32>
    %116 = vector.shape_cast %115 : vector<100xf32> to vector<1x100xf32>
    %cst_136 = arith.constant 4.000000e+00 : f32
    %117 = vector.broadcast %cst_136 : f32 to vector<1x100xf32>
    %118 = arith.divf %116, %117 : vector<1x100xf32>
    %119 = vector.broadcast %118 : vector<1x100xf32> to vector<4x100xf32>
    %120 = arith.subf %114, %119 : vector<4x100xf32>
    %121 = arith.mulf %120, %120 : vector<4x100xf32>
    %cst_137 = arith.constant dense<0.000000e+00> : vector<100xf32>
    %122 = vector.multi_reduction <add>, %121, %cst_137 [0] : vector<4x100xf32> to vector<100xf32>
    %123 = vector.shape_cast %122 : vector<100xf32> to vector<1x100xf32>
    %cst_138 = arith.constant 4.000000e+00 : f32
    %124 = vector.broadcast %cst_138 : f32 to vector<1x100xf32>
    %125 = arith.divf %123, %124 : vector<1x100xf32>
    %126 = vector.broadcast %118 : vector<1x100xf32> to vector<4x100xf32>
    %127 = arith.subf %114, %126 : vector<4x100xf32>
    %cst_139 = arith.constant 9.99999974E-6 : f32
    %128 = vector.broadcast %cst_139 : f32 to vector<1x100xf32>
    %129 = arith.addf %125, %128 : vector<1x100xf32>
    %130 = math.rsqrt %129 : vector<1x100xf32>
    %131 = vector.broadcast %130 : vector<1x100xf32> to vector<4x100xf32>
    %132 = arith.mulf %127, %131 : vector<4x100xf32>
    %c0_140 = arith.constant 0 : index
    %c0_141 = arith.constant 0 : index
    %133 = vector.load %arg8[%c0_140, %c0_141] : memref<1x100xf32, #tpu.memory_space<vmem>>, vector<1x100xf32>
    %134 = vector.broadcast %133 : vector<1x100xf32> to vector<4x100xf32>
    %135 = arith.mulf %132, %134 : vector<4x100xf32>
    %c0_142 = arith.constant 0 : index
    %c0_143 = arith.constant 0 : index
    %136 = vector.load %arg9[%c0_142, %c0_143] : memref<1x100xf32, #tpu.memory_space<vmem>>, vector<1x100xf32>
    %137 = vector.broadcast %136 : vector<1x100xf32> to vector<4x100xf32>
    %138 = arith.addf %135, %137 : vector<4x100xf32>
    %cst_144 = arith.constant 0.000000e+00 : f32
    %139 = vector.broadcast %cst_144 : f32 to vector<4x100xf32>
    %140 = arith.maximumf %138, %139 : vector<4x100xf32>
    %141 = arith.truncf %140 : vector<4x100xf32> to vector<4x100xbf16>
    %c0_145 = arith.constant 0 : index
    %c0_146 = arith.constant 0 : index
    %142 = vector.load %arg10[%c0_145, %c0_146] : memref<100x490xbf16, #tpu.memory_space<vmem>>, vector<100x490xbf16>
    %cst_147 = arith.constant dense<0.000000e+00> : vector<4x490xf32>
    %143 = tpu.matmul %141, %142, %cst_147 {dimension_numbers = #tpu.dot_dimension_numbers<[1], [0], [0], [1], [0, 0, 1, 1], [], []>} : vector<4x100xbf16>, vector<100x490xbf16>, vector<4x490xf32> -> vector<4x490xf32>
    %c0_148 = arith.constant 0 : index
    %c0_149 = arith.constant 0 : index
    %144 = vector.load %arg11[%c0_148, %c0_149] : memref<1x490xf32, #tpu.memory_space<vmem>>, vector<1x490xf32>
    %145 = vector.broadcast %144 : vector<1x490xf32> to vector<4x490xf32>
    %146 = arith.addf %143, %145 : vector<4x490xf32>
    %cst_150 = arith.constant dense<0.000000e+00> : vector<490xf32>
    %147 = vector.multi_reduction <add>, %146, %cst_150 [0] : vector<4x490xf32> to vector<490xf32>
    %148 = vector.shape_cast %147 : vector<490xf32> to vector<1x490xf32>
    %cst_151 = arith.constant 4.000000e+00 : f32
    %149 = vector.broadcast %cst_151 : f32 to vector<1x490xf32>
    %150 = arith.divf %148, %149 : vector<1x490xf32>
    %151 = vector.broadcast %150 : vector<1x490xf32> to vector<4x490xf32>
    %152 = arith.subf %146, %151 : vector<4x490xf32>
    %153 = arith.mulf %152, %152 : vector<4x490xf32>
    %cst_152 = arith.constant dense<0.000000e+00> : vector<490xf32>
    %154 = vector.multi_reduction <add>, %153, %cst_152 [0] : vector<4x490xf32> to vector<490xf32>
    %155 = vector.shape_cast %154 : vector<490xf32> to vector<1x490xf32>
    %cst_153 = arith.constant 4.000000e+00 : f32
    %156 = vector.broadcast %cst_153 : f32 to vector<1x490xf32>
    %157 = arith.divf %155, %156 : vector<1x490xf32>
    %158 = vector.broadcast %150 : vector<1x490xf32> to vector<4x490xf32>
    %159 = arith.subf %146, %158 : vector<4x490xf32>
    %cst_154 = arith.constant 9.99999974E-6 : f32
    %160 = vector.broadcast %cst_154 : f32 to vector<1x490xf32>
    %161 = arith.addf %157, %160 : vector<1x490xf32>
    %162 = math.rsqrt %161 : vector<1x490xf32>
    %163 = vector.broadcast %162 : vector<1x490xf32> to vector<4x490xf32>
    %164 = arith.mulf %159, %163 : vector<4x490xf32>
    %c0_155 = arith.constant 0 : index
    %c0_156 = arith.constant 0 : index
    %165 = vector.load %arg12[%c0_155, %c0_156] : memref<1x490xf32, #tpu.memory_space<vmem>>, vector<1x490xf32>
    %166 = vector.broadcast %165 : vector<1x490xf32> to vector<4x490xf32>
    %167 = arith.mulf %164, %166 : vector<4x490xf32>
    %c0_157 = arith.constant 0 : index
    %c0_158 = arith.constant 0 : index
    %168 = vector.load %arg13[%c0_157, %c0_158] : memref<1x490xf32, #tpu.memory_space<vmem>>, vector<1x490xf32>
    %169 = vector.broadcast %168 : vector<1x490xf32> to vector<4x490xf32>
    %170 = arith.addf %167, %169 : vector<4x490xf32>
    %cst_159 = arith.constant 0.000000e+00 : f32
    %171 = vector.broadcast %cst_159 : f32 to vector<4x490xf32>
    %172 = arith.maximumf %170, %171 : vector<4x490xf32>
    %173 = vector.extract_strided_slice %172 {offsets = [0, 0], sizes = [4, 70], strides = [1, 1]} : vector<4x490xf32> to vector<4x70xf32>
    %174 = arith.truncf %173 : vector<4x70xf32> to vector<4x70xbf16>
    %c0_160 = arith.constant 0 : index
    %c0_161 = arith.constant 0 : index
    %175 = vector.load %arg34[%c0_160, %c0_161] : memref<28x70xbf16, #tpu.memory_space<vmem>>, vector<4x70xbf16>
    tpu.vector_store %arg34[%c0_160, %c0_161], %174 {strides = array<i32>} : memref<28x70xbf16, #tpu.memory_space<vmem>>, vector<4x70xbf16>,
    %176 = vector.extract_strided_slice %172 {offsets = [0, 70], sizes = [4, 70], strides = [1, 1]} : vector<4x490xf32> to vector<4x70xf32>
    %177 = arith.truncf %176 : vector<4x70xf32> to vector<4x70xbf16>
    %c4_162 = arith.constant 4 : index
    %c0_163 = arith.constant 0 : index
    %178 = vector.load %arg34[%c4_162, %c0_163] : memref<28x70xbf16, #tpu.memory_space<vmem>>, vector<4x70xbf16>
    tpu.vector_store %arg34[%c4_162, %c0_163], %177 {strides = array<i32>} : memref<28x70xbf16, #tpu.memory_space<vmem>>, vector<4x70xbf16>,
    %179 = vector.extract_strided_slice %172 {offsets = [0, 140], sizes = [4, 70], strides = [1, 1]} : vector<4x490xf32> to vector<4x70xf32>
    %180 = arith.truncf %179 : vector<4x70xf32> to vector<4x70xbf16>
    %c8_164 = arith.constant 8 : index
    %c0_165 = arith.constant 0 : index
    %181 = vector.load %arg34[%c8_164, %c0_165] : memref<28x70xbf16, #tpu.memory_space<vmem>>, vector<4x70xbf16>
    tpu.vector_store %arg34[%c8_164, %c0_165], %180 {strides = array<i32>} : memref<28x70xbf16, #tpu.memory_space<vmem>>, vector<4x70xbf16>,
    %182 = vector.extract_strided_slice %172 {offsets = [0, 210], sizes = [4, 70], strides = [1, 1]} : vector<4x490xf32> to vector<4x70xf32>
    %183 = arith.truncf %182 : vector<4x70xf32> to vector<4x70xbf16>
    %c12_166 = arith.constant 12 : index
    %c0_167 = arith.constant 0 : index
    %184 = vector.load %arg34[%c12_166, %c0_167] : memref<28x70xbf16, #tpu.memory_space<vmem>>, vector<4x70xbf16>
    tpu.vector_store %arg34[%c12_166, %c0_167], %183 {strides = array<i32>} : memref<28x70xbf16, #tpu.memory_space<vmem>>, vector<4x70xbf16>,
    %185 = vector.extract_strided_slice %172 {offsets = [0, 280], sizes = [4, 70], strides = [1, 1]} : vector<4x490xf32> to vector<4x70xf32>
    %186 = arith.truncf %185 : vector<4x70xf32> to vector<4x70xbf16>
    %c16_168 = arith.constant 16 : index
    %c0_169 = arith.constant 0 : index
    %187 = vector.load %arg34[%c16_168, %c0_169] : memref<28x70xbf16, #tpu.memory_space<vmem>>, vector<4x70xbf16>
    tpu.vector_store %arg34[%c16_168, %c0_169], %186 {strides = array<i32>} : memref<28x70xbf16, #tpu.memory_space<vmem>>, vector<4x70xbf16>,
    %188 = vector.extract_strided_slice %172 {offsets = [0, 350], sizes = [4, 70], strides = [1, 1]} : vector<4x490xf32> to vector<4x70xf32>
    %189 = arith.truncf %188 : vector<4x70xf32> to vector<4x70xbf16>
    %c20 = arith.constant 20 : index
    %c0_170 = arith.constant 0 : index
    %190 = vector.load %arg34[%c20, %c0_170] : memref<28x70xbf16, #tpu.memory_space<vmem>>, vector<4x70xbf16>
    tpu.vector_store %arg34[%c20, %c0_170], %189 {strides = array<i32>} : memref<28x70xbf16, #tpu.memory_space<vmem>>, vector<4x70xbf16>,
    %191 = vector.extract_strided_slice %172 {offsets = [0, 420], sizes = [4, 70], strides = [1, 1]} : vector<4x490xf32> to vector<4x70xf32>
    %192 = arith.truncf %191 : vector<4x70xf32> to vector<4x70xbf16>
    %c24_171 = arith.constant 24 : index
    %c0_172 = arith.constant 0 : index
    %193 = vector.load %arg34[%c24_171, %c0_172] : memref<28x70xbf16, #tpu.memory_space<vmem>>, vector<4x70xbf16>
    tpu.vector_store %arg34[%c24_171, %c0_172], %192 {strides = array<i32>} : memref<28x70xbf16, #tpu.memory_space<vmem>>, vector<4x70xbf16>,
    %c0_173 = arith.constant 0 : index
    %c0_174 = arith.constant 0 : index
    %194 = vector.load %arg34[%c0_173, %c0_174] : memref<28x70xbf16, #tpu.memory_space<vmem>>, vector<28x70xbf16>
    %c0_175 = arith.constant 0 : index
    %c0_176 = arith.constant 0 : index
    %195 = vector.load %arg14[%c0_175, %c0_176] : memref<70x224xbf16, #tpu.memory_space<vmem>>, vector<70x224xbf16>
    %cst_177 = arith.constant dense<0.000000e+00> : vector<28x224xf32>
    %196 = tpu.matmul %194, %195, %cst_177 {dimension_numbers = #tpu.dot_dimension_numbers<[1], [0], [0], [1], [0, 0, 1, 1], [], []>} : vector<28x70xbf16>, vector<70x224xbf16>, vector<28x224xf32> -> vector<28x224xf32>
    %c0_178 = arith.constant 0 : index
    %c0_179 = arith.constant 0 : index
    %197 = vector.load %arg15[%c0_178, %c0_179] : memref<1x224xf32, #tpu.memory_space<vmem>>, vector<1x224xf32>
    %198 = vector.broadcast %197 : vector<1x224xf32> to vector<28x224xf32>
    %199 = arith.addf %196, %198 : vector<28x224xf32>
    %cst_180 = arith.constant dense<0.000000e+00> : vector<224xf32>
    %200 = vector.multi_reduction <add>, %199, %cst_180 [0] : vector<28x224xf32> to vector<224xf32>
    %201 = vector.shape_cast %200 : vector<224xf32> to vector<1x224xf32>
    %c0_181 = arith.constant 0 : index
    %c0_182 = arith.constant 0 : index
    %202 = vector.load %arg18[%c0_181, %c0_182] : memref<224x8xf32, #tpu.memory_space<vmem>>, vector<224x8xf32>
    %cst_183 = arith.constant dense<0.000000e+00> : vector<1x8xf32>
    %203 = tpu.matmul %201, %202, %cst_183 {dimension_numbers = #tpu.dot_dimension_numbers<[1], [0], [0], [1], [0, 0, 1, 1], [], []>} : vector<1x224xf32>, vector<224x8xf32>, vector<1x8xf32> -> vector<1x8xf32>
    %cst_184 = arith.constant 0.00127551018 : f32
    %204 = vector.broadcast %cst_184 : f32 to vector<1x8xf32>
    %205 = arith.mulf %203, %204 : vector<1x8xf32>
    %c0_185 = arith.constant 0 : index
    %c0_186 = arith.constant 0 : index
    %206 = vector.load %arg19[%c0_185, %c0_186] : memref<8x224xf32, #tpu.memory_space<vmem>>, vector<8x224xf32>
    %cst_187 = arith.constant dense<0.000000e+00> : vector<1x224xf32>
    %207 = tpu.matmul %205, %206, %cst_187 {dimension_numbers = #tpu.dot_dimension_numbers<[1], [0], [0], [1], [0, 0, 1, 1], [], []>} : vector<1x8xf32>, vector<8x224xf32>, vector<1x224xf32> -> vector<1x224xf32>
    %208 = vector.broadcast %207 : vector<1x224xf32> to vector<28x224xf32>
    %209 = arith.subf %199, %208 : vector<28x224xf32>
    %210 = arith.mulf %209, %209 : vector<28x224xf32>
    %cst_188 = arith.constant dense<0.000000e+00> : vector<224xf32>
    %211 = vector.multi_reduction <add>, %210, %cst_188 [0] : vector<28x224xf32> to vector<224xf32>
    %212 = vector.shape_cast %211 : vector<224xf32> to vector<1x224xf32>
    %c0_189 = arith.constant 0 : index
    %c0_190 = arith.constant 0 : index
    %213 = vector.load %arg18[%c0_189, %c0_190] : memref<224x8xf32, #tpu.memory_space<vmem>>, vector<224x8xf32>
    %cst_191 = arith.constant dense<0.000000e+00> : vector<1x8xf32>
    %214 = tpu.matmul %212, %213, %cst_191 {dimension_numbers = #tpu.dot_dimension_numbers<[1], [0], [0], [1], [0, 0, 1, 1], [], []>} : vector<1x224xf32>, vector<224x8xf32>, vector<1x8xf32> -> vector<1x8xf32>
    %cst_192 = arith.constant 0.00127551018 : f32
    %215 = vector.broadcast %cst_192 : f32 to vector<1x8xf32>
    %216 = arith.mulf %214, %215 : vector<1x8xf32>
    %c0_193 = arith.constant 0 : index
    %c0_194 = arith.constant 0 : index
    %217 = vector.load %arg16[%c0_193, %c0_194] : memref<1x8xf32, #tpu.memory_space<vmem>>, vector<1x8xf32>
    %cst_195 = arith.constant 9.99999974E-6 : f32
    %218 = vector.broadcast %cst_195 : f32 to vector<1x8xf32>
    %219 = arith.addf %216, %218 : vector<1x8xf32>
    %220 = math.rsqrt %219 : vector<1x8xf32>
    %221 = arith.mulf %217, %220 : vector<1x8xf32>
    %c0_196 = arith.constant 0 : index
    %c0_197 = arith.constant 0 : index
    %222 = vector.load %arg17[%c0_196, %c0_197] : memref<1x8xf32, #tpu.memory_space<vmem>>, vector<1x8xf32>
    %223 = arith.mulf %205, %221 : vector<1x8xf32>
    %224 = arith.subf %222, %223 : vector<1x8xf32>
    %c0_198 = arith.constant 0 : index
    %c0_199 = arith.constant 0 : index
    %225 = vector.load %arg19[%c0_198, %c0_199] : memref<8x224xf32, #tpu.memory_space<vmem>>, vector<8x224xf32>
    %cst_200 = arith.constant dense<0.000000e+00> : vector<1x224xf32>
    %226 = tpu.matmul %221, %225, %cst_200 {dimension_numbers = #tpu.dot_dimension_numbers<[1], [0], [0], [1], [0, 0, 1, 1], [], []>} : vector<1x8xf32>, vector<8x224xf32>, vector<1x224xf32> -> vector<1x224xf32>
    %227 = vector.broadcast %226 : vector<1x224xf32> to vector<28x224xf32>
    %228 = arith.mulf %199, %227 : vector<28x224xf32>
    %c0_201 = arith.constant 0 : index
    %c0_202 = arith.constant 0 : index
    %229 = vector.load %arg19[%c0_201, %c0_202] : memref<8x224xf32, #tpu.memory_space<vmem>>, vector<8x224xf32>
    %cst_203 = arith.constant dense<0.000000e+00> : vector<1x224xf32>
    %230 = tpu.matmul %224, %229, %cst_203 {dimension_numbers = #tpu.dot_dimension_numbers<[1], [0], [0], [1], [0, 0, 1, 1], [], []>} : vector<1x8xf32>, vector<8x224xf32>, vector<1x224xf32> -> vector<1x224xf32>
    %231 = vector.broadcast %230 : vector<1x224xf32> to vector<28x224xf32>
    %232 = arith.addf %228, %231 : vector<28x224xf32>
    %cst_204 = arith.constant 0.000000e+00 : f32
    %233 = vector.broadcast %cst_204 : f32 to vector<28x224xf32>
    %234 = arith.maximumf %232, %233 : vector<28x224xf32>
    %235 = vector.extract_strided_slice %234 {offsets = [0, 0], sizes = [28, 32], strides = [1, 1]} : vector<28x224xf32> to vector<28x32xf32>
    %236 = arith.truncf %235 : vector<28x32xf32> to vector<28x32xbf16>
    %c0_205 = arith.constant 0 : index
    %c0_206 = arith.constant 0 : index
    %237 = vector.load %arg35[%c0_205, %c0_206] : memref<196x32xbf16, #tpu.memory_space<vmem>>, vector<28x32xbf16>
    tpu.vector_store %arg35[%c0_205, %c0_206], %236 {strides = array<i32>} : memref<196x32xbf16, #tpu.memory_space<vmem>>, vector<28x32xbf16>,
    %238 = vector.extract_strided_slice %234 {offsets = [0, 32], sizes = [28, 32], strides = [1, 1]} : vector<28x224xf32> to vector<28x32xf32>
    %239 = arith.truncf %238 : vector<28x32xf32> to vector<28x32xbf16>
    %c28_207 = arith.constant 28 : index
    %c0_208 = arith.constant 0 : index
    %240 = vector.load %arg35[%c28_207, %c0_208] : memref<196x32xbf16, #tpu.memory_space<vmem>>, vector<28x32xbf16>
    tpu.vector_store %arg35[%c28_207, %c0_208], %239 {strides = array<i32>} : memref<196x32xbf16, #tpu.memory_space<vmem>>, vector<28x32xbf16>,
    %241 = vector.extract_strided_slice %234 {offsets = [0, 64], sizes = [28, 32], strides = [1, 1]} : vector<28x224xf32> to vector<28x32xf32>
    %242 = arith.truncf %241 : vector<28x32xf32> to vector<28x32xbf16>
    %c56_209 = arith.constant 56 : index
    %c0_210 = arith.constant 0 : index
    %243 = vector.load %arg35[%c56_209, %c0_210] : memref<196x32xbf16, #tpu.memory_space<vmem>>, vector<28x32xbf16>
    tpu.vector_store %arg35[%c56_209, %c0_210], %242 {strides = array<i32>} : memref<196x32xbf16, #tpu.memory_space<vmem>>, vector<28x32xbf16>,
    %244 = vector.extract_strided_slice %234 {offsets = [0, 96], sizes = [28, 32], strides = [1, 1]} : vector<28x224xf32> to vector<28x32xf32>
    %245 = arith.truncf %244 : vector<28x32xf32> to vector<28x32xbf16>
    %c84_211 = arith.constant 84 : index
    %c0_212 = arith.constant 0 : index
    %246 = vector.load %arg35[%c84_211, %c0_212] : memref<196x32xbf16, #tpu.memory_space<vmem>>, vector<28x32xbf16>
    tpu.vector_store %arg35[%c84_211, %c0_212], %245 {strides = array<i32>} : memref<196x32xbf16, #tpu.memory_space<vmem>>, vector<28x32xbf16>,
    %247 = vector.extract_strided_slice %234 {offsets = [0, 128], sizes = [28, 32], strides = [1, 1]} : vector<28x224xf32> to vector<28x32xf32>
    %248 = arith.truncf %247 : vector<28x32xf32> to vector<28x32xbf16>
    %c112 = arith.constant 112 : index
    %c0_213 = arith.constant 0 : index
    %249 = vector.load %arg35[%c112, %c0_213] : memref<196x32xbf16, #tpu.memory_space<vmem>>, vector<28x32xbf16>
    tpu.vector_store %arg35[%c112, %c0_213], %248 {strides = array<i32>} : memref<196x32xbf16, #tpu.memory_space<vmem>>, vector<28x32xbf16>,
    %250 = vector.extract_strided_slice %234 {offsets = [0, 160], sizes = [28, 32], strides = [1, 1]} : vector<28x224xf32> to vector<28x32xf32>
    %251 = arith.truncf %250 : vector<28x32xf32> to vector<28x32xbf16>
    %c140 = arith.constant 140 : index
    %c0_214 = arith.constant 0 : index
    %252 = vector.load %arg35[%c140, %c0_214] : memref<196x32xbf16, #tpu.memory_space<vmem>>, vector<28x32xbf16>
    tpu.vector_store %arg35[%c140, %c0_214], %251 {strides = array<i32>} : memref<196x32xbf16, #tpu.memory_space<vmem>>, vector<28x32xbf16>,
    %253 = vector.extract_strided_slice %234 {offsets = [0, 192], sizes = [28, 32], strides = [1, 1]} : vector<28x224xf32> to vector<28x32xf32>
    %254 = arith.truncf %253 : vector<28x32xf32> to vector<28x32xbf16>
    %c168 = arith.constant 168 : index
    %c0_215 = arith.constant 0 : index
    %255 = vector.load %arg35[%c168, %c0_215] : memref<196x32xbf16, #tpu.memory_space<vmem>>, vector<28x32xbf16>
    tpu.vector_store %arg35[%c168, %c0_215], %254 {strides = array<i32>} : memref<196x32xbf16, #tpu.memory_space<vmem>>, vector<28x32xbf16>,
    %c0_216 = arith.constant 0 : index
    %c0_217 = arith.constant 0 : index
    %256 = vector.load %arg35[%c0_216, %c0_217] : memref<196x32xbf16, #tpu.memory_space<vmem>>, vector<196x32xbf16>
    %c0_218 = arith.constant 0 : index
    %c0_219 = arith.constant 0 : index
    %257 = vector.load %arg20[%c0_218, %c0_219] : memref<32x256xbf16, #tpu.memory_space<vmem>>, vector<32x256xbf16>
    %cst_220 = arith.constant dense<0.000000e+00> : vector<196x256xf32>
    %258 = tpu.matmul %256, %257, %cst_220 {dimension_numbers = #tpu.dot_dimension_numbers<[1], [0], [0], [1], [0, 0, 1, 1], [], []>} : vector<196x32xbf16>, vector<32x256xbf16>, vector<196x256xf32> -> vector<196x256xf32>
    %c0_221 = arith.constant 0 : index
    %c0_222 = arith.constant 0 : index
    %259 = vector.load %arg21[%c0_221, %c0_222] : memref<1x256xf32, #tpu.memory_space<vmem>>, vector<1x256xf32>
    %260 = vector.broadcast %259 : vector<1x256xf32> to vector<196x256xf32>
    %261 = arith.addf %258, %260 : vector<196x256xf32>
    %cst_223 = arith.constant dense<0.000000e+00> : vector<256xf32>
    %262 = vector.multi_reduction <add>, %261, %cst_223 [0] : vector<196x256xf32> to vector<256xf32>
    %263 = vector.shape_cast %262 : vector<256xf32> to vector<1x256xf32>
    %c0_224 = arith.constant 0 : index
    %c0_225 = arith.constant 0 : index
    %264 = vector.load %arg24[%c0_224, %c0_225] : memref<256x16xf32, #tpu.memory_space<vmem>>, vector<256x16xf32>
    %cst_226 = arith.constant dense<0.000000e+00> : vector<1x16xf32>
    %265 = tpu.matmul %263, %264, %cst_226 {dimension_numbers = #tpu.dot_dimension_numbers<[1], [0], [0], [1], [0, 0, 1, 1], [], []>} : vector<1x256xf32>, vector<256x16xf32>, vector<1x16xf32> -> vector<1x16xf32>
    %cst_227 = arith.constant 3.18877544E-4 : f32
    %266 = vector.broadcast %cst_227 : f32 to vector<1x16xf32>
    %267 = arith.mulf %265, %266 : vector<1x16xf32>
    %c0_228 = arith.constant 0 : index
    %c0_229 = arith.constant 0 : index
    %268 = vector.load %arg25[%c0_228, %c0_229] : memref<16x256xf32, #tpu.memory_space<vmem>>, vector<16x256xf32>
    %cst_230 = arith.constant dense<0.000000e+00> : vector<1x256xf32>
    %269 = tpu.matmul %267, %268, %cst_230 {dimension_numbers = #tpu.dot_dimension_numbers<[1], [0], [0], [1], [0, 0, 1, 1], [], []>} : vector<1x16xf32>, vector<16x256xf32>, vector<1x256xf32> -> vector<1x256xf32>
    %270 = vector.broadcast %269 : vector<1x256xf32> to vector<196x256xf32>
    %271 = arith.subf %261, %270 : vector<196x256xf32>
    %272 = arith.mulf %271, %271 : vector<196x256xf32>
    %cst_231 = arith.constant dense<0.000000e+00> : vector<256xf32>
    %273 = vector.multi_reduction <add>, %272, %cst_231 [0] : vector<196x256xf32> to vector<256xf32>
    %274 = vector.shape_cast %273 : vector<256xf32> to vector<1x256xf32>
    %c0_232 = arith.constant 0 : index
    %c0_233 = arith.constant 0 : index
    %275 = vector.load %arg24[%c0_232, %c0_233] : memref<256x16xf32, #tpu.memory_space<vmem>>, vector<256x16xf32>
    %cst_234 = arith.constant dense<0.000000e+00> : vector<1x16xf32>
    %276 = tpu.matmul %274, %275, %cst_234 {dimension_numbers = #tpu.dot_dimension_numbers<[1], [0], [0], [1], [0, 0, 1, 1], [], []>} : vector<1x256xf32>, vector<256x16xf32>, vector<1x16xf32> -> vector<1x16xf32>
    %cst_235 = arith.constant 3.18877544E-4 : f32
    %277 = vector.broadcast %cst_235 : f32 to vector<1x16xf32>
    %278 = arith.mulf %276, %277 : vector<1x16xf32>
    %c0_236 = arith.constant 0 : index
    %c0_237 = arith.constant 0 : index
    %279 = vector.load %arg22[%c0_236, %c0_237] : memref<1x16xf32, #tpu.memory_space<vmem>>, vector<1x16xf32>
    %cst_238 = arith.constant 9.99999974E-6 : f32
    %280 = vector.broadcast %cst_238 : f32 to vector<1x16xf32>
    %281 = arith.addf %278, %280 : vector<1x16xf32>
    %282 = math.rsqrt %281 : vector<1x16xf32>
    %283 = arith.mulf %279, %282 : vector<1x16xf32>
    %c0_239 = arith.constant 0 : index
    %c0_240 = arith.constant 0 : index
    %284 = vector.load %arg23[%c0_239, %c0_240] : memref<1x16xf32, #tpu.memory_space<vmem>>, vector<1x16xf32>
    %285 = arith.mulf %267, %283 : vector<1x16xf32>
    %286 = arith.subf %284, %285 : vector<1x16xf32>
    %c0_241 = arith.constant 0 : index
    %c0_242 = arith.constant 0 : index
    %287 = vector.load %arg25[%c0_241, %c0_242] : memref<16x256xf32, #tpu.memory_space<vmem>>, vector<16x256xf32>
    %cst_243 = arith.constant dense<0.000000e+00> : vector<1x256xf32>
    %288 = tpu.matmul %283, %287, %cst_243 {dimension_numbers = #tpu.dot_dimension_numbers<[1], [0], [0], [1], [0, 0, 1, 1], [], []>} : vector<1x16xf32>, vector<16x256xf32>, vector<1x256xf32> -> vector<1x256xf32>
    %289 = vector.broadcast %288 : vector<1x256xf32> to vector<196x256xf32>
    %290 = arith.mulf %261, %289 : vector<196x256xf32>
    %c0_244 = arith.constant 0 : index
    %c0_245 = arith.constant 0 : index
    %291 = vector.load %arg25[%c0_244, %c0_245] : memref<16x256xf32, #tpu.memory_space<vmem>>, vector<16x256xf32>
    %cst_246 = arith.constant dense<0.000000e+00> : vector<1x256xf32>
    %292 = tpu.matmul %286, %291, %cst_246 {dimension_numbers = #tpu.dot_dimension_numbers<[1], [0], [0], [1], [0, 0, 1, 1], [], []>} : vector<1x16xf32>, vector<16x256xf32>, vector<1x256xf32> -> vector<1x256xf32>
    %293 = vector.broadcast %292 : vector<1x256xf32> to vector<196x256xf32>
    %294 = arith.addf %290, %293 : vector<196x256xf32>
    %295 = arith.negf %294 : vector<196x256xf32>
    %296 = math.exp %295 : vector<196x256xf32>
    %cst_247 = arith.constant 1.000000e+00 : f32
    %297 = vector.broadcast %cst_247 : f32 to vector<196x256xf32>
    %298 = arith.addf %297, %296 : vector<196x256xf32>
    %299 = arith.divf %297, %298 : vector<196x256xf32>
    %300 = arith.truncf %299 : vector<196x256xf32> to vector<196x256xbf16>
    %c0_248 = arith.constant 0 : index
    %c0_249 = arith.constant 0 : index
    %301 = vector.load %arg26[%c0_248, %c0_249] : memref<256x16xbf16, #tpu.memory_space<vmem>>, vector<256x16xbf16>
    %cst_250 = arith.constant dense<0.000000e+00> : vector<196x16xf32>
    %302 = tpu.matmul %300, %301, %cst_250 {dimension_numbers = #tpu.dot_dimension_numbers<[1], [0], [0], [1], [0, 0, 1, 1], [], []>} : vector<196x256xbf16>, vector<256x16xbf16>, vector<196x16xf32> -> vector<196x16xf32>
    %c0_251 = arith.constant 0 : index
    %c0_252 = arith.constant 0 : index
    %303 = vector.load %arg27[%c0_251, %c0_252] : memref<1x16xf32, #tpu.memory_space<vmem>>, vector<1x16xf32>
    %304 = vector.broadcast %303 : vector<1x16xf32> to vector<196x16xf32>
    %305 = arith.addf %302, %304 : vector<196x16xf32>
    %306 = arith.negf %305 : vector<196x16xf32>
    %307 = math.exp %306 : vector<196x16xf32>
    %cst_253 = arith.constant 1.000000e+00 : f32
    %308 = vector.broadcast %cst_253 : f32 to vector<196x16xf32>
    %309 = arith.addf %308, %307 : vector<196x16xf32>
    %310 = arith.divf %308, %309 : vector<196x16xf32>
    %c0_254 = arith.constant 0 : index
    %c0_255 = arith.constant 0 : index
    %311 = vector.load %arg28[%c0_254, %c0_255] : memref<196x16xf32, #tpu.memory_space<vmem>>, vector<196x16xf32>
    tpu.vector_store %arg28[%c0_254, %c0_255], %310 {strides = array<i32>} : memref<196x16xf32, #tpu.memory_space<vmem>>, vector<196x16xf32>,
    return
  }
  func.func @transform_0(%arg0: i32) -> (i32, i32, i32) {
    %c0_i32 = arith.constant 0 : i32
    %c0_i32_0 = arith.constant 0 : i32
    %c0_i32_1 = arith.constant 0 : i32
    %c0_i32_2 = arith.constant 0 : i32
    return %c0_i32, %c0_i32_0, %c0_i32_1 : i32, i32, i32
  }
  func.func @transform_1(%arg0: i32) -> (i32, i32) {
    %c0_i32 = arith.constant 0 : i32
    %c0_i32_0 = arith.constant 0 : i32
    %c0_i32_1 = arith.constant 0 : i32
    return %c0_i32, %c0_i32_0 : i32, i32
  }
  func.func @transform_2(%arg0: i32) -> (i32, i32) {
    %c0_i32 = arith.constant 0 : i32
    %c0_i32_0 = arith.constant 0 : i32
    %c0_i32_1 = arith.constant 0 : i32
    return %c0_i32, %c0_i32_0 : i32, i32
  }
  func.func @transform_3(%arg0: i32) -> (i32, i32) {
    %c0_i32 = arith.constant 0 : i32
    %c0_i32_0 = arith.constant 0 : i32
    %c0_i32_1 = arith.constant 0 : i32
    return %c0_i32, %c0_i32_0 : i32, i32
  }
  func.func @transform_4(%arg0: i32) -> (i32, i32) {
    %c0_i32 = arith.constant 0 : i32
    %c0_i32_0 = arith.constant 0 : i32
    %c0_i32_1 = arith.constant 0 : i32
    return %c0_i32, %c0_i32_0 : i32, i32
  }
  func.func @transform_5(%arg0: i32) -> (i32, i32) {
    %c0_i32 = arith.constant 0 : i32
    %c0_i32_0 = arith.constant 0 : i32
    %c0_i32_1 = arith.constant 0 : i32
    return %c0_i32, %c0_i32_0 : i32, i32
  }
  func.func @transform_6(%arg0: i32) -> (i32, i32) {
    %c0_i32 = arith.constant 0 : i32
    %c0_i32_0 = arith.constant 0 : i32
    %c0_i32_1 = arith.constant 0 : i32
    return %c0_i32, %c0_i32_0 : i32, i32
  }
  func.func @transform_7(%arg0: i32) -> (i32, i32) {
    %c0_i32 = arith.constant 0 : i32
    %c0_i32_0 = arith.constant 0 : i32
    %c0_i32_1 = arith.constant 0 : i32
    return %c0_i32, %c0_i32_0 : i32, i32
  }
  func.func @transform_8(%arg0: i32) -> (i32, i32) {
    %c0_i32 = arith.constant 0 : i32
    %c0_i32_0 = arith.constant 0 : i32
    %c0_i32_1 = arith.constant 0 : i32
    return %c0_i32, %c0_i32_0 : i32, i32
  }
  func.func @transform_9(%arg0: i32) -> (i32, i32) {
    %c0_i32 = arith.constant 0 : i32
    %c0_i32_0 = arith.constant 0 : i32
    %c0_i32_1 = arith.constant 0 : i32
    return %c0_i32, %c0_i32_0 : i32, i32
  }
  func.func @transform_10(%arg0: i32) -> (i32, i32) {
    %c0_i32 = arith.constant 0 : i32
    %c0_i32_0 = arith.constant 0 : i32
    %c0_i32_1 = arith.constant 0 : i32
    return %c0_i32, %c0_i32_0 : i32, i32
  }
  func.func @transform_11(%arg0: i32) -> (i32, i32) {
    %c0_i32 = arith.constant 0 : i32
    %c0_i32_0 = arith.constant 0 : i32
    %c0_i32_1 = arith.constant 0 : i32
    return %c0_i32, %c0_i32_0 : i32, i32
  }
  func.func @transform_12(%arg0: i32) -> (i32, i32) {
    %c0_i32 = arith.constant 0 : i32
    %c0_i32_0 = arith.constant 0 : i32
    %c0_i32_1 = arith.constant 0 : i32
    return %c0_i32, %c0_i32_0 : i32, i32
  }
  func.func @transform_13(%arg0: i32) -> (i32, i32) {
    %c0_i32 = arith.constant 0 : i32
    %c0_i32_0 = arith.constant 0 : i32
    %c0_i32_1 = arith.constant 0 : i32
    return %c0_i32, %c0_i32_0 : i32, i32
  }
  func.func @transform_14(%arg0: i32) -> (i32, i32) {
    %c0_i32 = arith.constant 0 : i32
    %c0_i32_0 = arith.constant 0 : i32
    %c0_i32_1 = arith.constant 0 : i32
    return %c0_i32, %c0_i32_0 : i32, i32
  }
  func.func @transform_15(%arg0: i32) -> (i32, i32) {
    %c0_i32 = arith.constant 0 : i32
    %c0_i32_0 = arith.constant 0 : i32
    %c0_i32_1 = arith.constant 0 : i32
    return %c0_i32, %c0_i32_0 : i32, i32
  }
  func.func @transform_16(%arg0: i32) -> (i32, i32) {
    %c0_i32 = arith.constant 0 : i32
    %c0_i32_0 = arith.constant 0 : i32
    %c0_i32_1 = arith.constant 0 : i32
    return %c0_i32, %c0_i32_0 : i32, i32
  }
  func.func @transform_17(%arg0: i32) -> (i32, i32) {
    %c0_i32 = arith.constant 0 : i32
    %c0_i32_0 = arith.constant 0 : i32
    %c0_i32_1 = arith.constant 0 : i32
    return %c0_i32, %c0_i32_0 : i32, i32
  }
  func.func @transform_18(%arg0: i32) -> (i32, i32) {
    %c0_i32 = arith.constant 0 : i32
    %c0_i32_0 = arith.constant 0 : i32
    %c0_i32_1 = arith.constant 0 : i32
    return %c0_i32, %c0_i32_0 : i32, i32
  }
  func.func @transform_19(%arg0: i32) -> (i32, i32) {
    %c0_i32 = arith.constant 0 : i32
    %c0_i32_0 = arith.constant 0 : i32
    %c0_i32_1 = arith.constant 0 : i32
    return %c0_i32, %c0_i32_0 : i32, i32
  }
  func.func @transform_20(%arg0: i32) -> (i32, i32) {
    %c0_i32 = arith.constant 0 : i32
    %c0_i32_0 = arith.constant 0 : i32
    %c0_i32_1 = arith.constant 0 : i32
    return %c0_i32, %c0_i32_0 : i32, i32
  }
  func.func @transform_21(%arg0: i32) -> (i32, i32) {
    %c0_i32 = arith.constant 0 : i32
    %c0_i32_0 = arith.constant 0 : i32
    %c0_i32_1 = arith.constant 0 : i32
    return %c0_i32, %c0_i32_0 : i32, i32
  }
  func.func @transform_22(%arg0: i32) -> (i32, i32) {
    %c0_i32 = arith.constant 0 : i32
    %c0_i32_0 = arith.constant 0 : i32
    %c0_i32_1 = arith.constant 0 : i32
    return %c0_i32, %c0_i32_0 : i32, i32
  }
  func.func @transform_23(%arg0: i32) -> (i32, i32) {
    %c0_i32 = arith.constant 0 : i32
    %c0_i32_0 = arith.constant 0 : i32
    %c0_i32_1 = arith.constant 0 : i32
    return %c0_i32, %c0_i32_0 : i32, i32
  }
  func.func @transform_24(%arg0: i32) -> (i32, i32) {
    %c0_i32 = arith.constant 0 : i32
    %c0_i32_0 = arith.constant 0 : i32
    %c0_i32_1 = arith.constant 0 : i32
    return %c0_i32, %c0_i32_0 : i32, i32
  }
  func.func @transform_25(%arg0: i32) -> (i32, i32) {
    %c0_i32 = arith.constant 0 : i32
    %c0_i32_0 = arith.constant 0 : i32
    %c0_i32_1 = arith.constant 0 : i32
    return %c0_i32, %c0_i32_0 : i32, i32
  }
  func.func @transform_26(%arg0: i32) -> (i32, i32) {
    %c0_i32 = arith.constant 0 : i32
    %c0_i32_0 = arith.constant 0 : i32
    %c0_i32_1 = arith.constant 0 : i32
    return %c0_i32, %c0_i32_0 : i32, i32
  }
  func.func @transform_27(%arg0: i32) -> (i32, i32) {
    %c0_i32 = arith.constant 0 : i32
    %c0_i32_0 = arith.constant 0 : i32
    %c0_i32_1 = arith.constant 0 : i32
    return %c0_i32, %c0_i32_0 : i32, i32
  }
}

</mosaic_0001>

<llo_original>
// kernel: _lambda_.1
$region0: #{_lambda_.1}
  #allocation0 [shape = 'u32[]', space=smem, size = 0x4, offset = 0x4, fixed_abs, tag = 'smem constant byte address 0x4 - core index']
  #allocation1 [shape = 'u32[144,128]{1,0:T(1,128)}', space=vmem, size = 0x12000, scoped, tag = 'internal scratch']
  #allocation2 [shape = 'bf16[96,112]{1,0:T(8,128)(2,1)}', space=vmem, size = 0x6000, scoped, tag = 'scratch operand']
  #allocation3 [shape = 'bf16[48,192]{1,0:T(8,128)(2,1)}', space=vmem, size = 0x6000, scoped, tag = 'scratch operand']
  #allocation4 [shape = 'bf16[32,768]{1,0:T(8,128)(2,1)}', space=vmem, size = 0xc000, scoped, tag = 'scratch operand']
  #allocation5 [shape = 'f32[16,128]{1,0:T(8,128)}', space=vmem, size = 0x2000, scoped, tag = 'scratch operand']
  #allocation6 [shape = 'bf16[4,512]{1,0:T(4,128)(2,1)}', space=vmem, size = 0x1000, scoped, tag = 'scratch operand']
  #allocation7 [shape = 'bf16[28,70]{1,0:T(8,128)(2,1)}', space=vmem, size = 0x2000, scoped, tag = 'scratch operand']
  #allocation8 [shape = 'bf16[196,32]{1,0:T(8,128)(2,1)}', space=vmem, size = 0xc800, scoped, tag = 'scratch operand']
  %s0 = inlined_call_operand.vmem [shape: bf16[4,28,28], index: 0, kind: input, shape index: {}]
  %s1 = inlined_call_operand.hbm [shape: bf16[112,384], index: 1, kind: input, shape index: {}]
  %s2 = inlined_call_operand.hbm [shape: f32[1,192], index: 2, kind: input, shape index: {}]
  %s3 = inlined_call_operand.hbm [shape: bf16[768,256], index: 3, kind: input, shape index: {}]
  %s4 = inlined_call_operand.hbm [shape: f32[1,128], index: 4, kind: input, shape index: {}]
  %s5 = inlined_call_operand.vmem [shape: bf16[512,100], index: 5, kind: input, shape index: {}]
  %s6 = inlined_call_operand.vmem [shape: f32[1,100], index: 6, kind: input, shape index: {}]
  %s7 = inlined_call_operand.vmem [shape: f32[1,100], index: 7, kind: input, shape index: {}]
  %s8 = inlined_call_operand.vmem [shape: f32[1,100], index: 8, kind: input, shape index: {}]
  %s9 = inlined_call_operand.hbm [shape: bf16[100,490], index: 9, kind: input, shape index: {}]
  %s10 = inlined_call_operand.vmem [shape: f32[1,490], index: 10, kind: input, shape index: {}]
  %s11 = inlined_call_operand.vmem [shape: f32[1,490], index: 11, kind: input, shape index: {}]
  %s12 = inlined_call_operand.vmem [shape: f32[1,490], index: 12, kind: input, shape index: {}]
  %s13 = inlined_call_operand.hbm [shape: bf16[70,224], index: 13, kind: input, shape index: {}]
  %s14 = inlined_call_operand.hbm [shape: f32[1,224], index: 14, kind: input, shape index: {}]
  %s15 = inlined_call_operand.vmem [shape: f32[1,8], index: 15, kind: input, shape index: {}]
  %s16 = inlined_call_operand.vmem [shape: f32[1,8], index: 16, kind: input, shape index: {}]
  %s17 = inlined_call_operand.hbm [shape: f32[224,8], index: 17, kind: input, shape index: {}]
  %s18 = inlined_call_operand.hbm [shape: f32[8,224], index: 18, kind: input, shape index: {}]
  %s19 = inlined_call_operand.vmem [shape: bf16[32,256], index: 19, kind: input, shape index: {}]
  %s20 = inlined_call_operand.vmem [shape: f32[1,256], index: 20, kind: input, shape index: {}]
  %s21 = inlined_call_operand.vmem [shape: f32[1,16], index: 21, kind: input, shape index: {}]
  %s22 = inlined_call_operand.vmem [shape: f32[1,16], index: 22, kind: input, shape index: {}]
  %s23 = inlined_call_operand.vmem [shape: f32[256,16], index: 23, kind: input, shape index: {}]
  %s24 = inlined_call_operand.vmem [shape: f32[16,256], index: 24, kind: input, shape index: {}]
  %s25 = inlined_call_operand.hbm [shape: bf16[256,16], index: 25, kind: input, shape index: {}]
  %s26 = inlined_call_operand.vmem [shape: f32[1,16], index: 26, kind: input, shape index: {}]
  %s27 = inlined_call_operand.vmem [shape: f32[196,16], index: 27, kind: output, shape index: {}]
  %s28 = sld [smem:[#allocation0]]
  $region158: #{_lambda_.1} parent=0
    _
  %s30 = ssub.s32 1, %s28
  %s31 = scalar_select 0, %s30, %s28
  $region1: #{_lambda_.1} parent=0
    #allocation9 [shape = 'u8[86016]{0}', space=vmem, size = 0x15000, scoped, tag = 'input window, operand 1, single buffered']
    #allocation10 [shape = 's32[1]{0}', space=sflag, size = 0x4, scoped, tag = 'scoped memory for _lambda_.1']
    #allocation11 [shape = 'u8[1024]{0}', space=vmem, size = 0x400, scoped, tag = 'input window, operand 2, single buffered']
    #allocation12 [shape = 's32[1]{0}', space=sflag, size = 0x4, scoped, tag = 'scoped memory for _lambda_.1']
    #allocation13 [shape = 'u8[393216]{0}', space=vmem, size = 0x60000, scoped, tag = 'input window, operand 3, single buffered']
    #allocation14 [shape = 'u8[512]{0}', space=vmem, size = 0x400, scoped, tag = 'input window, operand 4, single buffered']
    #allocation15 [shape = 's32[1]{0}', space=sflag, size = 0x4, scoped, tag = 'scoped memory for _lambda_.1']
    #allocation16 [shape = 'u8[106496]{0}', space=vmem, size = 0x1a000, scoped, tag = 'input window, operand 9, single buffered']
    #allocation17 [shape = 'u8[36864]{0}', space=vmem, size = 0x9000, scoped, tag = 'input window, operand 13, single buffered']
    #allocation18 [shape = 's32[1]{0}', space=sflag, size = 0x4, scoped, tag = 'scoped memory for _lambda_.1']
    #allocation19 [shape = 'u8[1024]{0}', space=vmem, size = 0x400, scoped, tag = 'input window, operand 14, single buffered']
    #allocation20 [shape = 'u8[114688]{0}', space=vmem, size = 0x1c000, scoped, tag = 'input window, operand 17, single buffered']
    #allocation21 [shape = 's32[1]{0}', space=sflag, size = 0x4, scoped, tag = 'scoped memory for _lambda_.1']
    #allocation22 [shape = 'u8[8192]{0}', space=vmem, size = 0x2000, scoped, tag = 'input window, operand 18, single buffered']
    #allocation23 [shape = 'u8[65536]{0}', space=vmem, size = 0x10000, scoped, tag = 'input window, operand 25, single buffered']
    #allocation24 [shape = 's32[1]{0}', space=sflag, size = 0x4, scoped, tag = 'scoped memory for _lambda_.1']
    %32 = vsyncpa [#allocation10], 0
    %33 = vsyncpa [#allocation12], 0
    %34 = vsyncpa [#allocation15], 0
    %35 = vsyncpa [#allocation18], 0
    %36 = vsyncpa [#allocation21], 0
    %37 = vsyncpa [#allocation24], 0
    // Predicated region
    $region2: #{_lambda_.1} parent=1 // pred_check
      _
    $region3: #{_lambda_.1} parent=1 // pred_check_branch
      %39 = sbr.rel (0) target = $region5
    $region4: #{_lambda_.1} parent=1 // pred_region
      _
    $region5: #{_lambda_.1} parent=1 // pred_fallthru
      _
    // Predicated region
    $region6: #{_lambda_.1} parent=1 // pred_check
      _
    $region7: #{_lambda_.1} parent=1 // pred_check_branch
      %41 = sbr.rel (0) target = $region9
    $region8: #{_lambda_.1} parent=1 // pred_region
      %s43 = ssub.s32 2688, 2688
      %44 = vsyncadd [#allocation10], %s43
      %s45 = sshll.u32 [#allocation9], 4
      %s46 = int_to_ptr.vmem [resolvable:$true] %s45
      %51 = dma.hbm_to_vmem [thread:$0]  %s1, 2688, %s46, [#allocation10], 192, 192, 12
    $region9: #{_lambda_.1} parent=1 // pred_fallthru
      _
    // Predicated region
    $region10: #{_lambda_.1} parent=1 // pred_check
      _
    $region11: #{_lambda_.1} parent=1 // pred_check_branch
      %53 = sbr.rel (0) target = $region13
    $region12: #{_lambda_.1} parent=1 // pred_region
      %s55 = ssub.s32 32, 32
      %56 = vsyncadd [#allocation12], %s55
      %s58 = sshll.u32 [#allocation11], 4
      %s59 = int_to_ptr.vmem [resolvable:$true] %s58
      %61 = dma.hbm_to_vmem [thread:$0]  %s2, 32, %s59, [#allocation12]
    $region13: #{_lambda_.1} parent=1 // pred_fallthru
      _
    // Predicated region
    $region14: #{_lambda_.1} parent=1 // pred_check
      _
    $region15: #{_lambda_.1} parent=1 // pred_check_branch
      %63 = sbr.rel (0) target = $region17
    $region16: #{_lambda_.1} parent=1 // pred_region
      %s65 = ssub.s32 12288, 12288
      %66 = vsyncadd [#allocation12], %s65
      %s67 = sshll.u32 [#allocation13], 4
      %s68 = int_to_ptr.vmem [resolvable:$true] %s67
      %73 = dma.hbm_to_vmem [thread:$0]  %s3, 12288, %s68, [#allocation12], 128, 128, 8
    $region17: #{_lambda_.1} parent=1 // pred_fallthru
      _
    // Predicated region
    $region18: #{_lambda_.1} parent=1 // pred_check
      _
    $region19: #{_lambda_.1} parent=1 // pred_check_branch
      %75 = sbr.rel (0) target = $region21
    $region20: #{_lambda_.1} parent=1 // pred_region
      %s77 = ssub.s32 16, 16
      %78 = vsyncadd [#allocation15], %s77
      %s80 = sshll.u32 [#allocation14], 4
      %s81 = int_to_ptr.vmem [resolvable:$true] %s80
      %83 = dma.hbm_to_vmem [thread:$0]  %s4, 16, %s81, [#allocation15]
    $region21: #{_lambda_.1} parent=1 // pred_fallthru
      _
    // Predicated region
    $region22: #{_lambda_.1} parent=1 // pred_check
      _
    $region23: #{_lambda_.1} parent=1 // pred_check_branch
      %85 = sbr.rel (0) target = $region25
    $region24: #{_lambda_.1} parent=1 // pred_region
      _
    $region25: #{_lambda_.1} parent=1 // pred_fallthru
      _
    // Predicated region
    $region26: #{_lambda_.1} parent=1 // pred_check
      _
    $region27: #{_lambda_.1} parent=1 // pred_check_branch
      %87 = sbr.rel (0) target = $region29
    $region28: #{_lambda_.1} parent=1 // pred_region
      _
    $region29: #{_lambda_.1} parent=1 // pred_fallthru
      _
    // Predicated region
    $region30: #{_lambda_.1} parent=1 // pred_check
      _
    $region31: #{_lambda_.1} parent=1 // pred_check_branch
      %89 = sbr.rel (0) target = $region33
    $region32: #{_lambda_.1} parent=1 // pred_region
      _
    $region33: #{_lambda_.1} parent=1 // pred_fallthru
      _
    // Predicated region
    $region34: #{_lambda_.1} parent=1 // pred_check
      _
    $region35: #{_lambda_.1} parent=1 // pred_check_branch
      %91 = sbr.rel (0) target = $region37
    $region36: #{_lambda_.1} parent=1 // pred_region
      _
    $region37: #{_lambda_.1} parent=1 // pred_fallthru
      _
    // Predicated region
    $region38: #{_lambda_.1} parent=1 // pred_check
      _
    $region39: #{_lambda_.1} parent=1 // pred_check_branch
      %93 = sbr.rel (0) target = $region41
    $region40: #{_lambda_.1} parent=1 // pred_region
      %s95 = ssub.s32 3328, 3328
      %96 = vsyncadd [#allocation15], %s95
      %s97 = sshll.u32 [#allocation16], 4
      %s98 = int_to_ptr.vmem [resolvable:$true] %s97
      %103 = dma.hbm_to_vmem [thread:$0]  %s9, 3328, %s98, [#allocation15], 256, 256, 16
    $region41: #{_lambda_.1} parent=1 // pred_fallthru
      _
    // Predicated region
    $region42: #{_lambda_.1} parent=1 // pred_check
      _
    $region43: #{_lambda_.1} parent=1 // pred_check_branch
      %105 = sbr.rel (0) target = $region45
    $region44: #{_lambda_.1} parent=1 // pred_region
      _
    $region45: #{_lambda_.1} parent=1 // pred_fallthru
      _
    // Predicated region
    $region46: #{_lambda_.1} parent=1 // pred_check
      _
    $region47: #{_lambda_.1} parent=1 // pred_check_branch
      %107 = sbr.rel (0) target = $region49
    $region48: #{_lambda_.1} parent=1 // pred_region
      _
    $region49: #{_lambda_.1} parent=1 // pred_fallthru
      _
    // Predicated region
    $region50: #{_lambda_.1} parent=1 // pred_check
      _
    $region51: #{_lambda_.1} parent=1 // pred_check_branch
      %109 = sbr.rel (0) target = $region53
    $region52: #{_lambda_.1} parent=1 // pred_region
      _
    $region53: #{_lambda_.1} parent=1 // pred_fallthru
      _
    // Predicated region
    $region54: #{_lambda_.1} parent=1 // pred_check
      _
    $region55: #{_lambda_.1} parent=1 // pred_check_branch
      %111 = sbr.rel (0) target = $region57
    $region56: #{_lambda_.1} parent=1 // pred_region
      %s113 = ssub.s32 1152, 1152
      %114 = vsyncadd [#allocation18], %s113
      %s115 = sshll.u32 [#allocation17], 4
      %s116 = int_to_ptr.vmem [resolvable:$true] %s115
      %121 = dma.hbm_to_vmem [thread:$0]  %s13, 1152, %s116, [#allocation18], 128, 128, 8
    $region57: #{_lambda_.1} parent=1 // pred_fallthru
      _
    // Predicated region
    $region58: #{_lambda_.1} parent=1 // pred_check
      _
    $region59: #{_lambda_.1} parent=1 // pred_check_branch
      %123 = sbr.rel (0) target = $region61
    $region60: #{_lambda_.1} parent=1 // pred_region
      %s125 = ssub.s32 32, 32
      %126 = vsyncadd [#allocation18], %s125
      %s128 = sshll.u32 [#allocation19], 4
      %s129 = int_to_ptr.vmem [resolvable:$true] %s128
      %131 = dma.hbm_to_vmem [thread:$0]  %s14, 32, %s129, [#allocation18]
    $region61: #{_lambda_.1} parent=1 // pred_fallthru
      _
    // Predicated region
    $region62: #{_lambda_.1} parent=1 // pred_check
      _
    $region63: #{_lambda_.1} parent=1 // pred_check_branch
      %133 = sbr.rel (0) target = $region65
    $region64: #{_lambda_.1} parent=1 // pred_region
      _
    $region65: #{_lambda_.1} parent=1 // pred_fallthru
      _
    // Predicated region
    $region66: #{_lambda_.1} parent=1 // pred_check
      _
    $region67: #{_lambda_.1} parent=1 // pred_check_branch
      %135 = sbr.rel (0) target = $region69
    $region68: #{_lambda_.1} parent=1 // pred_region
      _
    $region69: #{_lambda_.1} parent=1 // pred_fallthru
      _
    // Predicated region
    $region70: #{_lambda_.1} parent=1 // pred_check
      _
    $region71: #{_lambda_.1} parent=1 // pred_check_branch
      %137 = sbr.rel (0) target = $region73
    $region72: #{_lambda_.1} parent=1 // pred_region
      %s139 = ssub.s32 3584, 3584
      %140 = vsyncadd [#allocation21], %s139
      %s141 = sshll.u32 [#allocation20], 4
      %s142 = int_to_ptr.vmem [resolvable:$true] %s141
      %147 = dma.hbm_to_vmem [thread:$0]  %s17, 3584, %s142, [#allocation21], 128, 128, 8
    $region73: #{_lambda_.1} parent=1 // pred_fallthru
      _
    // Predicated region
    $region74: #{_lambda_.1} parent=1 // pred_check
      _
    $region75: #{_lambda_.1} parent=1 // pred_check_branch
      %149 = sbr.rel (0) target = $region77
    $region76: #{_lambda_.1} parent=1 // pred_region
      %s151 = ssub.s32 256, 256
      %152 = vsyncadd [#allocation21], %s151
      %s154 = sshll.u32 [#allocation22], 4
      %s155 = int_to_ptr.vmem [resolvable:$true] %s154
      %157 = dma.hbm_to_vmem [thread:$0]  %s18, 256, %s155, [#allocation21]
    $region77: #{_lambda_.1} parent=1 // pred_fallthru
      _
    // Predicated region
    $region78: #{_lambda_.1} parent=1 // pred_check
      _
    $region79: #{_lambda_.1} parent=1 // pred_check_branch
      %159 = sbr.rel (0) target = $region81
    $region80: #{_lambda_.1} parent=1 // pred_region
      _
    $region81: #{_lambda_.1} parent=1 // pred_fallthru
      _
    // Predicated region
    $region82: #{_lambda_.1} parent=1 // pred_check
      _
    $region83: #{_lambda_.1} parent=1 // pred_check_branch
      %161 = sbr.rel (0) target = $region85
    $region84: #{_lambda_.1} parent=1 // pred_region
      _
    $region85: #{_lambda_.1} parent=1 // pred_fallthru
      _
    // Predicated region
    $region86: #{_lambda_.1} parent=1 // pred_check
      _
    $region87: #{_lambda_.1} parent=1 // pred_check_branch
      %163 = sbr.rel (0) target = $region89
    $region88: #{_lambda_.1} parent=1 // pred_region
      _
    $region89: #{_lambda_.1} parent=1 // pred_fallthru
      _
    // Predicated region
    $region90: #{_lambda_.1} parent=1 // pred_check
      _
    $region91: #{_lambda_.1} parent=1 // pred_check_branch
      %165 = sbr.rel (0) target = $region93
    $region92: #{_lambda_.1} parent=1 // pred_region
      _
    $region93: #{_lambda_.1} parent=1 // pred_fallthru
      _
    // Predicated region
    $region94: #{_lambda_.1} parent=1 // pred_check
      _
    $region95: #{_lambda_.1} parent=1 // pred_check_branch
      %167 = sbr.rel (0) target = $region97
    $region96: #{_lambda_.1} parent=1 // pred_region
      _
    $region97: #{_lambda_.1} parent=1 // pred_fallthru
      _
    // Predicated region
    $region98: #{_lambda_.1} parent=1 // pred_check
      _
    $region99: #{_lambda_.1} parent=1 // pred_check_branch
      %169 = sbr.rel (0) target = $region101
    $region100: #{_lambda_.1} parent=1 // pred_region
      _
    $region101: #{_lambda_.1} parent=1 // pred_fallthru
      _
    // Predicated region
    $region102: #{_lambda_.1} parent=1 // pred_check
      _
    $region103: #{_lambda_.1} parent=1 // pred_check_branch
      %171 = sbr.rel (0) target = $region105
    $region104: #{_lambda_.1} parent=1 // pred_region
      %s173 = ssub.s32 2048, 2048
      %174 = vsyncadd [#allocation24], %s173
      %s175 = sshll.u32 [#allocation23], 4
      %s176 = int_to_ptr.vmem [resolvable:$true] %s175
      %181 = dma.hbm_to_vmem [thread:$0]  %s25, 2048, %s176, [#allocation24], 64, 64, 4
    $region105: #{_lambda_.1} parent=1 // pred_fallthru
      _
    // Predicated region
    $region106: #{_lambda_.1} parent=1 // pred_check
      _
    $region107: #{_lambda_.1} parent=1 // pred_check_branch
      %183 = sbr.rel (0) target = $region109
    $region108: #{_lambda_.1} parent=1 // pred_region
      _
    $region109: #{_lambda_.1} parent=1 // pred_fallthru
      _
    // Predicated region
    $region110: #{_lambda_.1} parent=1 // pred_check
      _
    $region111: #{_lambda_.1} parent=1 // pred_check_branch
      %185 = sbr.rel (0) target = $region113
    $region112: #{_lambda_.1} parent=1 // pred_region
      %186 = dma.done [#allocation10], 2688
    $region113: #{_lambda_.1} parent=1 // pred_fallthru
      _
    // Predicated region
    $region114: #{_lambda_.1} parent=1 // pred_check
      _
    $region115: #{_lambda_.1} parent=1 // pred_check_branch
      %188 = sbr.rel (0) target = $region117
    $region116: #{_lambda_.1} parent=1 // pred_region
      %189 = dma.done [#allocation12], 32
    $region117: #{_lambda_.1} parent=1 // pred_fallthru
      _
    // Predicated region
    $region118: #{_lambda_.1} parent=1 // pred_check
      _
    $region119: #{_lambda_.1} parent=1 // pred_check_branch
      %191 = sbr.rel (0) target = $region121
    $region120: #{_lambda_.1} parent=1 // pred_region
      %192 = dma.done [#allocation12], 12288
    $region121: #{_lambda_.1} parent=1 // pred_fallthru
      _
    // Predicated region
    $region122: #{_lambda_.1} parent=1 // pred_check
      _
    $region123: #{_lambda_.1} parent=1 // pred_check_branch
      %194 = sbr.rel (0) target = $region125
    $region124: #{_lambda_.1} parent=1 // pred_region
      %195 = dma.done [#allocation15], 16
    $region125: #{_lambda_.1} parent=1 // pred_fallthru
      _
    // Predicated region
    $region126: #{_lambda_.1} parent=1 // pred_check
      _
    $region127: #{_lambda_.1} parent=1 // pred_check_branch
      %197 = sbr.rel (0) target = $region129
    $region128: #{_lambda_.1} parent=1 // pred_region
      %198 = dma.done [#allocation15], 3328
    $region129: #{_lambda_.1} parent=1 // pred_fallthru
      _
    // Predicated region
    $region130: #{_lambda_.1} parent=1 // pred_check
      _
    $region131: #{_lambda_.1} parent=1 // pred_check_branch
      %200 = sbr.rel (0) target = $region133
    $region132: #{_lambda_.1} parent=1 // pred_region
      %201 = dma.done [#allocation18], 1152
    $region133: #{_lambda_.1} parent=1 // pred_fallthru
      _
    // Predicated region
    $region134: #{_lambda_.1} parent=1 // pred_check
      _
    $region135: #{_lambda_.1} parent=1 // pred_check_branch
      %203 = sbr.rel (0) target = $region137
    $region136: #{_lambda_.1} parent=1 // pred_region
      %204 = dma.done [#allocation18], 32
    $region137: #{_lambda_.1} parent=1 // pred_fallthru
      _
    // Predicated region
    $region138: #{_lambda_.1} parent=1 // pred_check
      _
    $region139: #{_lambda_.1} parent=1 // pred_check_branch
      %206 = sbr.rel (0) target = $region141
    $region140: #{_lambda_.1} parent=1 // pred_region
      %207 = dma.done [#allocation21], 3584
    $region141: #{_lambda_.1} parent=1 // pred_fallthru
      _
    // Predicated region
    $region142: #{_lambda_.1} parent=1 // pred_check
      _
    $region143: #{_lambda_.1} parent=1 // pred_check_branch
      %209 = sbr.rel (0) target = $region145
    $region144: #{_lambda_.1} parent=1 // pred_region
      %210 = dma.done [#allocation21], 256
    $region145: #{_lambda_.1} parent=1 // pred_fallthru
      _
    // Predicated region
    $region146: #{_lambda_.1} parent=1 // pred_check
      _
    $region147: #{_lambda_.1} parent=1 // pred_check_branch
      %212 = sbr.rel (0) target = $region149
    $region148: #{_lambda_.1} parent=1 // pred_region
      %213 = dma.done [#allocation24], 2048
    $region149: #{_lambda_.1} parent=1 // pred_fallthru
      _
    %v215 = vld [vmem:[%s0] sm:$0xf]
    %v216 = vld [vmem:[%s0 + $0x4] sm:$0xf]
    %v217 = vld [vmem:[%s0 + $0x8] sm:$0xf]
    %vm218 = vcmask 224256
    %219 = vst.msk [vmem:[#allocation2] sm:$0xf] %vm218, %v215
    %220 = vst.msk [vmem:[#allocation2 + $0x4] sm:$0xf] %vm218, %v216
    %221 = vst.msk [vmem:[#allocation2 + $0x8] sm:$0xf] %vm218, %v217
    %s222 = scalar_lea.vmem %s0, 16
    %v223 = vld [vmem:[%s222] sm:$0xf]
    %v224 = vld [vmem:[%s222 + $0x4] sm:$0xf]
    %v225 = vld [vmem:[%s222 + $0x8] sm:$0xf]
    %229 = vrot.lane.b32.xlu0 %v223, 28
    %v230 = vpop.permute.xlu0 %229
    %231 = vrot.lane.b32.xlu0 %v224, 28
    %v232 = vpop.permute.xlu0 %231
    %233 = vrot.lane.b32.xlu0 %v225, 28
    %v234 = vpop.permute.xlu0 %233
    %vm238 = vcmask 453856
    %239 = vst.msk [vmem:[#allocation2] sm:$0xf] %vm238, %v230
    %240 = vst.msk [vmem:[#allocation2 + $0x4] sm:$0xf] %vm238, %v232
    %241 = vst.msk [vmem:[#allocation2 + $0x8] sm:$0xf] %vm238, %v234
    %s242 = scalar_lea.vmem %s0, 32
    %v243 = vld [vmem:[%s242] sm:$0xf]
    %v244 = vld [vmem:[%s242 + $0x4] sm:$0xf]
    %v245 = vld [vmem:[%s242 + $0x8] sm:$0xf]
    %249 = vrot.lane.b32.xlu0 %v243, 56
    %v250 = vpop.permute.xlu0 %249
    %251 = vrot.lane.b32.xlu0 %v244, 56
    %v252 = vpop.permute.xlu0 %251
    %253 = vrot.lane.b32.xlu0 %v245, 56
    %v254 = vpop.permute.xlu0 %253
    %vm258 = vcmask 683456
    %259 = vst.msk [vmem:[#allocation2] sm:$0xf] %vm258, %v250
    %260 = vst.msk [vmem:[#allocation2 + $0x4] sm:$0xf] %vm258, %v252
    %261 = vst.msk [vmem:[#allocation2 + $0x8] sm:$0xf] %vm258, %v254
    %s262 = scalar_lea.vmem %s0, 48
    %v263 = vld [vmem:[%s262] sm:$0xf]
    %v264 = vld [vmem:[%s262 + $0x4] sm:$0xf]
    %v265 = vld [vmem:[%s262 + $0x8] sm:$0xf]
    %269 = vrot.lane.b32.xlu0 %v263, 84
    %v270 = vpop.permute.xlu0 %269
    %271 = vrot.lane.b32.xlu0 %v264, 84
    %v272 = vpop.permute.xlu0 %271
    %273 = vrot.lane.b32.xlu0 %v265, 84
    %v274 = vpop.permute.xlu0 %273
    %vm278 = vcmask 913056
    %279 = vst.msk [vmem:[#allocation2] sm:$0xf] %vm278, %v270
    %280 = vst.msk [vmem:[#allocation2 + $0x4] sm:$0xf] %vm278, %v272
    %281 = vst.msk [vmem:[#allocation2 + $0x8] sm:$0xf] %vm278, %v274
    %v282 = vld [vmem:[%s242] sm:$0xf]
    %v283 = vld [vmem:[%s242 + $0x4] sm:$0xf]
    %v284 = vld [vmem:[%s242 + $0x8] sm:$0xf]
    %285 = vst.msk [vmem:[#allocation2 + $0xc] sm:$0xf] %vm218, %v282
    %286 = vst.msk [vmem:[#allocation2 + $0x10] sm:$0xf] %vm218, %v283
    %287 = vst.msk [vmem:[#allocation2 + $0x14] sm:$0xf] %vm218, %v284
    %v288 = vld [vmem:[%s262] sm:$0xf]
    %v289 = vld [vmem:[%s262 + $0x4] sm:$0xf]
    %v290 = vld [vmem:[%s262 + $0x8] sm:$0xf]
    %294 = vrot.lane.b32.xlu0 %v288, 28
    %v295 = vpop.permute.xlu0 %294
    %296 = vrot.lane.b32.xlu0 %v289, 28
    %v297 = vpop.permute.xlu0 %296
    %298 = vrot.lane.b32.xlu0 %v290, 28
    %v299 = vpop.permute.xlu0 %298
    %303 = vst.msk [vmem:[#allocation2 + $0xc] sm:$0xf] %vm238, %v295
    %304 = vst.msk [vmem:[#allocation2 + $0x10] sm:$0xf] %vm238, %v297
    %305 = vst.msk [vmem:[#allocation2 + $0x14] sm:$0xf] %vm238, %v299
    %v306 = vld [vmem:[%s0] sm:$0xc]
    %v307 = vld [vmem:[%s0 + $0x4] sm:$0xf]
    %v308 = vld [vmem:[%s0 + $0x8] sm:$0xf]
    %v309 = vld [vmem:[%s0 + $0xc] sm:$0x3]
    %vm314 = vcmask 1041408
    %vm315 = vcmask 1045508
    %vm316 = vmor %vm314, %vm315
    %v317 = vrot.slane %v306, 6
    %v318 = vrot.slane %v317, 4
    %v319 = vrot.slane %v307, 6
    %v320 = vsel %vm316, %v318, %v319
    %v321 = vrot.slane %v319, 4
    %v322 = vrot.slane %v308, 6
    %v323 = vsel %vm316, %v321, %v322
    %v324 = vrot.slane %v322, 4
    %v325 = vrot.slane %v309, 6
    %v326 = vsel %vm316, %v324, %v325
    %327 = vrot.lane.b32.xlu0 %v320, 56
    %v328 = vpop.permute.xlu0 %327
    %329 = vrot.lane.b32.xlu0 %v323, 56
    %v330 = vpop.permute.xlu0 %329
    %331 = vrot.lane.b32.xlu0 %v326, 56
    %v332 = vpop.permute.xlu0 %331
    %336 = vst.msk [vmem:[#allocation2 + $0xc] sm:$0xf] %vm258, %v328
    %337 = vst.msk [vmem:[#allocation2 + $0x10] sm:$0xf] %vm258, %v330
    %338 = vst.msk [vmem:[#allocation2 + $0x14] sm:$0xf] %vm258, %v332
    %v339 = vld [vmem:[%s222] sm:$0xc]
    %v340 = vld [vmem:[%s222 + $0x4] sm:$0xf]
    %v341 = vld [vmem:[%s222 + $0x8] sm:$0xf]
    %v342 = vld [vmem:[%s222 + $0xc] sm:$0x3]
    %v347 = vrot.slane %v339, 6
    %v348 = vrot.slane %v347, 4
    %v349 = vrot.slane %v340, 6
    %v350 = vsel %vm316, %v348, %v349
    %v351 = vrot.slane %v349, 4
    %v352 = vrot.slane %v341, 6
    %v353 = vsel %vm316, %v351, %v352
    %v354 = vrot.slane %v352, 4
    %v355 = vrot.slane %v342, 6
    %v356 = vsel %vm316, %v354, %v355
    %357 = vrot.lane.b32.xlu0 %v350, 84
    %v358 = vpop.permute.xlu0 %357
    %359 = vrot.lane.b32.xlu0 %v353, 84
    %v360 = vpop.permute.xlu0 %359
    %361 = vrot.lane.b32.xlu0 %v356, 84
    %v362 = vpop.permute.xlu0 %361
    %366 = vst.msk [vmem:[#allocation2 + $0xc] sm:$0xf] %vm278, %v358
    %367 = vst.msk [vmem:[#allocation2 + $0x10] sm:$0xf] %vm278, %v360
    %368 = vst.msk [vmem:[#allocation2 + $0x14] sm:$0xf] %vm278, %v362
    %v369 = vld [vmem:[%s222] sm:$0xf]
    %v370 = vld [vmem:[%s222 + $0x4] sm:$0xf]
    %v371 = vld [vmem:[%s222 + $0x8] sm:$0xf]
    %372 = vst.msk [vmem:[#allocation2 + $0x18] sm:$0xf] %vm218, %v369
    %373 = vst.msk [vmem:[#allocation2 + $0x1c] sm:$0xf] %vm218, %v370
    %374 = vst.msk [vmem:[#allocation2 + $0x20] sm:$0xf] %vm218, %v371
    %v375 = vld [vmem:[%s242] sm:$0xf]
    %v376 = vld [vmem:[%s242 + $0x4] sm:$0xf]
    %v377 = vld [vmem:[%s242 + $0x8] sm:$0xf]
    %381 = vrot.lane.b32.xlu0 %v375, 28
    %v382 = vpop.permute.xlu0 %381
    %383 = vrot.lane.b32.xlu0 %v376, 28
    %v384 = vpop.permute.xlu0 %383
    %385 = vrot.lane.b32.xlu0 %v377, 28
    %v386 = vpop.permute.xlu0 %385
    %390 = vst.msk [vmem:[#allocation2 + $0x18] sm:$0xf] %vm238, %v382
    %391 = vst.msk [vmem:[#allocation2 + $0x1c] sm:$0xf] %vm238, %v384
    %392 = vst.msk [vmem:[#allocation2 + $0x20] sm:$0xf] %vm238, %v386
    %v393 = vld [vmem:[%s262] sm:$0xf]
    %v394 = vld [vmem:[%s262 + $0x4] sm:$0xf]
    %v395 = vld [vmem:[%s262 + $0x8] sm:$0xf]
    %399 = vrot.lane.b32.xlu0 %v393, 56
    %v400 = vpop.permute.xlu0 %399
    %401 = vrot.lane.b32.xlu0 %v394, 56
    %v402 = vpop.permute.xlu0 %401
    %403 = vrot.lane.b32.xlu0 %v395, 56
    %v404 = vpop.permute.xlu0 %403
    %408 = vst.msk [vmem:[#allocation2 + $0x18] sm:$0xf] %vm258, %v400
    %409 = vst.msk [vmem:[#allocation2 + $0x1c] sm:$0xf] %vm258, %v402
    %410 = vst.msk [vmem:[#allocation2 + $0x20] sm:$0xf] %vm258, %v404
    %v411 = vld [vmem:[%s0] sm:$0xc]
    %v412 = vld [vmem:[%s0 + $0x4] sm:$0xf]
    %v413 = vld [vmem:[%s0 + $0x8] sm:$0xf]
    %v414 = vld [vmem:[%s0 + $0xc] sm:$0x3]
    %v419 = vrot.slane %v411, 6
    %v420 = vrot.slane %v419, 4
    %v421 = vrot.slane %v412, 6
    %v422 = vsel %vm316, %v420, %v421
    %v423 = vrot.slane %v421, 4
    %v424 = vrot.slane %v413, 6
    %v425 = vsel %vm316, %v423, %v424
    %v426 = vrot.slane %v424, 4
    %v427 = vrot.slane %v414, 6
    %v428 = vsel %vm316, %v426, %v427
    %429 = vrot.lane.b32.xlu0 %v422, 84
    %v430 = vpop.permute.xlu0 %429
    %431 = vrot.lane.b32.xlu0 %v425, 84
    %v432 = vpop.permute.xlu0 %431
    %433 = vrot.lane.b32.xlu0 %v428, 84
    %v434 = vpop.permute.xlu0 %433
    %438 = vst.msk [vmem:[#allocation2 + $0x18] sm:$0xf] %vm278, %v430
    %439 = vst.msk [vmem:[#allocation2 + $0x1c] sm:$0xf] %vm278, %v432
    %440 = vst.msk [vmem:[#allocation2 + $0x20] sm:$0xf] %vm278, %v434
    %v441 = vld [vmem:[%s262] sm:$0xf]
    %v442 = vld [vmem:[%s262 + $0x4] sm:$0xf]
    %v443 = vld [vmem:[%s262 + $0x8] sm:$0xf]
    %444 = vst.msk [vmem:[#allocation2 + $0x24] sm:$0xf] %vm218, %v441
    %445 = vst.msk [vmem:[#allocation2 + $0x28] sm:$0xf] %vm218, %v442
    %446 = vst.msk [vmem:[#allocation2 + $0x2c] sm:$0xf] %vm218, %v443
    %v447 = vld [vmem:[%s0] sm:$0xc]
    %v448 = vld [vmem:[%s0 + $0x4] sm:$0xf]
    %v449 = vld [vmem:[%s0 + $0x8] sm:$0xf]
    %v450 = vld [vmem:[%s0 + $0xc] sm:$0x3]
    %v455 = vrot.slane %v447, 6
    %v456 = vrot.slane %v455, 4
    %v457 = vrot.slane %v448, 6
    %v458 = vsel %vm316, %v456, %v457
    %v459 = vrot.slane %v457, 4
    %v460 = vrot.slane %v449, 6
    %v461 = vsel %vm316, %v459, %v460
    %v462 = vrot.slane %v460, 4
    %v463 = vrot.slane %v450, 6
    %v464 = vsel %vm316, %v462, %v463
    %465 = vrot.lane.b32.xlu0 %v458, 28
    %v466 = vpop.permute.xlu0 %465
    %467 = vrot.lane.b32.xlu0 %v461, 28
    %v468 = vpop.permute.xlu0 %467
    %469 = vrot.lane.b32.xlu0 %v464, 28
    %v470 = vpop.permute.xlu0 %469
    %474 = vst.msk [vmem:[#allocation2 + $0x24] sm:$0xf] %vm238, %v466
    %475 = vst.msk [vmem:[#allocation2 + $0x28] sm:$0xf] %vm238, %v468
    %476 = vst.msk [vmem:[#allocation2 + $0x2c] sm:$0xf] %vm238, %v470
    %v477 = vld [vmem:[%s222] sm:$0xc]
    %v478 = vld [vmem:[%s222 + $0x4] sm:$0xf]
    %v479 = vld [vmem:[%s222 + $0x8] sm:$0xf]
    %v480 = vld [vmem:[%s222 + $0xc] sm:$0x3]
    %v485 = vrot.slane %v477, 6
    %v486 = vrot.slane %v485, 4
    %v487 = vrot.slane %v478, 6
    %v488 = vsel %vm316, %v486, %v487
    %v489 = vrot.slane %v487, 4
    %v490 = vrot.slane %v479, 6
    %v491 = vsel %vm316, %v489, %v490
    %v492 = vrot.slane %v490, 4
    %v493 = vrot.slane %v480, 6
    %v494 = vsel %vm316, %v492, %v493
    %495 = vrot.lane.b32.xlu0 %v488, 56
    %v496 = vpop.permute.xlu0 %495
    %497 = vrot.lane.b32.xlu0 %v491, 56
    %v498 = vpop.permute.xlu0 %497
    %499 = vrot.lane.b32.xlu0 %v494, 56
    %v500 = vpop.permute.xlu0 %499
    %504 = vst.msk [vmem:[#allocation2 + $0x24] sm:$0xf] %vm258, %v496
    %505 = vst.msk [vmem:[#allocation2 + $0x28] sm:$0xf] %vm258, %v498
    %506 = vst.msk [vmem:[#allocation2 + $0x2c] sm:$0xf] %vm258, %v500
    %v507 = vld [vmem:[%s242] sm:$0xc]
    %v508 = vld [vmem:[%s242 + $0x4] sm:$0xf]
    %v509 = vld [vmem:[%s242 + $0x8] sm:$0xf]
    %v510 = vld [vmem:[%s242 + $0xc] sm:$0x3]
    %v515 = vrot.slane %v507, 6
    %v516 = vrot.slane %v515, 4
    %v517 = vrot.slane %v508, 6
    %v518 = vsel %vm316, %v516, %v517
    %v519 = vrot.slane %v517, 4
    %v520 = vrot.slane %v509, 6
    %v521 = vsel %vm316, %v519, %v520
    %v522 = vrot.slane %v520, 4
    %v523 = vrot.slane %v510, 6
    %v524 = vsel %vm316, %v522, %v523
    %525 = vrot.lane.b32.xlu0 %v518, 84
    %v526 = vpop.permute.xlu0 %525
    %527 = vrot.lane.b32.xlu0 %v521, 84
    %v528 = vpop.permute.xlu0 %527
    %529 = vrot.lane.b32.xlu0 %v524, 84
    %v530 = vpop.permute.xlu0 %529
    %534 = vst.msk [vmem:[#allocation2 + $0x24] sm:$0xf] %vm278, %v526
    %535 = vst.msk [vmem:[#allocation2 + $0x28] sm:$0xf] %vm278, %v528
    %536 = vst.msk [vmem:[#allocation2 + $0x2c] sm:$0xf] %vm278, %v530
    %v537 = vld [vmem:[#allocation2] sm:$0xf]
    %v538 = vld [vmem:[#allocation2 + $0x4] sm:$0xf]
    %v539 = vld [vmem:[#allocation2 + $0x8] sm:$0xf]
    %v540 = vld [vmem:[#allocation2 + $0xc] sm:$0xf]
    %v541 = vld [vmem:[#allocation2 + $0x10] sm:$0xf]
    %v542 = vld [vmem:[#allocation2 + $0x14] sm:$0xf]
    %v543 = vld [vmem:[#allocation2 + $0x18] sm:$0xf]
    %v544 = vld [vmem:[#allocation2 + $0x1c] sm:$0xf]
    %v545 = vld [vmem:[#allocation2 + $0x20] sm:$0xf]
    %v546 = vld [vmem:[#allocation2 + $0x24] sm:$0xf]
    %v547 = vld [vmem:[#allocation2 + $0x28] sm:$0xf]
    %v548 = vld [vmem:[#allocation2 + $0x2c] sm:$0xf]
    %v549 = vld [vmem:[#allocation9] sm:$0xff]
    %v550 = vld [vmem:[#allocation9 + $0x8] sm:$0xf]
    %v551 = vld [vmem:[#allocation9 + $0xc] sm:$0xff]
    %v552 = vld [vmem:[#allocation9 + $0x14] sm:$0xf]
    %v553 = vld [vmem:[#allocation9 + $0x18] sm:$0xff]
    %v554 = vld [vmem:[#allocation9 + $0x20] sm:$0xf]
    %v555 = vld [vmem:[#allocation9 + $0x24] sm:$0xff]
    %v556 = vld [vmem:[#allocation9 + $0x2c] sm:$0xf]
    %v557 = vld [vmem:[#allocation9 + $0x30] sm:$0xff]
    %v558 = vld [vmem:[#allocation9 + $0x38] sm:$0xf]
    %v559 = vld [vmem:[#allocation9 + $0x3c] sm:$0xff]
    %v560 = vld [vmem:[#allocation9 + $0x44] sm:$0xf]
    %v561 = vld [vmem:[#allocation9 + $0x48] sm:$0xff]
    %v562 = vld [vmem:[#allocation9 + $0x50] sm:$0xf]
    %v563 = vld [vmem:[#allocation9 + $0x54] sm:$0xff]
    %v564 = vld [vmem:[#allocation9 + $0x5c] sm:$0xf]
    %v565 = vld [vmem:[#allocation9 + $0x60] sm:$0xff]
    %v566 = vld [vmem:[#allocation9 + $0x68] sm:$0xf]
    %v567 = vld [vmem:[#allocation9 + $0x6c] sm:$0xff]
    %v568 = vld [vmem:[#allocation9 + $0x74] sm:$0xf]
    %v569 = vld [vmem:[#allocation9 + $0x78] sm:$0xff]
    %v570 = vld [vmem:[#allocation9 + $0x80] sm:$0xf]
    %v571 = vld [vmem:[#allocation9 + $0x84] sm:$0xff]
    %v572 = vld [vmem:[#allocation9 + $0x8c] sm:$0xf]
    %v573 = vld [vmem:[#allocation9 + $0x90] sm:$0xff]
    %v574 = vld [vmem:[#allocation9 + $0x98] sm:$0xf]
    %v575 = vld [vmem:[#allocation9 + $0x9c] sm:$0xff]
    %v576 = vld [vmem:[#allocation9 + $0xa4] sm:$0xf]
    %v589 = vunpack.c.l.b16 %v537
    %v590 = vunpack.c.l.b16 %v538
    %v591 = vunpack.c.l.b16 %v539
    %v592 = vunpack.c.l.b16 %v540
    %v593 = vunpack.c.l.b16 %v541
    %v594 = vunpack.c.l.b16 %v542
    %v595 = vunpack.c.l.b16 %v543
    %v596 = vunpack.c.l.b16 %v544
    %v597 = vunpack.c.l.b16 %v545
    %v598 = vunpack.c.l.b16 %v546
    %v599 = vunpack.c.l.b16 %v547
    %v600 = vunpack.c.l.b16 %v548
    %v601 = vpack.c.b16 %v590, %v589
    %v602 = vpack.c.b16 %v592, %v591
    %v603 = vpack.c.b16 %v594, %v593
    %v604 = vpack.c.b16 %v596, %v595
    %v605 = vpack.c.b16 %v598, %v597
    %v606 = vpack.c.b16 %v600, %v599
    %v635 = vunpack.c.l.b16 %v549
    %v636 = vunpack.c.h.b16 %v549
    %v637 = vunpack.c.l.b16 %v550
    %v638 = vunpack.c.l.b16 %v551
    %v639 = vunpack.c.h.b16 %v551
    %v640 = vunpack.c.l.b16 %v552
    %v641 = vunpack.c.l.b16 %v553
    %v642 = vunpack.c.h.b16 %v553
    %v643 = vunpack.c.l.b16 %v554
    %v644 = vunpack.c.l.b16 %v555
    %v645 = vunpack.c.h.b16 %v555
    %v646 = vunpack.c.l.b16 %v556
    %v647 = vunpack.c.l.b16 %v557
    %v648 = vunpack.c.h.b16 %v557
    %v649 = vunpack.c.l.b16 %v558
    %v650 = vunpack.c.l.b16 %v559
    %v651 = vunpack.c.h.b16 %v559
    %v652 = vunpack.c.l.b16 %v560
    %v653 = vunpack.c.l.b16 %v561
    %v654 = vunpack.c.h.b16 %v561
    %v655 = vunpack.c.l.b16 %v562
    %v656 = vunpack.c.l.b16 %v563
    %v657 = vunpack.c.h.b16 %v563
    %v658 = vunpack.c.l.b16 %v564
    %v659 = vunpack.c.l.b16 %v565
    %v660 = vunpack.c.h.b16 %v565
    %v661 = vunpack.c.l.b16 %v566
    %v662 = vunpack.c.l.b16 %v567
    %v663 = vunpack.c.h.b16 %v567
    %v664 = vunpack.c.l.b16 %v568
    %v665 = vunpack.c.l.b16 %v569
    %v666 = vunpack.c.h.b16 %v569
    %v667 = vunpack.c.l.b16 %v570
    %v668 = vunpack.c.l.b16 %v571
    %v669 = vunpack.c.h.b16 %v571
    %v670 = vunpack.c.l.b16 %v572
    %v671 = vunpack.c.l.b16 %v573
    %v672 = vunpack.c.h.b16 %v573
    %v673 = vunpack.c.l.b16 %v574
    %v674 = vunpack.c.l.b16 %v575
    %v675 = vunpack.c.h.b16 %v575
    %v676 = vunpack.c.l.b16 %v576
    %v677 = vpack.c.b16 %v638, %v635
    %v678 = vpack.c.b16 %v639, %v636
    %v679 = vpack.c.b16 %v640, %v637
    %v680 = vpack.c.b16 %v644, %v641
    %v681 = vpack.c.b16 %v645, %v642
    %v682 = vpack.c.b16 %v646, %v643
    %v683 = vpack.c.b16 %v650, %v647
    %v684 = vpack.c.b16 %v651, %v648
    %v685 = vpack.c.b16 %v652, %v649
    %v686 = vpack.c.b16 %v656, %v653
    %v687 = vpack.c.b16 %v657, %v654
    %v688 = vpack.c.b16 %v658, %v655
    %v689 = vpack.c.b16 %v662, %v659
    %v690 = vpack.c.b16 %v663, %v660
    %v691 = vpack.c.b16 %v664, %v661
    %v692 = vpack.c.b16 %v668, %v665
    %v693 = vpack.c.b16 %v669, %v666
    %v694 = vpack.c.b16 %v670, %v667
    %v695 = vpack.c.b16 %v674, %v671
    %v696 = vpack.c.b16 %v675, %v672
    %v697 = vpack.c.b16 %v676, %v673
    %vm719 = vcmask 916480
    %v721 = vsel %vm719, %v601, 0
    %v724 = vsel %vm719, %v602, 0
    %v727 = vsel %vm719, %v603, 0
    %v730 = vsel %vm719, %v604, 0
    %v733 = vsel %vm719, %v605, 0
    %v736 = vsel %vm719, %v606, 0
    %738 = vmatprep.subr.bf16.mxu0 0
    %739 = vmatpush1.bf16.msra.mxu0 0
    %740 = vmatprep.subr.bf16.mxu0 %v696
    %741 = vmatpush1.bf16.msra.mxu0 %v695
    %742 = vmatprep.subr.bf16.mxu0 %v693
    %743 = vmatpush1.bf16.msra.mxu0 %v692
    %744 = vmatprep.subr.bf16.mxu0 %v690
    %745 = vmatpush1.bf16.msra.mxu0 %v689
    %746 = vmatprep.subr.bf16.mxu0 %v687
    %747 = vmatpush1.bf16.msra.mxu0 %v686
    %748 = vmatprep.subr.bf16.mxu0 %v684
    %749 = vmatpush1.bf16.msra.mxu0 %v683
    %750 = vmatprep.subr.bf16.mxu0 %v681
    %751 = vmatpush1.bf16.msra.mxu0 %v680
    %752 = vmatprep.subr.bf16.mxu0 %v678
    %753 = vmatpush1.bf16.msra.mxu0 %v677
    %754 = vmatprep.subr.bf16.mxu0 0
    %755 = vmatpush2.bf16.msra.mxu0 0
    %756 = vmatprep.subr.bf16.mxu0 0
    %757 = vmatpush2.bf16.msra.mxu0 0
    %758 = vmatprep.subr.bf16.mxu0 0
    %759 = vmatpush2.bf16.msra.mxu0 0
    %760 = vmatprep.subr.bf16.mxu0 0
    %761 = vmatpush2.bf16.msra.mxu0 0
    %762 = vmatprep.subr.bf16.mxu0 0
    %763 = vmatpush2.bf16.msra.mxu0 0
    %764 = vmatprep.subr.bf16.mxu0 0
    %765 = vmatpush2.bf16.msra.mxu0 0
    %766 = vmatprep.subr.bf16.mxu0 0
    %767 = vmatpush2.bf16.msra.mxu0 0
    %768 = vmatprep.subr.bf16.mxu0 0
    %769 = vmatpush2.bf16.msra.mxu0 0
    %770 = vmatprep.mubr.bf16.mxu0 0
    %771 = vmatmul.mubr.bf16.gmra.mxu0 %v721
    %v772 = vpop.f32.mrf.mxu0
    %v773 = vadd.f32 0.0, %v772
    %v774 = vpop.f32.mrf.mxu0
    %v775 = vadd.f32 0.0, %v774
    %v776 = vpop.f32.mrf.mxu0
    %v777 = vadd.f32 0.0, %v776
    %v778 = vpop.f32.mrf.mxu0
    %v779 = vadd.f32 0.0, %v778
    %780 = vmatprep.mubr.bf16.mxu0 0
    %781 = vmatmul.mubr.bf16.gmra.mxu0 %v724
    %v782 = vpop.f32.mrf.mxu0
    %v783 = vadd.f32 0.0, %v782
    %v784 = vpop.f32.mrf.mxu0
    %v785 = vadd.f32 0.0, %v784
    %v786 = vpop.f32.mrf.mxu0
    %v787 = vadd.f32 0.0, %v786
    %v788 = vpop.f32.mrf.mxu0
    %v789 = vadd.f32 0.0, %v788
    %790 = vmatprep.mubr.bf16.mxu0 0
    %791 = vmatmul.mubr.bf16.gmra.mxu0 %v727
    %v792 = vpop.f32.mrf.mxu0
    %v793 = vadd.f32 0.0, %v792
    %v794 = vpop.f32.mrf.mxu0
    %v795 = vadd.f32 0.0, %v794
    %v796 = vpop.f32.mrf.mxu0
    %v797 = vadd.f32 0.0, %v796
    %v798 = vpop.f32.mrf.mxu0
    %v799 = vadd.f32 0.0, %v798
    %800 = vmatprep.mubr.bf16.mxu0 0
    %801 = vmatmul.mubr.bf16.gmra.mxu0 %v730
    %v802 = vpop.f32.mrf.mxu0
    %v803 = vadd.f32 0.0, %v802
    %v804 = vpop.f32.mrf.mxu0
    %v805 = vadd.f32 0.0, %v804
    %v806 = vpop.f32.mrf.mxu0
    %v807 = vadd.f32 0.0, %v806
    %v808 = vpop.f32.mrf.mxu0
    %v809 = vadd.f32 0.0, %v808
    %810 = vmatprep.mubr.bf16.mxu0 0
    %811 = vmatmul.mubr.bf16.gmra.mxu0 %v733
    %v812 = vpop.f32.mrf.mxu0
    %v813 = vadd.f32 0.0, %v812
    %v814 = vpop.f32.mrf.mxu0
    %v815 = vadd.f32 0.0, %v814
    %v816 = vpop.f32.mrf.mxu0
    %v817 = vadd.f32 0.0, %v816
    %v818 = vpop.f32.mrf.mxu0
    %v819 = vadd.f32 0.0, %v818
    %820 = vmatprep.mubr.bf16.mxu0 0
    %821 = vmatmul.mubr.bf16.gmra.mxu0 %v736
    %v822 = vpop.f32.mrf.mxu0
    %v823 = vadd.f32 0.0, %v822
    %v824 = vpop.f32.mrf.mxu0
    %v825 = vadd.f32 0.0, %v824
    %v826 = vpop.f32.mrf.mxu0
    %v827 = vadd.f32 0.0, %v826
    %v828 = vpop.f32.mrf.mxu0
    %v829 = vadd.f32 0.0, %v828
    %830 = vdwg.mxu0
    %831 = vmatprep.subr.bf16.mxu0 0
    %832 = vmatpush1.bf16.msra.mxu0 0
    %833 = vmatprep.subr.bf16.mxu0 0
    %834 = vmatpush1.bf16.msra.mxu0 %v697
    %835 = vmatprep.subr.bf16.mxu0 0
    %836 = vmatpush1.bf16.msra.mxu0 %v694
    %837 = vmatprep.subr.bf16.mxu0 0
    %838 = vmatpush1.bf16.msra.mxu0 %v691
    %839 = vmatprep.subr.bf16.mxu0 0
    %840 = vmatpush1.bf16.msra.mxu0 %v688
    %841 = vmatprep.subr.bf16.mxu0 0
    %842 = vmatpush1.bf16.msra.mxu0 %v685
    %843 = vmatprep.subr.bf16.mxu0 0
    %844 = vmatpush1.bf16.msra.mxu0 %v682
    %845 = vmatprep.subr.bf16.mxu0 0
    %846 = vmatpush1.bf16.msra.mxu0 %v679
    %847 = vmatprep.subr.bf16.mxu0 0
    %848 = vmatpush2.bf16.msra.mxu0 0
    %849 = vmatprep.subr.bf16.mxu0 0
    %850 = vmatpush2.bf16.msra.mxu0 0
    %851 = vmatprep.subr.bf16.mxu0 0
    %852 = vmatpush2.bf16.msra.mxu0 0
    %853 = vmatprep.subr.bf16.mxu0 0
    %854 = vmatpush2.bf16.msra.mxu0 0
    %855 = vmatprep.subr.bf16.mxu0 0
    %856 = vmatpush2.bf16.msra.mxu0 0
    %857 = vmatprep.subr.bf16.mxu0 0
    %858 = vmatpush2.bf16.msra.mxu0 0
    %859 = vmatprep.subr.bf16.mxu0 0
    %860 = vmatpush2.bf16.msra.mxu0 0
    %861 = vmatprep.subr.bf16.mxu0 0
    %862 = vmatpush2.bf16.msra.mxu0 0
    %863 = vmatprep.mubr.bf16.mxu0 0
    %864 = vmatmul.mubr.bf16.gmra.mxu0 %v721
    %v865 = vpop.f32.mrf.mxu0
    %v866 = vadd.f32 0.0, %v865
    %v867 = vpop.f32.mrf.mxu0
    %v868 = vpop.f32.mrf.mxu0
    %v869 = vadd.f32 0.0, %v868
    %v870 = vpop.f32.mrf.mxu0
    %871 = vmatprep.mubr.bf16.mxu0 0
    %872 = vmatmul.mubr.bf16.gmra.mxu0 %v724
    %v873 = vpop.f32.mrf.mxu0
    %v874 = vadd.f32 0.0, %v873
    %v875 = vpop.f32.mrf.mxu0
    %v876 = vpop.f32.mrf.mxu0
    %v877 = vadd.f32 0.0, %v876
    %v878 = vpop.f32.mrf.mxu0
    %879 = vmatprep.mubr.bf16.mxu0 0
    %880 = vmatmul.mubr.bf16.gmra.mxu0 %v727
    %v881 = vpop.f32.mrf.mxu0
    %v882 = vadd.f32 0.0, %v881
    %v883 = vpop.f32.mrf.mxu0
    %v884 = vpop.f32.mrf.mxu0
    %v885 = vadd.f32 0.0, %v884
    %v886 = vpop.f32.mrf.mxu0
    %887 = vmatprep.mubr.bf16.mxu0 0
    %888 = vmatmul.mubr.bf16.gmra.mxu0 %v730
    %v889 = vpop.f32.mrf.mxu0
    %v890 = vadd.f32 0.0, %v889
    %v891 = vpop.f32.mrf.mxu0
    %v892 = vpop.f32.mrf.mxu0
    %v893 = vadd.f32 0.0, %v892
    %v894 = vpop.f32.mrf.mxu0
    %895 = vmatprep.mubr.bf16.mxu0 0
    %896 = vmatmul.mubr.bf16.gmra.mxu0 %v733
    %v897 = vpop.f32.mrf.mxu0
    %v898 = vadd.f32 0.0, %v897
    %v899 = vpop.f32.mrf.mxu0
    %v900 = vpop.f32.mrf.mxu0
    %v901 = vadd.f32 0.0, %v900
    %v902 = vpop.f32.mrf.mxu0
    %903 = vmatprep.mubr.bf16.mxu0 0
    %904 = vmatmul.mubr.bf16.gmra.mxu0 %v736
    %v905 = vpop.f32.mrf.mxu0
    %v906 = vadd.f32 0.0, %v905
    %v907 = vpop.f32.mrf.mxu0
    %v908 = vpop.f32.mrf.mxu0
    %v909 = vadd.f32 0.0, %v908
    %v910 = vpop.f32.mrf.mxu0
    %911 = vdwg.mxu0
    %924 = vrot.lane.b32.xlu0 %v775, 64
    %v925 = vpop.permute.xlu0 %924
    %926 = vrot.lane.b32.xlu0 %v866, 64
    %v927 = vpop.permute.xlu0 %926
    %928 = vrot.lane.b32.xlu0 %v779, 64
    %v929 = vpop.permute.xlu0 %928
    %930 = vrot.lane.b32.xlu0 %v869, 64
    %v931 = vpop.permute.xlu0 %930
    %932 = vrot.lane.b32.xlu0 %v785, 64
    %v933 = vpop.permute.xlu0 %932
    %934 = vrot.lane.b32.xlu0 %v874, 64
    %v935 = vpop.permute.xlu0 %934
    %936 = vrot.lane.b32.xlu0 %v789, 64
    %v937 = vpop.permute.xlu0 %936
    %938 = vrot.lane.b32.xlu0 %v877, 64
    %v939 = vpop.permute.xlu0 %938
    %940 = vrot.lane.b32.xlu0 %v795, 64
    %v941 = vpop.permute.xlu0 %940
    %942 = vrot.lane.b32.xlu0 %v882, 64
    %v943 = vpop.permute.xlu0 %942
    %944 = vrot.lane.b32.xlu0 %v799, 64
    %v945 = vpop.permute.xlu0 %944
    %946 = vrot.lane.b32.xlu0 %v885, 64
    %v947 = vpop.permute.xlu0 %946
    %vm948 = vcmask 523264
    %v949 = vsel %vm948, %v925, %v927
    %v950 = vsel %vm948, %v929, %v931
    %v951 = vsel %vm948, %v933, %v935
    %v952 = vsel %vm948, %v937, %v939
    %v953 = vsel %vm948, %v941, %v943
    %v954 = vsel %vm948, %v945, %v947
    %v967 = vmax.f32 %v773, %v949
    %v968 = vmax.f32 %v775, %v927
    %v969 = vmax.f32 %v777, %v950
    %v970 = vmax.f32 %v779, %v931
    %v971 = vmax.f32 %v783, %v951
    %v972 = vmax.f32 %v785, %v935
    %v973 = vmax.f32 %v787, %v952
    %v974 = vmax.f32 %v789, %v939
    %v975 = vmax.f32 %v793, %v953
    %v976 = vmax.f32 %v795, %v943
    %v977 = vmax.f32 %v797, %v954
    %v978 = vmax.f32 %v799, %v947
    %991 = vrot.lane.b32.xlu0 %v805, 64
    %v992 = vpop.permute.xlu0 %991
    %993 = vrot.lane.b32.xlu0 %v890, 64
    %v994 = vpop.permute.xlu0 %993
    %995 = vrot.lane.b32.xlu0 %v809, 64
    %v996 = vpop.permute.xlu0 %995
    %997 = vrot.lane.b32.xlu0 %v893, 64
    %v998 = vpop.permute.xlu0 %997
    %999 = vrot.lane.b32.xlu0 %v815, 64
    %v1000 = vpop.permute.xlu0 %999
    %1001 = vrot.lane.b32.xlu0 %v898, 64
    %v1002 = vpop.permute.xlu0 %1001
    %1003 = vrot.lane.b32.xlu0 %v819, 64
    %v1004 = vpop.permute.xlu0 %1003
    %1005 = vrot.lane.b32.xlu0 %v901, 64
    %v1006 = vpop.permute.xlu0 %1005
    %1007 = vrot.lane.b32.xlu0 %v825, 64
    %v1008 = vpop.permute.xlu0 %1007
    %1009 = vrot.lane.b32.xlu0 %v906, 64
    %v1010 = vpop.permute.xlu0 %1009
    %1011 = vrot.lane.b32.xlu0 %v829, 64
    %v1012 = vpop.permute.xlu0 %1011
    %1013 = vrot.lane.b32.xlu0 %v909, 64
    %v1014 = vpop.permute.xlu0 %1013
    %v1015 = vsel %vm948, %v992, %v994
    %v1016 = vsel %vm948, %v996, %v998
    %v1017 = vsel %vm948, %v1000, %v1002
    %v1018 = vsel %vm948, %v1004, %v1006
    %v1019 = vsel %vm948, %v1008, %v1010
    %v1020 = vsel %vm948, %v1012, %v1014
    %v1033 = vmax.f32 %v803, %v1015
    %v1034 = vmax.f32 %v805, %v994
    %v1035 = vmax.f32 %v807, %v1016
    %v1036 = vmax.f32 %v809, %v998
    %v1037 = vmax.f32 %v813, %v1017
    %v1038 = vmax.f32 %v815, %v1002
    %v1039 = vmax.f32 %v817, %v1018
    %v1040 = vmax.f32 %v819, %v1006
    %v1041 = vmax.f32 %v823, %v1019
    %v1042 = vmax.f32 %v825, %v1010
    %v1043 = vmax.f32 %v827, %v1020
    %v1044 = vmax.f32 %v829, %v1014
    %v1045 = vmax.f32 %v967, %v1033
    %v1046 = vmax.f32 %v968, %v1034
    %v1047 = vmax.f32 %v969, %v1035
    %v1048 = vmax.f32 %v970, %v1036
    %v1049 = vmax.f32 %v971, %v1037
    %v1050 = vmax.f32 %v972, %v1038
    %v1051 = vmax.f32 %v973, %v1039
    %v1052 = vmax.f32 %v974, %v1040
    %v1053 = vmax.f32 %v975, %v1041
    %v1054 = vmax.f32 %v976, %v1042
    %v1055 = vmax.f32 %v977, %v1043
    %v1056 = vmax.f32 %v978, %v1044
    %v1057 = vld [vmem:[#allocation11] sm:$0x3]
    %v1059 = vlaneseq
    %v1060 = vshrl.u32 %v1059, 7
    %v1061 = vsub.s32 0, %v1060
    %v1062 = vrot.slane %v1057, %v1061
    %v1063 = vlaneseq
    %v1064 = vshrl.u32 %v1063, 7
    %v1065 = vsub.s32 1, %v1064
    %v1066 = vrot.slane %v1057, %v1065
    %v1069 = vadd.f32 %v1045, %v1062
    %v1070 = vadd.f32 %v1046, %v1066
    %v1071 = vadd.f32 %v1047, %v1062
    %v1072 = vadd.f32 %v1048, %v1066
    %v1073 = vadd.f32 %v1049, %v1062
    %v1074 = vadd.f32 %v1050, %v1066
    %v1075 = vadd.f32 %v1051, %v1062
    %v1076 = vadd.f32 %v1052, %v1066
    %v1077 = vadd.f32 %v1053, %v1062
    %v1078 = vadd.f32 %v1054, %v1066
    %v1079 = vadd.f32 %v1055, %v1062
    %v1080 = vadd.f32 %v1056, %v1066
    %v1081 = vmax.f32 %v1069, 0.0
    %v1082 = vmax.f32 %v1070, 0.0
    %v1083 = vmax.f32 %v1071, 0.0
    %v1084 = vmax.f32 %v1072, 0.0
    %v1085 = vmax.f32 %v1073, 0.0
    %v1086 = vmax.f32 %v1074, 0.0
    %v1087 = vmax.f32 %v1075, 0.0
    %v1088 = vmax.f32 %v1076, 0.0
    %v1089 = vmax.f32 %v1077, 0.0
    %v1090 = vmax.f32 %v1078, 0.0
    %v1091 = vmax.f32 %v1079, 0.0
    %v1092 = vmax.f32 %v1080, 0.0
    %v1093 = vpack.c.bf16 %v1083, %v1081
    %v1094 = vpack.c.bf16 %v1084, %v1082
    %v1095 = vpack.c.bf16 %v1087, %v1085
    %v1096 = vpack.c.bf16 %v1088, %v1086
    %v1097 = vpack.c.bf16 %v1091, %v1089
    %v1098 = vpack.c.bf16 %v1092, %v1090
    %v1105 = vunpack.c.l.b16 %v1093
    %v1106 = vunpack.c.l.b16 %v1094
    %v1107 = vunpack.c.h.b16 %v1093
    %v1108 = vunpack.c.h.b16 %v1094
    %v1109 = vunpack.c.l.b16 %v1095
    %v1110 = vunpack.c.l.b16 %v1096
    %v1111 = vunpack.c.h.b16 %v1095
    %v1112 = vunpack.c.h.b16 %v1096
    %v1113 = vunpack.c.l.b16 %v1097
    %v1114 = vunpack.c.l.b16 %v1098
    %v1115 = vunpack.c.h.b16 %v1097
    %v1116 = vunpack.c.h.b16 %v1098
    %v1117 = vpack.c.b16 %v1106, %v1105
    %v1118 = vpack.c.b16 %v1108, %v1107
    %v1119 = vpack.c.b16 %v1110, %v1109
    %v1120 = vpack.c.b16 %v1112, %v1111
    %v1121 = vpack.c.b16 %v1114, %v1113
    %v1122 = vpack.c.b16 %v1116, %v1115
    %vm1129 = vcmask 1043456
    %vm1130 = vcmask 523268
    %vm1131 = vmor %vm1130, %vm1129
    %1132 = vst.msk [vmem:[#allocation3] sm:$0xff] %vm1131, %v1117
    %1133 = vst.msk [vmem:[#allocation3 + $0x8] sm:$0xff] %vm1131, %v1118
    %1134 = vst.msk [vmem:[#allocation3 + $0x10] sm:$0xff] %vm1131, %v1119
    %1135 = vst.msk [vmem:[#allocation3 + $0x18] sm:$0xff] %vm1131, %v1120
    %1136 = vst.msk [vmem:[#allocation3 + $0x20] sm:$0xff] %vm1131, %v1121
    %1137 = vst.msk [vmem:[#allocation3 + $0x28] sm:$0xff] %vm1131, %v1122
    %v1138 = vld [vmem:[#allocation3] sm:$0xff]
    %v1139 = vld [vmem:[#allocation3 + $0x8] sm:$0xff]
    %1140 = vst.msk [vmem:[#allocation4] sm:$0xff] %vm1131, %v1138
    %1141 = vst.msk [vmem:[#allocation4 + $0x18] sm:$0xff] %vm1131, %v1139
    %v1142 = vld [vmem:[#allocation3 + $0x18] sm:$0xff]
    %v1143 = vld [vmem:[#allocation3 + $0x20] sm:$0xff]
    %1146 = vrot.lane.b32.xlu0 %v1142, 64
    %v1147 = vpop.permute.xlu0 %1146
    %1148 = vrot.lane.b32.xlu0 %v1143, 64
    %v1149 = vpop.permute.xlu0 %1148
    %v1150 = vrot.slane %v1147, 4
    %v1151 = vrot.slane %v1149, 4
    %vm1152 = vcmask 523264
    %v1153 = vsel %vm1152, %v1150, %v1147
    %v1154 = vsel %vm1152, %v1151, %v1149
    %vm1157 = vcmask 1043968
    %vm1158 = vcmask 1047556
    %vm1159 = vmor %vm1158, %vm1157
    %1160 = vst.msk [vmem:[#allocation4 + $0x4] sm:$0xff] %vm1159, %v1153
    %1161 = vst.msk [vmem:[#allocation4 + $0x1c] sm:$0xff] %vm1159, %v1154
    %v1162 = vld [vmem:[#allocation3] sm:$0xcc]
    %v1163 = vld [vmem:[#allocation3 + $0x8] sm:$0xff]
    %v1164 = vld [vmem:[#allocation3 + $0x10] sm:$0x33]
    %v1168 = vrot.slane %v1162, 6
    %v1169 = vrot.slane %v1168, 4
    %v1170 = vrot.slane %v1163, 6
    %v1171 = vsel %vm316, %v1169, %v1170
    %v1172 = vrot.slane %v1170, 4
    %v1173 = vrot.slane %v1164, 6
    %v1174 = vsel %vm316, %v1172, %v1173
    %1177 = vst.msk [vmem:[#allocation4 + $0xc] sm:$0xff] %vm1131, %v1171
    %1178 = vst.msk [vmem:[#allocation4 + $0x24] sm:$0xff] %vm1131, %v1174
    %v1179 = vld [vmem:[#allocation3 + $0x18] sm:$0xcc]
    %v1180 = vld [vmem:[#allocation3 + $0x20] sm:$0xff]
    %v1181 = vld [vmem:[#allocation3 + $0x28] sm:$0x33]
    %v1185 = vrot.slane %v1179, 6
    %v1186 = vrot.slane %v1185, 4
    %v1187 = vrot.slane %v1180, 6
    %v1188 = vsel %vm316, %v1186, %v1187
    %v1189 = vrot.slane %v1187, 4
    %v1190 = vrot.slane %v1181, 6
    %v1191 = vsel %vm316, %v1189, %v1190
    %1192 = vrot.lane.b32.xlu0 %v1188, 64
    %v1193 = vpop.permute.xlu0 %1192
    %1194 = vrot.lane.b32.xlu0 %v1191, 64
    %v1195 = vpop.permute.xlu0 %1194
    %v1196 = vrot.slane %v1193, 4
    %v1197 = vrot.slane %v1195, 4
    %v1198 = vsel %vm1152, %v1196, %v1193
    %v1199 = vsel %vm1152, %v1197, %v1195
    %1202 = vst.msk [vmem:[#allocation4 + $0x10] sm:$0xff] %vm1159, %v1198
    %1203 = vst.msk [vmem:[#allocation4 + $0x28] sm:$0xff] %vm1159, %v1199
    %v1204 = vld [vmem:[#allocation3 + $0x18] sm:$0xff]
    %v1205 = vld [vmem:[#allocation3 + $0x20] sm:$0xff]
    %1206 = vst.msk [vmem:[#allocation4 + $0x30] sm:$0xff] %vm1131, %v1204
    %1207 = vst.msk [vmem:[#allocation4 + $0x48] sm:$0xff] %vm1131, %v1205
    %v1208 = vld [vmem:[#allocation3] sm:$0xcc]
    %v1209 = vld [vmem:[#allocation3 + $0x8] sm:$0xff]
    %v1210 = vld [vmem:[#allocation3 + $0x10] sm:$0x33]
    %v1214 = vrot.slane %v1208, 6
    %v1215 = vrot.slane %v1214, 4
    %v1216 = vrot.slane %v1209, 6
    %v1217 = vsel %vm316, %v1215, %v1216
    %v1218 = vrot.slane %v1216, 4
    %v1219 = vrot.slane %v1210, 6
    %v1220 = vsel %vm316, %v1218, %v1219
    %1221 = vrot.lane.b32.xlu0 %v1217, 64
    %v1222 = vpop.permute.xlu0 %1221
    %1223 = vrot.lane.b32.xlu0 %v1220, 64
    %v1224 = vpop.permute.xlu0 %1223
    %v1225 = vrot.slane %v1222, 4
    %v1226 = vrot.slane %v1224, 4
    %v1227 = vsel %vm1152, %v1225, %v1222
    %v1228 = vsel %vm1152, %v1226, %v1224
    %1231 = vst.msk [vmem:[#allocation4 + $0x34] sm:$0xff] %vm1159, %v1227
    %1232 = vst.msk [vmem:[#allocation4 + $0x4c] sm:$0xff] %vm1159, %v1228
    %v1233 = vld [vmem:[#allocation3 + $0x18] sm:$0xcc]
    %v1234 = vld [vmem:[#allocation3 + $0x20] sm:$0xff]
    %v1235 = vld [vmem:[#allocation3 + $0x28] sm:$0x33]
    %v1239 = vrot.slane %v1233, 6
    %v1240 = vrot.slane %v1239, 4
    %v1241 = vrot.slane %v1234, 6
    %v1242 = vsel %vm316, %v1240, %v1241
    %v1243 = vrot.slane %v1241, 4
    %v1244 = vrot.slane %v1235, 6
    %v1245 = vsel %vm316, %v1243, %v1244
    %1248 = vst.msk [vmem:[#allocation4 + $0x3c] sm:$0xff] %vm1131, %v1242
    %1249 = vst.msk [vmem:[#allocation4 + $0x54] sm:$0xff] %vm1131, %v1245
    %v1250 = vld [vmem:[#allocation3 + $0x8] sm:$0xff]
    %v1251 = vld [vmem:[#allocation3 + $0x10] sm:$0xff]
    %1254 = vrot.lane.b32.xlu0 %v1250, 64
    %v1255 = vpop.permute.xlu0 %1254
    %1256 = vrot.lane.b32.xlu0 %v1251, 64
    %v1257 = vpop.permute.xlu0 %1256
    %v1258 = vrot.slane %v1255, 4
    %v1259 = vrot.slane %v1257, 4
    %v1260 = vsel %vm1152, %v1258, %v1255
    %v1261 = vsel %vm1152, %v1259, %v1257
    %1264 = vst.msk [vmem:[#allocation4 + $0x40] sm:$0xff] %vm1159, %v1260
    %1265 = vst.msk [vmem:[#allocation4 + $0x58] sm:$0xff] %vm1159, %v1261
    %v1266 = vld [vmem:[#allocation4] sm:$0xff]
    %v1267 = vld [vmem:[#allocation4 + $0x8] sm:$0xff]
    %v1268 = vld [vmem:[#allocation4 + $0x10] sm:$0xff]
    %v1269 = vld [vmem:[#allocation4 + $0x18] sm:$0xff]
    %v1270 = vld [vmem:[#allocation4 + $0x20] sm:$0xff]
    %v1271 = vld [vmem:[#allocation4 + $0x28] sm:$0xff]
    %v1272 = vld [vmem:[#allocation4 + $0x30] sm:$0xff]
    %v1273 = vld [vmem:[#allocation4 + $0x38] sm:$0xff]
    %v1274 = vld [vmem:[#allocation4 + $0x40] sm:$0xff]
    %v1275 = vld [vmem:[#allocation4 + $0x48] sm:$0xff]
    %v1276 = vld [vmem:[#allocation4 + $0x50] sm:$0xff]
    %v1277 = vld [vmem:[#allocation4 + $0x58] sm:$0xff]
    %v1278 = vld [vmem:[#allocation13] sm:$0xff]
    %v1279 = vld [vmem:[#allocation13 + $0x8] sm:$0xff]
    %v1280 = vld [vmem:[#allocation13 + $0x10] sm:$0xff]
    %v1281 = vld [vmem:[#allocation13 + $0x18] sm:$0xff]
    %v1282 = vld [vmem:[#allocation13 + $0x20] sm:$0xff]
    %v1283 = vld [vmem:[#allocation13 + $0x28] sm:$0xff]
    %v1284 = vld [vmem:[#allocation13 + $0x30] sm:$0xff]
    %v1285 = vld [vmem:[#allocation13 + $0x38] sm:$0xff]
    %v1286 = vld [vmem:[#allocation13 + $0x40] sm:$0xff]
    %v1287 = vld [vmem:[#allocation13 + $0x48] sm:$0xff]
    %v1288 = vld [vmem:[#allocation13 + $0x50] sm:$0xff]
    %v1289 = vld [vmem:[#allocation13 + $0x58] sm:$0xff]
    %v1290 = vld [vmem:[#allocation13 + $0x60] sm:$0xff]
    %v1291 = vld [vmem:[#allocation13 + $0x68] sm:$0xff]
    %v1292 = vld [vmem:[#allocation13 + $0x70] sm:$0xff]
    %v1293 = vld [vmem:[#allocation13 + $0x78] sm:$0xff]
    %v1294 = vld [vmem:[#allocation13 + $0x80] sm:$0xff]
    %v1295 = vld [vmem:[#allocation13 + $0x88] sm:$0xff]
    %v1296 = vld [vmem:[#allocation13 + $0x90] sm:$0xff]
    %v1297 = vld [vmem:[#allocation13 + $0x98] sm:$0xff]
    %v1298 = vld [vmem:[#allocation13 + $0xa0] sm:$0xff]
    %v1299 = vld [vmem:[#allocation13 + $0xa8] sm:$0xff]
    %v1300 = vld [vmem:[#allocation13 + $0xb0] sm:$0xff]
    %v1301 = vld [vmem:[#allocation13 + $0xb8] sm:$0xff]
    %v1302 = vld [vmem:[#allocation13 + $0xc0] sm:$0xff]
    %v1303 = vld [vmem:[#allocation13 + $0xc8] sm:$0xff]
    %v1304 = vld [vmem:[#allocation13 + $0xd0] sm:$0xff]
    %v1305 = vld [vmem:[#allocation13 + $0xd8] sm:$0xff]
    %v1306 = vld [vmem:[#allocation13 + $0xe0] sm:$0xff]
    %v1307 = vld [vmem:[#allocation13 + $0xe8] sm:$0xff]
    %v1308 = vld [vmem:[#allocation13 + $0xf0] sm:$0xff]
    %v1309 = vld [vmem:[#allocation13 + $0xf8] sm:$0xff]
    %v1310 = vld [vmem:[#allocation13 + $0x100] sm:$0xff]
    %v1311 = vld [vmem:[#allocation13 + $0x108] sm:$0xff]
    %v1312 = vld [vmem:[#allocation13 + $0x110] sm:$0xff]
    %v1313 = vld [vmem:[#allocation13 + $0x118] sm:$0xff]
    %v1314 = vld [vmem:[#allocation13 + $0x120] sm:$0xff]
    %v1315 = vld [vmem:[#allocation13 + $0x128] sm:$0xff]
    %v1316 = vld [vmem:[#allocation13 + $0x130] sm:$0xff]
    %v1317 = vld [vmem:[#allocation13 + $0x138] sm:$0xff]
    %v1318 = vld [vmem:[#allocation13 + $0x140] sm:$0xff]
    %v1319 = vld [vmem:[#allocation13 + $0x148] sm:$0xff]
    %v1320 = vld [vmem:[#allocation13 + $0x150] sm:$0xff]
    %v1321 = vld [vmem:[#allocation13 + $0x158] sm:$0xff]
    %v1322 = vld [vmem:[#allocation13 + $0x160] sm:$0xff]
    %v1323 = vld [vmem:[#allocation13 + $0x168] sm:$0xff]
    %v1324 = vld [vmem:[#allocation13 + $0x170] sm:$0xff]
    %v1325 = vld [vmem:[#allocation13 + $0x178] sm:$0xff]
    %v1326 = vld [vmem:[#allocation13 + $0x180] sm:$0xff]
    %v1327 = vld [vmem:[#allocation13 + $0x188] sm:$0xff]
    %v1328 = vld [vmem:[#allocation13 + $0x190] sm:$0xff]
    %v1329 = vld [vmem:[#allocation13 + $0x198] sm:$0xff]
    %v1330 = vld [vmem:[#allocation13 + $0x1a0] sm:$0xff]
    %v1331 = vld [vmem:[#allocation13 + $0x1a8] sm:$0xff]
    %v1332 = vld [vmem:[#allocation13 + $0x1b0] sm:$0xff]
    %v1333 = vld [vmem:[#allocation13 + $0x1b8] sm:$0xff]
    %v1334 = vld [vmem:[#allocation13 + $0x1c0] sm:$0xff]
    %v1335 = vld [vmem:[#allocation13 + $0x1c8] sm:$0xff]
    %v1336 = vld [vmem:[#allocation13 + $0x1d0] sm:$0xff]
    %v1337 = vld [vmem:[#allocation13 + $0x1d8] sm:$0xff]
    %v1338 = vld [vmem:[#allocation13 + $0x1e0] sm:$0xff]
    %v1339 = vld [vmem:[#allocation13 + $0x1e8] sm:$0xff]
    %v1340 = vld [vmem:[#allocation13 + $0x1f0] sm:$0xff]
    %v1341 = vld [vmem:[#allocation13 + $0x1f8] sm:$0xff]
    %v1342 = vld [vmem:[#allocation13 + $0x200] sm:$0xff]
    %v1343 = vld [vmem:[#allocation13 + $0x208] sm:$0xff]
    %v1344 = vld [vmem:[#allocation13 + $0x210] sm:$0xff]
    %v1345 = vld [vmem:[#allocation13 + $0x218] sm:$0xff]
    %v1346 = vld [vmem:[#allocation13 + $0x220] sm:$0xff]
    %v1347 = vld [vmem:[#allocation13 + $0x228] sm:$0xff]
    %v1348 = vld [vmem:[#allocation13 + $0x230] sm:$0xff]
    %v1349 = vld [vmem:[#allocation13 + $0x238] sm:$0xff]
    %v1350 = vld [vmem:[#allocation13 + $0x240] sm:$0xff]
    %v1351 = vld [vmem:[#allocation13 + $0x248] sm:$0xff]
    %v1352 = vld [vmem:[#allocation13 + $0x250] sm:$0xff]
    %v1353 = vld [vmem:[#allocation13 + $0x258] sm:$0xff]
    %v1354 = vld [vmem:[#allocation13 + $0x260] sm:$0xff]
    %v1355 = vld [vmem:[#allocation13 + $0x268] sm:$0xff]
    %v1356 = vld [vmem:[#allocation13 + $0x270] sm:$0xff]
    %v1357 = vld [vmem:[#allocation13 + $0x278] sm:$0xff]
    %v1358 = vld [vmem:[#allocation13 + $0x280] sm:$0xff]
    %v1359 = vld [vmem:[#allocation13 + $0x288] sm:$0xff]
    %v1360 = vld [vmem:[#allocation13 + $0x290] sm:$0xff]
    %v1361 = vld [vmem:[#allocation13 + $0x298] sm:$0xff]
    %v1362 = vld [vmem:[#allocation13 + $0x2a0] sm:$0xff]
    %v1363 = vld [vmem:[#allocation13 + $0x2a8] sm:$0xff]
    %v1364 = vld [vmem:[#allocation13 + $0x2b0] sm:$0xff]
    %v1365 = vld [vmem:[#allocation13 + $0x2b8] sm:$0xff]
    %v1366 = vld [vmem:[#allocation13 + $0x2c0] sm:$0xff]
    %v1367 = vld [vmem:[#allocation13 + $0x2c8] sm:$0xff]
    %v1368 = vld [vmem:[#allocation13 + $0x2d0] sm:$0xff]
    %v1369 = vld [vmem:[#allocation13 + $0x2d8] sm:$0xff]
    %v1370 = vld [vmem:[#allocation13 + $0x2e0] sm:$0xff]
    %v1371 = vld [vmem:[#allocation13 + $0x2e8] sm:$0xff]
    %v1372 = vld [vmem:[#allocation13 + $0x2f0] sm:$0xff]
    %v1373 = vld [vmem:[#allocation13 + $0x2f8] sm:$0xff]
    %v1386 = vunpack.c.l.b16 %v1266
    %v1387 = vunpack.c.h.b16 %v1266
    %v1388 = vunpack.c.l.b16 %v1267
    %v1389 = vunpack.c.h.b16 %v1267
    %v1390 = vunpack.c.l.b16 %v1268
    %v1391 = vunpack.c.h.b16 %v1268
    %v1392 = vunpack.c.l.b16 %v1269
    %v1393 = vunpack.c.h.b16 %v1269
    %v1394 = vunpack.c.l.b16 %v1270
    %v1395 = vunpack.c.h.b16 %v1270
    %v1396 = vunpack.c.l.b16 %v1271
    %v1397 = vunpack.c.h.b16 %v1271
    %v1398 = vunpack.c.l.b16 %v1272
    %v1399 = vunpack.c.h.b16 %v1272
    %v1400 = vunpack.c.l.b16 %v1273
    %v1401 = vunpack.c.h.b16 %v1273
    %v1402 = vunpack.c.l.b16 %v1274
    %v1403 = vunpack.c.h.b16 %v1274
    %v1404 = vunpack.c.l.b16 %v1275
    %v1405 = vunpack.c.h.b16 %v1275
    %v1406 = vunpack.c.l.b16 %v1276
    %v1407 = vunpack.c.h.b16 %v1276
    %v1408 = vunpack.c.l.b16 %v1277
    %v1409 = vunpack.c.h.b16 %v1277
    %v1410 = vpack.c.b16 %v1392, %v1386
    %v1411 = vpack.c.b16 %v1393, %v1387
    %v1412 = vpack.c.b16 %v1394, %v1388
    %v1413 = vpack.c.b16 %v1395, %v1389
    %v1414 = vpack.c.b16 %v1396, %v1390
    %v1415 = vpack.c.b16 %v1397, %v1391
    %v1416 = vpack.c.b16 %v1404, %v1398
    %v1417 = vpack.c.b16 %v1405, %v1399
    %v1418 = vpack.c.b16 %v1406, %v1400
    %v1419 = vpack.c.b16 %v1407, %v1401
    %v1420 = vpack.c.b16 %v1408, %v1402
    %v1421 = vpack.c.b16 %v1409, %v1403
    %v1530 = vunpack.c.l.b16 %v1278
    %v1531 = vunpack.c.h.b16 %v1278
    %v1532 = vunpack.c.l.b16 %v1279
    %v1533 = vunpack.c.h.b16 %v1279
    %v1534 = vunpack.c.l.b16 %v1280
    %v1535 = vunpack.c.h.b16 %v1280
    %v1536 = vunpack.c.l.b16 %v1281
    %v1537 = vunpack.c.h.b16 %v1281
    %v1538 = vunpack.c.l.b16 %v1282
    %v1539 = vunpack.c.h.b16 %v1282
    %v1540 = vunpack.c.l.b16 %v1283
    %v1541 = vunpack.c.h.b16 %v1283
    %v1542 = vunpack.c.l.b16 %v1284
    %v1543 = vunpack.c.h.b16 %v1284
    %v1544 = vunpack.c.l.b16 %v1285
    %v1545 = vunpack.c.h.b16 %v1285
    %v1546 = vunpack.c.l.b16 %v1286
    %v1547 = vunpack.c.h.b16 %v1286
    %v1548 = vunpack.c.l.b16 %v1287
    %v1549 = vunpack.c.h.b16 %v1287
    %v1550 = vunpack.c.l.b16 %v1288
    %v1551 = vunpack.c.h.b16 %v1288
    %v1552 = vunpack.c.l.b16 %v1289
    %v1553 = vunpack.c.h.b16 %v1289
    %v1554 = vunpack.c.l.b16 %v1290
    %v1555 = vunpack.c.h.b16 %v1290
    %v1556 = vunpack.c.l.b16 %v1291
    %v1557 = vunpack.c.h.b16 %v1291
    %v1558 = vunpack.c.l.b16 %v1292
    %v1559 = vunpack.c.h.b16 %v1292
    %v1560 = vunpack.c.l.b16 %v1293
    %v1561 = vunpack.c.h.b16 %v1293
    %v1562 = vunpack.c.l.b16 %v1294
    %v1563 = vunpack.c.h.b16 %v1294
    %v1564 = vunpack.c.l.b16 %v1295
    %v1565 = vunpack.c.h.b16 %v1295
    %v1566 = vunpack.c.l.b16 %v1296
    %v1567 = vunpack.c.h.b16 %v1296
    %v1568 = vunpack.c.l.b16 %v1297
    %v1569 = vunpack.c.h.b16 %v1297
    %v1570 = vunpack.c.l.b16 %v1298
    %v1571 = vunpack.c.h.b16 %v1298
    %v1572 = vunpack.c.l.b16 %v1299
    %v1573 = vunpack.c.h.b16 %v1299
    %v1574 = vunpack.c.l.b16 %v1300
    %v1575 = vunpack.c.h.b16 %v1300
    %v1576 = vunpack.c.l.b16 %v1301
    %v1577 = vunpack.c.h.b16 %v1301
    %v1578 = vunpack.c.l.b16 %v1302
    %v1579 = vunpack.c.h.b16 %v1302
    %v1580 = vunpack.c.l.b16 %v1303
    %v1581 = vunpack.c.h.b16 %v1303
    %v1582 = vunpack.c.l.b16 %v1304
    %v1583 = vunpack.c.h.b16 %v1304
    %v1584 = vunpack.c.l.b16 %v1305
    %v1585 = vunpack.c.h.b16 %v1305
    %v1586 = vunpack.c.l.b16 %v1306
    %v1587 = vunpack.c.h.b16 %v1306
    %v1588 = vunpack.c.l.b16 %v1307
    %v1589 = vunpack.c.h.b16 %v1307
    %v1590 = vunpack.c.l.b16 %v1308
    %v1591 = vunpack.c.h.b16 %v1308
    %v1592 = vunpack.c.l.b16 %v1309
    %v1593 = vunpack.c.h.b16 %v1309
    %v1594 = vunpack.c.l.b16 %v1310
    %v1595 = vunpack.c.h.b16 %v1310
    %v1596 = vunpack.c.l.b16 %v1311
    %v1597 = vunpack.c.h.b16 %v1311
    %v1598 = vunpack.c.l.b16 %v1312
    %v1599 = vunpack.c.h.b16 %v1312
    %v1600 = vunpack.c.l.b16 %v1313
    %v1601 = vunpack.c.h.b16 %v1313
    %v1602 = vunpack.c.l.b16 %v1314
    %v1603 = vunpack.c.h.b16 %v1314
    %v1604 = vunpack.c.l.b16 %v1315
    %v1605 = vunpack.c.h.b16 %v1315
    %v1606 = vunpack.c.l.b16 %v1316
    %v1607 = vunpack.c.h.b16 %v1316
    %v1608 = vunpack.c.l.b16 %v1317
    %v1609 = vunpack.c.h.b16 %v1317
    %v1610 = vunpack.c.l.b16 %v1318
    %v1611 = vunpack.c.h.b16 %v1318
    %v1612 = vunpack.c.l.b16 %v1319
    %v1613 = vunpack.c.h.b16 %v1319
    %v1614 = vunpack.c.l.b16 %v1320
    %v1615 = vunpack.c.h.b16 %v1320
    %v1616 = vunpack.c.l.b16 %v1321
    %v1617 = vunpack.c.h.b16 %v1321
    %v1618 = vunpack.c.l.b16 %v1322
    %v1619 = vunpack.c.h.b16 %v1322
    %v1620 = vunpack.c.l.b16 %v1323
    %v1621 = vunpack.c.h.b16 %v1323
    %v1622 = vunpack.c.l.b16 %v1324
    %v1623 = vunpack.c.h.b16 %v1324
    %v1624 = vunpack.c.l.b16 %v1325
    %v1625 = vunpack.c.h.b16 %v1325
    %v1626 = vunpack.c.l.b16 %v1326
    %v1627 = vunpack.c.h.b16 %v1326
    %v1628 = vunpack.c.l.b16 %v1327
    %v1629 = vunpack.c.h.b16 %v1327
    %v1630 = vunpack.c.l.b16 %v1328
    %v1631 = vunpack.c.h.b16 %v1328
    %v1632 = vunpack.c.l.b16 %v1329
    %v1633 = vunpack.c.h.b16 %v1329
    %v1634 = vunpack.c.l.b16 %v1330
    %v1635 = vunpack.c.h.b16 %v1330
    %v1636 = vunpack.c.l.b16 %v1331
    %v1637 = vunpack.c.h.b16 %v1331
    %v1638 = vunpack.c.l.b16 %v1332
    %v1639 = vunpack.c.h.b16 %v1332
    %v1640 = vunpack.c.l.b16 %v1333
    %v1641 = vunpack.c.h.b16 %v1333
    %v1642 = vunpack.c.l.b16 %v1334
    %v1643 = vunpack.c.h.b16 %v1334
    %v1644 = vunpack.c.l.b16 %v1335
    %v1645 = vunpack.c.h.b16 %v1335
    %v1646 = vunpack.c.l.b16 %v1336
    %v1647 = vunpack.c.h.b16 %v1336
    %v1648 = vunpack.c.l.b16 %v1337
    %v1649 = vunpack.c.h.b16 %v1337
    %v1650 = vunpack.c.l.b16 %v1338
    %v1651 = vunpack.c.h.b16 %v1338
    %v1652 = vunpack.c.l.b16 %v1339
    %v1653 = vunpack.c.h.b16 %v1339
    %v1654 = vunpack.c.l.b16 %v1340
    %v1655 = vunpack.c.h.b16 %v1340
    %v1656 = vunpack.c.l.b16 %v1341
    %v1657 = vunpack.c.h.b16 %v1341
    %v1658 = vunpack.c.l.b16 %v1342
    %v1659 = vunpack.c.h.b16 %v1342
    %v1660 = vunpack.c.l.b16 %v1343
    %v1661 = vunpack.c.h.b16 %v1343
    %v1662 = vunpack.c.l.b16 %v1344
    %v1663 = vunpack.c.h.b16 %v1344
    %v1664 = vunpack.c.l.b16 %v1345
    %v1665 = vunpack.c.h.b16 %v1345
    %v1666 = vunpack.c.l.b16 %v1346
    %v1667 = vunpack.c.h.b16 %v1346
    %v1668 = vunpack.c.l.b16 %v1347
    %v1669 = vunpack.c.h.b16 %v1347
    %v1670 = vunpack.c.l.b16 %v1348
    %v1671 = vunpack.c.h.b16 %v1348
    %v1672 = vunpack.c.l.b16 %v1349
    %v1673 = vunpack.c.h.b16 %v1349
    %v1674 = vunpack.c.l.b16 %v1350
    %v1675 = vunpack.c.h.b16 %v1350
    %v1676 = vunpack.c.l.b16 %v1351
    %v1677 = vunpack.c.h.b16 %v1351
    %v1678 = vunpack.c.l.b16 %v1352
    %v1679 = vunpack.c.h.b16 %v1352
    %v1680 = vunpack.c.l.b16 %v1353
    %v1681 = vunpack.c.h.b16 %v1353
    %v1682 = vunpack.c.l.b16 %v1354
    %v1683 = vunpack.c.h.b16 %v1354
    %v1684 = vunpack.c.l.b16 %v1355
    %v1685 = vunpack.c.h.b16 %v1355
    %v1686 = vunpack.c.l.b16 %v1356
    %v1687 = vunpack.c.h.b16 %v1356
    %v1688 = vunpack.c.l.b16 %v1357
    %v1689 = vunpack.c.h.b16 %v1357
    %v1690 = vunpack.c.l.b16 %v1358
    %v1691 = vunpack.c.h.b16 %v1358
    %v1692 = vunpack.c.l.b16 %v1359
    %v1693 = vunpack.c.h.b16 %v1359
    %v1694 = vunpack.c.l.b16 %v1360
    %v1695 = vunpack.c.h.b16 %v1360
    %v1696 = vunpack.c.l.b16 %v1361
    %v1697 = vunpack.c.h.b16 %v1361
    %v1698 = vunpack.c.l.b16 %v1362
    %v1699 = vunpack.c.h.b16 %v1362
    %v1700 = vunpack.c.l.b16 %v1363
    %v1701 = vunpack.c.h.b16 %v1363
    %v1702 = vunpack.c.l.b16 %v1364
    %v1703 = vunpack.c.h.b16 %v1364
    %v1704 = vunpack.c.l.b16 %v1365
    %v1705 = vunpack.c.h.b16 %v1365
    %v1706 = vunpack.c.l.b16 %v1366
    %v1707 = vunpack.c.h.b16 %v1366
    %v1708 = vunpack.c.l.b16 %v1367
    %v1709 = vunpack.c.h.b16 %v1367
    %v1710 = vunpack.c.l.b16 %v1368
    %v1711 = vunpack.c.h.b16 %v1368
    %v1712 = vunpack.c.l.b16 %v1369
    %v1713 = vunpack.c.h.b16 %v1369
    %v1714 = vunpack.c.l.b16 %v1370
    %v1715 = vunpack.c.h.b16 %v1370
    %v1716 = vunpack.c.l.b16 %v1371
    %v1717 = vunpack.c.h.b16 %v1371
    %v1718 = vunpack.c.l.b16 %v1372
    %v1719 = vunpack.c.h.b16 %v1372
    %v1720 = vunpack.c.l.b16 %v1373
    %v1721 = vunpack.c.h.b16 %v1373
    %v1722 = vpack.c.b16 %v1532, %v1530
    %v1723 = vpack.c.b16 %v1533, %v1531
    %v1724 = vpack.c.b16 %v1536, %v1534
    %v1725 = vpack.c.b16 %v1537, %v1535
    %v1726 = vpack.c.b16 %v1540, %v1538
    %v1727 = vpack.c.b16 %v1541, %v1539
    %v1728 = vpack.c.b16 %v1544, %v1542
    %v1729 = vpack.c.b16 %v1545, %v1543
    %v1730 = vpack.c.b16 %v1548, %v1546
    %v1731 = vpack.c.b16 %v1549, %v1547
    %v1732 = vpack.c.b16 %v1552, %v1550
    %v1733 = vpack.c.b16 %v1553, %v1551
    %v1734 = vpack.c.b16 %v1556, %v1554
    %v1735 = vpack.c.b16 %v1557, %v1555
    %v1736 = vpack.c.b16 %v1560, %v1558
    %v1737 = vpack.c.b16 %v1561, %v1559
    %v1738 = vpack.c.b16 %v1564, %v1562
    %v1739 = vpack.c.b16 %v1565, %v1563
    %v1740 = vpack.c.b16 %v1568, %v1566
    %v1741 = vpack.c.b16 %v1569, %v1567
    %v1742 = vpack.c.b16 %v1572, %v1570
    %v1743 = vpack.c.b16 %v1573, %v1571
    %v1744 = vpack.c.b16 %v1576, %v1574
    %v1745 = vpack.c.b16 %v1577, %v1575
    %v1746 = vpack.c.b16 %v1580, %v1578
    %v1747 = vpack.c.b16 %v1581, %v1579
    %v1748 = vpack.c.b16 %v1584, %v1582
    %v1749 = vpack.c.b16 %v1585, %v1583
    %v1750 = vpack.c.b16 %v1588, %v1586
    %v1751 = vpack.c.b16 %v1589, %v1587
    %v1752 = vpack.c.b16 %v1592, %v1590
    %v1753 = vpack.c.b16 %v1593, %v1591
    %v1754 = vpack.c.b16 %v1596, %v1594
    %v1755 = vpack.c.b16 %v1597, %v1595
    %v1756 = vpack.c.b16 %v1600, %v1598
    %v1757 = vpack.c.b16 %v1601, %v1599
    %v1758 = vpack.c.b16 %v1604, %v1602
    %v1759 = vpack.c.b16 %v1605, %v1603
    %v1760 = vpack.c.b16 %v1608, %v1606
    %v1761 = vpack.c.b16 %v1609, %v1607
    %v1762 = vpack.c.b16 %v1612, %v1610
    %v1763 = vpack.c.b16 %v1613, %v1611
    %v1764 = vpack.c.b16 %v1616, %v1614
    %v1765 = vpack.c.b16 %v1617, %v1615
    %v1766 = vpack.c.b16 %v1620, %v1618
    %v1767 = vpack.c.b16 %v1621, %v1619
    %v1768 = vpack.c.b16 %v1624, %v1622
    %v1769 = vpack.c.b16 %v1625, %v1623
    %v1770 = vpack.c.b16 %v1628, %v1626
    %v1771 = vpack.c.b16 %v1629, %v1627
    %v1772 = vpack.c.b16 %v1632, %v1630
    %v1773 = vpack.c.b16 %v1633, %v1631
    %v1774 = vpack.c.b16 %v1636, %v1634
    %v1775 = vpack.c.b16 %v1637, %v1635
    %v1776 = vpack.c.b16 %v1640, %v1638
    %v1777 = vpack.c.b16 %v1641, %v1639
    %v1778 = vpack.c.b16 %v1644, %v1642
    %v1779 = vpack.c.b16 %v1645, %v1643
    %v1780 = vpack.c.b16 %v1648, %v1646
    %v1781 = vpack.c.b16 %v1649, %v1647
    %v1782 = vpack.c.b16 %v1652, %v1650
    %v1783 = vpack.c.b16 %v1653, %v1651
    %v1784 = vpack.c.b16 %v1656, %v1654
    %v1785 = vpack.c.b16 %v1657, %v1655
    %v1786 = vpack.c.b16 %v1660, %v1658
    %v1787 = vpack.c.b16 %v1661, %v1659
    %v1788 = vpack.c.b16 %v1664, %v1662
    %v1789 = vpack.c.b16 %v1665, %v1663
    %v1790 = vpack.c.b16 %v1668, %v1666
    %v1791 = vpack.c.b16 %v1669, %v1667
    %v1792 = vpack.c.b16 %v1672, %v1670
    %v1793 = vpack.c.b16 %v1673, %v1671
    %v1794 = vpack.c.b16 %v1676, %v1674
    %v1795 = vpack.c.b16 %v1677, %v1675
    %v1796 = vpack.c.b16 %v1680, %v1678
    %v1797 = vpack.c.b16 %v1681, %v1679
    %v1798 = vpack.c.b16 %v1684, %v1682
    %v1799 = vpack.c.b16 %v1685, %v1683
    %v1800 = vpack.c.b16 %v1688, %v1686
    %v1801 = vpack.c.b16 %v1689, %v1687
    %v1802 = vpack.c.b16 %v1692, %v1690
    %v1803 = vpack.c.b16 %v1693, %v1691
    %v1804 = vpack.c.b16 %v1696, %v1694
    %v1805 = vpack.c.b16 %v1697, %v1695
    %v1806 = vpack.c.b16 %v1700, %v1698
    %v1807 = vpack.c.b16 %v1701, %v1699
    %v1808 = vpack.c.b16 %v1704, %v1702
    %v1809 = vpack.c.b16 %v1705, %v1703
    %v1810 = vpack.c.b16 %v1708, %v1706
    %v1811 = vpack.c.b16 %v1709, %v1707
    %v1812 = vpack.c.b16 %v1712, %v1710
    %v1813 = vpack.c.b16 %v1713, %v1711
    %v1814 = vpack.c.b16 %v1716, %v1714
    %v1815 = vpack.c.b16 %v1717, %v1715
    %v1816 = vpack.c.b16 %v1720, %v1718
    %v1817 = vpack.c.b16 %v1721, %v1719
    %1914 = vmatprep.subr.bf16.mxu0 %v1737
    %1915 = vmatpush1.bf16.msra.mxu0 %v1736
    %1916 = vmatprep.subr.bf16.mxu0 %v1735
    %1917 = vmatpush1.bf16.msra.mxu0 %v1734
    %1918 = vmatprep.subr.bf16.mxu0 %v1733
    %1919 = vmatpush1.bf16.msra.mxu0 %v1732
    %1920 = vmatprep.subr.bf16.mxu0 %v1731
    %1921 = vmatpush1.bf16.msra.mxu0 %v1730
    %1922 = vmatprep.subr.bf16.mxu0 %v1729
    %1923 = vmatpush1.bf16.msra.mxu0 %v1728
    %1924 = vmatprep.subr.bf16.mxu0 %v1727
    %1925 = vmatpush1.bf16.msra.mxu0 %v1726
    %1926 = vmatprep.subr.bf16.mxu0 %v1725
    %1927 = vmatpush1.bf16.msra.mxu0 %v1724
    %1928 = vmatprep.subr.bf16.mxu0 %v1723
    %1929 = vmatpush1.bf16.msra.mxu0 %v1722
    %1930 = vmatprep.subr.bf16.mxu0 %v1753
    %1931 = vmatpush2.bf16.msra.mxu0 %v1752
    %1932 = vmatprep.subr.bf16.mxu0 %v1751
    %1933 = vmatpush2.bf16.msra.mxu0 %v1750
    %1934 = vmatprep.subr.bf16.mxu0 %v1749
    %1935 = vmatpush2.bf16.msra.mxu0 %v1748
    %1936 = vmatprep.subr.bf16.mxu0 %v1747
    %1937 = vmatpush2.bf16.msra.mxu0 %v1746
    %1938 = vmatprep.subr.bf16.mxu0 %v1745
    %1939 = vmatpush2.bf16.msra.mxu0 %v1744
    %1940 = vmatprep.subr.bf16.mxu0 %v1743
    %1941 = vmatpush2.bf16.msra.mxu0 %v1742
    %1942 = vmatprep.subr.bf16.mxu0 %v1741
    %1943 = vmatpush2.bf16.msra.mxu0 %v1740
    %1944 = vmatprep.subr.bf16.mxu0 %v1739
    %1945 = vmatpush2.bf16.msra.mxu0 %v1738
    %1946 = vmatprep.mubr.bf16.mxu0 %v1411
    %1947 = vmatmul.mubr.bf16.gmra.mxu0 %v1410
    %v1948 = vpop.f32.mrf.mxu0
    %v1949 = vadd.f32 0.0, %v1948
    %v1950 = vpop.f32.mrf.mxu0
    %v1951 = vadd.f32 0.0, %v1950
    %v1952 = vpop.f32.mrf.mxu0
    %v1953 = vadd.f32 0.0, %v1952
    %v1954 = vpop.f32.mrf.mxu0
    %v1955 = vadd.f32 0.0, %v1954
    %1956 = vmatprep.mubr.bf16.mxu0 %v1417
    %1957 = vmatmul.mubr.bf16.gmra.mxu0 %v1416
    %v1958 = vpop.f32.mrf.mxu0
    %v1959 = vadd.f32 0.0, %v1958
    %v1960 = vpop.f32.mrf.mxu0
    %v1961 = vadd.f32 0.0, %v1960
    %v1962 = vpop.f32.mrf.mxu0
    %v1963 = vadd.f32 0.0, %v1962
    %v1964 = vpop.f32.mrf.mxu0
    %v1965 = vadd.f32 0.0, %v1964
    %1966 = vdwg.mxu0
    %1967 = vmatprep.subr.bf16.mxu0 %v1769
    %1968 = vmatpush1.bf16.msra.mxu0 %v1768
    %1969 = vmatprep.subr.bf16.mxu0 %v1767
    %1970 = vmatpush1.bf16.msra.mxu0 %v1766
    %1971 = vmatprep.subr.bf16.mxu0 %v1765
    %1972 = vmatpush1.bf16.msra.mxu0 %v1764
    %1973 = vmatprep.subr.bf16.mxu0 %v1763
    %1974 = vmatpush1.bf16.msra.mxu0 %v1762
    %1975 = vmatprep.subr.bf16.mxu0 %v1761
    %1976 = vmatpush1.bf16.msra.mxu0 %v1760
    %1977 = vmatprep.subr.bf16.mxu0 %v1759
    %1978 = vmatpush1.bf16.msra.mxu0 %v1758
    %1979 = vmatprep.subr.bf16.mxu0 %v1757
    %1980 = vmatpush1.bf16.msra.mxu0 %v1756
    %1981 = vmatprep.subr.bf16.mxu0 %v1755
    %1982 = vmatpush1.bf16.msra.mxu0 %v1754
    %1983 = vmatprep.subr.bf16.mxu0 %v1785
    %1984 = vmatpush2.bf16.msra.mxu0 %v1784
    %1985 = vmatprep.subr.bf16.mxu0 %v1783
    %1986 = vmatpush2.bf16.msra.mxu0 %v1782
    %1987 = vmatprep.subr.bf16.mxu0 %v1781
    %1988 = vmatpush2.bf16.msra.mxu0 %v1780
    %1989 = vmatprep.subr.bf16.mxu0 %v1779
    %1990 = vmatpush2.bf16.msra.mxu0 %v1778
    %1991 = vmatprep.subr.bf16.mxu0 %v1777
    %1992 = vmatpush2.bf16.msra.mxu0 %v1776
    %1993 = vmatprep.subr.bf16.mxu0 %v1775
    %1994 = vmatpush2.bf16.msra.mxu0 %v1774
    %1995 = vmatprep.subr.bf16.mxu0 %v1773
    %1996 = vmatpush2.bf16.msra.mxu0 %v1772
    %1997 = vmatprep.subr.bf16.mxu0 %v1771
    %1998 = vmatpush2.bf16.msra.mxu0 %v1770
    %1999 = vmatprep.mubr.bf16.mxu0 %v1413
    %2000 = vmatmul.mubr.bf16.gmra.mxu0 %v1412
    %v2001 = vpop.f32.mrf.mxu0
    %v2002 = vadd.f32 %v1949, %v2001
    %v2003 = vpop.f32.mrf.mxu0
    %v2004 = vadd.f32 %v1951, %v2003
    %v2005 = vpop.f32.mrf.mxu0
    %v2006 = vadd.f32 %v1953, %v2005
    %v2007 = vpop.f32.mrf.mxu0
    %v2008 = vadd.f32 %v1955, %v2007
    %2009 = vmatprep.mubr.bf16.mxu0 %v1419
    %2010 = vmatmul.mubr.bf16.gmra.mxu0 %v1418
    %v2011 = vpop.f32.mrf.mxu0
    %v2012 = vadd.f32 %v1959, %v2011
    %v2013 = vpop.f32.mrf.mxu0
    %v2014 = vadd.f32 %v1961, %v2013
    %v2015 = vpop.f32.mrf.mxu0
    %v2016 = vadd.f32 %v1963, %v2015
    %v2017 = vpop.f32.mrf.mxu0
    %v2018 = vadd.f32 %v1965, %v2017
    %2019 = vdwg.mxu0
    %2020 = vmatprep.subr.bf16.mxu0 %v1801
    %2021 = vmatpush1.bf16.msra.mxu0 %v1800
    %2022 = vmatprep.subr.bf16.mxu0 %v1799
    %2023 = vmatpush1.bf16.msra.mxu0 %v1798
    %2024 = vmatprep.subr.bf16.mxu0 %v1797
    %2025 = vmatpush1.bf16.msra.mxu0 %v1796
    %2026 = vmatprep.subr.bf16.mxu0 %v1795
    %2027 = vmatpush1.bf16.msra.mxu0 %v1794
    %2028 = vmatprep.subr.bf16.mxu0 %v1793
    %2029 = vmatpush1.bf16.msra.mxu0 %v1792
    %2030 = vmatprep.subr.bf16.mxu0 %v1791
    %2031 = vmatpush1.bf16.msra.mxu0 %v1790
    %2032 = vmatprep.subr.bf16.mxu0 %v1789
    %2033 = vmatpush1.bf16.msra.mxu0 %v1788
    %2034 = vmatprep.subr.bf16.mxu0 %v1787
    %2035 = vmatpush1.bf16.msra.mxu0 %v1786
    %2036 = vmatprep.subr.bf16.mxu0 %v1817
    %2037 = vmatpush2.bf16.msra.mxu0 %v1816
    %2038 = vmatprep.subr.bf16.mxu0 %v1815
    %2039 = vmatpush2.bf16.msra.mxu0 %v1814
    %2040 = vmatprep.subr.bf16.mxu0 %v1813
    %2041 = vmatpush2.bf16.msra.mxu0 %v1812
    %2042 = vmatprep.subr.bf16.mxu0 %v1811
    %2043 = vmatpush2.bf16.msra.mxu0 %v1810
    %2044 = vmatprep.subr.bf16.mxu0 %v1809
    %2045 = vmatpush2.bf16.msra.mxu0 %v1808
    %2046 = vmatprep.subr.bf16.mxu0 %v1807
    %2047 = vmatpush2.bf16.msra.mxu0 %v1806
    %2048 = vmatprep.subr.bf16.mxu0 %v1805
    %2049 = vmatpush2.bf16.msra.mxu0 %v1804
    %2050 = vmatprep.subr.bf16.mxu0 %v1803
    %2051 = vmatpush2.bf16.msra.mxu0 %v1802
    %2052 = vmatprep.mubr.bf16.mxu0 %v1415
    %2053 = vmatmul.mubr.bf16.gmra.mxu0 %v1414
    %v2054 = vpop.f32.mrf.mxu0
    %v2055 = vadd.f32 %v2002, %v2054
    %v2056 = vpop.f32.mrf.mxu0
    %v2057 = vadd.f32 %v2004, %v2056
    %v2058 = vpop.f32.mrf.mxu0
    %v2059 = vadd.f32 %v2006, %v2058
    %v2060 = vpop.f32.mrf.mxu0
    %v2061 = vadd.f32 %v2008, %v2060
    %2062 = vmatprep.mubr.bf16.mxu0 %v1421
    %2063 = vmatmul.mubr.bf16.gmra.mxu0 %v1420
    %v2064 = vpop.f32.mrf.mxu0
    %v2065 = vadd.f32 %v2012, %v2064
    %v2066 = vpop.f32.mrf.mxu0
    %v2067 = vadd.f32 %v2014, %v2066
    %v2068 = vpop.f32.mrf.mxu0
    %v2069 = vadd.f32 %v2016, %v2068
    %v2070 = vpop.f32.mrf.mxu0
    %v2071 = vadd.f32 %v2018, %v2070
    %2072 = vdwg.mxu0
    %v2073 = vmax.f32 %v2055, %v2057
    %v2074 = vmax.f32 %v2059, %v2061
    %v2075 = vmax.f32 %v2065, %v2067
    %v2076 = vmax.f32 %v2069, %v2071
    %v2077 = vmax.f32 %v2073, %v2075
    %v2078 = vmax.f32 %v2074, %v2076
    %v2079 = vld [vmem:[#allocation14] sm:$0x1]
    %v2081 = vlaneseq
    %v2082 = vshrl.u32 %v2081, 7
    %v2083 = vsub.s32 0, %v2082
    %v2084 = vrot.slane %v2079, %v2083
    %v2086 = vadd.f32 %v2077, %v2084
    %v2087 = vadd.f32 %v2078, %v2084
    %v2088 = vmax.f32 %v2086, 0.0
    %v2089 = vmax.f32 %v2087, 0.0
    %2090 = vst [vmem:[#allocation5] sm:$0xff] %v2088
    %2091 = vst [vmem:[#allocation5 + $0x8] sm:$0xff] %v2089
    %v2092 = vld [vmem:[#allocation5] sm:$0xf]
    %v2093 = vpack.c.bf16 %v2092, %v2092
    %2094 = vst [vmem:[#allocation6] sm:$0x3] %v2093
    %v2095 = vld [vmem:[#allocation5 + $0x4] sm:$0xf]
    %v2096 = vpack.c.bf16 %v2095, %v2095
    %2097 = vst [vmem:[#allocation6 + $0x2] sm:$0x3] %v2096
    %v2098 = vld [vmem:[#allocation5 + $0x8] sm:$0xf]
    %v2099 = vpack.c.bf16 %v2098, %v2098
    %2100 = vst [vmem:[#allocation6 + $0x4] sm:$0x3] %v2099
    %v2101 = vld [vmem:[#allocation5 + $0xc] sm:$0xf]
    %v2102 = vpack.c.bf16 %v2101, %v2101
    %2103 = vst [vmem:[#allocation6 + $0x6] sm:$0x3] %v2102
    %v2104 = vld [vmem:[#allocation6] sm:$0xff]
    %v2105 = vld [vmem:[%s5] sm:$0xf]
    %v2106 = vld [vmem:[%s5 + $0x4] sm:$0xf]
    %v2107 = vld [vmem:[%s5 + $0x8] sm:$0xf]
    %v2108 = vld [vmem:[%s5 + $0xc] sm:$0xf]
    %v2109 = vld [vmem:[%s5 + $0x10] sm:$0xf]
    %v2110 = vld [vmem:[%s5 + $0x14] sm:$0xf]
    %v2111 = vld [vmem:[%s5 + $0x18] sm:$0xf]
    %v2112 = vld [vmem:[%s5 + $0x1c] sm:$0xf]
    %v2113 = vld [vmem:[%s5 + $0x20] sm:$0xf]
    %v2114 = vld [vmem:[%s5 + $0x24] sm:$0xf]
    %v2115 = vld [vmem:[%s5 + $0x28] sm:$0xf]
    %v2116 = vld [vmem:[%s5 + $0x2c] sm:$0xf]
    %v2117 = vld [vmem:[%s5 + $0x30] sm:$0xf]
    %v2118 = vld [vmem:[%s5 + $0x34] sm:$0xf]
    %v2119 = vld [vmem:[%s5 + $0x38] sm:$0xf]
    %v2120 = vld [vmem:[%s5 + $0x3c] sm:$0xf]
    %v2121 = vld [vmem:[%s5 + $0x40] sm:$0xf]
    %v2122 = vld [vmem:[%s5 + $0x44] sm:$0xf]
    %v2123 = vld [vmem:[%s5 + $0x48] sm:$0xf]
    %v2124 = vld [vmem:[%s5 + $0x4c] sm:$0xf]
    %v2125 = vld [vmem:[%s5 + $0x50] sm:$0xf]
    %v2126 = vld [vmem:[%s5 + $0x54] sm:$0xf]
    %v2127 = vld [vmem:[%s5 + $0x58] sm:$0xf]
    %v2128 = vld [vmem:[%s5 + $0x5c] sm:$0xf]
    %v2129 = vld [vmem:[%s5 + $0x60] sm:$0xf]
    %v2130 = vld [vmem:[%s5 + $0x64] sm:$0xf]
    %v2131 = vld [vmem:[%s5 + $0x68] sm:$0xf]
    %v2132 = vld [vmem:[%s5 + $0x6c] sm:$0xf]
    %v2133 = vld [vmem:[%s5 + $0x70] sm:$0xf]
    %v2134 = vld [vmem:[%s5 + $0x74] sm:$0xf]
    %v2135 = vld [vmem:[%s5 + $0x78] sm:$0xf]
    %v2136 = vld [vmem:[%s5 + $0x7c] sm:$0xf]
    %v2137 = vld [vmem:[%s5 + $0x80] sm:$0xf]
    %v2138 = vld [vmem:[%s5 + $0x84] sm:$0xf]
    %v2139 = vld [vmem:[%s5 + $0x88] sm:$0xf]
    %v2140 = vld [vmem:[%s5 + $0x8c] sm:$0xf]
    %v2141 = vld [vmem:[%s5 + $0x90] sm:$0xf]
    %v2142 = vld [vmem:[%s5 + $0x94] sm:$0xf]
    %v2143 = vld [vmem:[%s5 + $0x98] sm:$0xf]
    %v2144 = vld [vmem:[%s5 + $0x9c] sm:$0xf]
    %v2145 = vld [vmem:[%s5 + $0xa0] sm:$0xf]
    %v2146 = vld [vmem:[%s5 + $0xa4] sm:$0xf]
    %v2147 = vld [vmem:[%s5 + $0xa8] sm:$0xf]
    %v2148 = vld [vmem:[%s5 + $0xac] sm:$0xf]
    %v2149 = vld [vmem:[%s5 + $0xb0] sm:$0xf]
    %v2150 = vld [vmem:[%s5 + $0xb4] sm:$0xf]
    %v2151 = vld [vmem:[%s5 + $0xb8] sm:$0xf]
    %v2152 = vld [vmem:[%s5 + $0xbc] sm:$0xf]
    %v2153 = vld [vmem:[%s5 + $0xc0] sm:$0xf]
    %v2154 = vld [vmem:[%s5 + $0xc4] sm:$0xf]
    %v2155 = vld [vmem:[%s5 + $0xc8] sm:$0xf]
    %v2156 = vld [vmem:[%s5 + $0xcc] sm:$0xf]
    %v2157 = vld [vmem:[%s5 + $0xd0] sm:$0xf]
    %v2158 = vld [vmem:[%s5 + $0xd4] sm:$0xf]
    %v2159 = vld [vmem:[%s5 + $0xd8] sm:$0xf]
    %v2160 = vld [vmem:[%s5 + $0xdc] sm:$0xf]
    %v2161 = vld [vmem:[%s5 + $0xe0] sm:$0xf]
    %v2162 = vld [vmem:[%s5 + $0xe4] sm:$0xf]
    %v2163 = vld [vmem:[%s5 + $0xe8] sm:$0xf]
    %v2164 = vld [vmem:[%s5 + $0xec] sm:$0xf]
    %v2165 = vld [vmem:[%s5 + $0xf0] sm:$0xf]
    %v2166 = vld [vmem:[%s5 + $0xf4] sm:$0xf]
    %v2167 = vld [vmem:[%s5 + $0xf8] sm:$0xf]
    %v2168 = vld [vmem:[%s5 + $0xfc] sm:$0xf]
    %v2169 = vld [vmem:[%s6] sm:$0x1]
    %v2171 = vlaneseq
    %v2172 = vshrl.u32 %v2171, 7
    %v2173 = vsub.s32 0, %v2172
    %v2174 = vrot.slane %v2169, %v2173
    %v2177 = vcombine.high %v2104, %v2104
    %v2179 = vunpack.c.l.s4 1983009808
    %v2180 = vunpack.c.0.s8 %v2179
    %v2181 = vlaneseq
    %v2182 = vshrl.u32 %v2181, 7
    %v2183 = vsub.s32 %v2180, %v2182
    %v2184 = vrot.slane %v2104, %v2183
    %v2186 = vunpack.c.l.s4 1983009808
    %v2187 = vunpack.c.0.s8 %v2186
    %v2188 = vlaneseq
    %v2189 = vshrl.u32 %v2188, 7
    %v2190 = vsub.s32 %v2187, %v2189
    %v2191 = vrot.slane %v2177, %v2190
    %v2192 = vcombine.high %v2184, %v2184
    %v2193 = vcombine.high %v2191, %v2191
    %v2262 = vunpack.c.l.b16 %v2105
    %v2263 = vunpack.c.l.b16 %v2106
    %v2264 = vunpack.c.l.b16 %v2107
    %v2265 = vunpack.c.l.b16 %v2108
    %v2266 = vunpack.c.l.b16 %v2109
    %v2267 = vunpack.c.l.b16 %v2110
    %v2268 = vunpack.c.l.b16 %v2111
    %v2269 = vunpack.c.l.b16 %v2112
    %v2270 = vunpack.c.l.b16 %v2113
    %v2271 = vunpack.c.l.b16 %v2114
    %v2272 = vunpack.c.l.b16 %v2115
    %v2273 = vunpack.c.l.b16 %v2116
    %v2274 = vunpack.c.l.b16 %v2117
    %v2275 = vunpack.c.l.b16 %v2118
    %v2276 = vunpack.c.l.b16 %v2119
    %v2277 = vunpack.c.l.b16 %v2120
    %v2278 = vunpack.c.l.b16 %v2121
    %v2279 = vunpack.c.l.b16 %v2122
    %v2280 = vunpack.c.l.b16 %v2123
    %v2281 = vunpack.c.l.b16 %v2124
    %v2282 = vunpack.c.l.b16 %v2125
    %v2283 = vunpack.c.l.b16 %v2126
    %v2284 = vunpack.c.l.b16 %v2127
    %v2285 = vunpack.c.l.b16 %v2128
    %v2286 = vunpack.c.l.b16 %v2129
    %v2287 = vunpack.c.l.b16 %v2130
    %v2288 = vunpack.c.l.b16 %v2131
    %v2289 = vunpack.c.l.b16 %v2132
    %v2290 = vunpack.c.l.b16 %v2133
    %v2291 = vunpack.c.l.b16 %v2134
    %v2292 = vunpack.c.l.b16 %v2135
    %v2293 = vunpack.c.l.b16 %v2136
    %v2294 = vunpack.c.l.b16 %v2137
    %v2295 = vunpack.c.l.b16 %v2138
    %v2296 = vunpack.c.l.b16 %v2139
    %v2297 = vunpack.c.l.b16 %v2140
    %v2298 = vunpack.c.l.b16 %v2141
    %v2299 = vunpack.c.l.b16 %v2142
    %v2300 = vunpack.c.l.b16 %v2143
    %v2301 = vunpack.c.l.b16 %v2144
    %v2302 = vunpack.c.l.b16 %v2145
    %v2303 = vunpack.c.l.b16 %v2146
    %v2304 = vunpack.c.l.b16 %v2147
    %v2305 = vunpack.c.l.b16 %v2148
    %v2306 = vunpack.c.l.b16 %v2149
    %v2307 = vunpack.c.l.b16 %v2150
    %v2308 = vunpack.c.l.b16 %v2151
    %v2309 = vunpack.c.l.b16 %v2152
    %v2310 = vunpack.c.l.b16 %v2153
    %v2311 = vunpack.c.l.b16 %v2154
    %v2312 = vunpack.c.l.b16 %v2155
    %v2313 = vunpack.c.l.b16 %v2156
    %v2314 = vunpack.c.l.b16 %v2157
    %v2315 = vunpack.c.l.b16 %v2158
    %v2316 = vunpack.c.l.b16 %v2159
    %v2317 = vunpack.c.l.b16 %v2160
    %v2318 = vunpack.c.l.b16 %v2161
    %v2319 = vunpack.c.l.b16 %v2162
    %v2320 = vunpack.c.l.b16 %v2163
    %v2321 = vunpack.c.l.b16 %v2164
    %v2322 = vunpack.c.l.b16 %v2165
    %v2323 = vunpack.c.l.b16 %v2166
    %v2324 = vunpack.c.l.b16 %v2167
    %v2325 = vunpack.c.l.b16 %v2168
    %v2326 = vpack.c.b16 %v2263, %v2262
    %v2327 = vpack.c.b16 %v2265, %v2264
    %v2328 = vpack.c.b16 %v2267, %v2266
    %v2329 = vpack.c.b16 %v2269, %v2268
    %v2330 = vpack.c.b16 %v2271, %v2270
    %v2331 = vpack.c.b16 %v2273, %v2272
    %v2332 = vpack.c.b16 %v2275, %v2274
    %v2333 = vpack.c.b16 %v2277, %v2276
    %v2334 = vpack.c.b16 %v2279, %v2278
    %v2335 = vpack.c.b16 %v2281, %v2280
    %v2336 = vpack.c.b16 %v2283, %v2282
    %v2337 = vpack.c.b16 %v2285, %v2284
    %v2338 = vpack.c.b16 %v2287, %v2286
    %v2339 = vpack.c.b16 %v2289, %v2288
    %v2340 = vpack.c.b16 %v2291, %v2290
    %v2341 = vpack.c.b16 %v2293, %v2292
    %v2342 = vpack.c.b16 %v2295, %v2294
    %v2343 = vpack.c.b16 %v2297, %v2296
    %v2344 = vpack.c.b16 %v2299, %v2298
    %v2345 = vpack.c.b16 %v2301, %v2300
    %v2346 = vpack.c.b16 %v2303, %v2302
    %v2347 = vpack.c.b16 %v2305, %v2304
    %v2348 = vpack.c.b16 %v2307, %v2306
    %v2349 = vpack.c.b16 %v2309, %v2308
    %v2350 = vpack.c.b16 %v2311, %v2310
    %v2351 = vpack.c.b16 %v2313, %v2312
    %v2352 = vpack.c.b16 %v2315, %v2314
    %v2353 = vpack.c.b16 %v2317, %v2316
    %v2354 = vpack.c.b16 %v2319, %v2318
    %v2355 = vpack.c.b16 %v2321, %v2320
    %v2356 = vpack.c.b16 %v2323, %v2322
    %v2357 = vpack.c.b16 %v2325, %v2324
    %2390 = vmatprep.subr.bf16.mxu0 0
    %2391 = vmatpush1.bf16.msra.mxu0 %v2333
    %2392 = vmatprep.subr.bf16.mxu0 0
    %2393 = vmatpush1.bf16.msra.mxu0 %v2332
    %2394 = vmatprep.subr.bf16.mxu0 0
    %2395 = vmatpush1.bf16.msra.mxu0 %v2331
    %2396 = vmatprep.subr.bf16.mxu0 0
    %2397 = vmatpush1.bf16.msra.mxu0 %v2330
    %2398 = vmatprep.subr.bf16.mxu0 0
    %2399 = vmatpush1.bf16.msra.mxu0 %v2329
    %2400 = vmatprep.subr.bf16.mxu0 0
    %2401 = vmatpush1.bf16.msra.mxu0 %v2328
    %2402 = vmatprep.subr.bf16.mxu0 0
    %2403 = vmatpush1.bf16.msra.mxu0 %v2327
    %2404 = vmatprep.subr.bf16.mxu0 0
    %2405 = vmatpush1.bf16.msra.mxu0 %v2326
    %2406 = vmatprep.subr.bf16.mxu0 0
    %2407 = vmatpush2.bf16.msra.mxu0 %v2341
    %2408 = vmatprep.subr.bf16.mxu0 0
    %2409 = vmatpush2.bf16.msra.mxu0 %v2340
    %2410 = vmatprep.subr.bf16.mxu0 0
    %2411 = vmatpush2.bf16.msra.mxu0 %v2339
    %2412 = vmatprep.subr.bf16.mxu0 0
    %2413 = vmatpush2.bf16.msra.mxu0 %v2338
    %2414 = vmatprep.subr.bf16.mxu0 0
    %2415 = vmatpush2.bf16.msra.mxu0 %v2337
    %2416 = vmatprep.subr.bf16.mxu0 0
    %2417 = vmatpush2.bf16.msra.mxu0 %v2336
    %2418 = vmatprep.subr.bf16.mxu0 0
    %2419 = vmatpush2.bf16.msra.mxu0 %v2335
    %2420 = vmatprep.subr.bf16.mxu0 0
    %2421 = vmatpush2.bf16.msra.mxu0 %v2334
    %2422 = vmatprep.mubr.bf16.mxu0 %v2192
    %2423 = vmatmul.mubr.bf16.gmra.mxu0 %v2184
    %v2424 = vpop.f32.mrf.mxu0
    %v2425 = vadd.f32 %v2174, %v2424
    %v2426 = vpop.f32.mrf.mxu0
    %v2427 = vpop.f32.mrf.mxu0
    %v2428 = vpop.f32.mrf.mxu0
    %2429 = vdwg.mxu0
    %2430 = vmatprep.subr.bf16.mxu0 0
    %2431 = vmatpush1.bf16.msra.mxu0 %v2349
    %2432 = vmatprep.subr.bf16.mxu0 0
    %2433 = vmatpush1.bf16.msra.mxu0 %v2348
    %2434 = vmatprep.subr.bf16.mxu0 0
    %2435 = vmatpush1.bf16.msra.mxu0 %v2347
    %2436 = vmatprep.subr.bf16.mxu0 0
    %2437 = vmatpush1.bf16.msra.mxu0 %v2346
    %2438 = vmatprep.subr.bf16.mxu0 0
    %2439 = vmatpush1.bf16.msra.mxu0 %v2345
    %2440 = vmatprep.subr.bf16.mxu0 0
    %2441 = vmatpush1.bf16.msra.mxu0 %v2344
    %2442 = vmatprep.subr.bf16.mxu0 0
    %2443 = vmatpush1.bf16.msra.mxu0 %v2343
    %2444 = vmatprep.subr.bf16.mxu0 0
    %2445 = vmatpush1.bf16.msra.mxu0 %v2342
    %2446 = vmatprep.subr.bf16.mxu0 0
    %2447 = vmatpush2.bf16.msra.mxu0 %v2357
    %2448 = vmatprep.subr.bf16.mxu0 0
    %2449 = vmatpush2.bf16.msra.mxu0 %v2356
    %2450 = vmatprep.subr.bf16.mxu0 0
    %2451 = vmatpush2.bf16.msra.mxu0 %v2355
    %2452 = vmatprep.subr.bf16.mxu0 0
    %2453 = vmatpush2.bf16.msra.mxu0 %v2354
    %2454 = vmatprep.subr.bf16.mxu0 0
    %2455 = vmatpush2.bf16.msra.mxu0 %v2353
    %2456 = vmatprep.subr.bf16.mxu0 0
    %2457 = vmatpush2.bf16.msra.mxu0 %v2352
    %2458 = vmatprep.subr.bf16.mxu0 0
    %2459 = vmatpush2.bf16.msra.mxu0 %v2351
    %2460 = vmatprep.subr.bf16.mxu0 0
    %2461 = vmatpush2.bf16.msra.mxu0 %v2350
    %2462 = vmatprep.mubr.bf16.mxu0 %v2193
    %2463 = vmatmul.mubr.bf16.gmra.mxu0 %v2191
    %v2464 = vpop.f32.mrf.mxu0
    %v2465 = vadd.f32 %v2425, %v2464
    %v2466 = vpop.f32.mrf.mxu0
    %v2467 = vpop.f32.mrf.mxu0
    %v2468 = vpop.f32.mrf.mxu0
    %2469 = vdwg.mxu0
    %vm2470 = vcmask 814080
    %v2471 = vsel %vm2470, %v2465, 0.0
    %v2472 = vrot.slane %v2471, 4
    %v2473 = vadd.f32 %v2471, %v2472
    %v2474 = vrot.slane %v2473, 2
    %v2475 = vadd.f32 %v2473, %v2474
    %v2476 = vrot.slane %v2475, 1
    %v2477 = vadd.f32 %v2475, %v2476
    %v2478 = vrcp.pop 4.0
    %v2479 = vmul.f32 %v2477, %v2478
    %v2480 = vsub.f32 %v2465, %v2479
    %v2481 = vmul.f32 %v2480, %v2480
    %v2482 = vsel %vm2470, %v2481, 0.0
    %v2483 = vrot.slane %v2482, 4
    %v2484 = vadd.f32 %v2482, %v2483
    %v2485 = vrot.slane %v2484, 2
    %v2486 = vadd.f32 %v2484, %v2485
    %v2487 = vrot.slane %v2486, 1
    %v2488 = vadd.f32 %v2486, %v2487
    %v2489 = vmul.f32 %v2488, %v2478
    %v2490 = vadd.f32 %v2489, 1e-05
    %v2491 = vrsqrt.pop %v2490
    %v2492 = vmul.f32 %v2480, %v2491
    %v2493 = vld [vmem:[%s7] sm:$0x1]
    %v2495 = vlaneseq
    %v2496 = vshrl.u32 %v2495, 7
    %v2497 = vsub.s32 0, %v2496
    %v2498 = vrot.slane %v2493, %v2497
    %v2500 = vmul.f32 %v2492, %v2498
    %v2501 = vld [vmem:[%s8] sm:$0x1]
    %v2503 = vlaneseq
    %v2504 = vshrl.u32 %v2503, 7
    %v2505 = vsub.s32 0, %v2504
    %v2506 = vrot.slane %v2501, %v2505
    %v2508 = vadd.f32 %v2500, %v2506
    %v2509 = vmax.f32 %v2508, 0.0
    %v2510 = vpack.c.bf16 %v2509, %v2509
    %v2511 = vld [vmem:[#allocation16] sm:$0xff]
    %v2512 = vld [vmem:[#allocation16 + $0x8] sm:$0xff]
    %v2513 = vld [vmem:[#allocation16 + $0x10] sm:$0xff]
    %v2514 = vld [vmem:[#allocation16 + $0x18] sm:$0xff]
    %v2515 = vld [vmem:[#allocation16 + $0x20] sm:$0xff]
    %v2516 = vld [vmem:[#allocation16 + $0x28] sm:$0xff]
    %v2517 = vld [vmem:[#allocation16 + $0x30] sm:$0xff]
    %v2518 = vld [vmem:[#allocation16 + $0x38] sm:$0xff]
    %v2519 = vld [vmem:[#allocation16 + $0x40] sm:$0xff]
    %v2520 = vld [vmem:[#allocation16 + $0x48] sm:$0xff]
    %v2521 = vld [vmem:[#allocation16 + $0x50] sm:$0xff]
    %v2522 = vld [vmem:[#allocation16 + $0x58] sm:$0xff]
    %v2523 = vld [vmem:[#allocation16 + $0x60] sm:$0xff]
    %v2524 = vld [vmem:[#allocation16 + $0x68] sm:$0xff]
    %v2525 = vld [vmem:[#allocation16 + $0x70] sm:$0xff]
    %v2526 = vld [vmem:[#allocation16 + $0x78] sm:$0xff]
    %v2527 = vld [vmem:[#allocation16 + $0x80] sm:$0xff]
    %v2528 = vld [vmem:[#allocation16 + $0x88] sm:$0xff]
    %v2529 = vld [vmem:[#allocation16 + $0x90] sm:$0xff]
    %v2530 = vld [vmem:[#allocation16 + $0x98] sm:$0xff]
    %v2531 = vld [vmem:[#allocation16 + $0xa0] sm:$0xff]
    %v2532 = vld [vmem:[#allocation16 + $0xa8] sm:$0xff]
    %v2533 = vld [vmem:[#allocation16 + $0xb0] sm:$0xff]
    %v2534 = vld [vmem:[#allocation16 + $0xb8] sm:$0xff]
    %v2535 = vld [vmem:[#allocation16 + $0xc0] sm:$0x33]
    %v2536 = vld [vmem:[#allocation16 + $0xc8] sm:$0x33]
    %v2537 = vld [vmem:[%s10] sm:$0xf]
    %v2539 = vlaneseq
    %v2540 = vshrl.u32 %v2539, 7
    %v2541 = vsub.s32 0, %v2540
    %v2542 = vrot.slane %v2537, %v2541
    %v2543 = vlaneseq
    %v2544 = vshrl.u32 %v2543, 7
    %v2545 = vsub.s32 1, %v2544
    %v2546 = vrot.slane %v2537, %v2545
    %v2547 = vlaneseq
    %v2548 = vshrl.u32 %v2547, 7
    %v2549 = vsub.s32 2, %v2548
    %v2550 = vrot.slane %v2537, %v2549
    %v2551 = vlaneseq
    %v2552 = vshrl.u32 %v2551, 7
    %v2553 = vsub.s32 3, %v2552
    %v2554 = vrot.slane %v2537, %v2553
    %v2585 = vunpack.c.l.b16 %v2511
    %v2586 = vunpack.c.h.b16 %v2511
    %v2587 = vunpack.c.l.b16 %v2512
    %v2588 = vunpack.c.h.b16 %v2512
    %v2589 = vunpack.c.l.b16 %v2513
    %v2590 = vunpack.c.h.b16 %v2513
    %v2591 = vunpack.c.l.b16 %v2514
    %v2592 = vunpack.c.h.b16 %v2514
    %v2593 = vunpack.c.l.b16 %v2515
    %v2594 = vunpack.c.h.b16 %v2515
    %v2595 = vunpack.c.l.b16 %v2516
    %v2596 = vunpack.c.h.b16 %v2516
    %v2597 = vunpack.c.l.b16 %v2517
    %v2598 = vunpack.c.h.b16 %v2517
    %v2599 = vunpack.c.l.b16 %v2518
    %v2600 = vunpack.c.h.b16 %v2518
    %v2601 = vunpack.c.l.b16 %v2519
    %v2602 = vunpack.c.h.b16 %v2519
    %v2603 = vunpack.c.l.b16 %v2520
    %v2604 = vunpack.c.h.b16 %v2520
    %v2605 = vunpack.c.l.b16 %v2521
    %v2606 = vunpack.c.h.b16 %v2521
    %v2607 = vunpack.c.l.b16 %v2522
    %v2608 = vunpack.c.h.b16 %v2522
    %v2609 = vunpack.c.l.b16 %v2523
    %v2610 = vunpack.c.h.b16 %v2523
    %v2611 = vunpack.c.l.b16 %v2524
    %v2612 = vunpack.c.h.b16 %v2524
    %v2613 = vunpack.c.l.b16 %v2525
    %v2614 = vunpack.c.h.b16 %v2525
    %v2615 = vunpack.c.l.b16 %v2526
    %v2616 = vunpack.c.h.b16 %v2526
    %v2617 = vunpack.c.l.b16 %v2527
    %v2618 = vunpack.c.h.b16 %v2527
    %v2619 = vunpack.c.l.b16 %v2528
    %v2620 = vunpack.c.h.b16 %v2528
    %v2621 = vunpack.c.l.b16 %v2529
    %v2622 = vunpack.c.h.b16 %v2529
    %v2623 = vunpack.c.l.b16 %v2530
    %v2624 = vunpack.c.h.b16 %v2530
    %v2625 = vunpack.c.l.b16 %v2531
    %v2626 = vunpack.c.h.b16 %v2531
    %v2627 = vunpack.c.l.b16 %v2532
    %v2628 = vunpack.c.h.b16 %v2532
    %v2629 = vunpack.c.l.b16 %v2533
    %v2630 = vunpack.c.h.b16 %v2533
    %v2631 = vunpack.c.l.b16 %v2534
    %v2632 = vunpack.c.h.b16 %v2534
    %v2633 = vunpack.c.l.b16 %v2535
    %v2634 = vunpack.c.h.b16 %v2535
    %v2635 = vunpack.c.l.b16 %v2536
    %v2636 = vunpack.c.h.b16 %v2536
    %v2637 = vpack.c.b16 %v2589, %v2585
    %v2638 = vpack.c.b16 %v2590, %v2586
    %v2639 = vpack.c.b16 %v2591, %v2587
    %v2640 = vpack.c.b16 %v2592, %v2588
    %v2641 = vpack.c.b16 %v2597, %v2593
    %v2642 = vpack.c.b16 %v2598, %v2594
    %v2643 = vpack.c.b16 %v2599, %v2595
    %v2644 = vpack.c.b16 %v2600, %v2596
    %v2645 = vpack.c.b16 %v2605, %v2601
    %v2646 = vpack.c.b16 %v2606, %v2602
    %v2647 = vpack.c.b16 %v2607, %v2603
    %v2648 = vpack.c.b16 %v2608, %v2604
    %v2649 = vpack.c.b16 %v2613, %v2609
    %v2650 = vpack.c.b16 %v2614, %v2610
    %v2651 = vpack.c.b16 %v2615, %v2611
    %v2652 = vpack.c.b16 %v2616, %v2612
    %v2653 = vpack.c.b16 %v2621, %v2617
    %v2654 = vpack.c.b16 %v2622, %v2618
    %v2655 = vpack.c.b16 %v2623, %v2619
    %v2656 = vpack.c.b16 %v2624, %v2620
    %v2657 = vpack.c.b16 %v2629, %v2625
    %v2658 = vpack.c.b16 %v2630, %v2626
    %v2659 = vpack.c.b16 %v2631, %v2627
    %v2660 = vpack.c.b16 %v2632, %v2628
    %v2661 = vpack.c.b16 %v2633, %v2633
    %v2662 = vpack.c.b16 %v2634, %v2634
    %v2663 = vpack.c.b16 %v2635, %v2635
    %v2664 = vpack.c.b16 %v2636, %v2636
    %vm2689 = vcmask 818176
    %v2691 = vsel %vm2689, %v2510, 0
    %vm2693 = vcmask 1041408
    %v2695 = vsel %vm2693, %v2661, 0
    %v2698 = vsel %vm2693, %v2662, 0
    %v2701 = vsel %vm2693, %v2663, 0
    %v2704 = vsel %vm2693, %v2664, 0
    %2706 = vmatprep.subr.bf16.mxu0 0
    %2707 = vmatpush1.bf16.msra.mxu0 0
    %2708 = vmatprep.subr.bf16.mxu0 %v2698
    %2709 = vmatpush1.bf16.msra.mxu0 %v2695
    %2710 = vmatprep.subr.bf16.mxu0 %v2658
    %2711 = vmatpush1.bf16.msra.mxu0 %v2657
    %2712 = vmatprep.subr.bf16.mxu0 %v2654
    %2713 = vmatpush1.bf16.msra.mxu0 %v2653
    %2714 = vmatprep.subr.bf16.mxu0 %v2650
    %2715 = vmatpush1.bf16.msra.mxu0 %v2649
    %2716 = vmatprep.subr.bf16.mxu0 %v2646
    %2717 = vmatpush1.bf16.msra.mxu0 %v2645
    %2718 = vmatprep.subr.bf16.mxu0 %v2642
    %2719 = vmatpush1.bf16.msra.mxu0 %v2641
    %2720 = vmatprep.subr.bf16.mxu0 %v2638
    %2721 = vmatpush1.bf16.msra.mxu0 %v2637
    %2722 = vmatprep.subr.bf16.mxu0 0
    %2723 = vmatpush2.bf16.msra.mxu0 0
    %2724 = vmatprep.subr.bf16.mxu0 0
    %2725 = vmatpush2.bf16.msra.mxu0 0
    %2726 = vmatprep.subr.bf16.mxu0 0
    %2727 = vmatpush2.bf16.msra.mxu0 0
    %2728 = vmatprep.subr.bf16.mxu0 0
    %2729 = vmatpush2.bf16.msra.mxu0 0
    %2730 = vmatprep.subr.bf16.mxu0 0
    %2731 = vmatpush2.bf16.msra.mxu0 0
    %2732 = vmatprep.subr.bf16.mxu0 0
    %2733 = vmatpush2.bf16.msra.mxu0 0
    %2734 = vmatprep.subr.bf16.mxu0 0
    %2735 = vmatpush2.bf16.msra.mxu0 0
    %2736 = vmatprep.subr.bf16.mxu0 0
    %2737 = vmatpush2.bf16.msra.mxu0 0
    %2738 = vmatprep.mubr.bf16.mxu0 0
    %2739 = vmatmul.mubr.bf16.gmra.mxu0 %v2691
    %v2740 = vpop.f32.mrf.mxu0
    %v2741 = vadd.f32 %v2542, %v2740
    %v2742 = vpop.f32.mrf.mxu0
    %v2743 = vadd.f32 %v2546, %v2742
    %v2744 = vpop.f32.mrf.mxu0
    %v2745 = vpop.f32.mrf.mxu0
    %2746 = vdwg.mxu0
    %2747 = vmatprep.subr.bf16.mxu0 0
    %2748 = vmatpush1.bf16.msra.mxu0 0
    %2749 = vmatprep.subr.bf16.mxu0 %v2704
    %2750 = vmatpush1.bf16.msra.mxu0 %v2701
    %2751 = vmatprep.subr.bf16.mxu0 %v2660
    %2752 = vmatpush1.bf16.msra.mxu0 %v2659
    %2753 = vmatprep.subr.bf16.mxu0 %v2656
    %2754 = vmatpush1.bf16.msra.mxu0 %v2655
    %2755 = vmatprep.subr.bf16.mxu0 %v2652
    %2756 = vmatpush1.bf16.msra.mxu0 %v2651
    %2757 = vmatprep.subr.bf16.mxu0 %v2648
    %2758 = vmatpush1.bf16.msra.mxu0 %v2647
    %2759 = vmatprep.subr.bf16.mxu0 %v2644
    %2760 = vmatpush1.bf16.msra.mxu0 %v2643
    %2761 = vmatprep.subr.bf16.mxu0 %v2640
    %2762 = vmatpush1.bf16.msra.mxu0 %v2639
    %2763 = vmatprep.subr.bf16.mxu0 0
    %2764 = vmatpush2.bf16.msra.mxu0 0
    %2765 = vmatprep.subr.bf16.mxu0 0
    %2766 = vmatpush2.bf16.msra.mxu0 0
    %2767 = vmatprep.subr.bf16.mxu0 0
    %2768 = vmatpush2.bf16.msra.mxu0 0
    %2769 = vmatprep.subr.bf16.mxu0 0
    %2770 = vmatpush2.bf16.msra.mxu0 0
    %2771 = vmatprep.subr.bf16.mxu0 0
    %2772 = vmatpush2.bf16.msra.mxu0 0
    %2773 = vmatprep.subr.bf16.mxu0 0
    %2774 = vmatpush2.bf16.msra.mxu0 0
    %2775 = vmatprep.subr.bf16.mxu0 0
    %2776 = vmatpush2.bf16.msra.mxu0 0
    %2777 = vmatprep.subr.bf16.mxu0 0
    %2778 = vmatpush2.bf16.msra.mxu0 0
    %2779 = vmatprep.mubr.bf16.mxu0 0
    %2780 = vmatmul.mubr.bf16.gmra.mxu0 %v2691
    %v2781 = vpop.f32.mrf.mxu0
    %v2782 = vadd.f32 %v2550, %v2781
    %v2783 = vpop.f32.mrf.mxu0
    %v2784 = vadd.f32 %v2554, %v2783
    %v2785 = vpop.f32.mrf.mxu0
    %v2786 = vpop.f32.mrf.mxu0
    %2787 = vdwg.mxu0
    %v2788 = vsel %vm1129, %v2741, 0.0
    %v2789 = vrot.slane %v2788, 4
    %v2790 = vadd.f32 %v2788, %v2789
    %v2791 = vrot.slane %v2790, 2
    %v2792 = vadd.f32 %v2790, %v2791
    %v2793 = vrot.slane %v2792, 1
    %v2794 = vadd.f32 %v2792, %v2793
    %v2795 = vsel %vm1129, %v2743, 0.0
    %v2796 = vrot.slane %v2795, 4
    %v2797 = vadd.f32 %v2795, %v2796
    %v2798 = vrot.slane %v2797, 2
    %v2799 = vadd.f32 %v2797, %v2798
    %v2800 = vrot.slane %v2799, 1
    %v2801 = vadd.f32 %v2799, %v2800
    %v2802 = vsel %vm1129, %v2782, 0.0
    %v2803 = vrot.slane %v2802, 4
    %v2804 = vadd.f32 %v2802, %v2803
    %v2805 = vrot.slane %v2804, 2
    %v2806 = vadd.f32 %v2804, %v2805
    %v2807 = vrot.slane %v2806, 1
    %v2808 = vadd.f32 %v2806, %v2807
    %vm2809 = vcmask 863232
    %v2810 = vsel %vm2809, %v2784, 0.0
    %v2811 = vrot.slane %v2810, 4
    %v2812 = vadd.f32 %v2810, %v2811
    %v2813 = vrot.slane %v2812, 2
    %v2814 = vadd.f32 %v2812, %v2813
    %v2815 = vrot.slane %v2814, 1
    %v2816 = vadd.f32 %v2814, %v2815
    %v2817 = vmul.f32 %v2794, %v2478
    %v2818 = vmul.f32 %v2801, %v2478
    %v2819 = vmul.f32 %v2808, %v2478
    %v2820 = vmul.f32 %v2816, %v2478
    %v2821 = vsub.f32 %v2741, %v2817
    %v2822 = vsub.f32 %v2743, %v2818
    %v2823 = vsub.f32 %v2782, %v2819
    %v2824 = vsub.f32 %v2784, %v2820
    %v2825 = vmul.f32 %v2821, %v2821
    %v2826 = vmul.f32 %v2822, %v2822
    %v2827 = vmul.f32 %v2823, %v2823
    %v2828 = vmul.f32 %v2824, %v2824
    %v2829 = vsel %vm1129, %v2825, 0.0
    %v2830 = vrot.slane %v2829, 4
    %v2831 = vadd.f32 %v2829, %v2830
    %v2832 = vrot.slane %v2831, 2
    %v2833 = vadd.f32 %v2831, %v2832
    %v2834 = vrot.slane %v2833, 1
    %v2835 = vadd.f32 %v2833, %v2834
    %v2836 = vsel %vm1129, %v2826, 0.0
    %v2837 = vrot.slane %v2836, 4
    %v2838 = vadd.f32 %v2836, %v2837
    %v2839 = vrot.slane %v2838, 2
    %v2840 = vadd.f32 %v2838, %v2839
    %v2841 = vrot.slane %v2840, 1
    %v2842 = vadd.f32 %v2840, %v2841
    %v2843 = vsel %vm1129, %v2827, 0.0
    %v2844 = vrot.slane %v2843, 4
    %v2845 = vadd.f32 %v2843, %v2844
    %v2846 = vrot.slane %v2845, 2
    %v2847 = vadd.f32 %v2845, %v2846
    %v2848 = vrot.slane %v2847, 1
    %v2849 = vadd.f32 %v2847, %v2848
    %v2850 = vsel %vm2809, %v2828, 0.0
    %v2851 = vrot.slane %v2850, 4
    %v2852 = vadd.f32 %v2850, %v2851
    %v2853 = vrot.slane %v2852, 2
    %v2854 = vadd.f32 %v2852, %v2853
    %v2855 = vrot.slane %v2854, 1
    %v2856 = vadd.f32 %v2854, %v2855
    %v2857 = vmul.f32 %v2835, %v2478
    %v2858 = vmul.f32 %v2842, %v2478
    %v2859 = vmul.f32 %v2849, %v2478
    %v2860 = vmul.f32 %v2856, %v2478
    %v2861 = vadd.f32 %v2857, 1e-05
    %v2862 = vadd.f32 %v2858, 1e-05
    %v2863 = vadd.f32 %v2859, 1e-05
    %v2864 = vadd.f32 %v2860, 1e-05
    %v2865 = vrsqrt.pop %v2861
    %v2866 = vrsqrt.pop %v2862
    %v2867 = vrsqrt.pop %v2863
    %v2868 = vrsqrt.pop %v2864
    %v2869 = vmul.f32 %v2821, %v2865
    %v2870 = vmul.f32 %v2822, %v2866
    %v2871 = vmul.f32 %v2823, %v2867
    %v2872 = vmul.f32 %v2824, %v2868
    %v2873 = vld [vmem:[%s11] sm:$0xf]
    %v2875 = vlaneseq
    %v2876 = vshrl.u32 %v2875, 7
    %v2877 = vsub.s32 0, %v2876
    %v2878 = vrot.slane %v2873, %v2877
    %v2879 = vlaneseq
    %v2880 = vshrl.u32 %v2879, 7
    %v2881 = vsub.s32 1, %v2880
    %v2882 = vrot.slane %v2873, %v2881
    %v2883 = vlaneseq
    %v2884 = vshrl.u32 %v2883, 7
    %v2885 = vsub.s32 2, %v2884
    %v2886 = vrot.slane %v2873, %v2885
    %v2887 = vlaneseq
    %v2888 = vshrl.u32 %v2887, 7
    %v2889 = vsub.s32 3, %v2888
    %v2890 = vrot.slane %v2873, %v2889
    %v2895 = vmul.f32 %v2869, %v2878
    %v2896 = vmul.f32 %v2870, %v2882
    %v2897 = vmul.f32 %v2871, %v2886
    %v2898 = vmul.f32 %v2872, %v2890
    %v2899 = vld [vmem:[%s12] sm:$0xf]
    %v2901 = vlaneseq
    %v2902 = vshrl.u32 %v2901, 7
    %v2903 = vsub.s32 0, %v2902
    %v2904 = vrot.slane %v2899, %v2903
    %v2905 = vlaneseq
    %v2906 = vshrl.u32 %v2905, 7
    %v2907 = vsub.s32 1, %v2906
    %v2908 = vrot.slane %v2899, %v2907
    %v2909 = vlaneseq
    %v2910 = vshrl.u32 %v2909, 7
    %v2911 = vsub.s32 2, %v2910
    %v2912 = vrot.slane %v2899, %v2911
    %v2913 = vlaneseq
    %v2914 = vshrl.u32 %v2913, 7
    %v2915 = vsub.s32 3, %v2914
    %v2916 = vrot.slane %v2899, %v2915
    %v2921 = vadd.f32 %v2895, %v2904
    %v2922 = vadd.f32 %v2896, %v2908
    %v2923 = vadd.f32 %v2897, %v2912
    %v2924 = vadd.f32 %v2898, %v2916
    %v2925 = vmax.f32 %v2921, 0.0
    %v2926 = vmax.f32 %v2922, 0.0
    %v2927 = vmax.f32 %v2923, 0.0
    %v2928 = vmax.f32 %v2924, 0.0
    %v2929 = vpack.c.bf16 %v2925, %v2925
    %vm2930 = vcmask 566272
    %2931 = vst.msk [vmem:[#allocation7] sm:$0x3] %vm2930, %v2929
    %v2932 = vpack.c.bf16 %v2926, %v2926
    %v2935 = vunpack.c.l.b16 %v2929
    %v2936 = vunpack.c.l.b16 %v2932
    %v2937 = vpack.c.b16 %v2936, %v2935
    %v2938 = vrot.slane %v2937, 6
    %2939 = vrot.lane.b32.xlu0 %v2938, 58
    %v2940 = vpop.permute.xlu0 %2939
    %v2941 = vrot.slane %v2940, 4
    %vm2942 = vcmask 474112
    %v2943 = vsel %vm2942, %v2940, %v2941
    %vm2945 = vcmask 568322
    %2946 = vst.msk [vmem:[#allocation7] sm:$0xc] %vm2945, %v2943
    %v2947 = vpack.c.b16 %v2936, %v2936
    %2948 = vrot.lane.b32.xlu0 %v2947, 116
    %v2949 = vpop.permute.xlu0 %2948
    %2951 = vst.msk [vmem:[#allocation7 + $0x4] sm:$0x3] %vm2930, %v2949
    %v2952 = vpack.c.bf16 %v2927, %v2927
    %v2954 = vunpack.c.l.b16 %v2952
    %v2955 = vpack.c.b16 %v2954, %v2936
    %v2956 = vrot.slane %v2955, 6
    %2957 = vrot.lane.b32.xlu0 %v2956, 46
    %v2958 = vpop.permute.xlu0 %2957
    %v2959 = vrot.slane %v2958, 4
    %vm2960 = vcmask 375808
    %v2961 = vsel %vm2960, %v2958, %v2959
    %2963 = vst.msk [vmem:[#allocation7 + $0x4] sm:$0xc] %vm2945, %v2961
    %v2964 = vpack.c.b16 %v2954, %v2954
    %2965 = vrot.lane.b32.xlu0 %v2964, 104
    %v2966 = vpop.permute.xlu0 %2965
    %2968 = vst.msk [vmem:[#allocation7 + $0x8] sm:$0x3] %vm2930, %v2966
    %v2969 = vpack.c.bf16 %v2928, %v2928
    %v2971 = vunpack.c.l.b16 %v2969
    %v2972 = vpack.c.b16 %v2971, %v2954
    %v2973 = vrot.slane %v2972, 6
    %2974 = vrot.lane.b32.xlu0 %v2973, 34
    %v2975 = vpop.permute.xlu0 %2974
    %v2976 = vrot.slane %v2975, 4
    %vm2977 = vcmask 277504
    %v2978 = vsel %vm2977, %v2975, %v2976
    %2980 = vst.msk [vmem:[#allocation7 + $0x8] sm:$0xc] %vm2945, %v2978
    %v2981 = vpack.c.b16 %v2971, %v2971
    %2982 = vrot.lane.b32.xlu0 %v2981, 92
    %v2983 = vpop.permute.xlu0 %2982
    %2985 = vst.msk [vmem:[#allocation7 + $0xc] sm:$0x3] %vm2930, %v2983
    %v2986 = vld [vmem:[#allocation7] sm:$0xf]
    %v2987 = vld [vmem:[#allocation7 + $0x4] sm:$0xf]
    %v2988 = vld [vmem:[#allocation7 + $0x8] sm:$0xf]
    %v2989 = vld [vmem:[#allocation7 + $0xc] sm:$0x3]
    %v2990 = vld [vmem:[#allocation17] sm:$0xff]
    %v2991 = vld [vmem:[#allocation17 + $0x8] sm:$0xff]
    %v2992 = vld [vmem:[#allocation17 + $0x10] sm:$0xff]
    %v2993 = vld [vmem:[#allocation17 + $0x18] sm:$0xff]
    %v2994 = vld [vmem:[#allocation17 + $0x20] sm:$0xff]
    %v2995 = vld [vmem:[#allocation17 + $0x28] sm:$0xff]
    %v2996 = vld [vmem:[#allocation17 + $0x30] sm:$0xff]
    %v2997 = vld [vmem:[#allocation17 + $0x38] sm:$0xff]
    %v2998 = vld [vmem:[#allocation17 + $0x40] sm:$0x77]
    %v2999 = vld [vmem:[#allocation19] sm:$0x3]
    %v3001 = vlaneseq
    %v3002 = vshrl.u32 %v3001, 7
    %v3003 = vsub.s32 0, %v3002
    %v3004 = vrot.slane %v2999, %v3003
    %v3005 = vlaneseq
    %v3006 = vshrl.u32 %v3005, 7
    %v3007 = vsub.s32 1, %v3006
    %v3008 = vrot.slane %v2999, %v3007
    %v3015 = vunpack.c.l.b16 %v2986
    %v3016 = vunpack.c.l.b16 %v2987
    %v3017 = vunpack.c.l.b16 %v2988
    %v3018 = vunpack.c.l.b16 %v2989
    %v3019 = vpack.c.b16 %v3016, %v3015
    %v3020 = vpack.c.b16 %v3018, %v3017
    %v3030 = vunpack.c.l.b16 %v2990
    %v3031 = vunpack.c.h.b16 %v2990
    %v3032 = vunpack.c.l.b16 %v2991
    %v3033 = vunpack.c.h.b16 %v2991
    %v3034 = vunpack.c.l.b16 %v2992
    %v3035 = vunpack.c.h.b16 %v2992
    %v3036 = vunpack.c.l.b16 %v2993
    %v3037 = vunpack.c.h.b16 %v2993
    %v3038 = vunpack.c.l.b16 %v2994
    %v3039 = vunpack.c.h.b16 %v2994
    %v3040 = vunpack.c.l.b16 %v2995
    %v3041 = vunpack.c.h.b16 %v2995
    %v3042 = vunpack.c.l.b16 %v2996
    %v3043 = vunpack.c.h.b16 %v2996
    %v3044 = vunpack.c.l.b16 %v2997
    %v3045 = vunpack.c.h.b16 %v2997
    %v3046 = vunpack.c.l.b16 %v2998
    %v3047 = vunpack.c.h.b16 %v2998
    %v3048 = vpack.c.b16 %v3032, %v3030
    %v3049 = vpack.c.b16 %v3033, %v3031
    %v3050 = vpack.c.b16 %v3036, %v3034
    %v3051 = vpack.c.b16 %v3037, %v3035
    %v3052 = vpack.c.b16 %v3040, %v3038
    %v3053 = vpack.c.b16 %v3041, %v3039
    %v3054 = vpack.c.b16 %v3044, %v3042
    %v3055 = vpack.c.b16 %v3045, %v3043
    %v3056 = vpack.c.b16 %v3046, %v3046
    %v3057 = vpack.c.b16 %v3047, %v3047
    %vm3066 = vcmask 572416
    %v3068 = vsel %vm3066, %v3019, 0
    %v3071 = vsel %vm3066, %v3020, 0
    %vm3073 = vcmask 1042432
    %v3075 = vsel %vm3073, %v3056, 0
    %v3078 = vsel %vm3073, %v3057, 0
    %3080 = vmatprep.subr.bf16.mxu0 0
    %3081 = vmatpush1.bf16.msra.mxu0 0
    %3082 = vmatprep.subr.bf16.mxu0 0
    %3083 = vmatpush1.bf16.msra.mxu0 0
    %3084 = vmatprep.subr.bf16.mxu0 0
    %3085 = vmatpush1.bf16.msra.mxu0 0
    %3086 = vmatprep.subr.bf16.mxu0 %v3078
    %3087 = vmatpush1.bf16.msra.mxu0 %v3075
    %3088 = vmatprep.subr.bf16.mxu0 %v3055
    %3089 = vmatpush1.bf16.msra.mxu0 %v3054
    %3090 = vmatprep.subr.bf16.mxu0 %v3053
    %3091 = vmatpush1.bf16.msra.mxu0 %v3052
    %3092 = vmatprep.subr.bf16.mxu0 %v3051
    %3093 = vmatpush1.bf16.msra.mxu0 %v3050
    %3094 = vmatprep.subr.bf16.mxu0 %v3049
    %3095 = vmatpush1.bf16.msra.mxu0 %v3048
    %3096 = vmatprep.subr.bf16.mxu0 0
    %3097 = vmatpush2.bf16.msra.mxu0 0
    %3098 = vmatprep.subr.bf16.mxu0 0
    %3099 = vmatpush2.bf16.msra.mxu0 0
    %3100 = vmatprep.subr.bf16.mxu0 0
    %3101 = vmatpush2.bf16.msra.mxu0 0
    %3102 = vmatprep.subr.bf16.mxu0 0
    %3103 = vmatpush2.bf16.msra.mxu0 0
    %3104 = vmatprep.subr.bf16.mxu0 0
    %3105 = vmatpush2.bf16.msra.mxu0 0
    %3106 = vmatprep.subr.bf16.mxu0 0
    %3107 = vmatpush2.bf16.msra.mxu0 0
    %3108 = vmatprep.subr.bf16.mxu0 0
    %3109 = vmatpush2.bf16.msra.mxu0 0
    %3110 = vmatprep.subr.bf16.mxu0 0
    %3111 = vmatpush2.bf16.msra.mxu0 0
    %3112 = vmatprep.mubr.bf16.mxu0 0
    %3113 = vmatmul.mubr.bf16.gmra.mxu0 %v3068
    %v3114 = vpop.f32.mrf.mxu0
    %v3115 = vadd.f32 %v3004, %v3114
    %v3116 = vpop.f32.mrf.mxu0
    %v3117 = vadd.f32 %v3008, %v3116
    %v3118 = vpop.f32.mrf.mxu0
    %v3119 = vadd.f32 %v3004, %v3118
    %v3120 = vpop.f32.mrf.mxu0
    %v3121 = vadd.f32 %v3008, %v3120
    %3122 = vmatprep.mubr.bf16.mxu0 0
    %3123 = vmatmul.mubr.bf16.gmra.mxu0 %v3071
    %v3124 = vpop.f32.mrf.mxu0
    %v3125 = vadd.f32 %v3004, %v3124
    %v3126 = vpop.f32.mrf.mxu0
    %v3127 = vadd.f32 %v3008, %v3126
    %v3128 = vpop.f32.mrf.mxu0
    %v3129 = vadd.f32 %v3004, %v3128
    %v3130 = vpop.f32.mrf.mxu0
    %v3131 = vadd.f32 %v3008, %v3130
    %3132 = vdwg.mxu0
    %v3133 = vadd.f32 %v3115, %v3119
    %v3134 = vadd.f32 %v3133, %v3125
    %v3135 = vsel %vm1129, %v3129, 0.0
    %v3136 = vadd.f32 %v3134, %v3135
    %v3137 = vrot.slane %v3136, 4
    %v3138 = vadd.f32 %v3136, %v3137
    %v3139 = vrot.slane %v3138, 2
    %v3140 = vadd.f32 %v3138, %v3139
    %v3141 = vrot.slane %v3140, 1
    %v3142 = vadd.f32 %v3140, %v3141
    %vm3143 = vcmask 785408
    %v3144 = vsel %vm3143, %v3117, 0.0
    %v3145 = vsel %vm3143, %v3121, 0.0
    %v3146 = vadd.f32 %v3144, %v3145
    %v3147 = vsel %vm3143, %v3127, 0.0
    %v3148 = vadd.f32 %v3146, %v3147
    %vm3149 = vcmask 781312
    %v3150 = vsel %vm3149, %v3131, 0.0
    %v3151 = vadd.f32 %v3148, %v3150
    %v3152 = vrot.slane %v3151, 4
    %v3153 = vadd.f32 %v3151, %v3152
    %v3154 = vrot.slane %v3153, 2
    %v3155 = vadd.f32 %v3153, %v3154
    %v3156 = vrot.slane %v3155, 1
    %v3157 = vadd.f32 %v3155, %v3156
    %v3158 = vld [vmem:[#allocation20] sm:$0xff]
    %v3159 = vld [vmem:[#allocation20 + $0x8] sm:$0xff]
    %v3160 = vld [vmem:[#allocation20 + $0x10] sm:$0xff]
    %v3161 = vld [vmem:[#allocation20 + $0x18] sm:$0xff]
    %v3162 = vld [vmem:[#allocation20 + $0x20] sm:$0xff]
    %v3163 = vld [vmem:[#allocation20 + $0x28] sm:$0xff]
    %v3164 = vld [vmem:[#allocation20 + $0x30] sm:$0xff]
    %v3165 = vld [vmem:[#allocation20 + $0x38] sm:$0xff]
    %v3166 = vld [vmem:[#allocation20 + $0x40] sm:$0xff]
    %v3167 = vld [vmem:[#allocation20 + $0x48] sm:$0xff]
    %v3168 = vld [vmem:[#allocation20 + $0x50] sm:$0xff]
    %v3169 = vld [vmem:[#allocation20 + $0x58] sm:$0xff]
    %v3170 = vld [vmem:[#allocation20 + $0x60] sm:$0xff]
    %v3171 = vld [vmem:[#allocation20 + $0x68] sm:$0xff]
    %v3172 = vld [vmem:[#allocation20 + $0x70] sm:$0xff]
    %v3173 = vld [vmem:[#allocation20 + $0x78] sm:$0xff]
    %v3174 = vld [vmem:[#allocation20 + $0x80] sm:$0xff]
    %v3175 = vld [vmem:[#allocation20 + $0x88] sm:$0xff]
    %v3176 = vld [vmem:[#allocation20 + $0x90] sm:$0xff]
    %v3177 = vld [vmem:[#allocation20 + $0x98] sm:$0xff]
    %v3178 = vld [vmem:[#allocation20 + $0xa0] sm:$0xff]
    %v3179 = vld [vmem:[#allocation20 + $0xa8] sm:$0xff]
    %v3180 = vld [vmem:[#allocation20 + $0xb0] sm:$0xff]
    %v3181 = vld [vmem:[#allocation20 + $0xb8] sm:$0xff]
    %v3182 = vld [vmem:[#allocation20 + $0xc0] sm:$0xff]
    %v3183 = vld [vmem:[#allocation20 + $0xc8] sm:$0xff]
    %v3184 = vld [vmem:[#allocation20 + $0xd0] sm:$0xff]
    %v3185 = vld [vmem:[#allocation20 + $0xd8] sm:$0xff]
    %v3187 = vsel %vm3143, %v3157, 0
    %3189 = vmatprep.subr.mxu0 0.0
    %3190 = vmatpush1.msra.mxu0 %v3173
    %3191 = vmatprep.subr.mxu0 0.0
    %3192 = vmatpush1.msra.mxu0 %v3172
    %3193 = vmatprep.subr.mxu0 0.0
    %3194 = vmatpush1.msra.mxu0 %v3171
    %3195 = vmatprep.subr.mxu0 0.0
    %3196 = vmatpush1.msra.mxu0 %v3170
    %3197 = vmatprep.subr.mxu0 0.0
    %3198 = vmatpush1.msra.mxu0 %v3169
    %3199 = vmatprep.subr.mxu0 0.0
    %3200 = vmatpush1.msra.mxu0 %v3168
    %3201 = vmatprep.subr.mxu0 0.0
    %3202 = vmatpush1.msra.mxu0 %v3167
    %3203 = vmatprep.subr.mxu0 0.0
    %3204 = vmatpush1.msra.mxu0 %v3166
    %3205 = vmatprep.subr.mxu0 0.0
    %3206 = vmatpush1.msra.mxu0 %v3165
    %3207 = vmatprep.subr.mxu0 0.0
    %3208 = vmatpush1.msra.mxu0 %v3164
    %3209 = vmatprep.subr.mxu0 0.0
    %3210 = vmatpush1.msra.mxu0 %v3163
    %3211 = vmatprep.subr.mxu0 0.0
    %3212 = vmatpush1.msra.mxu0 %v3162
    %3213 = vmatprep.subr.mxu0 0.0
    %3214 = vmatpush1.msra.mxu0 %v3161
    %3215 = vmatprep.subr.mxu0 0.0
    %3216 = vmatpush1.msra.mxu0 %v3160
    %3217 = vmatprep.subr.mxu0 0.0
    %3218 = vmatpush1.msra.mxu0 %v3159
    %3219 = vmatprep.subr.mxu0 0.0
    %3220 = vmatpush1.msra.mxu0 %v3158
    %3221 = vmatprep.subr.mxu0 0.0
    %3222 = vmatpush2.msra.mxu0 0.0
    %3223 = vmatprep.subr.mxu0 0.0
    %3224 = vmatpush2.msra.mxu0 0.0
    %3225 = vmatprep.subr.mxu0 0.0
    %3226 = vmatpush2.msra.mxu0 0.0
    %3227 = vmatprep.subr.mxu0 0.0
    %3228 = vmatpush2.msra.mxu0 0.0
    %3229 = vmatprep.subr.mxu0 0.0
    %3230 = vmatpush2.msra.mxu0 %v3185
    %3231 = vmatprep.subr.mxu0 0.0
    %3232 = vmatpush2.msra.mxu0 %v3184
    %3233 = vmatprep.subr.mxu0 0.0
    %3234 = vmatpush2.msra.mxu0 %v3183
    %3235 = vmatprep.subr.mxu0 0.0
    %3236 = vmatpush2.msra.mxu0 %v3182
    %3237 = vmatprep.subr.mxu0 0.0
    %3238 = vmatpush2.msra.mxu0 %v3181
    %3239 = vmatprep.subr.mxu0 0.0
    %3240 = vmatpush2.msra.mxu0 %v3180
    %3241 = vmatprep.subr.mxu0 0.0
    %3242 = vmatpush2.msra.mxu0 %v3179
    %3243 = vmatprep.subr.mxu0 0.0
    %3244 = vmatpush2.msra.mxu0 %v3178
    %3245 = vmatprep.subr.mxu0 0.0
    %3246 = vmatpush2.msra.mxu0 %v3177
    %3247 = vmatprep.subr.mxu0 0.0
    %3248 = vmatpush2.msra.mxu0 %v3176
    %3249 = vmatprep.subr.mxu0 0.0
    %3250 = vmatpush2.msra.mxu0 %v3175
    %3251 = vmatprep.subr.mxu0 0.0
    %3252 = vmatpush2.msra.mxu0 %v3174
    %3253 = vmatprep.mubr.f32.mxu0 %v3187
    %3254 = vmatmul.mubr.f32.gmra.mxu0 %v3142
    %v3255 = vpop.f32.mrf.mxu0
    %v3256 = vadd.f32 0.0, %v3255
    %v3257 = vpop.f32.mrf.mxu0
    %3258 = vdwg.mxu0
    %v3259 = vmul.f32 %v3256, 0.0012755102
    %v3260 = vld [vmem:[#allocation22] sm:$0xff]
    %v3261 = vld [vmem:[#allocation22 + $0x8] sm:$0xff]
    %vm3262 = vcmask 64512
    %v3264 = vsel %vm3262, %v3259, 0
    %3266 = vmatprep.subr.mxu0 0.0
    %3267 = vmatpush1.msra.mxu0 0.0
    %3268 = vmatprep.subr.mxu0 0.0
    %3269 = vmatpush1.msra.mxu0 0.0
    %3270 = vmatprep.subr.mxu0 0.0
    %3271 = vmatpush1.msra.mxu0 0.0
    %3272 = vmatprep.subr.mxu0 0.0
    %3273 = vmatpush1.msra.mxu0 0.0
    %3274 = vmatprep.subr.mxu0 0.0
    %3275 = vmatpush1.msra.mxu0 0.0
    %3276 = vmatprep.subr.mxu0 0.0
    %3277 = vmatpush1.msra.mxu0 0.0
    %3278 = vmatprep.subr.mxu0 0.0
    %3279 = vmatpush1.msra.mxu0 0.0
    %3280 = vmatprep.subr.mxu0 0.0
    %3281 = vmatpush1.msra.mxu0 0.0
    %3282 = vmatprep.subr.mxu0 0.0
    %3283 = vmatpush1.msra.mxu0 0.0
    %3284 = vmatprep.subr.mxu0 0.0
    %3285 = vmatpush1.msra.mxu0 0.0
    %3286 = vmatprep.subr.mxu0 0.0
    %3287 = vmatpush1.msra.mxu0 0.0
    %3288 = vmatprep.subr.mxu0 0.0
    %3289 = vmatpush1.msra.mxu0 0.0
    %3290 = vmatprep.subr.mxu0 0.0
    %3291 = vmatpush1.msra.mxu0 0.0
    %3292 = vmatprep.subr.mxu0 0.0
    %3293 = vmatpush1.msra.mxu0 0.0
    %3294 = vmatprep.subr.mxu0 0.0
    %3295 = vmatpush1.msra.mxu0 0.0
    %3296 = vmatprep.subr.mxu0 %v3261
    %3297 = vmatpush1.msra.mxu0 %v3260
    %3298 = vmatprep.subr.mxu0 0.0
    %3299 = vmatpush2.msra.mxu0 0.0
    %3300 = vmatprep.subr.mxu0 0.0
    %3301 = vmatpush2.msra.mxu0 0.0
    %3302 = vmatprep.subr.mxu0 0.0
    %3303 = vmatpush2.msra.mxu0 0.0
    %3304 = vmatprep.subr.mxu0 0.0
    %3305 = vmatpush2.msra.mxu0 0.0
    %3306 = vmatprep.subr.mxu0 0.0
    %3307 = vmatpush2.msra.mxu0 0.0
    %3308 = vmatprep.subr.mxu0 0.0
    %3309 = vmatpush2.msra.mxu0 0.0
    %3310 = vmatprep.subr.mxu0 0.0
    %3311 = vmatpush2.msra.mxu0 0.0
    %3312 = vmatprep.subr.mxu0 0.0
    %3313 = vmatpush2.msra.mxu0 0.0
    %3314 = vmatprep.subr.mxu0 0.0
    %3315 = vmatpush2.msra.mxu0 0.0
    %3316 = vmatprep.subr.mxu0 0.0
    %3317 = vmatpush2.msra.mxu0 0.0
    %3318 = vmatprep.subr.mxu0 0.0
    %3319 = vmatpush2.msra.mxu0 0.0
    %3320 = vmatprep.subr.mxu0 0.0
    %3321 = vmatpush2.msra.mxu0 0.0
    %3322 = vmatprep.subr.mxu0 0.0
    %3323 = vmatpush2.msra.mxu0 0.0
    %3324 = vmatprep.subr.mxu0 0.0
    %3325 = vmatpush2.msra.mxu0 0.0
    %3326 = vmatprep.subr.mxu0 0.0
    %3327 = vmatpush2.msra.mxu0 0.0
    %3328 = vmatprep.subr.mxu0 0.0
    %3329 = vmatpush2.msra.mxu0 0.0
    %3330 = vmatprep.mubr.f32.mxu0 0.0
    %3331 = vmatmul.mubr.f32.gmra.mxu0 %v3264
    %v3332 = vpop.f32.mrf.mxu0
    %v3333 = vadd.f32 0.0, %v3332
    %v3334 = vpop.f32.mrf.mxu0
    %v3335 = vadd.f32 0.0, %v3334
    %3336 = vdwg.mxu0
    %v3337 = vlaneseq
    %v3338 = vshrl.u32 %v3337, 7
    %v3339 = vsub.s32 0, %v3338
    %v3340 = vrot.slane %v3333, %v3339
    %v3341 = vlaneseq
    %v3342 = vshrl.u32 %v3341, 7
    %v3343 = vsub.s32 0, %v3342
    %v3344 = vrot.slane %v3335, %v3343
    %v3345 = vsub.f32 %v3115, %v3340
    %v3346 = vsub.f32 %v3117, %v3344
    %v3347 = vsub.f32 %v3119, %v3340
    %v3348 = vsub.f32 %v3121, %v3344
    %v3349 = vsub.f32 %v3125, %v3340
    %v3350 = vsub.f32 %v3127, %v3344
    %v3351 = vsub.f32 %v3129, %v3340
    %v3352 = vsub.f32 %v3131, %v3344
    %v3353 = vmul.f32 %v3345, %v3345
    %v3354 = vmul.f32 %v3346, %v3346
    %v3355 = vmul.f32 %v3347, %v3347
    %v3356 = vmul.f32 %v3348, %v3348
    %v3357 = vmul.f32 %v3349, %v3349
    %v3358 = vmul.f32 %v3350, %v3350
    %v3359 = vmul.f32 %v3351, %v3351
    %v3360 = vmul.f32 %v3352, %v3352
    %v3361 = vadd.f32 %v3353, %v3355
    %v3362 = vadd.f32 %v3361, %v3357
    %v3363 = vsel %vm1129, %v3359, 0.0
    %v3364 = vadd.f32 %v3362, %v3363
    %v3365 = vrot.slane %v3364, 4
    %v3366 = vadd.f32 %v3364, %v3365
    %v3367 = vrot.slane %v3366, 2
    %v3368 = vadd.f32 %v3366, %v3367
    %v3369 = vrot.slane %v3368, 1
    %v3370 = vadd.f32 %v3368, %v3369
    %v3371 = vsel %vm3143, %v3354, 0.0
    %v3372 = vsel %vm3143, %v3356, 0.0
    %v3373 = vadd.f32 %v3371, %v3372
    %v3374 = vsel %vm3143, %v3358, 0.0
    %v3375 = vadd.f32 %v3373, %v3374
    %v3376 = vsel %vm3149, %v3360, 0.0
    %v3377 = vadd.f32 %v3375, %v3376
    %v3378 = vrot.slane %v3377, 4
    %v3379 = vadd.f32 %v3377, %v3378
    %v3380 = vrot.slane %v3379, 2
    %v3381 = vadd.f32 %v3379, %v3380
    %v3382 = vrot.slane %v3381, 1
    %v3383 = vadd.f32 %v3381, %v3382
    %v3385 = vsel %vm3143, %v3383, 0
    %3387 = vmatprep.subr.mxu0 0.0
    %3388 = vmatpush1.msra.mxu0 %v3173
    %3389 = vmatprep.subr.mxu0 0.0
    %3390 = vmatpush1.msra.mxu0 %v3172
    %3391 = vmatprep.subr.mxu0 0.0
    %3392 = vmatpush1.msra.mxu0 %v3171
    %3393 = vmatprep.subr.mxu0 0.0
    %3394 = vmatpush1.msra.mxu0 %v3170
    %3395 = vmatprep.subr.mxu0 0.0
    %3396 = vmatpush1.msra.mxu0 %v3169
    %3397 = vmatprep.subr.mxu0 0.0
    %3398 = vmatpush1.msra.mxu0 %v3168
    %3399 = vmatprep.subr.mxu0 0.0
    %3400 = vmatpush1.msra.mxu0 %v3167
    %3401 = vmatprep.subr.mxu0 0.0
    %3402 = vmatpush1.msra.mxu0 %v3166
    %3403 = vmatprep.subr.mxu0 0.0
    %3404 = vmatpush1.msra.mxu0 %v3165
    %3405 = vmatprep.subr.mxu0 0.0
    %3406 = vmatpush1.msra.mxu0 %v3164
    %3407 = vmatprep.subr.mxu0 0.0
    %3408 = vmatpush1.msra.mxu0 %v3163
    %3409 = vmatprep.subr.mxu0 0.0
    %3410 = vmatpush1.msra.mxu0 %v3162
    %3411 = vmatprep.subr.mxu0 0.0
    %3412 = vmatpush1.msra.mxu0 %v3161
    %3413 = vmatprep.subr.mxu0 0.0
    %3414 = vmatpush1.msra.mxu0 %v3160
    %3415 = vmatprep.subr.mxu0 0.0
    %3416 = vmatpush1.msra.mxu0 %v3159
    %3417 = vmatprep.subr.mxu0 0.0
    %3418 = vmatpush1.msra.mxu0 %v3158
    %3419 = vmatprep.subr.mxu0 0.0
    %3420 = vmatpush2.msra.mxu0 0.0
    %3421 = vmatprep.subr.mxu0 0.0
    %3422 = vmatpush2.msra.mxu0 0.0
    %3423 = vmatprep.subr.mxu0 0.0
    %3424 = vmatpush2.msra.mxu0 0.0
    %3425 = vmatprep.subr.mxu0 0.0
    %3426 = vmatpush2.msra.mxu0 0.0
    %3427 = vmatprep.subr.mxu0 0.0
    %3428 = vmatpush2.msra.mxu0 %v3185
    %3429 = vmatprep.subr.mxu0 0.0
    %3430 = vmatpush2.msra.mxu0 %v3184
    %3431 = vmatprep.subr.mxu0 0.0
    %3432 = vmatpush2.msra.mxu0 %v3183
    %3433 = vmatprep.subr.mxu0 0.0
    %3434 = vmatpush2.msra.mxu0 %v3182
    %3435 = vmatprep.subr.mxu0 0.0
    %3436 = vmatpush2.msra.mxu0 %v3181
    %3437 = vmatprep.subr.mxu0 0.0
    %3438 = vmatpush2.msra.mxu0 %v3180
    %3439 = vmatprep.subr.mxu0 0.0
    %3440 = vmatpush2.msra.mxu0 %v3179
    %3441 = vmatprep.subr.mxu0 0.0
    %3442 = vmatpush2.msra.mxu0 %v3178
    %3443 = vmatprep.subr.mxu0 0.0
    %3444 = vmatpush2.msra.mxu0 %v3177
    %3445 = vmatprep.subr.mxu0 0.0
    %3446 = vmatpush2.msra.mxu0 %v3176
    %3447 = vmatprep.subr.mxu0 0.0
    %3448 = vmatpush2.msra.mxu0 %v3175
    %3449 = vmatprep.subr.mxu0 0.0
    %3450 = vmatpush2.msra.mxu0 %v3174
    %3451 = vmatprep.mubr.f32.mxu0 %v3385
    %3452 = vmatmul.mubr.f32.gmra.mxu0 %v3370
    %v3453 = vpop.f32.mrf.mxu0
    %v3454 = vadd.f32 0.0, %v3453
    %v3455 = vpop.f32.mrf.mxu0
    %3456 = vdwg.mxu0
    %v3457 = vmul.f32 %v3454, 0.0012755102
    %v3458 = vld [vmem:[%s15] sm:$0x1]
    %v3459 = vadd.f32 %v3457, 1e-05
    %v3460 = vrsqrt.pop %v3459
    %v3461 = vmul.f32 %v3458, %v3460
    %v3462 = vld [vmem:[%s16] sm:$0x1]
    %v3463 = vmul.f32 %v3259, %v3461
    %v3464 = vsub.f32 %v3462, %v3463
    %v3466 = vsel %vm3262, %v3461, 0
    %3468 = vmatprep.subr.mxu0 0.0
    %3469 = vmatpush1.msra.mxu0 0.0
    %3470 = vmatprep.subr.mxu0 0.0
    %3471 = vmatpush1.msra.mxu0 0.0
    %3472 = vmatprep.subr.mxu0 0.0
    %3473 = vmatpush1.msra.mxu0 0.0
    %3474 = vmatprep.subr.mxu0 0.0
    %3475 = vmatpush1.msra.mxu0 0.0
    %3476 = vmatprep.subr.mxu0 0.0
    %3477 = vmatpush1.msra.mxu0 0.0
    %3478 = vmatprep.subr.mxu0 0.0
    %3479 = vmatpush1.msra.mxu0 0.0
    %3480 = vmatprep.subr.mxu0 0.0
    %3481 = vmatpush1.msra.mxu0 0.0
    %3482 = vmatprep.subr.mxu0 0.0
    %3483 = vmatpush1.msra.mxu0 0.0
    %3484 = vmatprep.subr.mxu0 0.0
    %3485 = vmatpush1.msra.mxu0 0.0
    %3486 = vmatprep.subr.mxu0 0.0
    %3487 = vmatpush1.msra.mxu0 0.0
    %3488 = vmatprep.subr.mxu0 0.0
    %3489 = vmatpush1.msra.mxu0 0.0
    %3490 = vmatprep.subr.mxu0 0.0
    %3491 = vmatpush1.msra.mxu0 0.0
    %3492 = vmatprep.subr.mxu0 0.0
    %3493 = vmatpush1.msra.mxu0 0.0
    %3494 = vmatprep.subr.mxu0 0.0
    %3495 = vmatpush1.msra.mxu0 0.0
    %3496 = vmatprep.subr.mxu0 0.0
    %3497 = vmatpush1.msra.mxu0 0.0
    %3498 = vmatprep.subr.mxu0 %v3261
    %3499 = vmatpush1.msra.mxu0 %v3260
    %3500 = vmatprep.subr.mxu0 0.0
    %3501 = vmatpush2.msra.mxu0 0.0
    %3502 = vmatprep.subr.mxu0 0.0
    %3503 = vmatpush2.msra.mxu0 0.0
    %3504 = vmatprep.subr.mxu0 0.0
    %3505 = vmatpush2.msra.mxu0 0.0
    %3506 = vmatprep.subr.mxu0 0.0
    %3507 = vmatpush2.msra.mxu0 0.0
    %3508 = vmatprep.subr.mxu0 0.0
    %3509 = vmatpush2.msra.mxu0 0.0
    %3510 = vmatprep.subr.mxu0 0.0
    %3511 = vmatpush2.msra.mxu0 0.0
    %3512 = vmatprep.subr.mxu0 0.0
    %3513 = vmatpush2.msra.mxu0 0.0
    %3514 = vmatprep.subr.mxu0 0.0
    %3515 = vmatpush2.msra.mxu0 0.0
    %3516 = vmatprep.subr.mxu0 0.0
    %3517 = vmatpush2.msra.mxu0 0.0
    %3518 = vmatprep.subr.mxu0 0.0
    %3519 = vmatpush2.msra.mxu0 0.0
    %3520 = vmatprep.subr.mxu0 0.0
    %3521 = vmatpush2.msra.mxu0 0.0
    %3522 = vmatprep.subr.mxu0 0.0
    %3523 = vmatpush2.msra.mxu0 0.0
    %3524 = vmatprep.subr.mxu0 0.0
    %3525 = vmatpush2.msra.mxu0 0.0
    %3526 = vmatprep.subr.mxu0 0.0
    %3527 = vmatpush2.msra.mxu0 0.0
    %3528 = vmatprep.subr.mxu0 0.0
    %3529 = vmatpush2.msra.mxu0 0.0
    %3530 = vmatprep.subr.mxu0 0.0
    %3531 = vmatpush2.msra.mxu0 0.0
    %3532 = vmatprep.mubr.f32.mxu0 0.0
    %3533 = vmatmul.mubr.f32.gmra.mxu0 %v3466
    %v3534 = vpop.f32.mrf.mxu0
    %v3535 = vadd.f32 0.0, %v3534
    %v3536 = vpop.f32.mrf.mxu0
    %v3537 = vadd.f32 0.0, %v3536
    %3538 = vdwg.mxu0
    %v3539 = vlaneseq
    %v3540 = vshrl.u32 %v3539, 7
    %v3541 = vsub.s32 0, %v3540
    %v3542 = vrot.slane %v3535, %v3541
    %v3543 = vlaneseq
    %v3544 = vshrl.u32 %v3543, 7
    %v3545 = vsub.s32 0, %v3544
    %v3546 = vrot.slane %v3537, %v3545
    %v3547 = vmul.f32 %v3115, %v3542
    %v3548 = vmul.f32 %v3117, %v3546
    %v3549 = vmul.f32 %v3119, %v3542
    %v3550 = vmul.f32 %v3121, %v3546
    %v3551 = vmul.f32 %v3125, %v3542
    %v3552 = vmul.f32 %v3127, %v3546
    %v3553 = vmul.f32 %v3129, %v3542
    %v3554 = vmul.f32 %v3131, %v3546
    %v3556 = vsel %vm3262, %v3464, 0
    %3558 = vmatprep.subr.mxu0 0.0
    %3559 = vmatpush1.msra.mxu0 0.0
    %3560 = vmatprep.subr.mxu0 0.0
    %3561 = vmatpush1.msra.mxu0 0.0
    %3562 = vmatprep.subr.mxu0 0.0
    %3563 = vmatpush1.msra.mxu0 0.0
    %3564 = vmatprep.subr.mxu0 0.0
    %3565 = vmatpush1.msra.mxu0 0.0
    %3566 = vmatprep.subr.mxu0 0.0
    %3567 = vmatpush1.msra.mxu0 0.0
    %3568 = vmatprep.subr.mxu0 0.0
    %3569 = vmatpush1.msra.mxu0 0.0
    %3570 = vmatprep.subr.mxu0 0.0
    %3571 = vmatpush1.msra.mxu0 0.0
    %3572 = vmatprep.subr.mxu0 0.0
    %3573 = vmatpush1.msra.mxu0 0.0
    %3574 = vmatprep.subr.mxu0 0.0
    %3575 = vmatpush1.msra.mxu0 0.0
    %3576 = vmatprep.subr.mxu0 0.0
    %3577 = vmatpush1.msra.mxu0 0.0
    %3578 = vmatprep.subr.mxu0 0.0
    %3579 = vmatpush1.msra.mxu0 0.0
    %3580 = vmatprep.subr.mxu0 0.0
    %3581 = vmatpush1.msra.mxu0 0.0
    %3582 = vmatprep.subr.mxu0 0.0
    %3583 = vmatpush1.msra.mxu0 0.0
    %3584 = vmatprep.subr.mxu0 0.0
    %3585 = vmatpush1.msra.mxu0 0.0
    %3586 = vmatprep.subr.mxu0 0.0
    %3587 = vmatpush1.msra.mxu0 0.0
    %3588 = vmatprep.subr.mxu0 %v3261
    %3589 = vmatpush1.msra.mxu0 %v3260
    %3590 = vmatprep.subr.mxu0 0.0
    %3591 = vmatpush2.msra.mxu0 0.0
    %3592 = vmatprep.subr.mxu0 0.0
    %3593 = vmatpush2.msra.mxu0 0.0
    %3594 = vmatprep.subr.mxu0 0.0
    %3595 = vmatpush2.msra.mxu0 0.0
    %3596 = vmatprep.subr.mxu0 0.0
    %3597 = vmatpush2.msra.mxu0 0.0
    %3598 = vmatprep.subr.mxu0 0.0
    %3599 = vmatpush2.msra.mxu0 0.0
    %3600 = vmatprep.subr.mxu0 0.0
    %3601 = vmatpush2.msra.mxu0 0.0
    %3602 = vmatprep.subr.mxu0 0.0
    %3603 = vmatpush2.msra.mxu0 0.0
    %3604 = vmatprep.subr.mxu0 0.0
    %3605 = vmatpush2.msra.mxu0 0.0
    %3606 = vmatprep.subr.mxu0 0.0
    %3607 = vmatpush2.msra.mxu0 0.0
    %3608 = vmatprep.subr.mxu0 0.0
    %3609 = vmatpush2.msra.mxu0 0.0
    %3610 = vmatprep.subr.mxu0 0.0
    %3611 = vmatpush2.msra.mxu0 0.0
    %3612 = vmatprep.subr.mxu0 0.0
    %3613 = vmatpush2.msra.mxu0 0.0
    %3614 = vmatprep.subr.mxu0 0.0
    %3615 = vmatpush2.msra.mxu0 0.0
    %3616 = vmatprep.subr.mxu0 0.0
    %3617 = vmatpush2.msra.mxu0 0.0
    %3618 = vmatprep.subr.mxu0 0.0
    %3619 = vmatpush2.msra.mxu0 0.0
    %3620 = vmatprep.subr.mxu0 0.0
    %3621 = vmatpush2.msra.mxu0 0.0
    %3622 = vmatprep.mubr.f32.mxu0 0.0
    %3623 = vmatmul.mubr.f32.gmra.mxu0 %v3556
    %v3624 = vpop.f32.mrf.mxu0
    %v3625 = vadd.f32 0.0, %v3624
    %v3626 = vpop.f32.mrf.mxu0
    %v3627 = vadd.f32 0.0, %v3626
    %3628 = vdwg.mxu0
    %v3629 = vlaneseq
    %v3630 = vshrl.u32 %v3629, 7
    %v3631 = vsub.s32 0, %v3630
    %v3632 = vrot.slane %v3625, %v3631
    %v3633 = vlaneseq
    %v3634 = vshrl.u32 %v3633, 7
    %v3635 = vsub.s32 0, %v3634
    %v3636 = vrot.slane %v3627, %v3635
    %v3637 = vadd.f32 %v3547, %v3632
    %v3638 = vadd.f32 %v3548, %v3636
    %v3639 = vadd.f32 %v3549, %v3632
    %v3640 = vadd.f32 %v3550, %v3636
    %v3641 = vadd.f32 %v3551, %v3632
    %v3642 = vadd.f32 %v3552, %v3636
    %v3643 = vadd.f32 %v3553, %v3632
    %v3644 = vadd.f32 %v3554, %v3636
    %v3645 = vmax.f32 %v3637, 0.0
    %v3646 = vmax.f32 %v3638, 0.0
    %v3647 = vmax.f32 %v3639, 0.0
    %v3648 = vmax.f32 %v3640, 0.0
    %v3649 = vmax.f32 %v3641, 0.0
    %v3650 = vmax.f32 %v3642, 0.0
    %v3651 = vmax.f32 %v3643, 0.0
    %v3652 = vmax.f32 %v3644, 0.0
    %v3653 = vpack.c.bf16 %v3647, %v3645
    %v3654 = vpack.c.bf16 %v3651, %v3649
    %v3657 = vunpack.c.l.b16 %v3653
    %v3658 = vunpack.c.h.b16 %v3653
    %v3659 = vunpack.c.l.b16 %v3654
    %v3660 = vunpack.c.h.b16 %v3654
    %v3661 = vpack.c.b16 %v3657, %v3657
    %v3662 = vpack.c.b16 %v3658, %v3658
    %v3663 = vpack.c.b16 %v3659, %v3659
    %v3664 = vpack.c.b16 %v3660, %v3660
    %vm3669 = vcmask 257024
    %3670 = vst.msk [vmem:[#allocation8] sm:$0xf] %vm3669, %v3661
    %3671 = vst.msk [vmem:[#allocation8 + $0x4] sm:$0xf] %vm3669, %v3662
    %3672 = vst.msk [vmem:[#allocation8 + $0x8] sm:$0xf] %vm3669, %v3663
    %vm3673 = vcmask 254976
    %3674 = vst.msk [vmem:[#allocation8 + $0xc] sm:$0x3] %vm3673, %v3664
    %v3675 = vrot.slane %v3661, 6
    %v3676 = vrot.slane %v3675, 4
    %v3677 = vrot.slane %v3662, 6
    %v3678 = vsel %vm316, %v3676, %v3677
    %v3679 = vrot.slane %v3677, 4
    %v3680 = vrot.slane %v3663, 6
    %v3681 = vsel %vm316, %v3679, %v3680
    %v3682 = vrot.slane %v3680, 4
    %v3683 = vrot.slane %v3664, 6
    %v3684 = vsel %vm316, %v3682, %v3683
    %3685 = vrot.lane.b32.xlu0 %v3675, 96
    %v3686 = vpop.permute.xlu0 %3685
    %3687 = vrot.lane.b32.xlu0 %v3678, 96
    %v3688 = vpop.permute.xlu0 %3687
    %3689 = vrot.lane.b32.xlu0 %v3681, 96
    %v3690 = vpop.permute.xlu0 %3689
    %3691 = vrot.lane.b32.xlu0 %v3684, 96
    %v3692 = vpop.permute.xlu0 %3691
    %vm3697 = vcmask 257026
    %3698 = vst.msk [vmem:[#allocation8 + $0xc] sm:$0xc] %vm3697, %v3686
    %3699 = vst.msk [vmem:[#allocation8 + $0x10] sm:$0xf] %vm3669, %v3688
    %3700 = vst.msk [vmem:[#allocation8 + $0x14] sm:$0xf] %vm3669, %v3690
    %3701 = vst.msk [vmem:[#allocation8 + $0x18] sm:$0xf] %vm3669, %v3692
    %3702 = vrot.lane.b32.xlu0 %v3661, 64
    %v3703 = vpop.permute.xlu0 %3702
    %3704 = vrot.lane.b32.xlu0 %v3662, 64
    %v3705 = vpop.permute.xlu0 %3704
    %3706 = vrot.lane.b32.xlu0 %v3663, 64
    %v3707 = vpop.permute.xlu0 %3706
    %3708 = vrot.lane.b32.xlu0 %v3664, 64
    %v3709 = vpop.permute.xlu0 %3708
    %3714 = vst.msk [vmem:[#allocation8 + $0x1c] sm:$0xf] %vm3669, %v3703
    %3715 = vst.msk [vmem:[#allocation8 + $0x20] sm:$0xf] %vm3669, %v3705
    %3716 = vst.msk [vmem:[#allocation8 + $0x24] sm:$0xf] %vm3669, %v3707
    %3717 = vst.msk [vmem:[#allocation8 + $0x28] sm:$0x3] %vm3673, %v3709
    %3718 = vrot.lane.b32.xlu0 %v3675, 32
    %v3719 = vpop.permute.xlu0 %3718
    %3720 = vrot.lane.b32.xlu0 %v3678, 32
    %v3721 = vpop.permute.xlu0 %3720
    %3722 = vrot.lane.b32.xlu0 %v3681, 32
    %v3723 = vpop.permute.xlu0 %3722
    %3724 = vrot.lane.b32.xlu0 %v3684, 32
    %v3725 = vpop.permute.xlu0 %3724
    %3730 = vst.msk [vmem:[#allocation8 + $0x28] sm:$0xc] %vm3697, %v3719
    %3731 = vst.msk [vmem:[#allocation8 + $0x2c] sm:$0xf] %vm3669, %v3721
    %3732 = vst.msk [vmem:[#allocation8 + $0x30] sm:$0xf] %vm3669, %v3723
    %3733 = vst.msk [vmem:[#allocation8 + $0x34] sm:$0xf] %vm3669, %v3725
    %v3734 = vpack.c.bf16 %v3648, %v3646
    %v3735 = vpack.c.bf16 %v3652, %v3650
    %v3738 = vunpack.c.l.b16 %v3734
    %v3739 = vunpack.c.h.b16 %v3734
    %v3740 = vunpack.c.l.b16 %v3735
    %v3741 = vunpack.c.h.b16 %v3735
    %v3742 = vpack.c.b16 %v3738, %v3738
    %v3743 = vpack.c.b16 %v3739, %v3739
    %v3744 = vpack.c.b16 %v3740, %v3740
    %v3745 = vpack.c.b16 %v3741, %v3741
    %3750 = vst.msk [vmem:[#allocation8 + $0x38] sm:$0xf] %vm3669, %v3742
    %3751 = vst.msk [vmem:[#allocation8 + $0x3c] sm:$0xf] %vm3669, %v3743
    %3752 = vst.msk [vmem:[#allocation8 + $0x40] sm:$0xf] %vm3669, %v3744
    %3753 = vst.msk [vmem:[#allocation8 + $0x44] sm:$0x3] %vm3673, %v3745
    %v3754 = vrot.slane %v3742, 6
    %v3755 = vrot.slane %v3754, 4
    %v3756 = vrot.slane %v3743, 6
    %v3757 = vsel %vm316, %v3755, %v3756
    %v3758 = vrot.slane %v3756, 4
    %v3759 = vrot.slane %v3744, 6
    %v3760 = vsel %vm316, %v3758, %v3759
    %v3761 = vrot.slane %v3759, 4
    %v3762 = vrot.slane %v3745, 6
    %v3763 = vsel %vm316, %v3761, %v3762
    %3764 = vrot.lane.b32.xlu0 %v3754, 96
    %v3765 = vpop.permute.xlu0 %3764
    %3766 = vrot.lane.b32.xlu0 %v3757, 96
    %v3767 = vpop.permute.xlu0 %3766
    %3768 = vrot.lane.b32.xlu0 %v3760, 96
    %v3769 = vpop.permute.xlu0 %3768
    %3770 = vrot.lane.b32.xlu0 %v3763, 96
    %v3771 = vpop.permute.xlu0 %3770
    %3776 = vst.msk [vmem:[#allocation8 + $0x44] sm:$0xc] %vm3697, %v3765
    %3777 = vst.msk [vmem:[#allocation8 + $0x48] sm:$0xf] %vm3669, %v3767
    %3778 = vst.msk [vmem:[#allocation8 + $0x4c] sm:$0xf] %vm3669, %v3769
    %3779 = vst.msk [vmem:[#allocation8 + $0x50] sm:$0xf] %vm3669, %v3771
    %3780 = vrot.lane.b32.xlu0 %v3742, 64
    %v3781 = vpop.permute.xlu0 %3780
    %3782 = vrot.lane.b32.xlu0 %v3743, 64
    %v3783 = vpop.permute.xlu0 %3782
    %3784 = vrot.lane.b32.xlu0 %v3744, 64
    %v3785 = vpop.permute.xlu0 %3784
    %3786 = vrot.lane.b32.xlu0 %v3745, 64
    %v3787 = vpop.permute.xlu0 %3786
    %3792 = vst.msk [vmem:[#allocation8 + $0x54] sm:$0xf] %vm3669, %v3781
    %3793 = vst.msk [vmem:[#allocation8 + $0x58] sm:$0xf] %vm3669, %v3783
    %3794 = vst.msk [vmem:[#allocation8 + $0x5c] sm:$0xf] %vm3669, %v3785
    %3795 = vst.msk [vmem:[#allocation8 + $0x60] sm:$0x3] %vm3673, %v3787
    %v3796 = vld [vmem:[#allocation8] sm:$0xf]
    %v3797 = vld [vmem:[#allocation8 + $0x4] sm:$0xf]
    %v3798 = vld [vmem:[#allocation8 + $0x8] sm:$0xf]
    %v3799 = vld [vmem:[#allocation8 + $0xc] sm:$0xf]
    %v3800 = vld [vmem:[#allocation8 + $0x10] sm:$0xf]
    %v3801 = vld [vmem:[#allocation8 + $0x14] sm:$0xf]
    %v3802 = vld [vmem:[#allocation8 + $0x18] sm:$0xf]
    %v3803 = vld [vmem:[#allocation8 + $0x1c] sm:$0xf]
    %v3804 = vld [vmem:[#allocation8 + $0x20] sm:$0xf]
    %v3805 = vld [vmem:[#allocation8 + $0x24] sm:$0xf]
    %v3806 = vld [vmem:[#allocation8 + $0x28] sm:$0xf]
    %v3807 = vld [vmem:[#allocation8 + $0x2c] sm:$0xf]
    %v3808 = vld [vmem:[#allocation8 + $0x30] sm:$0xf]
    %v3809 = vld [vmem:[#allocation8 + $0x34] sm:$0xf]
    %v3810 = vld [vmem:[#allocation8 + $0x38] sm:$0xf]
    %v3811 = vld [vmem:[#allocation8 + $0x3c] sm:$0xf]
    %v3812 = vld [vmem:[#allocation8 + $0x40] sm:$0xf]
    %v3813 = vld [vmem:[#allocation8 + $0x44] sm:$0xf]
    %v3814 = vld [vmem:[#allocation8 + $0x48] sm:$0xf]
    %v3815 = vld [vmem:[#allocation8 + $0x4c] sm:$0xf]
    %v3816 = vld [vmem:[#allocation8 + $0x50] sm:$0xf]
    %v3817 = vld [vmem:[#allocation8 + $0x54] sm:$0xf]
    %v3818 = vld [vmem:[#allocation8 + $0x58] sm:$0xf]
    %v3819 = vld [vmem:[#allocation8 + $0x5c] sm:$0xf]
    %v3820 = vld [vmem:[#allocation8 + $0x60] sm:$0x3]
    %v3821 = vld [vmem:[%s19] sm:$0xff]
    %v3822 = vld [vmem:[%s19 + $0x8] sm:$0xff]
    %v3823 = vld [vmem:[%s19 + $0x10] sm:$0xff]
    %v3824 = vld [vmem:[%s19 + $0x18] sm:$0xff]
    %v3825 = vld [vmem:[%s20] sm:$0x3]
    %v3827 = vlaneseq
    %v3828 = vshrl.u32 %v3827, 7
    %v3829 = vsub.s32 0, %v3828
    %v3830 = vrot.slane %v3825, %v3829
    %v3831 = vlaneseq
    %v3832 = vshrl.u32 %v3831, 7
    %v3833 = vsub.s32 1, %v3832
    %v3834 = vrot.slane %v3825, %v3833
    %v3862 = vunpack.c.l.b16 %v3796
    %v3863 = vunpack.c.l.b16 %v3797
    %v3864 = vunpack.c.l.b16 %v3798
    %v3865 = vunpack.c.l.b16 %v3799
    %v3866 = vunpack.c.l.b16 %v3800
    %v3867 = vunpack.c.l.b16 %v3801
    %v3868 = vunpack.c.l.b16 %v3802
    %v3869 = vunpack.c.l.b16 %v3803
    %v3870 = vunpack.c.l.b16 %v3804
    %v3871 = vunpack.c.l.b16 %v3805
    %v3872 = vunpack.c.l.b16 %v3806
    %v3873 = vunpack.c.l.b16 %v3807
    %v3874 = vunpack.c.l.b16 %v3808
    %v3875 = vunpack.c.l.b16 %v3809
    %v3876 = vunpack.c.l.b16 %v3810
    %v3877 = vunpack.c.l.b16 %v3811
    %v3878 = vunpack.c.l.b16 %v3812
    %v3879 = vunpack.c.l.b16 %v3813
    %v3880 = vunpack.c.l.b16 %v3814
    %v3881 = vunpack.c.l.b16 %v3815
    %v3882 = vunpack.c.l.b16 %v3816
    %v3883 = vunpack.c.l.b16 %v3817
    %v3884 = vunpack.c.l.b16 %v3818
    %v3885 = vunpack.c.l.b16 %v3819
    %v3886 = vunpack.c.l.b16 %v3820
    %v3887 = vpack.c.b16 %v3863, %v3862
    %v3888 = vpack.c.b16 %v3865, %v3864
    %v3889 = vpack.c.b16 %v3867, %v3866
    %v3890 = vpack.c.b16 %v3869, %v3868
    %v3891 = vpack.c.b16 %v3871, %v3870
    %v3892 = vpack.c.b16 %v3873, %v3872
    %v3893 = vpack.c.b16 %v3875, %v3874
    %v3894 = vpack.c.b16 %v3877, %v3876
    %v3895 = vpack.c.b16 %v3879, %v3878
    %v3896 = vpack.c.b16 %v3881, %v3880
    %v3897 = vpack.c.b16 %v3883, %v3882
    %v3898 = vpack.c.b16 %v3885, %v3884
    %v3899 = vpack.c.b16 %v3886, %v3886
    %v3904 = vunpack.c.l.b16 %v3821
    %v3905 = vunpack.c.h.b16 %v3821
    %v3906 = vunpack.c.l.b16 %v3822
    %v3907 = vunpack.c.h.b16 %v3822
    %v3908 = vunpack.c.l.b16 %v3823
    %v3909 = vunpack.c.h.b16 %v3823
    %v3910 = vunpack.c.l.b16 %v3824
    %v3911 = vunpack.c.h.b16 %v3824
    %v3912 = vpack.c.b16 %v3906, %v3904
    %v3913 = vpack.c.b16 %v3907, %v3905
    %v3914 = vpack.c.b16 %v3910, %v3908
    %v3915 = vpack.c.b16 %v3911, %v3909
    %vm3920 = vcmask 261120
    %v3922 = vsel %vm3920, %v3887, 0
    %v3925 = vsel %vm3920, %v3888, 0
    %v3928 = vsel %vm3920, %v3889, 0
    %v3931 = vsel %vm3920, %v3890, 0
    %v3934 = vsel %vm3920, %v3891, 0
    %v3937 = vsel %vm3920, %v3892, 0
    %v3940 = vsel %vm3920, %v3893, 0
    %v3943 = vsel %vm3920, %v3894, 0
    %v3946 = vsel %vm3920, %v3895, 0
    %v3949 = vsel %vm3920, %v3896, 0
    %v3952 = vsel %vm3920, %v3897, 0
    %v3955 = vsel %vm3920, %v3898, 0
    %v3958 = vsel %vm3920, %v3899, 0
    %3960 = vmatprep.subr.bf16.mxu0 0
    %3961 = vmatpush1.bf16.msra.mxu0 0
    %3962 = vmatprep.subr.bf16.mxu0 0
    %3963 = vmatpush1.bf16.msra.mxu0 0
    %3964 = vmatprep.subr.bf16.mxu0 0
    %3965 = vmatpush1.bf16.msra.mxu0 0
    %3966 = vmatprep.subr.bf16.mxu0 0
    %3967 = vmatpush1.bf16.msra.mxu0 0
    %3968 = vmatprep.subr.bf16.mxu0 0
    %3969 = vmatpush1.bf16.msra.mxu0 0
    %3970 = vmatprep.subr.bf16.mxu0 0
    %3971 = vmatpush1.bf16.msra.mxu0 0
    %3972 = vmatprep.subr.bf16.mxu0 %v3915
    %3973 = vmatpush1.bf16.msra.mxu0 %v3914
    %3974 = vmatprep.subr.bf16.mxu0 %v3913
    %3975 = vmatpush1.bf16.msra.mxu0 %v3912
    %3976 = vmatprep.subr.bf16.mxu0 0
    %3977 = vmatpush2.bf16.msra.mxu0 0
    %3978 = vmatprep.subr.bf16.mxu0 0
    %3979 = vmatpush2.bf16.msra.mxu0 0
    %3980 = vmatprep.subr.bf16.mxu0 0
    %3981 = vmatpush2.bf16.msra.mxu0 0
    %3982 = vmatprep.subr.bf16.mxu0 0
    %3983 = vmatpush2.bf16.msra.mxu0 0
    %3984 = vmatprep.subr.bf16.mxu0 0
    %3985 = vmatpush2.bf16.msra.mxu0 0
    %3986 = vmatprep.subr.bf16.mxu0 0
    %3987 = vmatpush2.bf16.msra.mxu0 0
    %3988 = vmatprep.subr.bf16.mxu0 0
    %3989 = vmatpush2.bf16.msra.mxu0 0
    %3990 = vmatprep.subr.bf16.mxu0 0
    %3991 = vmatpush2.bf16.msra.mxu0 0
    %3992 = vmatprep.mubr.bf16.mxu0 0
    %3993 = vmatmul.mubr.bf16.gmra.mxu0 %v3922
    %v3994 = vpop.f32.mrf.mxu0
    %v3995 = vadd.f32 %v3830, %v3994
    %v3996 = vpop.f32.mrf.mxu0
    %v3997 = vadd.f32 %v3834, %v3996
    %v3998 = vpop.f32.mrf.mxu0
    %v3999 = vadd.f32 %v3830, %v3998
    %v4000 = vpop.f32.mrf.mxu0
    %v4001 = vadd.f32 %v3834, %v4000
    %4002 = vmatprep.mubr.bf16.mxu0 0
    %4003 = vmatmul.mubr.bf16.gmra.mxu0 %v3925
    %v4004 = vpop.f32.mrf.mxu0
    %v4005 = vadd.f32 %v3830, %v4004
    %v4006 = vpop.f32.mrf.mxu0
    %v4007 = vadd.f32 %v3834, %v4006
    %v4008 = vpop.f32.mrf.mxu0
    %v4009 = vadd.f32 %v3830, %v4008
    %v4010 = vpop.f32.mrf.mxu0
    %v4011 = vadd.f32 %v3834, %v4010
    %4012 = vmatprep.mubr.bf16.mxu0 0
    %4013 = vmatmul.mubr.bf16.gmra.mxu0 %v3928
    %v4014 = vpop.f32.mrf.mxu0
    %v4015 = vadd.f32 %v3830, %v4014
    %v4016 = vpop.f32.mrf.mxu0
    %v4017 = vadd.f32 %v3834, %v4016
    %v4018 = vpop.f32.mrf.mxu0
    %v4019 = vadd.f32 %v3830, %v4018
    %v4020 = vpop.f32.mrf.mxu0
    %v4021 = vadd.f32 %v3834, %v4020
    %4022 = vmatprep.mubr.bf16.mxu0 0
    %4023 = vmatmul.mubr.bf16.gmra.mxu0 %v3931
    %v4024 = vpop.f32.mrf.mxu0
    %v4025 = vadd.f32 %v3830, %v4024
    %v4026 = vpop.f32.mrf.mxu0
    %v4027 = vadd.f32 %v3834, %v4026
    %v4028 = vpop.f32.mrf.mxu0
    %v4029 = vadd.f32 %v3830, %v4028
    %v4030 = vpop.f32.mrf.mxu0
    %v4031 = vadd.f32 %v3834, %v4030
    %4032 = vmatprep.mubr.bf16.mxu0 0
    %4033 = vmatmul.mubr.bf16.gmra.mxu0 %v3934
    %v4034 = vpop.f32.mrf.mxu0
    %v4035 = vadd.f32 %v3830, %v4034
    %v4036 = vpop.f32.mrf.mxu0
    %v4037 = vadd.f32 %v3834, %v4036
    %v4038 = vpop.f32.mrf.mxu0
    %v4039 = vadd.f32 %v3830, %v4038
    %v4040 = vpop.f32.mrf.mxu0
    %v4041 = vadd.f32 %v3834, %v4040
    %4042 = vmatprep.mubr.bf16.mxu0 0
    %4043 = vmatmul.mubr.bf16.gmra.mxu0 %v3937
    %v4044 = vpop.f32.mrf.mxu0
    %v4045 = vadd.f32 %v3830, %v4044
    %v4046 = vpop.f32.mrf.mxu0
    %v4047 = vadd.f32 %v3834, %v4046
    %v4048 = vpop.f32.mrf.mxu0
    %v4049 = vadd.f32 %v3830, %v4048
    %v4050 = vpop.f32.mrf.mxu0
    %v4051 = vadd.f32 %v3834, %v4050
    %4052 = vmatprep.mubr.bf16.mxu0 0
    %4053 = vmatmul.mubr.bf16.gmra.mxu0 %v3940
    %v4054 = vpop.f32.mrf.mxu0
    %v4055 = vadd.f32 %v3830, %v4054
    %v4056 = vpop.f32.mrf.mxu0
    %v4057 = vadd.f32 %v3834, %v4056
    %v4058 = vpop.f32.mrf.mxu0
    %v4059 = vadd.f32 %v3830, %v4058
    %v4060 = vpop.f32.mrf.mxu0
    %v4061 = vadd.f32 %v3834, %v4060
    %4062 = vmatprep.mubr.bf16.mxu0 0
    %4063 = vmatmul.mubr.bf16.gmra.mxu0 %v3943
    %v4064 = vpop.f32.mrf.mxu0
    %v4065 = vadd.f32 %v3830, %v4064
    %v4066 = vpop.f32.mrf.mxu0
    %v4067 = vadd.f32 %v3834, %v4066
    %v4068 = vpop.f32.mrf.mxu0
    %v4069 = vadd.f32 %v3830, %v4068
    %v4070 = vpop.f32.mrf.mxu0
    %v4071 = vadd.f32 %v3834, %v4070
    %4072 = vmatprep.mubr.bf16.mxu0 0
    %4073 = vmatmul.mubr.bf16.gmra.mxu0 %v3946
    %v4074 = vpop.f32.mrf.mxu0
    %v4075 = vadd.f32 %v3830, %v4074
    %v4076 = vpop.f32.mrf.mxu0
    %v4077 = vadd.f32 %v3834, %v4076
    %v4078 = vpop.f32.mrf.mxu0
    %v4079 = vadd.f32 %v3830, %v4078
    %v4080 = vpop.f32.mrf.mxu0
    %v4081 = vadd.f32 %v3834, %v4080
    %4082 = vmatprep.mubr.bf16.mxu0 0
    %4083 = vmatmul.mubr.bf16.gmra.mxu0 %v3949
    %v4084 = vpop.f32.mrf.mxu0
    %v4085 = vadd.f32 %v3830, %v4084
    %v4086 = vpop.f32.mrf.mxu0
    %v4087 = vadd.f32 %v3834, %v4086
    %v4088 = vpop.f32.mrf.mxu0
    %v4089 = vadd.f32 %v3830, %v4088
    %v4090 = vpop.f32.mrf.mxu0
    %v4091 = vadd.f32 %v3834, %v4090
    %4092 = vmatprep.mubr.bf16.mxu0 0
    %4093 = vmatmul.mubr.bf16.gmra.mxu0 %v3952
    %v4094 = vpop.f32.mrf.mxu0
    %v4095 = vadd.f32 %v3830, %v4094
    %v4096 = vpop.f32.mrf.mxu0
    %v4097 = vadd.f32 %v3834, %v4096
    %v4098 = vpop.f32.mrf.mxu0
    %v4099 = vadd.f32 %v3830, %v4098
    %v4100 = vpop.f32.mrf.mxu0
    %v4101 = vadd.f32 %v3834, %v4100
    %4102 = vmatprep.mubr.bf16.mxu0 0
    %4103 = vmatmul.mubr.bf16.gmra.mxu0 %v3955
    %v4104 = vpop.f32.mrf.mxu0
    %v4105 = vadd.f32 %v3830, %v4104
    %v4106 = vpop.f32.mrf.mxu0
    %v4107 = vadd.f32 %v3834, %v4106
    %v4108 = vpop.f32.mrf.mxu0
    %v4109 = vadd.f32 %v3830, %v4108
    %v4110 = vpop.f32.mrf.mxu0
    %v4111 = vadd.f32 %v3834, %v4110
    %4112 = vmatprep.mubr.bf16.mxu0 0
    %4113 = vmatmul.mubr.bf16.gmra.mxu0 %v3958
    %v4114 = vpop.f32.mrf.mxu0
    %v4115 = vadd.f32 %v3830, %v4114
    %v4116 = vpop.f32.mrf.mxu0
    %v4117 = vadd.f32 %v3834, %v4116
    %v4118 = vpop.f32.mrf.mxu0
    %v4119 = vpop.f32.mrf.mxu0
    %4120 = vdwg.mxu0
    %v4121 = vadd.f32 %v3995, %v3999
    %v4122 = vadd.f32 %v4121, %v4005
    %v4123 = vadd.f32 %v4122, %v4009
    %v4124 = vadd.f32 %v4123, %v4015
    %v4125 = vadd.f32 %v4124, %v4019
    %v4126 = vadd.f32 %v4125, %v4025
    %v4127 = vadd.f32 %v4126, %v4029
    %v4128 = vadd.f32 %v4127, %v4035
    %v4129 = vadd.f32 %v4128, %v4039
    %v4130 = vadd.f32 %v4129, %v4045
    %v4131 = vadd.f32 %v4130, %v4049
    %v4132 = vadd.f32 %v4131, %v4055
    %v4133 = vadd.f32 %v4132, %v4059
    %v4134 = vadd.f32 %v4133, %v4065
    %v4135 = vadd.f32 %v4134, %v4069
    %v4136 = vadd.f32 %v4135, %v4075
    %v4137 = vadd.f32 %v4136, %v4079
    %v4138 = vadd.f32 %v4137, %v4085
    %v4139 = vadd.f32 %v4138, %v4089
    %v4140 = vadd.f32 %v4139, %v4095
    %v4141 = vadd.f32 %v4140, %v4099
    %v4142 = vadd.f32 %v4141, %v4105
    %v4143 = vadd.f32 %v4142, %v4109
    %v4144 = vsel %vm1129, %v4115, 0.0
    %v4145 = vadd.f32 %v4143, %v4144
    %v4146 = vrot.slane %v4145, 4
    %v4147 = vadd.f32 %v4145, %v4146
    %v4148 = vrot.slane %v4147, 2
    %v4149 = vadd.f32 %v4147, %v4148
    %v4150 = vrot.slane %v4149, 1
    %v4151 = vadd.f32 %v4149, %v4150
    %v4152 = vadd.f32 %v3997, %v4001
    %v4153 = vadd.f32 %v4152, %v4007
    %v4154 = vadd.f32 %v4153, %v4011
    %v4155 = vadd.f32 %v4154, %v4017
    %v4156 = vadd.f32 %v4155, %v4021
    %v4157 = vadd.f32 %v4156, %v4027
    %v4158 = vadd.f32 %v4157, %v4031
    %v4159 = vadd.f32 %v4158, %v4037
    %v4160 = vadd.f32 %v4159, %v4041
    %v4161 = vadd.f32 %v4160, %v4047
    %v4162 = vadd.f32 %v4161, %v4051
    %v4163 = vadd.f32 %v4162, %v4057
    %v4164 = vadd.f32 %v4163, %v4061
    %v4165 = vadd.f32 %v4164, %v4067
    %v4166 = vadd.f32 %v4165, %v4071
    %v4167 = vadd.f32 %v4166, %v4077
    %v4168 = vadd.f32 %v4167, %v4081
    %v4169 = vadd.f32 %v4168, %v4087
    %v4170 = vadd.f32 %v4169, %v4091
    %v4171 = vadd.f32 %v4170, %v4097
    %v4172 = vadd.f32 %v4171, %v4101
    %v4173 = vadd.f32 %v4172, %v4107
    %v4174 = vadd.f32 %v4173, %v4111
    %v4175 = vsel %vm1129, %v4117, 0.0
    %v4176 = vadd.f32 %v4174, %v4175
    %v4177 = vrot.slane %v4176, 4
    %v4178 = vadd.f32 %v4176, %v4177
    %v4179 = vrot.slane %v4178, 2
    %v4180 = vadd.f32 %v4178, %v4179
    %v4181 = vrot.slane %v4180, 1
    %v4182 = vadd.f32 %v4180, %v4181
    %v4183 = vld [vmem:[%s23] sm:$0xff]
    %v4184 = vld [vmem:[%s23 + $0x8] sm:$0xff]
    %v4185 = vld [vmem:[%s23 + $0x10] sm:$0xff]
    %v4186 = vld [vmem:[%s23 + $0x18] sm:$0xff]
    %v4187 = vld [vmem:[%s23 + $0x20] sm:$0xff]
    %v4188 = vld [vmem:[%s23 + $0x28] sm:$0xff]
    %v4189 = vld [vmem:[%s23 + $0x30] sm:$0xff]
    %v4190 = vld [vmem:[%s23 + $0x38] sm:$0xff]
    %v4191 = vld [vmem:[%s23 + $0x40] sm:$0xff]
    %v4192 = vld [vmem:[%s23 + $0x48] sm:$0xff]
    %v4193 = vld [vmem:[%s23 + $0x50] sm:$0xff]
    %v4194 = vld [vmem:[%s23 + $0x58] sm:$0xff]
    %v4195 = vld [vmem:[%s23 + $0x60] sm:$0xff]
    %v4196 = vld [vmem:[%s23 + $0x68] sm:$0xff]
    %v4197 = vld [vmem:[%s23 + $0x70] sm:$0xff]
    %v4198 = vld [vmem:[%s23 + $0x78] sm:$0xff]
    %v4199 = vld [vmem:[%s23 + $0x80] sm:$0xff]
    %v4200 = vld [vmem:[%s23 + $0x88] sm:$0xff]
    %v4201 = vld [vmem:[%s23 + $0x90] sm:$0xff]
    %v4202 = vld [vmem:[%s23 + $0x98] sm:$0xff]
    %v4203 = vld [vmem:[%s23 + $0xa0] sm:$0xff]
    %v4204 = vld [vmem:[%s23 + $0xa8] sm:$0xff]
    %v4205 = vld [vmem:[%s23 + $0xb0] sm:$0xff]
    %v4206 = vld [vmem:[%s23 + $0xb8] sm:$0xff]
    %v4207 = vld [vmem:[%s23 + $0xc0] sm:$0xff]
    %v4208 = vld [vmem:[%s23 + $0xc8] sm:$0xff]
    %v4209 = vld [vmem:[%s23 + $0xd0] sm:$0xff]
    %v4210 = vld [vmem:[%s23 + $0xd8] sm:$0xff]
    %v4211 = vld [vmem:[%s23 + $0xe0] sm:$0xff]
    %v4212 = vld [vmem:[%s23 + $0xe8] sm:$0xff]
    %v4213 = vld [vmem:[%s23 + $0xf0] sm:$0xff]
    %v4214 = vld [vmem:[%s23 + $0xf8] sm:$0xff]
    %4215 = vmatprep.subr.mxu0 0.0
    %4216 = vmatpush1.msra.mxu0 %v4198
    %4217 = vmatprep.subr.mxu0 0.0
    %4218 = vmatpush1.msra.mxu0 %v4197
    %4219 = vmatprep.subr.mxu0 0.0
    %4220 = vmatpush1.msra.mxu0 %v4196
    %4221 = vmatprep.subr.mxu0 0.0
    %4222 = vmatpush1.msra.mxu0 %v4195
    %4223 = vmatprep.subr.mxu0 0.0
    %4224 = vmatpush1.msra.mxu0 %v4194
    %4225 = vmatprep.subr.mxu0 0.0
    %4226 = vmatpush1.msra.mxu0 %v4193
    %4227 = vmatprep.subr.mxu0 0.0
    %4228 = vmatpush1.msra.mxu0 %v4192
    %4229 = vmatprep.subr.mxu0 0.0
    %4230 = vmatpush1.msra.mxu0 %v4191
    %4231 = vmatprep.subr.mxu0 0.0
    %4232 = vmatpush1.msra.mxu0 %v4190
    %4233 = vmatprep.subr.mxu0 0.0
    %4234 = vmatpush1.msra.mxu0 %v4189
    %4235 = vmatprep.subr.mxu0 0.0
    %4236 = vmatpush1.msra.mxu0 %v4188
    %4237 = vmatprep.subr.mxu0 0.0
    %4238 = vmatpush1.msra.mxu0 %v4187
    %4239 = vmatprep.subr.mxu0 0.0
    %4240 = vmatpush1.msra.mxu0 %v4186
    %4241 = vmatprep.subr.mxu0 0.0
    %4242 = vmatpush1.msra.mxu0 %v4185
    %4243 = vmatprep.subr.mxu0 0.0
    %4244 = vmatpush1.msra.mxu0 %v4184
    %4245 = vmatprep.subr.mxu0 0.0
    %4246 = vmatpush1.msra.mxu0 %v4183
    %4247 = vmatprep.subr.mxu0 0.0
    %4248 = vmatpush2.msra.mxu0 %v4214
    %4249 = vmatprep.subr.mxu0 0.0
    %4250 = vmatpush2.msra.mxu0 %v4213
    %4251 = vmatprep.subr.mxu0 0.0
    %4252 = vmatpush2.msra.mxu0 %v4212
    %4253 = vmatprep.subr.mxu0 0.0
    %4254 = vmatpush2.msra.mxu0 %v4211
    %4255 = vmatprep.subr.mxu0 0.0
    %4256 = vmatpush2.msra.mxu0 %v4210
    %4257 = vmatprep.subr.mxu0 0.0
    %4258 = vmatpush2.msra.mxu0 %v4209
    %4259 = vmatprep.subr.mxu0 0.0
    %4260 = vmatpush2.msra.mxu0 %v4208
    %4261 = vmatprep.subr.mxu0 0.0
    %4262 = vmatpush2.msra.mxu0 %v4207
    %4263 = vmatprep.subr.mxu0 0.0
    %4264 = vmatpush2.msra.mxu0 %v4206
    %4265 = vmatprep.subr.mxu0 0.0
    %4266 = vmatpush2.msra.mxu0 %v4205
    %4267 = vmatprep.subr.mxu0 0.0
    %4268 = vmatpush2.msra.mxu0 %v4204
    %4269 = vmatprep.subr.mxu0 0.0
    %4270 = vmatpush2.msra.mxu0 %v4203
    %4271 = vmatprep.subr.mxu0 0.0
    %4272 = vmatpush2.msra.mxu0 %v4202
    %4273 = vmatprep.subr.mxu0 0.0
    %4274 = vmatpush2.msra.mxu0 %v4201
    %4275 = vmatprep.subr.mxu0 0.0
    %4276 = vmatpush2.msra.mxu0 %v4200
    %4277 = vmatprep.subr.mxu0 0.0
    %4278 = vmatpush2.msra.mxu0 %v4199
    %4279 = vmatprep.mubr.f32.mxu0 %v4182
    %4280 = vmatmul.mubr.f32.gmra.mxu0 %v4151
    %v4281 = vpop.f32.mrf.mxu0
    %v4282 = vadd.f32 0.0, %v4281
    %v4283 = vpop.f32.mrf.mxu0
    %4284 = vdwg.mxu0
    %v4285 = vmul.f32 %v4282, 0.00031887754
    %v4286 = vld [vmem:[%s24] sm:$0xff]
    %v4287 = vld [vmem:[%s24 + $0x8] sm:$0xff]
    %v4288 = vld [vmem:[%s24 + $0x10] sm:$0xff]
    %v4289 = vld [vmem:[%s24 + $0x18] sm:$0xff]
    %vm4290 = vcmask 130048
    %v4292 = vsel %vm4290, %v4285, 0
    %4294 = vmatprep.subr.mxu0 0.0
    %4295 = vmatpush1.msra.mxu0 0.0
    %4296 = vmatprep.subr.mxu0 0.0
    %4297 = vmatpush1.msra.mxu0 0.0
    %4298 = vmatprep.subr.mxu0 0.0
    %4299 = vmatpush1.msra.mxu0 0.0
    %4300 = vmatprep.subr.mxu0 0.0
    %4301 = vmatpush1.msra.mxu0 0.0
    %4302 = vmatprep.subr.mxu0 0.0
    %4303 = vmatpush1.msra.mxu0 0.0
    %4304 = vmatprep.subr.mxu0 0.0
    %4305 = vmatpush1.msra.mxu0 0.0
    %4306 = vmatprep.subr.mxu0 0.0
    %4307 = vmatpush1.msra.mxu0 0.0
    %4308 = vmatprep.subr.mxu0 0.0
    %4309 = vmatpush1.msra.mxu0 0.0
    %4310 = vmatprep.subr.mxu0 0.0
    %4311 = vmatpush1.msra.mxu0 0.0
    %4312 = vmatprep.subr.mxu0 0.0
    %4313 = vmatpush1.msra.mxu0 0.0
    %4314 = vmatprep.subr.mxu0 0.0
    %4315 = vmatpush1.msra.mxu0 0.0
    %4316 = vmatprep.subr.mxu0 0.0
    %4317 = vmatpush1.msra.mxu0 0.0
    %4318 = vmatprep.subr.mxu0 0.0
    %4319 = vmatpush1.msra.mxu0 0.0
    %4320 = vmatprep.subr.mxu0 0.0
    %4321 = vmatpush1.msra.mxu0 0.0
    %4322 = vmatprep.subr.mxu0 %v4289
    %4323 = vmatpush1.msra.mxu0 %v4288
    %4324 = vmatprep.subr.mxu0 %v4287
    %4325 = vmatpush1.msra.mxu0 %v4286
    %4326 = vmatprep.subr.mxu0 0.0
    %4327 = vmatpush2.msra.mxu0 0.0
    %4328 = vmatprep.subr.mxu0 0.0
    %4329 = vmatpush2.msra.mxu0 0.0
    %4330 = vmatprep.subr.mxu0 0.0
    %4331 = vmatpush2.msra.mxu0 0.0
    %4332 = vmatprep.subr.mxu0 0.0
    %4333 = vmatpush2.msra.mxu0 0.0
    %4334 = vmatprep.subr.mxu0 0.0
    %4335 = vmatpush2.msra.mxu0 0.0
    %4336 = vmatprep.subr.mxu0 0.0
    %4337 = vmatpush2.msra.mxu0 0.0
    %4338 = vmatprep.subr.mxu0 0.0
    %4339 = vmatpush2.msra.mxu0 0.0
    %4340 = vmatprep.subr.mxu0 0.0
    %4341 = vmatpush2.msra.mxu0 0.0
    %4342 = vmatprep.subr.mxu0 0.0
    %4343 = vmatpush2.msra.mxu0 0.0
    %4344 = vmatprep.subr.mxu0 0.0
    %4345 = vmatpush2.msra.mxu0 0.0
    %4346 = vmatprep.subr.mxu0 0.0
    %4347 = vmatpush2.msra.mxu0 0.0
    %4348 = vmatprep.subr.mxu0 0.0
    %4349 = vmatpush2.msra.mxu0 0.0
    %4350 = vmatprep.subr.mxu0 0.0
    %4351 = vmatpush2.msra.mxu0 0.0
    %4352 = vmatprep.subr.mxu0 0.0
    %4353 = vmatpush2.msra.mxu0 0.0
    %4354 = vmatprep.subr.mxu0 0.0
    %4355 = vmatpush2.msra.mxu0 0.0
    %4356 = vmatprep.subr.mxu0 0.0
    %4357 = vmatpush2.msra.mxu0 0.0
    %4358 = vmatprep.mubr.f32.mxu0 0.0
    %4359 = vmatmul.mubr.f32.gmra.mxu0 %v4292
    %v4360 = vpop.f32.mrf.mxu0
    %v4361 = vadd.f32 0.0, %v4360
    %v4362 = vpop.f32.mrf.mxu0
    %v4363 = vadd.f32 0.0, %v4362
    %4364 = vdwg.mxu0
    %v4365 = vlaneseq
    %v4366 = vshrl.u32 %v4365, 7
    %v4367 = vsub.s32 0, %v4366
    %v4368 = vrot.slane %v4361, %v4367
    %v4369 = vlaneseq
    %v4370 = vshrl.u32 %v4369, 7
    %v4371 = vsub.s32 0, %v4370
    %v4372 = vrot.slane %v4363, %v4371
    %v4373 = vsub.f32 %v3995, %v4368
    %v4374 = vsub.f32 %v3997, %v4372
    %v4375 = vsub.f32 %v3999, %v4368
    %v4376 = vsub.f32 %v4001, %v4372
    %v4377 = vsub.f32 %v4005, %v4368
    %v4378 = vsub.f32 %v4007, %v4372
    %v4379 = vsub.f32 %v4009, %v4368
    %v4380 = vsub.f32 %v4011, %v4372
    %v4381 = vsub.f32 %v4015, %v4368
    %v4382 = vsub.f32 %v4017, %v4372
    %v4383 = vsub.f32 %v4019, %v4368
    %v4384 = vsub.f32 %v4021, %v4372
    %v4385 = vsub.f32 %v4025, %v4368
    %v4386 = vsub.f32 %v4027, %v4372
    %v4387 = vsub.f32 %v4029, %v4368
    %v4388 = vsub.f32 %v4031, %v4372
    %v4389 = vsub.f32 %v4035, %v4368
    %v4390 = vsub.f32 %v4037, %v4372
    %v4391 = vsub.f32 %v4039, %v4368
    %v4392 = vsub.f32 %v4041, %v4372
    %v4393 = vsub.f32 %v4045, %v4368
    %v4394 = vsub.f32 %v4047, %v4372
    %v4395 = vsub.f32 %v4049, %v4368
    %v4396 = vsub.f32 %v4051, %v4372
    %v4397 = vsub.f32 %v4055, %v4368
    %v4398 = vsub.f32 %v4057, %v4372
    %v4399 = vsub.f32 %v4059, %v4368
    %v4400 = vsub.f32 %v4061, %v4372
    %v4401 = vsub.f32 %v4065, %v4368
    %v4402 = vsub.f32 %v4067, %v4372
    %v4403 = vsub.f32 %v4069, %v4368
    %v4404 = vsub.f32 %v4071, %v4372
    %v4405 = vsub.f32 %v4075, %v4368
    %v4406 = vsub.f32 %v4077, %v4372
    %v4407 = vsub.f32 %v4079, %v4368
    %v4408 = vsub.f32 %v4081, %v4372
    %v4409 = vsub.f32 %v4085, %v4368
    %v4410 = vsub.f32 %v4087, %v4372
    %v4411 = vsub.f32 %v4089, %v4368
    %v4412 = vsub.f32 %v4091, %v4372
    %v4413 = vsub.f32 %v4095, %v4368
    %v4414 = vsub.f32 %v4097, %v4372
    %v4415 = vsub.f32 %v4099, %v4368
    %v4416 = vsub.f32 %v4101, %v4372
    %v4417 = vsub.f32 %v4105, %v4368
    %v4418 = vsub.f32 %v4107, %v4372
    %v4419 = vsub.f32 %v4109, %v4368
    %v4420 = vsub.f32 %v4111, %v4372
    %v4421 = vsub.f32 %v4115, %v4368
    %v4422 = vsub.f32 %v4117, %v4372
    %v4423 = vmul.f32 %v4373, %v4373
    %v4424 = vmul.f32 %v4374, %v4374
    %v4425 = vmul.f32 %v4375, %v4375
    %v4426 = vmul.f32 %v4376, %v4376
    %v4427 = vmul.f32 %v4377, %v4377
    %v4428 = vmul.f32 %v4378, %v4378
    %v4429 = vmul.f32 %v4379, %v4379
    %v4430 = vmul.f32 %v4380, %v4380
    %v4431 = vmul.f32 %v4381, %v4381
    %v4432 = vmul.f32 %v4382, %v4382
    %v4433 = vmul.f32 %v4383, %v4383
    %v4434 = vmul.f32 %v4384, %v4384
    %v4435 = vmul.f32 %v4385, %v4385
    %v4436 = vmul.f32 %v4386, %v4386
    %v4437 = vmul.f32 %v4387, %v4387
    %v4438 = vmul.f32 %v4388, %v4388
    %v4439 = vmul.f32 %v4389, %v4389
    %v4440 = vmul.f32 %v4390, %v4390
    %v4441 = vmul.f32 %v4391, %v4391
    %v4442 = vmul.f32 %v4392, %v4392
    %v4443 = vmul.f32 %v4393, %v4393
    %v4444 = vmul.f32 %v4394, %v4394
    %v4445 = vmul.f32 %v4395, %v4395
    %v4446 = vmul.f32 %v4396, %v4396
    %v4447 = vmul.f32 %v4397, %v4397
    %v4448 = vmul.f32 %v4398, %v4398
    %v4449 = vmul.f32 %v4399, %v4399
    %v4450 = vmul.f32 %v4400, %v4400
    %v4451 = vmul.f32 %v4401, %v4401
    %v4452 = vmul.f32 %v4402, %v4402
    %v4453 = vmul.f32 %v4403, %v4403
    %v4454 = vmul.f32 %v4404, %v4404
    %v4455 = vmul.f32 %v4405, %v4405
    %v4456 = vmul.f32 %v4406, %v4406
    %v4457 = vmul.f32 %v4407, %v4407
    %v4458 = vmul.f32 %v4408, %v4408
    %v4459 = vmul.f32 %v4409, %v4409
    %v4460 = vmul.f32 %v4410, %v4410
    %v4461 = vmul.f32 %v4411, %v4411
    %v4462 = vmul.f32 %v4412, %v4412
    %v4463 = vmul.f32 %v4413, %v4413
    %v4464 = vmul.f32 %v4414, %v4414
    %v4465 = vmul.f32 %v4415, %v4415
    %v4466 = vmul.f32 %v4416, %v4416
    %v4467 = vmul.f32 %v4417, %v4417
    %v4468 = vmul.f32 %v4418, %v4418
    %v4469 = vmul.f32 %v4419, %v4419
    %v4470 = vmul.f32 %v4420, %v4420
    %v4471 = vmul.f32 %v4421, %v4421
    %v4472 = vmul.f32 %v4422, %v4422
    %v4473 = vadd.f32 %v4423, %v4425
    %v4474 = vadd.f32 %v4473, %v4427
    %v4475 = vadd.f32 %v4474, %v4429
    %v4476 = vadd.f32 %v4475, %v4431
    %v4477 = vadd.f32 %v4476, %v4433
    %v4478 = vadd.f32 %v4477, %v4435
    %v4479 = vadd.f32 %v4478, %v4437
    %v4480 = vadd.f32 %v4479, %v4439
    %v4481 = vadd.f32 %v4480, %v4441
    %v4482 = vadd.f32 %v4481, %v4443
    %v4483 = vadd.f32 %v4482, %v4445
    %v4484 = vadd.f32 %v4483, %v4447
    %v4485 = vadd.f32 %v4484, %v4449
    %v4486 = vadd.f32 %v4485, %v4451
    %v4487 = vadd.f32 %v4486, %v4453
    %v4488 = vadd.f32 %v4487, %v4455
    %v4489 = vadd.f32 %v4488, %v4457
    %v4490 = vadd.f32 %v4489, %v4459
    %v4491 = vadd.f32 %v4490, %v4461
    %v4492 = vadd.f32 %v4491, %v4463
    %v4493 = vadd.f32 %v4492, %v4465
    %v4494 = vadd.f32 %v4493, %v4467
    %v4495 = vadd.f32 %v4494, %v4469
    %v4496 = vsel %vm1129, %v4471, 0.0
    %v4497 = vadd.f32 %v4495, %v4496
    %v4498 = vrot.slane %v4497, 4
    %v4499 = vadd.f32 %v4497, %v4498
    %v4500 = vrot.slane %v4499, 2
    %v4501 = vadd.f32 %v4499, %v4500
    %v4502 = vrot.slane %v4501, 1
    %v4503 = vadd.f32 %v4501, %v4502
    %v4504 = vadd.f32 %v4424, %v4426
    %v4505 = vadd.f32 %v4504, %v4428
    %v4506 = vadd.f32 %v4505, %v4430
    %v4507 = vadd.f32 %v4506, %v4432
    %v4508 = vadd.f32 %v4507, %v4434
    %v4509 = vadd.f32 %v4508, %v4436
    %v4510 = vadd.f32 %v4509, %v4438
    %v4511 = vadd.f32 %v4510, %v4440
    %v4512 = vadd.f32 %v4511, %v4442
    %v4513 = vadd.f32 %v4512, %v4444
    %v4514 = vadd.f32 %v4513, %v4446
    %v4515 = vadd.f32 %v4514, %v4448
    %v4516 = vadd.f32 %v4515, %v4450
    %v4517 = vadd.f32 %v4516, %v4452
    %v4518 = vadd.f32 %v4517, %v4454
    %v4519 = vadd.f32 %v4518, %v4456
    %v4520 = vadd.f32 %v4519, %v4458
    %v4521 = vadd.f32 %v4520, %v4460
    %v4522 = vadd.f32 %v4521, %v4462
    %v4523 = vadd.f32 %v4522, %v4464
    %v4524 = vadd.f32 %v4523, %v4466
    %v4525 = vadd.f32 %v4524, %v4468
    %v4526 = vadd.f32 %v4525, %v4470
    %v4527 = vsel %vm1129, %v4472, 0.0
    %v4528 = vadd.f32 %v4526, %v4527
    %v4529 = vrot.slane %v4528, 4
    %v4530 = vadd.f32 %v4528, %v4529
    %v4531 = vrot.slane %v4530, 2
    %v4532 = vadd.f32 %v4530, %v4531
    %v4533 = vrot.slane %v4532, 1
    %v4534 = vadd.f32 %v4532, %v4533
    %4535 = vmatprep.subr.mxu0 0.0
    %4536 = vmatpush1.msra.mxu0 %v4198
    %4537 = vmatprep.subr.mxu0 0.0
    %4538 = vmatpush1.msra.mxu0 %v4197
    %4539 = vmatprep.subr.mxu0 0.0
    %4540 = vmatpush1.msra.mxu0 %v4196
    %4541 = vmatprep.subr.mxu0 0.0
    %4542 = vmatpush1.msra.mxu0 %v4195
    %4543 = vmatprep.subr.mxu0 0.0
    %4544 = vmatpush1.msra.mxu0 %v4194
    %4545 = vmatprep.subr.mxu0 0.0
    %4546 = vmatpush1.msra.mxu0 %v4193
    %4547 = vmatprep.subr.mxu0 0.0
    %4548 = vmatpush1.msra.mxu0 %v4192
    %4549 = vmatprep.subr.mxu0 0.0
    %4550 = vmatpush1.msra.mxu0 %v4191
    %4551 = vmatprep.subr.mxu0 0.0
    %4552 = vmatpush1.msra.mxu0 %v4190
    %4553 = vmatprep.subr.mxu0 0.0
    %4554 = vmatpush1.msra.mxu0 %v4189
    %4555 = vmatprep.subr.mxu0 0.0
    %4556 = vmatpush1.msra.mxu0 %v4188
    %4557 = vmatprep.subr.mxu0 0.0
    %4558 = vmatpush1.msra.mxu0 %v4187
    %4559 = vmatprep.subr.mxu0 0.0
    %4560 = vmatpush1.msra.mxu0 %v4186
    %4561 = vmatprep.subr.mxu0 0.0
    %4562 = vmatpush1.msra.mxu0 %v4185
    %4563 = vmatprep.subr.mxu0 0.0
    %4564 = vmatpush1.msra.mxu0 %v4184
    %4565 = vmatprep.subr.mxu0 0.0
    %4566 = vmatpush1.msra.mxu0 %v4183
    %4567 = vmatprep.subr.mxu0 0.0
    %4568 = vmatpush2.msra.mxu0 %v4214
    %4569 = vmatprep.subr.mxu0 0.0
    %4570 = vmatpush2.msra.mxu0 %v4213
    %4571 = vmatprep.subr.mxu0 0.0
    %4572 = vmatpush2.msra.mxu0 %v4212
    %4573 = vmatprep.subr.mxu0 0.0
    %4574 = vmatpush2.msra.mxu0 %v4211
    %4575 = vmatprep.subr.mxu0 0.0
    %4576 = vmatpush2.msra.mxu0 %v4210
    %4577 = vmatprep.subr.mxu0 0.0
    %4578 = vmatpush2.msra.mxu0 %v4209
    %4579 = vmatprep.subr.mxu0 0.0
    %4580 = vmatpush2.msra.mxu0 %v4208
    %4581 = vmatprep.subr.mxu0 0.0
    %4582 = vmatpush2.msra.mxu0 %v4207
    %4583 = vmatprep.subr.mxu0 0.0
    %4584 = vmatpush2.msra.mxu0 %v4206
    %4585 = vmatprep.subr.mxu0 0.0
    %4586 = vmatpush2.msra.mxu0 %v4205
    %4587 = vmatprep.subr.mxu0 0.0
    %4588 = vmatpush2.msra.mxu0 %v4204
    %4589 = vmatprep.subr.mxu0 0.0
    %4590 = vmatpush2.msra.mxu0 %v4203
    %4591 = vmatprep.subr.mxu0 0.0
    %4592 = vmatpush2.msra.mxu0 %v4202
    %4593 = vmatprep.subr.mxu0 0.0
    %4594 = vmatpush2.msra.mxu0 %v4201
    %4595 = vmatprep.subr.mxu0 0.0
    %4596 = vmatpush2.msra.mxu0 %v4200
    %4597 = vmatprep.subr.mxu0 0.0
    %4598 = vmatpush2.msra.mxu0 %v4199
    %4599 = vmatprep.mubr.f32.mxu0 %v4534
    %4600 = vmatmul.mubr.f32.gmra.mxu0 %v4503
    %v4601 = vpop.f32.mrf.mxu0
    %v4602 = vadd.f32 0.0, %v4601
    %v4603 = vpop.f32.mrf.mxu0
    %4604 = vdwg.mxu0
    %v4605 = vmul.f32 %v4602, 0.00031887754
    %v4606 = vld [vmem:[%s21] sm:$0x1]
    %v4607 = vadd.f32 %v4605, 1e-05
    %v4608 = vrsqrt.pop %v4607
    %v4609 = vmul.f32 %v4606, %v4608
    %v4610 = vld [vmem:[%s22] sm:$0x1]
    %v4611 = vmul.f32 %v4285, %v4609
    %v4612 = vsub.f32 %v4610, %v4611
    %v4614 = vsel %vm4290, %v4609, 0
    %4616 = vmatprep.subr.mxu0 0.0
    %4617 = vmatpush1.msra.mxu0 0.0
    %4618 = vmatprep.subr.mxu0 0.0
    %4619 = vmatpush1.msra.mxu0 0.0
    %4620 = vmatprep.subr.mxu0 0.0
    %4621 = vmatpush1.msra.mxu0 0.0
    %4622 = vmatprep.subr.mxu0 0.0
    %4623 = vmatpush1.msra.mxu0 0.0
    %4624 = vmatprep.subr.mxu0 0.0
    %4625 = vmatpush1.msra.mxu0 0.0
    %4626 = vmatprep.subr.mxu0 0.0
    %4627 = vmatpush1.msra.mxu0 0.0
    %4628 = vmatprep.subr.mxu0 0.0
    %4629 = vmatpush1.msra.mxu0 0.0
    %4630 = vmatprep.subr.mxu0 0.0
    %4631 = vmatpush1.msra.mxu0 0.0
    %4632 = vmatprep.subr.mxu0 0.0
    %4633 = vmatpush1.msra.mxu0 0.0
    %4634 = vmatprep.subr.mxu0 0.0
    %4635 = vmatpush1.msra.mxu0 0.0
    %4636 = vmatprep.subr.mxu0 0.0
    %4637 = vmatpush1.msra.mxu0 0.0
    %4638 = vmatprep.subr.mxu0 0.0
    %4639 = vmatpush1.msra.mxu0 0.0
    %4640 = vmatprep.subr.mxu0 0.0
    %4641 = vmatpush1.msra.mxu0 0.0
    %4642 = vmatprep.subr.mxu0 0.0
    %4643 = vmatpush1.msra.mxu0 0.0
    %4644 = vmatprep.subr.mxu0 %v4289
    %4645 = vmatpush1.msra.mxu0 %v4288
    %4646 = vmatprep.subr.mxu0 %v4287
    %4647 = vmatpush1.msra.mxu0 %v4286
    %4648 = vmatprep.subr.mxu0 0.0
    %4649 = vmatpush2.msra.mxu0 0.0
    %4650 = vmatprep.subr.mxu0 0.0
    %4651 = vmatpush2.msra.mxu0 0.0
    %4652 = vmatprep.subr.mxu0 0.0
    %4653 = vmatpush2.msra.mxu0 0.0
    %4654 = vmatprep.subr.mxu0 0.0
    %4655 = vmatpush2.msra.mxu0 0.0
    %4656 = vmatprep.subr.mxu0 0.0
    %4657 = vmatpush2.msra.mxu0 0.0
    %4658 = vmatprep.subr.mxu0 0.0
    %4659 = vmatpush2.msra.mxu0 0.0
    %4660 = vmatprep.subr.mxu0 0.0
    %4661 = vmatpush2.msra.mxu0 0.0
    %4662 = vmatprep.subr.mxu0 0.0
    %4663 = vmatpush2.msra.mxu0 0.0
    %4664 = vmatprep.subr.mxu0 0.0
    %4665 = vmatpush2.msra.mxu0 0.0
    %4666 = vmatprep.subr.mxu0 0.0
    %4667 = vmatpush2.msra.mxu0 0.0
    %4668 = vmatprep.subr.mxu0 0.0
    %4669 = vmatpush2.msra.mxu0 0.0
    %4670 = vmatprep.subr.mxu0 0.0
    %4671 = vmatpush2.msra.mxu0 0.0
    %4672 = vmatprep.subr.mxu0 0.0
    %4673 = vmatpush2.msra.mxu0 0.0
    %4674 = vmatprep.subr.mxu0 0.0
    %4675 = vmatpush2.msra.mxu0 0.0
    %4676 = vmatprep.subr.mxu0 0.0
    %4677 = vmatpush2.msra.mxu0 0.0
    %4678 = vmatprep.subr.mxu0 0.0
    %4679 = vmatpush2.msra.mxu0 0.0
    %4680 = vmatprep.mubr.f32.mxu0 0.0
    %4681 = vmatmul.mubr.f32.gmra.mxu0 %v4614
    %v4682 = vpop.f32.mrf.mxu0
    %v4683 = vadd.f32 0.0, %v4682
    %v4684 = vpop.f32.mrf.mxu0
    %v4685 = vadd.f32 0.0, %v4684
    %4686 = vdwg.mxu0
    %v4687 = vlaneseq
    %v4688 = vshrl.u32 %v4687, 7
    %v4689 = vsub.s32 0, %v4688
    %v4690 = vrot.slane %v4683, %v4689
    %v4691 = vlaneseq
    %v4692 = vshrl.u32 %v4691, 7
    %v4693 = vsub.s32 0, %v4692
    %v4694 = vrot.slane %v4685, %v4693
    %v4695 = vmul.f32 %v3995, %v4690
    %v4696 = vmul.f32 %v3997, %v4694
    %v4697 = vmul.f32 %v3999, %v4690
    %v4698 = vmul.f32 %v4001, %v4694
    %v4699 = vmul.f32 %v4005, %v4690
    %v4700 = vmul.f32 %v4007, %v4694
    %v4701 = vmul.f32 %v4009, %v4690
    %v4702 = vmul.f32 %v4011, %v4694
    %v4703 = vmul.f32 %v4015, %v4690
    %v4704 = vmul.f32 %v4017, %v4694
    %v4705 = vmul.f32 %v4019, %v4690
    %v4706 = vmul.f32 %v4021, %v4694
    %v4707 = vmul.f32 %v4025, %v4690
    %v4708 = vmul.f32 %v4027, %v4694
    %v4709 = vmul.f32 %v4029, %v4690
    %v4710 = vmul.f32 %v4031, %v4694
    %v4711 = vmul.f32 %v4035, %v4690
    %v4712 = vmul.f32 %v4037, %v4694
    %v4713 = vmul.f32 %v4039, %v4690
    %v4714 = vmul.f32 %v4041, %v4694
    %v4715 = vmul.f32 %v4045, %v4690
    %v4716 = vmul.f32 %v4047, %v4694
    %v4717 = vmul.f32 %v4049, %v4690
    %v4718 = vmul.f32 %v4051, %v4694
    %v4719 = vmul.f32 %v4055, %v4690
    %v4720 = vmul.f32 %v4057, %v4694
    %v4721 = vmul.f32 %v4059, %v4690
    %v4722 = vmul.f32 %v4061, %v4694
    %v4723 = vmul.f32 %v4065, %v4690
    %v4724 = vmul.f32 %v4067, %v4694
    %v4725 = vmul.f32 %v4069, %v4690
    %v4726 = vmul.f32 %v4071, %v4694
    %v4727 = vmul.f32 %v4075, %v4690
    %v4728 = vmul.f32 %v4077, %v4694
    %v4729 = vmul.f32 %v4079, %v4690
    %v4730 = vmul.f32 %v4081, %v4694
    %v4731 = vmul.f32 %v4085, %v4690
    %v4732 = vmul.f32 %v4087, %v4694
    %v4733 = vmul.f32 %v4089, %v4690
    %v4734 = vmul.f32 %v4091, %v4694
    %v4735 = vmul.f32 %v4095, %v4690
    %v4736 = vmul.f32 %v4097, %v4694
    %v4737 = vmul.f32 %v4099, %v4690
    %v4738 = vmul.f32 %v4101, %v4694
    %v4739 = vmul.f32 %v4105, %v4690
    %v4740 = vmul.f32 %v4107, %v4694
    %v4741 = vmul.f32 %v4109, %v4690
    %v4742 = vmul.f32 %v4111, %v4694
    %v4743 = vmul.f32 %v4115, %v4690
    %v4744 = vmul.f32 %v4117, %v4694
    %v4746 = vsel %vm4290, %v4612, 0
    %4748 = vmatprep.subr.mxu0 0.0
    %4749 = vmatpush1.msra.mxu0 0.0
    %4750 = vmatprep.subr.mxu0 0.0
    %4751 = vmatpush1.msra.mxu0 0.0
    %4752 = vmatprep.subr.mxu0 0.0
    %4753 = vmatpush1.msra.mxu0 0.0
    %4754 = vmatprep.subr.mxu0 0.0
    %4755 = vmatpush1.msra.mxu0 0.0
    %4756 = vmatprep.subr.mxu0 0.0
    %4757 = vmatpush1.msra.mxu0 0.0
    %4758 = vmatprep.subr.mxu0 0.0
    %4759 = vmatpush1.msra.mxu0 0.0
    %4760 = vmatprep.subr.mxu0 0.0
    %4761 = vmatpush1.msra.mxu0 0.0
    %4762 = vmatprep.subr.mxu0 0.0
    %4763 = vmatpush1.msra.mxu0 0.0
    %4764 = vmatprep.subr.mxu0 0.0
    %4765 = vmatpush1.msra.mxu0 0.0
    %4766 = vmatprep.subr.mxu0 0.0
    %4767 = vmatpush1.msra.mxu0 0.0
    %4768 = vmatprep.subr.mxu0 0.0
    %4769 = vmatpush1.msra.mxu0 0.0
    %4770 = vmatprep.subr.mxu0 0.0
    %4771 = vmatpush1.msra.mxu0 0.0
    %4772 = vmatprep.subr.mxu0 0.0
    %4773 = vmatpush1.msra.mxu0 0.0
    %4774 = vmatprep.subr.mxu0 0.0
    %4775 = vmatpush1.msra.mxu0 0.0
    %4776 = vmatprep.subr.mxu0 %v4289
    %4777 = vmatpush1.msra.mxu0 %v4288
    %4778 = vmatprep.subr.mxu0 %v4287
    %4779 = vmatpush1.msra.mxu0 %v4286
    %4780 = vmatprep.subr.mxu0 0.0
    %4781 = vmatpush2.msra.mxu0 0.0
    %4782 = vmatprep.subr.mxu0 0.0
    %4783 = vmatpush2.msra.mxu0 0.0
    %4784 = vmatprep.subr.mxu0 0.0
    %4785 = vmatpush2.msra.mxu0 0.0
    %4786 = vmatprep.subr.mxu0 0.0
    %4787 = vmatpush2.msra.mxu0 0.0
    %4788 = vmatprep.subr.mxu0 0.0
    %4789 = vmatpush2.msra.mxu0 0.0
    %4790 = vmatprep.subr.mxu0 0.0
    %4791 = vmatpush2.msra.mxu0 0.0
    %4792 = vmatprep.subr.mxu0 0.0
    %4793 = vmatpush2.msra.mxu0 0.0
    %4794 = vmatprep.subr.mxu0 0.0
    %4795 = vmatpush2.msra.mxu0 0.0
    %4796 = vmatprep.subr.mxu0 0.0
    %4797 = vmatpush2.msra.mxu0 0.0
    %4798 = vmatprep.subr.mxu0 0.0
    %4799 = vmatpush2.msra.mxu0 0.0
    %4800 = vmatprep.subr.mxu0 0.0
    %4801 = vmatpush2.msra.mxu0 0.0
    %4802 = vmatprep.subr.mxu0 0.0
    %4803 = vmatpush2.msra.mxu0 0.0
    %4804 = vmatprep.subr.mxu0 0.0
    %4805 = vmatpush2.msra.mxu0 0.0
    %4806 = vmatprep.subr.mxu0 0.0
    %4807 = vmatpush2.msra.mxu0 0.0
    %4808 = vmatprep.subr.mxu0 0.0
    %4809 = vmatpush2.msra.mxu0 0.0
    %4810 = vmatprep.subr.mxu0 0.0
    %4811 = vmatpush2.msra.mxu0 0.0
    %4812 = vmatprep.mubr.f32.mxu0 0.0
    %4813 = vmatmul.mubr.f32.gmra.mxu0 %v4746
    %v4814 = vpop.f32.mrf.mxu0
    %v4815 = vadd.f32 0.0, %v4814
    %v4816 = vpop.f32.mrf.mxu0
    %v4817 = vadd.f32 0.0, %v4816
    %4818 = vdwg.mxu0
    %v4819 = vlaneseq
    %v4820 = vshrl.u32 %v4819, 7
    %v4821 = vsub.s32 0, %v4820
    %v4822 = vrot.slane %v4815, %v4821
    %v4823 = vlaneseq
    %v4824 = vshrl.u32 %v4823, 7
    %v4825 = vsub.s32 0, %v4824
    %v4826 = vrot.slane %v4817, %v4825
    %v4827 = vadd.f32 %v4695, %v4822
    %v4828 = vadd.f32 %v4696, %v4826
    %v4829 = vadd.f32 %v4697, %v4822
    %v4830 = vadd.f32 %v4698, %v4826
    %v4831 = vadd.f32 %v4699, %v4822
    %v4832 = vadd.f32 %v4700, %v4826
    %v4833 = vadd.f32 %v4701, %v4822
    %v4834 = vadd.f32 %v4702, %v4826
    %v4835 = vadd.f32 %v4703, %v4822
    %v4836 = vadd.f32 %v4704, %v4826
    %v4837 = vadd.f32 %v4705, %v4822
    %v4838 = vadd.f32 %v4706, %v4826
    %v4839 = vadd.f32 %v4707, %v4822
    %v4840 = vadd.f32 %v4708, %v4826
    %v4841 = vadd.f32 %v4709, %v4822
    %v4842 = vadd.f32 %v4710, %v4826
    %v4843 = vadd.f32 %v4711, %v4822
    %v4844 = vadd.f32 %v4712, %v4826
    %v4845 = vadd.f32 %v4713, %v4822
    %v4846 = vadd.f32 %v4714, %v4826
    %v4847 = vadd.f32 %v4715, %v4822
    %v4848 = vadd.f32 %v4716, %v4826
    %v4849 = vadd.f32 %v4717, %v4822
    %v4850 = vadd.f32 %v4718, %v4826
    %v4851 = vadd.f32 %v4719, %v4822
    %v4852 = vadd.f32 %v4720, %v4826
    %v4853 = vadd.f32 %v4721, %v4822
    %v4854 = vadd.f32 %v4722, %v4826
    %v4855 = vadd.f32 %v4723, %v4822
    %v4856 = vadd.f32 %v4724, %v4826
    %v4857 = vadd.f32 %v4725, %v4822
    %v4858 = vadd.f32 %v4726, %v4826
    %v4859 = vadd.f32 %v4727, %v4822
    %v4860 = vadd.f32 %v4728, %v4826
    %v4861 = vadd.f32 %v4729, %v4822
    %v4862 = vadd.f32 %v4730, %v4826
    %v4863 = vadd.f32 %v4731, %v4822
    %v4864 = vadd.f32 %v4732, %v4826
    %v4865 = vadd.f32 %v4733, %v4822
    %v4866 = vadd.f32 %v4734, %v4826
    %v4867 = vadd.f32 %v4735, %v4822
    %v4868 = vadd.f32 %v4736, %v4826
    %v4869 = vadd.f32 %v4737, %v4822
    %v4870 = vadd.f32 %v4738, %v4826
    %v4871 = vadd.f32 %v4739, %v4822
    %v4872 = vadd.f32 %v4740, %v4826
    %v4873 = vadd.f32 %v4741, %v4822
    %v4874 = vadd.f32 %v4742, %v4826
    %v4875 = vadd.f32 %v4743, %v4822
    %v4876 = vadd.f32 %v4744, %v4826
    %v4877 = vxor.u32 %v4827, 2147483648
    %v4878 = vxor.u32 %v4828, 2147483648
    %v4879 = vxor.u32 %v4829, 2147483648
    %v4880 = vxor.u32 %v4830, 2147483648
    %v4881 = vxor.u32 %v4831, 2147483648
    %v4882 = vxor.u32 %v4832, 2147483648
    %v4883 = vxor.u32 %v4833, 2147483648
    %v4884 = vxor.u32 %v4834, 2147483648
    %v4885 = vxor.u32 %v4835, 2147483648
    %v4886 = vxor.u32 %v4836, 2147483648
    %v4887 = vxor.u32 %v4837, 2147483648
    %v4888 = vxor.u32 %v4838, 2147483648
    %v4889 = vxor.u32 %v4839, 2147483648
    %v4890 = vxor.u32 %v4840, 2147483648
    %v4891 = vxor.u32 %v4841, 2147483648
    %v4892 = vxor.u32 %v4842, 2147483648
    %v4893 = vxor.u32 %v4843, 2147483648
    %v4894 = vxor.u32 %v4844, 2147483648
    %v4895 = vxor.u32 %v4845, 2147483648
    %v4896 = vxor.u32 %v4846, 2147483648
    %v4897 = vxor.u32 %v4847, 2147483648
    %v4898 = vxor.u32 %v4848, 2147483648
    %v4899 = vxor.u32 %v4849, 2147483648
    %v4900 = vxor.u32 %v4850, 2147483648
    %v4901 = vxor.u32 %v4851, 2147483648
    %v4902 = vxor.u32 %v4852, 2147483648
    %v4903 = vxor.u32 %v4853, 2147483648
    %v4904 = vxor.u32 %v4854, 2147483648
    %v4905 = vxor.u32 %v4855, 2147483648
    %v4906 = vxor.u32 %v4856, 2147483648
    %v4907 = vxor.u32 %v4857, 2147483648
    %v4908 = vxor.u32 %v4858, 2147483648
    %v4909 = vxor.u32 %v4859, 2147483648
    %v4910 = vxor.u32 %v4860, 2147483648
    %v4911 = vxor.u32 %v4861, 2147483648
    %v4912 = vxor.u32 %v4862, 2147483648
    %v4913 = vxor.u32 %v4863, 2147483648
    %v4914 = vxor.u32 %v4864, 2147483648
    %v4915 = vxor.u32 %v4865, 2147483648
    %v4916 = vxor.u32 %v4866, 2147483648
    %v4917 = vxor.u32 %v4867, 2147483648
    %v4918 = vxor.u32 %v4868, 2147483648
    %v4919 = vxor.u32 %v4869, 2147483648
    %v4920 = vxor.u32 %v4870, 2147483648
    %v4921 = vxor.u32 %v4871, 2147483648
    %v4922 = vxor.u32 %v4872, 2147483648
    %v4923 = vxor.u32 %v4873, 2147483648
    %v4924 = vxor.u32 %v4874, 2147483648
    %v4925 = vxor.u32 %v4875, 2147483648
    %v4926 = vxor.u32 %v4876, 2147483648
    %v4927 = vmul.f32 %v4877, 1.442695
    %v4928 = vpow.pop %v4927
    %v4929 = vmul.f32 %v4878, 1.442695
    %v4930 = vpow.pop %v4929
    %v4931 = vmul.f32 %v4879, 1.442695
    %v4932 = vpow.pop %v4931
    %v4933 = vmul.f32 %v4880, 1.442695
    %v4934 = vpow.pop %v4933
    %v4935 = vmul.f32 %v4881, 1.442695
    %v4936 = vpow.pop %v4935
    %v4937 = vmul.f32 %v4882, 1.442695
    %v4938 = vpow.pop %v4937
    %v4939 = vmul.f32 %v4883, 1.442695
    %v4940 = vpow.pop %v4939
    %v4941 = vmul.f32 %v4884, 1.442695
    %v4942 = vpow.pop %v4941
    %v4943 = vmul.f32 %v4885, 1.442695
    %v4944 = vpow.pop %v4943
    %v4945 = vmul.f32 %v4886, 1.442695
    %v4946 = vpow.pop %v4945
    %v4947 = vmul.f32 %v4887, 1.442695
    %v4948 = vpow.pop %v4947
    %v4949 = vmul.f32 %v4888, 1.442695
    %v4950 = vpow.pop %v4949
    %v4951 = vmul.f32 %v4889, 1.442695
    %v4952 = vpow.pop %v4951
    %v4953 = vmul.f32 %v4890, 1.442695
    %v4954 = vpow.pop %v4953
    %v4955 = vmul.f32 %v4891, 1.442695
    %v4956 = vpow.pop %v4955
    %v4957 = vmul.f32 %v4892, 1.442695
    %v4958 = vpow.pop %v4957
    %v4959 = vmul.f32 %v4893, 1.442695
    %v4960 = vpow.pop %v4959
    %v4961 = vmul.f32 %v4894, 1.442695
    %v4962 = vpow.pop %v4961
    %v4963 = vmul.f32 %v4895, 1.442695
    %v4964 = vpow.pop %v4963
    %v4965 = vmul.f32 %v4896, 1.442695
    %v4966 = vpow.pop %v4965
    %v4967 = vmul.f32 %v4897, 1.442695
    %v4968 = vpow.pop %v4967
    %v4969 = vmul.f32 %v4898, 1.442695
    %v4970 = vpow.pop %v4969
    %v4971 = vmul.f32 %v4899, 1.442695
    %v4972 = vpow.pop %v4971
    %v4973 = vmul.f32 %v4900, 1.442695
    %v4974 = vpow.pop %v4973
    %v4975 = vmul.f32 %v4901, 1.442695
    %v4976 = vpow.pop %v4975
    %v4977 = vmul.f32 %v4902, 1.442695
    %v4978 = vpow.pop %v4977
    %v4979 = vmul.f32 %v4903, 1.442695
    %v4980 = vpow.pop %v4979
    %v4981 = vmul.f32 %v4904, 1.442695
    %v4982 = vpow.pop %v4981
    %v4983 = vmul.f32 %v4905, 1.442695
    %v4984 = vpow.pop %v4983
    %v4985 = vmul.f32 %v4906, 1.442695
    %v4986 = vpow.pop %v4985
    %v4987 = vmul.f32 %v4907, 1.442695
    %v4988 = vpow.pop %v4987
    %v4989 = vmul.f32 %v4908, 1.442695
    %v4990 = vpow.pop %v4989
    %v4991 = vmul.f32 %v4909, 1.442695
    %v4992 = vpow.pop %v4991
    %v4993 = vmul.f32 %v4910, 1.442695
    %v4994 = vpow.pop %v4993
    %v4995 = vmul.f32 %v4911, 1.442695
    %v4996 = vpow.pop %v4995
    %v4997 = vmul.f32 %v4912, 1.442695
    %v4998 = vpow.pop %v4997
    %v4999 = vmul.f32 %v4913, 1.442695
    %v5000 = vpow.pop %v4999
    %v5001 = vmul.f32 %v4914, 1.442695
    %v5002 = vpow.pop %v5001
    %v5003 = vmul.f32 %v4915, 1.442695
    %v5004 = vpow.pop %v5003
    %v5005 = vmul.f32 %v4916, 1.442695
    %v5006 = vpow.pop %v5005
    %v5007 = vmul.f32 %v4917, 1.442695
    %v5008 = vpow.pop %v5007
    %v5009 = vmul.f32 %v4918, 1.442695
    %v5010 = vpow.pop %v5009
    %v5011 = vmul.f32 %v4919, 1.442695
    %v5012 = vpow.pop %v5011
    %v5013 = vmul.f32 %v4920, 1.442695
    %v5014 = vpow.pop %v5013
    %v5015 = vmul.f32 %v4921, 1.442695
    %v5016 = vpow.pop %v5015
    %v5017 = vmul.f32 %v4922, 1.442695
    %v5018 = vpow.pop %v5017
    %v5019 = vmul.f32 %v4923, 1.442695
    %v5020 = vpow.pop %v5019
    %v5021 = vmul.f32 %v4924, 1.442695
    %v5022 = vpow.pop %v5021
    %v5023 = vmul.f32 %v4925, 1.442695
    %v5024 = vpow.pop %v5023
    %v5025 = vmul.f32 %v4926, 1.442695
    %v5026 = vpow.pop %v5025
    %v5027 = vadd.f32 %v4928, 1.0
    %v5028 = vadd.f32 %v4930, 1.0
    %v5029 = vadd.f32 %v4932, 1.0
    %v5030 = vadd.f32 %v4934, 1.0
    %v5031 = vadd.f32 %v4936, 1.0
    %v5032 = vadd.f32 %v4938, 1.0
    %v5033 = vadd.f32 %v4940, 1.0
    %v5034 = vadd.f32 %v4942, 1.0
    %v5035 = vadd.f32 %v4944, 1.0
    %v5036 = vadd.f32 %v4946, 1.0
    %v5037 = vadd.f32 %v4948, 1.0
    %v5038 = vadd.f32 %v4950, 1.0
    %v5039 = vadd.f32 %v4952, 1.0
    %v5040 = vadd.f32 %v4954, 1.0
    %v5041 = vadd.f32 %v4956, 1.0
    %v5042 = vadd.f32 %v4958, 1.0
    %v5043 = vadd.f32 %v4960, 1.0
    %v5044 = vadd.f32 %v4962, 1.0
    %v5045 = vadd.f32 %v4964, 1.0
    %v5046 = vadd.f32 %v4966, 1.0
    %v5047 = vadd.f32 %v4968, 1.0
    %v5048 = vadd.f32 %v4970, 1.0
    %v5049 = vadd.f32 %v4972, 1.0
    %v5050 = vadd.f32 %v4974, 1.0
    %v5051 = vadd.f32 %v4976, 1.0
    %v5052 = vadd.f32 %v4978, 1.0
    %v5053 = vadd.f32 %v4980, 1.0
    %v5054 = vadd.f32 %v4982, 1.0
    %v5055 = vadd.f32 %v4984, 1.0
    %v5056 = vadd.f32 %v4986, 1.0
    %v5057 = vadd.f32 %v4988, 1.0
    %v5058 = vadd.f32 %v4990, 1.0
    %v5059 = vadd.f32 %v4992, 1.0
    %v5060 = vadd.f32 %v4994, 1.0
    %v5061 = vadd.f32 %v4996, 1.0
    %v5062 = vadd.f32 %v4998, 1.0
    %v5063 = vadd.f32 %v5000, 1.0
    %v5064 = vadd.f32 %v5002, 1.0
    %v5065 = vadd.f32 %v5004, 1.0
    %v5066 = vadd.f32 %v5006, 1.0
    %v5067 = vadd.f32 %v5008, 1.0
    %v5068 = vadd.f32 %v5010, 1.0
    %v5069 = vadd.f32 %v5012, 1.0
    %v5070 = vadd.f32 %v5014, 1.0
    %v5071 = vadd.f32 %v5016, 1.0
    %v5072 = vadd.f32 %v5018, 1.0
    %v5073 = vadd.f32 %v5020, 1.0
    %v5074 = vadd.f32 %v5022, 1.0
    %v5075 = vadd.f32 %v5024, 1.0
    %v5076 = vadd.f32 %v5026, 1.0
    %v5077 = vrcp.pop %v5027
    %v5078 = vmul.f32 1.0, %v5077
    %v5079 = vrcp.pop %v5028
    %v5080 = vmul.f32 1.0, %v5079
    %v5081 = vrcp.pop %v5029
    %v5082 = vmul.f32 1.0, %v5081
    %v5083 = vrcp.pop %v5030
    %v5084 = vmul.f32 1.0, %v5083
    %v5085 = vrcp.pop %v5031
    %v5086 = vmul.f32 1.0, %v5085
    %v5087 = vrcp.pop %v5032
    %v5088 = vmul.f32 1.0, %v5087
    %v5089 = vrcp.pop %v5033
    %v5090 = vmul.f32 1.0, %v5089
    %v5091 = vrcp.pop %v5034
    %v5092 = vmul.f32 1.0, %v5091
    %v5093 = vrcp.pop %v5035
    %v5094 = vmul.f32 1.0, %v5093
    %v5095 = vrcp.pop %v5036
    %v5096 = vmul.f32 1.0, %v5095
    %v5097 = vrcp.pop %v5037
    %v5098 = vmul.f32 1.0, %v5097
    %v5099 = vrcp.pop %v5038
    %v5100 = vmul.f32 1.0, %v5099
    %v5101 = vrcp.pop %v5039
    %v5102 = vmul.f32 1.0, %v5101
    %v5103 = vrcp.pop %v5040
    %v5104 = vmul.f32 1.0, %v5103
    %v5105 = vrcp.pop %v5041
    %v5106 = vmul.f32 1.0, %v5105
    %v5107 = vrcp.pop %v5042
    %v5108 = vmul.f32 1.0, %v5107
    %v5109 = vrcp.pop %v5043
    %v5110 = vmul.f32 1.0, %v5109
    %v5111 = vrcp.pop %v5044
    %v5112 = vmul.f32 1.0, %v5111
    %v5113 = vrcp.pop %v5045
    %v5114 = vmul.f32 1.0, %v5113
    %v5115 = vrcp.pop %v5046
    %v5116 = vmul.f32 1.0, %v5115
    %v5117 = vrcp.pop %v5047
    %v5118 = vmul.f32 1.0, %v5117
    %v5119 = vrcp.pop %v5048
    %v5120 = vmul.f32 1.0, %v5119
    %v5121 = vrcp.pop %v5049
    %v5122 = vmul.f32 1.0, %v5121
    %v5123 = vrcp.pop %v5050
    %v5124 = vmul.f32 1.0, %v5123
    %v5125 = vrcp.pop %v5051
    %v5126 = vmul.f32 1.0, %v5125
    %v5127 = vrcp.pop %v5052
    %v5128 = vmul.f32 1.0, %v5127
    %v5129 = vrcp.pop %v5053
    %v5130 = vmul.f32 1.0, %v5129
    %v5131 = vrcp.pop %v5054
    %v5132 = vmul.f32 1.0, %v5131
    %v5133 = vrcp.pop %v5055
    %v5134 = vmul.f32 1.0, %v5133
    %v5135 = vrcp.pop %v5056
    %v5136 = vmul.f32 1.0, %v5135
    %v5137 = vrcp.pop %v5057
    %v5138 = vmul.f32 1.0, %v5137
    %v5139 = vrcp.pop %v5058
    %v5140 = vmul.f32 1.0, %v5139
    %v5141 = vrcp.pop %v5059
    %v5142 = vmul.f32 1.0, %v5141
    %v5143 = vrcp.pop %v5060
    %v5144 = vmul.f32 1.0, %v5143
    %v5145 = vrcp.pop %v5061
    %v5146 = vmul.f32 1.0, %v5145
    %v5147 = vrcp.pop %v5062
    %v5148 = vmul.f32 1.0, %v5147
    %v5149 = vrcp.pop %v5063
    %v5150 = vmul.f32 1.0, %v5149
    %v5151 = vrcp.pop %v5064
    %v5152 = vmul.f32 1.0, %v5151
    %v5153 = vrcp.pop %v5065
    %v5154 = vmul.f32 1.0, %v5153
    %v5155 = vrcp.pop %v5066
    %v5156 = vmul.f32 1.0, %v5155
    %v5157 = vrcp.pop %v5067
    %v5158 = vmul.f32 1.0, %v5157
    %v5159 = vrcp.pop %v5068
    %v5160 = vmul.f32 1.0, %v5159
    %v5161 = vrcp.pop %v5069
    %v5162 = vmul.f32 1.0, %v5161
    %v5163 = vrcp.pop %v5070
    %v5164 = vmul.f32 1.0, %v5163
    %v5165 = vrcp.pop %v5071
    %v5166 = vmul.f32 1.0, %v5165
    %v5167 = vrcp.pop %v5072
    %v5168 = vmul.f32 1.0, %v5167
    %v5169 = vrcp.pop %v5073
    %v5170 = vmul.f32 1.0, %v5169
    %v5171 = vrcp.pop %v5074
    %v5172 = vmul.f32 1.0, %v5171
    %v5173 = vrcp.pop %v5075
    %v5174 = vmul.f32 1.0, %v5173
    %v5175 = vrcp.pop %v5076
    %v5176 = vmul.f32 1.0, %v5175
    %v5177 = vpack.c.bf16 %v5082, %v5078
    %v5178 = vpack.c.bf16 %v5084, %v5080
    %v5179 = vpack.c.bf16 %v5090, %v5086
    %v5180 = vpack.c.bf16 %v5092, %v5088
    %v5181 = vpack.c.bf16 %v5098, %v5094
    %v5182 = vpack.c.bf16 %v5100, %v5096
    %v5183 = vpack.c.bf16 %v5106, %v5102
    %v5184 = vpack.c.bf16 %v5108, %v5104
    %v5185 = vpack.c.bf16 %v5114, %v5110
    %v5186 = vpack.c.bf16 %v5116, %v5112
    %v5187 = vpack.c.bf16 %v5122, %v5118
    %v5188 = vpack.c.bf16 %v5124, %v5120
    %v5189 = vpack.c.bf16 %v5130, %v5126
    %v5190 = vpack.c.bf16 %v5132, %v5128
    %v5191 = vpack.c.bf16 %v5138, %v5134
    %v5192 = vpack.c.bf16 %v5140, %v5136
    %v5193 = vpack.c.bf16 %v5146, %v5142
    %v5194 = vpack.c.bf16 %v5148, %v5144
    %v5195 = vpack.c.bf16 %v5154, %v5150
    %v5196 = vpack.c.bf16 %v5156, %v5152
    %v5197 = vpack.c.bf16 %v5162, %v5158
    %v5198 = vpack.c.bf16 %v5164, %v5160
    %v5199 = vpack.c.bf16 %v5170, %v5166
    %v5200 = vpack.c.bf16 %v5172, %v5168
    %v5201 = vpack.c.bf16 %v5174, %v5174
    %v5202 = vpack.c.bf16 %v5176, %v5176
    %v5203 = vld [vmem:[#allocation23] sm:$0xf]
    %v5204 = vld [vmem:[#allocation23 + $0x4] sm:$0xf]
    %v5205 = vld [vmem:[#allocation23 + $0x8] sm:$0xf]
    %v5206 = vld [vmem:[#allocation23 + $0xc] sm:$0xf]
    %v5207 = vld [vmem:[#allocation23 + $0x10] sm:$0xf]
    %v5208 = vld [vmem:[#allocation23 + $0x14] sm:$0xf]
    %v5209 = vld [vmem:[#allocation23 + $0x18] sm:$0xf]
    %v5210 = vld [vmem:[#allocation23 + $0x1c] sm:$0xf]
    %v5211 = vld [vmem:[#allocation23 + $0x20] sm:$0xf]
    %v5212 = vld [vmem:[#allocation23 + $0x24] sm:$0xf]
    %v5213 = vld [vmem:[#allocation23 + $0x28] sm:$0xf]
    %v5214 = vld [vmem:[#allocation23 + $0x2c] sm:$0xf]
    %v5215 = vld [vmem:[#allocation23 + $0x30] sm:$0xf]
    %v5216 = vld [vmem:[#allocation23 + $0x34] sm:$0xf]
    %v5217 = vld [vmem:[#allocation23 + $0x38] sm:$0xf]
    %v5218 = vld [vmem:[#allocation23 + $0x3c] sm:$0xf]
    %v5219 = vld [vmem:[#allocation23 + $0x40] sm:$0xf]
    %v5220 = vld [vmem:[#allocation23 + $0x44] sm:$0xf]
    %v5221 = vld [vmem:[#allocation23 + $0x48] sm:$0xf]
    %v5222 = vld [vmem:[#allocation23 + $0x4c] sm:$0xf]
    %v5223 = vld [vmem:[#allocation23 + $0x50] sm:$0xf]
    %v5224 = vld [vmem:[#allocation23 + $0x54] sm:$0xf]
    %v5225 = vld [vmem:[#allocation23 + $0x58] sm:$0xf]
    %v5226 = vld [vmem:[#allocation23 + $0x5c] sm:$0xf]
    %v5227 = vld [vmem:[#allocation23 + $0x60] sm:$0xf]
    %v5228 = vld [vmem:[#allocation23 + $0x64] sm:$0xf]
    %v5229 = vld [vmem:[#allocation23 + $0x68] sm:$0xf]
    %v5230 = vld [vmem:[#allocation23 + $0x6c] sm:$0xf]
    %v5231 = vld [vmem:[#allocation23 + $0x70] sm:$0xf]
    %v5232 = vld [vmem:[#allocation23 + $0x74] sm:$0xf]
    %v5233 = vld [vmem:[#allocation23 + $0x78] sm:$0xf]
    %v5234 = vld [vmem:[#allocation23 + $0x7c] sm:$0xf]
    %v5235 = vld [vmem:[%s26] sm:$0x1]
    %v5237 = vlaneseq
    %v5238 = vshrl.u32 %v5237, 7
    %v5239 = vsub.s32 0, %v5238
    %v5240 = vrot.slane %v5235, %v5239
    %v5274 = vunpack.c.l.b16 %v5203
    %v5275 = vunpack.c.l.b16 %v5204
    %v5276 = vunpack.c.l.b16 %v5205
    %v5277 = vunpack.c.l.b16 %v5206
    %v5278 = vunpack.c.l.b16 %v5207
    %v5279 = vunpack.c.l.b16 %v5208
    %v5280 = vunpack.c.l.b16 %v5209
    %v5281 = vunpack.c.l.b16 %v5210
    %v5282 = vunpack.c.l.b16 %v5211
    %v5283 = vunpack.c.l.b16 %v5212
    %v5284 = vunpack.c.l.b16 %v5213
    %v5285 = vunpack.c.l.b16 %v5214
    %v5286 = vunpack.c.l.b16 %v5215
    %v5287 = vunpack.c.l.b16 %v5216
    %v5288 = vunpack.c.l.b16 %v5217
    %v5289 = vunpack.c.l.b16 %v5218
    %v5290 = vunpack.c.l.b16 %v5219
    %v5291 = vunpack.c.l.b16 %v5220
    %v5292 = vunpack.c.l.b16 %v5221
    %v5293 = vunpack.c.l.b16 %v5222
    %v5294 = vunpack.c.l.b16 %v5223
    %v5295 = vunpack.c.l.b16 %v5224
    %v5296 = vunpack.c.l.b16 %v5225
    %v5297 = vunpack.c.l.b16 %v5226
    %v5298 = vunpack.c.l.b16 %v5227
    %v5299 = vunpack.c.l.b16 %v5228
    %v5300 = vunpack.c.l.b16 %v5229
    %v5301 = vunpack.c.l.b16 %v5230
    %v5302 = vunpack.c.l.b16 %v5231
    %v5303 = vunpack.c.l.b16 %v5232
    %v5304 = vunpack.c.l.b16 %v5233
    %v5305 = vunpack.c.l.b16 %v5234
    %v5306 = vpack.c.b16 %v5275, %v5274
    %v5307 = vpack.c.b16 %v5277, %v5276
    %v5308 = vpack.c.b16 %v5279, %v5278
    %v5309 = vpack.c.b16 %v5281, %v5280
    %v5310 = vpack.c.b16 %v5283, %v5282
    %v5311 = vpack.c.b16 %v5285, %v5284
    %v5312 = vpack.c.b16 %v5287, %v5286
    %v5313 = vpack.c.b16 %v5289, %v5288
    %v5314 = vpack.c.b16 %v5291, %v5290
    %v5315 = vpack.c.b16 %v5293, %v5292
    %v5316 = vpack.c.b16 %v5295, %v5294
    %v5317 = vpack.c.b16 %v5297, %v5296
    %v5318 = vpack.c.b16 %v5299, %v5298
    %v5319 = vpack.c.b16 %v5301, %v5300
    %v5320 = vpack.c.b16 %v5303, %v5302
    %v5321 = vpack.c.b16 %v5305, %v5304
    %5338 = vmatprep.subr.bf16.mxu0 0
    %5339 = vmatpush1.bf16.msra.mxu0 %v5313
    %5340 = vmatprep.subr.bf16.mxu0 0
    %5341 = vmatpush1.bf16.msra.mxu0 %v5312
    %5342 = vmatprep.subr.bf16.mxu0 0
    %5343 = vmatpush1.bf16.msra.mxu0 %v5311
    %5344 = vmatprep.subr.bf16.mxu0 0
    %5345 = vmatpush1.bf16.msra.mxu0 %v5310
    %5346 = vmatprep.subr.bf16.mxu0 0
    %5347 = vmatpush1.bf16.msra.mxu0 %v5309
    %5348 = vmatprep.subr.bf16.mxu0 0
    %5349 = vmatpush1.bf16.msra.mxu0 %v5308
    %5350 = vmatprep.subr.bf16.mxu0 0
    %5351 = vmatpush1.bf16.msra.mxu0 %v5307
    %5352 = vmatprep.subr.bf16.mxu0 0
    %5353 = vmatpush1.bf16.msra.mxu0 %v5306
    %5354 = vmatprep.subr.bf16.mxu0 0
    %5355 = vmatpush2.bf16.msra.mxu0 %v5321
    %5356 = vmatprep.subr.bf16.mxu0 0
    %5357 = vmatpush2.bf16.msra.mxu0 %v5320
    %5358 = vmatprep.subr.bf16.mxu0 0
    %5359 = vmatpush2.bf16.msra.mxu0 %v5319
    %5360 = vmatprep.subr.bf16.mxu0 0
    %5361 = vmatpush2.bf16.msra.mxu0 %v5318
    %5362 = vmatprep.subr.bf16.mxu0 0
    %5363 = vmatpush2.bf16.msra.mxu0 %v5317
    %5364 = vmatprep.subr.bf16.mxu0 0
    %5365 = vmatpush2.bf16.msra.mxu0 %v5316
    %5366 = vmatprep.subr.bf16.mxu0 0
    %5367 = vmatpush2.bf16.msra.mxu0 %v5315
    %5368 = vmatprep.subr.bf16.mxu0 0
    %5369 = vmatpush2.bf16.msra.mxu0 %v5314
    %5370 = vmatprep.mubr.bf16.mxu0 %v5178
    %5371 = vmatmul.mubr.bf16.gmra.mxu0 %v5177
    %v5372 = vpop.f32.mrf.mxu0
    %v5373 = vadd.f32 %v5240, %v5372
    %v5374 = vpop.f32.mrf.mxu0
    %v5375 = vpop.f32.mrf.mxu0
    %v5376 = vadd.f32 %v5240, %v5375
    %v5377 = vpop.f32.mrf.mxu0
    %5378 = vmatprep.mubr.bf16.mxu0 %v5180
    %5379 = vmatmul.mubr.bf16.gmra.mxu0 %v5179
    %v5380 = vpop.f32.mrf.mxu0
    %v5381 = vadd.f32 %v5240, %v5380
    %v5382 = vpop.f32.mrf.mxu0
    %v5383 = vpop.f32.mrf.mxu0
    %v5384 = vadd.f32 %v5240, %v5383
    %v5385 = vpop.f32.mrf.mxu0
    %5386 = vmatprep.mubr.bf16.mxu0 %v5182
    %5387 = vmatmul.mubr.bf16.gmra.mxu0 %v5181
    %v5388 = vpop.f32.mrf.mxu0
    %v5389 = vadd.f32 %v5240, %v5388
    %v5390 = vpop.f32.mrf.mxu0
    %v5391 = vpop.f32.mrf.mxu0
    %v5392 = vadd.f32 %v5240, %v5391
    %v5393 = vpop.f32.mrf.mxu0
    %5394 = vmatprep.mubr.bf16.mxu0 %v5184
    %5395 = vmatmul.mubr.bf16.gmra.mxu0 %v5183
    %v5396 = vpop.f32.mrf.mxu0
    %v5397 = vadd.f32 %v5240, %v5396
    %v5398 = vpop.f32.mrf.mxu0
    %v5399 = vpop.f32.mrf.mxu0
    %v5400 = vadd.f32 %v5240, %v5399
    %v5401 = vpop.f32.mrf.mxu0
    %5402 = vmatprep.mubr.bf16.mxu0 %v5186
    %5403 = vmatmul.mubr.bf16.gmra.mxu0 %v5185
    %v5404 = vpop.f32.mrf.mxu0
    %v5405 = vadd.f32 %v5240, %v5404
    %v5406 = vpop.f32.mrf.mxu0
    %v5407 = vpop.f32.mrf.mxu0
    %v5408 = vadd.f32 %v5240, %v5407
    %v5409 = vpop.f32.mrf.mxu0
    %5410 = vmatprep.mubr.bf16.mxu0 %v5188
    %5411 = vmatmul.mubr.bf16.gmra.mxu0 %v5187
    %v5412 = vpop.f32.mrf.mxu0
    %v5413 = vadd.f32 %v5240, %v5412
    %v5414 = vpop.f32.mrf.mxu0
    %v5415 = vpop.f32.mrf.mxu0
    %v5416 = vadd.f32 %v5240, %v5415
    %v5417 = vpop.f32.mrf.mxu0
    %5418 = vmatprep.mubr.bf16.mxu0 %v5190
    %5419 = vmatmul.mubr.bf16.gmra.mxu0 %v5189
    %v5420 = vpop.f32.mrf.mxu0
    %v5421 = vadd.f32 %v5240, %v5420
    %v5422 = vpop.f32.mrf.mxu0
    %v5423 = vpop.f32.mrf.mxu0
    %v5424 = vadd.f32 %v5240, %v5423
    %v5425 = vpop.f32.mrf.mxu0
    %5426 = vmatprep.mubr.bf16.mxu0 %v5192
    %5427 = vmatmul.mubr.bf16.gmra.mxu0 %v5191
    %v5428 = vpop.f32.mrf.mxu0
    %v5429 = vadd.f32 %v5240, %v5428
    %v5430 = vpop.f32.mrf.mxu0
    %v5431 = vpop.f32.mrf.mxu0
    %v5432 = vadd.f32 %v5240, %v5431
    %v5433 = vpop.f32.mrf.mxu0
    %5434 = vmatprep.mubr.bf16.mxu0 %v5194
    %5435 = vmatmul.mubr.bf16.gmra.mxu0 %v5193
    %v5436 = vpop.f32.mrf.mxu0
    %v5437 = vadd.f32 %v5240, %v5436
    %v5438 = vpop.f32.mrf.mxu0
    %v5439 = vpop.f32.mrf.mxu0
    %v5440 = vadd.f32 %v5240, %v5439
    %v5441 = vpop.f32.mrf.mxu0
    %5442 = vmatprep.mubr.bf16.mxu0 %v5196
    %5443 = vmatmul.mubr.bf16.gmra.mxu0 %v5195
    %v5444 = vpop.f32.mrf.mxu0
    %v5445 = vadd.f32 %v5240, %v5444
    %v5446 = vpop.f32.mrf.mxu0
    %v5447 = vpop.f32.mrf.mxu0
    %v5448 = vadd.f32 %v5240, %v5447
    %v5449 = vpop.f32.mrf.mxu0
    %5450 = vmatprep.mubr.bf16.mxu0 %v5198
    %5451 = vmatmul.mubr.bf16.gmra.mxu0 %v5197
    %v5452 = vpop.f32.mrf.mxu0
    %v5453 = vadd.f32 %v5240, %v5452
    %v5454 = vpop.f32.mrf.mxu0
    %v5455 = vpop.f32.mrf.mxu0
    %v5456 = vadd.f32 %v5240, %v5455
    %v5457 = vpop.f32.mrf.mxu0
    %5458 = vmatprep.mubr.bf16.mxu0 %v5200
    %5459 = vmatmul.mubr.bf16.gmra.mxu0 %v5199
    %v5460 = vpop.f32.mrf.mxu0
    %v5461 = vadd.f32 %v5240, %v5460
    %v5462 = vpop.f32.mrf.mxu0
    %v5463 = vpop.f32.mrf.mxu0
    %v5464 = vadd.f32 %v5240, %v5463
    %v5465 = vpop.f32.mrf.mxu0
    %5466 = vmatprep.mubr.bf16.mxu0 %v5202
    %5467 = vmatmul.mubr.bf16.gmra.mxu0 %v5201
    %v5468 = vpop.f32.mrf.mxu0
    %v5469 = vadd.f32 %v5240, %v5468
    %v5470 = vpop.f32.mrf.mxu0
    %v5471 = vpop.f32.mrf.mxu0
    %v5472 = vpop.f32.mrf.mxu0
    %5473 = vdwg.mxu0
    %v5474 = vxor.u32 %v5373, 2147483648
    %v5475 = vxor.u32 %v5376, 2147483648
    %v5476 = vxor.u32 %v5381, 2147483648
    %v5477 = vxor.u32 %v5384, 2147483648
    %v5478 = vxor.u32 %v5389, 2147483648
    %v5479 = vxor.u32 %v5392, 2147483648
    %v5480 = vxor.u32 %v5397, 2147483648
    %v5481 = vxor.u32 %v5400, 2147483648
    %v5482 = vxor.u32 %v5405, 2147483648
    %v5483 = vxor.u32 %v5408, 2147483648
    %v5484 = vxor.u32 %v5413, 2147483648
    %v5485 = vxor.u32 %v5416, 2147483648
    %v5486 = vxor.u32 %v5421, 2147483648
    %v5487 = vxor.u32 %v5424, 2147483648
    %v5488 = vxor.u32 %v5429, 2147483648
    %v5489 = vxor.u32 %v5432, 2147483648
    %v5490 = vxor.u32 %v5437, 2147483648
    %v5491 = vxor.u32 %v5440, 2147483648
    %v5492 = vxor.u32 %v5445, 2147483648
    %v5493 = vxor.u32 %v5448, 2147483648
    %v5494 = vxor.u32 %v5453, 2147483648
    %v5495 = vxor.u32 %v5456, 2147483648
    %v5496 = vxor.u32 %v5461, 2147483648
    %v5497 = vxor.u32 %v5464, 2147483648
    %v5498 = vxor.u32 %v5469, 2147483648
    %v5499 = vmul.f32 %v5474, 1.442695
    %v5500 = vpow.pop %v5499
    %v5501 = vmul.f32 %v5475, 1.442695
    %v5502 = vpow.pop %v5501
    %v5503 = vmul.f32 %v5476, 1.442695
    %v5504 = vpow.pop %v5503
    %v5505 = vmul.f32 %v5477, 1.442695
    %v5506 = vpow.pop %v5505
    %v5507 = vmul.f32 %v5478, 1.442695
    %v5508 = vpow.pop %v5507
    %v5509 = vmul.f32 %v5479, 1.442695
    %v5510 = vpow.pop %v5509
    %v5511 = vmul.f32 %v5480, 1.442695
    %v5512 = vpow.pop %v5511
    %v5513 = vmul.f32 %v5481, 1.442695
    %v5514 = vpow.pop %v5513
    %v5515 = vmul.f32 %v5482, 1.442695
    %v5516 = vpow.pop %v5515
    %v5517 = vmul.f32 %v5483, 1.442695
    %v5518 = vpow.pop %v5517
    %v5519 = vmul.f32 %v5484, 1.442695
    %v5520 = vpow.pop %v5519
    %v5521 = vmul.f32 %v5485, 1.442695
    %v5522 = vpow.pop %v5521
    %v5523 = vmul.f32 %v5486, 1.442695
    %v5524 = vpow.pop %v5523
    %v5525 = vmul.f32 %v5487, 1.442695
    %v5526 = vpow.pop %v5525
    %v5527 = vmul.f32 %v5488, 1.442695
    %v5528 = vpow.pop %v5527
    %v5529 = vmul.f32 %v5489, 1.442695
    %v5530 = vpow.pop %v5529
    %v5531 = vmul.f32 %v5490, 1.442695
    %v5532 = vpow.pop %v5531
    %v5533 = vmul.f32 %v5491, 1.442695
    %v5534 = vpow.pop %v5533
    %v5535 = vmul.f32 %v5492, 1.442695
    %v5536 = vpow.pop %v5535
    %v5537 = vmul.f32 %v5493, 1.442695
    %v5538 = vpow.pop %v5537
    %v5539 = vmul.f32 %v5494, 1.442695
    %v5540 = vpow.pop %v5539
    %v5541 = vmul.f32 %v5495, 1.442695
    %v5542 = vpow.pop %v5541
    %v5543 = vmul.f32 %v5496, 1.442695
    %v5544 = vpow.pop %v5543
    %v5545 = vmul.f32 %v5497, 1.442695
    %v5546 = vpow.pop %v5545
    %v5547 = vmul.f32 %v5498, 1.442695
    %v5548 = vpow.pop %v5547
    %v5549 = vadd.f32 %v5500, 1.0
    %v5550 = vadd.f32 %v5502, 1.0
    %v5551 = vadd.f32 %v5504, 1.0
    %v5552 = vadd.f32 %v5506, 1.0
    %v5553 = vadd.f32 %v5508, 1.0
    %v5554 = vadd.f32 %v5510, 1.0
    %v5555 = vadd.f32 %v5512, 1.0
    %v5556 = vadd.f32 %v5514, 1.0
    %v5557 = vadd.f32 %v5516, 1.0
    %v5558 = vadd.f32 %v5518, 1.0
    %v5559 = vadd.f32 %v5520, 1.0
    %v5560 = vadd.f32 %v5522, 1.0
    %v5561 = vadd.f32 %v5524, 1.0
    %v5562 = vadd.f32 %v5526, 1.0
    %v5563 = vadd.f32 %v5528, 1.0
    %v5564 = vadd.f32 %v5530, 1.0
    %v5565 = vadd.f32 %v5532, 1.0
    %v5566 = vadd.f32 %v5534, 1.0
    %v5567 = vadd.f32 %v5536, 1.0
    %v5568 = vadd.f32 %v5538, 1.0
    %v5569 = vadd.f32 %v5540, 1.0
    %v5570 = vadd.f32 %v5542, 1.0
    %v5571 = vadd.f32 %v5544, 1.0
    %v5572 = vadd.f32 %v5546, 1.0
    %v5573 = vadd.f32 %v5548, 1.0
    %v5574 = vrcp.pop %v5549
    %v5575 = vmul.f32 1.0, %v5574
    %v5576 = vrcp.pop %v5550
    %v5577 = vmul.f32 1.0, %v5576
    %v5578 = vrcp.pop %v5551
    %v5579 = vmul.f32 1.0, %v5578
    %v5580 = vrcp.pop %v5552
    %v5581 = vmul.f32 1.0, %v5580
    %v5582 = vrcp.pop %v5553
    %v5583 = vmul.f32 1.0, %v5582
    %v5584 = vrcp.pop %v5554
    %v5585 = vmul.f32 1.0, %v5584
    %v5586 = vrcp.pop %v5555
    %v5587 = vmul.f32 1.0, %v5586
    %v5588 = vrcp.pop %v5556
    %v5589 = vmul.f32 1.0, %v5588
    %v5590 = vrcp.pop %v5557
    %v5591 = vmul.f32 1.0, %v5590
    %v5592 = vrcp.pop %v5558
    %v5593 = vmul.f32 1.0, %v5592
    %v5594 = vrcp.pop %v5559
    %v5595 = vmul.f32 1.0, %v5594
    %v5596 = vrcp.pop %v5560
    %v5597 = vmul.f32 1.0, %v5596
    %v5598 = vrcp.pop %v5561
    %v5599 = vmul.f32 1.0, %v5598
    %v5600 = vrcp.pop %v5562
    %v5601 = vmul.f32 1.0, %v5600
    %v5602 = vrcp.pop %v5563
    %v5603 = vmul.f32 1.0, %v5602
    %v5604 = vrcp.pop %v5564
    %v5605 = vmul.f32 1.0, %v5604
    %v5606 = vrcp.pop %v5565
    %v5607 = vmul.f32 1.0, %v5606
    %v5608 = vrcp.pop %v5566
    %v5609 = vmul.f32 1.0, %v5608
    %v5610 = vrcp.pop %v5567
    %v5611 = vmul.f32 1.0, %v5610
    %v5612 = vrcp.pop %v5568
    %v5613 = vmul.f32 1.0, %v5612
    %v5614 = vrcp.pop %v5569
    %v5615 = vmul.f32 1.0, %v5614
    %v5616 = vrcp.pop %v5570
    %v5617 = vmul.f32 1.0, %v5616
    %v5618 = vrcp.pop %v5571
    %v5619 = vmul.f32 1.0, %v5618
    %v5620 = vrcp.pop %v5572
    %v5621 = vmul.f32 1.0, %v5620
    %v5622 = vrcp.pop %v5573
    %v5623 = vmul.f32 1.0, %v5622
    %5624 = vst.msk [vmem:[%s27] sm:$0xff] %vm4290, %v5575
    %5625 = vst.msk [vmem:[%s27 + $0x8] sm:$0xff] %vm4290, %v5577
    %5626 = vst.msk [vmem:[%s27 + $0x10] sm:$0xff] %vm4290, %v5579
    %5627 = vst.msk [vmem:[%s27 + $0x18] sm:$0xff] %vm4290, %v5581
    %5628 = vst.msk [vmem:[%s27 + $0x20] sm:$0xff] %vm4290, %v5583
    %5629 = vst.msk [vmem:[%s27 + $0x28] sm:$0xff] %vm4290, %v5585
    %5630 = vst.msk [vmem:[%s27 + $0x30] sm:$0xff] %vm4290, %v5587
    %5631 = vst.msk [vmem:[%s27 + $0x38] sm:$0xff] %vm4290, %v5589
    %5632 = vst.msk [vmem:[%s27 + $0x40] sm:$0xff] %vm4290, %v5591
    %5633 = vst.msk [vmem:[%s27 + $0x48] sm:$0xff] %vm4290, %v5593
    %5634 = vst.msk [vmem:[%s27 + $0x50] sm:$0xff] %vm4290, %v5595
    %5635 = vst.msk [vmem:[%s27 + $0x58] sm:$0xff] %vm4290, %v5597
    %5636 = vst.msk [vmem:[%s27 + $0x60] sm:$0xff] %vm4290, %v5599
    %5637 = vst.msk [vmem:[%s27 + $0x68] sm:$0xff] %vm4290, %v5601
    %5638 = vst.msk [vmem:[%s27 + $0x70] sm:$0xff] %vm4290, %v5603
    %5639 = vst.msk [vmem:[%s27 + $0x78] sm:$0xff] %vm4290, %v5605
    %5640 = vst.msk [vmem:[%s27 + $0x80] sm:$0xff] %vm4290, %v5607
    %5641 = vst.msk [vmem:[%s27 + $0x88] sm:$0xff] %vm4290, %v5609
    %5642 = vst.msk [vmem:[%s27 + $0x90] sm:$0xff] %vm4290, %v5611
    %5643 = vst.msk [vmem:[%s27 + $0x98] sm:$0xff] %vm4290, %v5613
    %5644 = vst.msk [vmem:[%s27 + $0xa0] sm:$0xff] %vm4290, %v5615
    %5645 = vst.msk [vmem:[%s27 + $0xa8] sm:$0xff] %vm4290, %v5617
    %5646 = vst.msk [vmem:[%s27 + $0xb0] sm:$0xff] %vm4290, %v5619
    %5647 = vst.msk [vmem:[%s27 + $0xb8] sm:$0xff] %vm4290, %v5621
    %vm5648 = vcmask 125952
    %5649 = vst.msk [vmem:[%s27 + $0xc0] sm:$0xf] %vm5648, %v5623
    // Predicated region
    $region150: #{_lambda_.1} parent=1 // pred_check
      _
    $region151: #{_lambda_.1} parent=1 // pred_check_branch
      %5651 = sbr.rel (0) target = $region153
    $region152: #{_lambda_.1} parent=1 // pred_region
      _
    $region153: #{_lambda_.1} parent=1 // pred_fallthru
      _
    // Predicated region
    $region154: #{_lambda_.1} parent=1 // pred_check
      _
    $region155: #{_lambda_.1} parent=1 // pred_check_branch
      %5653 = sbr.rel (0) target = $region157
    $region156: #{_lambda_.1} parent=1 // pred_region
      _
    $region157: #{_lambda_.1} parent=1 // pred_fallthru
      _
    %5654 = vsyncpa [#allocation10], 1
    %5655 = vsyncpa [#allocation12], 1
    %5656 = vsyncpa [#allocation15], 1
    %5657 = vsyncpa [#allocation18], 1
    %5658 = vsyncpa [#allocation21], 1
    %5659 = vsyncpa [#allocation24], 1

</llo_original>
